<compile_context>
chip_gen: v7x
topology: tpu7x:2x2x1
jax: 0.10.0
libtpu: 0.0.40
codegen_flags: <defaults>
</compile_context>

<pallas_src>
import functools

import numpy as np
import jax
import jax.numpy as jnp
from jax.experimental import pallas as pl
from jax.experimental.pallas import tpu as pltpu


def _round_up(x, m):
    return ((x + m - 1) // m) * m


# ------------------------ fused bidirectional GRU layer ---------------------
def _bigru_layer_kernel(x_ref, wih_f_ref, wih_b_ref, whh_ref, bias_i_ref, bhh_n_ref,
                        out_ref, *pool_refs, T, H2p, compute_pool):
    """Serial GRU recurrence for one bidirectional layer (fwd+bwd fused).

    x_ref     : (T, Bp, Finp)  bf16, layer input (time-major, batch/lane padded)
    wih_f/b   : (Finp, 3*H2p)  bf16, per-gate input weights (fwd / bwd lane halves)
    whh       : (H2p, 3*H2p)   bf16, fused r|z|n recurrent weights, block-diag fwd|bwd
    bias_i    : (1, 3*H2p)     f32,  b_ih (+ b_hh folded for r,z gates)
    bhh_n     : (1, H2p)       f32,  hidden bias of the n gate (stays inside r*(...))
    out       : (T, Bp, H2p)   f32,  row t = [h_fwd(t) | h_bwd(T-1-t) | pad]
    pool      : (Bp, H2p)      f32,  tanh(tanh(max over time)) (final layer only)
    """
    wih_f = wih_f_ref[...]
    wih_b = wih_b_ref[...]
    whh = whh_ref[...]
    Bp = x_ref.shape[1]

    # Hoisted broadcasts: JAX does not CSE broadcast_in_dim across an unrolled loop.
    bias_ib = jnp.broadcast_to(bias_i_ref[...], (Bp, 3 * H2p))
    bhh_nb = jnp.broadcast_to(bhh_n_ref[...], (Bp, H2p))

    h = jnp.zeros((Bp, H2p), jnp.float32)
    if compute_pool:
        m = jnp.full((Bp, H2p), -jnp.inf, jnp.float32)

    # T is small & static -> fully unrolled, static ref[t] indices, carry in vregs.
    # TODO(synk): for large T switch to lax.fori_loop(..., unroll=k) + a T-chunked
    # "arbitrary" grid axis carrying h/m in VMEM scratch (bounds VMEM, enables
    # double-buffered pipelining; re-derive chunk size for v7x's 64 MiB VMEM).
    for t in range(T):
        # Input projection fused into the kernel; fwd half uses x[t], bwd half x[T-1-t].
        gi = (jnp.dot(x_ref[t], wih_f, preferred_element_type=jnp.float32)
              + jnp.dot(x_ref[T - 1 - t], wih_b, preferred_element_type=jnp.float32)
              + bias_ib)
        # Single fused recurrent matmul (r|z|n gates, both directions) per step.
        gh = jnp.dot(h.astype(whh.dtype), whh, preferred_element_type=jnp.float32)
        # PyTorch gate order r | z | n; b_hh_r / b_hh_z already folded into bias_i.
        r = jax.nn.sigmoid(gi[:, :H2p] + gh[:, :H2p])
        z = jax.nn.sigmoid(gi[:, H2p:2 * H2p] + gh[:, H2p:2 * H2p])
        n = jnp.tanh(gi[:, 2 * H2p:] + r * (gh[:, 2 * H2p:] + bhh_nb))
        h = (1.0 - z) * n + z * h
        out_ref[t] = h
        if compute_pool:
            m = jnp.maximum(m, h)

    if compute_pool:
        # tanh(maxpool_T(tanh(.))) == tanh(tanh(max(.))) since tanh is monotonic.
        pool_refs[0][...] = jnp.tanh(jnp.tanh(m))


def bigru_layer(x, wih_f, wih_b, whh, bias_i, bhh_n, *, T, H2p, compute_pool):
    Tn, Bp, Finp = x.shape
    kernel = functools.partial(_bigru_layer_kernel, T=T, H2p=H2p,
                               compute_pool=compute_pool)
    full3 = lambda i: (0, 0, 0)
    full2 = lambda i: (0, 0)

    out_shapes = [jax.ShapeDtypeStruct((T, Bp, H2p), jnp.float32)]
    out_specs = [pl.BlockSpec((T, Bp, H2p), full3)]
    if compute_pool:
        out_shapes.append(jax.ShapeDtypeStruct((Bp, H2p), jnp.float32))
        out_specs.append(pl.BlockSpec((Bp, H2p), full2))

    res = pl.pallas_call(
        kernel,
        out_shape=tuple(out_shapes),
        grid=(1,),
        in_specs=[
            pl.BlockSpec((T, Bp, Finp), full3),
            pl.BlockSpec(wih_f.shape, full2),
            pl.BlockSpec(wih_b.shape, full2),
            pl.BlockSpec(whh.shape, full2),
            pl.BlockSpec(bias_i.shape, full2),
            pl.BlockSpec(bhh_n.shape, full2),
        ],
        out_specs=tuple(out_specs),
        compiler_params=pltpu.CompilerParams(
            dimension_semantics=("arbitrary",),
            vmem_limit_bytes=32 * 1024 * 1024),   # explicit; fits v7x 64MiB physical
    )(x, wih_f, wih_b, whh, bias_i, bhh_n)

    if compute_pool:
        return res[0], res[1]
    return res[0]


# ----------------------------- weight packing -------------------------------
def prepare_params(params, num_layers, hidden, input_size):
    """Pack PyTorch-layout GRU params once into the fused, lane-padded kernel layout."""
    H = hidden
    H2 = 2 * H
    H2p = _round_up(H2, 128)
    prepared = []
    for l in range(num_layers):
        Fin = input_size if l == 0 else H2
        Finp = _round_up(Fin, 128)
        w_ih_f, w_hh_f, b_ih_f, b_hh_f = params[(l, 0)]
        w_ih_b, w_hh_b, b_ih_b, b_hh_b = params[(l, 1)]

        wih_f = jnp.zeros((Finp, 3 * H2p), jnp.float32)
        wih_b = jnp.zeros((Finp, 3 * H2p), jnp.float32)
        whh = jnp.zeros((H2p, 3 * H2p), jnp.float32)
        bias_i = jnp.zeros((1, 3 * H2p), jnp.float32)
        bhh_n = jnp.zeros((1, H2p), jnp.float32)

        for g in range(3):                         # gate order: r, z, n
            sl = slice(g * H, (g + 1) * H)
            c0 = g * H2p
            wih_f = wih_f.at[:Fin, c0:c0 + H].set(w_ih_f[sl, :].T)
            wih_b = wih_b.at[:Fin, c0 + H:c0 + H2].set(w_ih_b[sl, :].T)
            whh = whh.at[:H, c0:c0 + H].set(w_hh_f[sl, :].T)
            whh = whh.at[H:H2, c0 + H:c0 + H2].set(w_hh_b[sl, :].T)
            bf = b_ih_f[sl]
            bb = b_ih_b[sl]
            if g < 2:                              # r, z: fold hidden bias in too
                bf = bf + b_hh_f[sl]
                bb = bb + b_hh_b[sl]
            bias_i = bias_i.at[0, c0:c0 + H].set(bf)
            bias_i = bias_i.at[0, c0 + H:c0 + H2].set(bb)
        bhh_n = bhh_n.at[0, :H].set(b_hh_f[2 * H:])
        bhh_n = bhh_n.at[0, H:H2].set(b_hh_b[2 * H:])

        # bf16 MXU operands (biases / elementwise stay fp32 in-kernel).
        prepared.append((wih_f.astype(jnp.bfloat16), wih_b.astype(jnp.bfloat16),
                         whh.astype(jnp.bfloat16), bias_i, bhh_n))
    return tuple(prepared)


# ------------------------------- full forward --------------------------------
def utterance_net_forward(x, prepared, num_layers, hidden):
    """x: (B, T, input_size) float32.
    Returns (gru_out_con (B, 2H), gru_out (B, T, 2H)) matching the PyTorch module."""
    # TODO(synk): nn.Dropout is treated as inference-mode identity (no PRNG mask).
    B, T, _ = x.shape
    H = hidden
    H2 = 2 * H
    H2p = _round_up(H2, 128)
    Bp = _round_up(B, 8)

    layer_in = jnp.transpose(x, (1, 0, 2))                   # (T, B, Fin) time-major
    pooled = None
    for l in range(num_layers):
        wih_f, wih_b, whh, bias_i, bhh_n = prepared[l]
        Finp = wih_f.shape[0]
        Fin = layer_in.shape[-1]

        # Pad batch to 8 sublanes / features to 128 lanes; cast MXU operand to bf16.
        x_pad = jnp.zeros((T, Bp, Finp), jnp.bfloat16)
        x_pad = x_pad.at[:, :B, :Fin].set(layer_in.astype(jnp.bfloat16))

        is_last = (l == num_layers - 1)
        if is_last:
            out, pool_pad = bigru_layer(x_pad, wih_f, wih_b, whh, bias_i, bhh_n,
                                        T=T, H2p=H2p, compute_pool=True)
            pooled = pool_pad[:B, :H2]
        else:
            out = bigru_layer(x_pad, wih_f, wih_b, whh, bias_i, bhh_n,
                              T=T, H2p=H2p, compute_pool=False)

        # Kernel row t holds [h_fwd(t) | h_bwd(T-1-t) | pad]; restore natural time
        # order for the backward half -> layer output (T, B, 2H).
        layer_in = jnp.concatenate([out[:, :B, :H], out[::-1, :B, H:H2]], axis=-1)

    gru_out = jnp.transpose(layer_in, (1, 0, 2))              # (B, T, 2H) batch_first
    return pooled, gru_out


# -------------------------------- parameters ---------------------------------
def init_params(key, input_size, hidden, num_layers):
    params = {}
    bound = 1.0 / np.sqrt(hidden)
    for l in range(num_layers):
        in_l = input_size if l == 0 else 2 * hidden
        for d in range(2):
            key, k1, k2, k3, k4 = jax.random.split(key, 5)
            params[(l, d)] = (
                jax.random.uniform(k1, (3 * hidden, in_l), jnp.float32, -bound, bound),
                jax.random.uniform(k2, (3 * hidden, hidden), jnp.float32, -bound, bound),
                jax.random.uniform(k3, (3 * hidden,), jnp.float32, -bound, bound),
                jax.random.uniform(k4, (3 * hidden,), jnp.float32, -bound, bound),
            )
    return params


# ----------------------------- pure-JAX reference -----------------------------
def reference_forward(x, params, num_layers, hidden):
    B, T, _ = x.shape
    H = hidden
    layer_in = x
    for l in range(num_layers):
        dir_outs = []
        for d in range(2):
            w_ih, w_hh, b_ih, b_hh = params[(l, d)]
            h = jnp.zeros((B, H), jnp.float32)
            ys = [None] * T
            order = range(T) if d == 0 else range(T - 1, -1, -1)
            for t in order:
                x_t = layer_in[:, t, :]
                gi = x_t @ w_ih.T + b_ih
                gh = h @ w_hh.T + b_hh
                r = jax.nn.sigmoid(gi[:, :H] + gh[:, :H])
                z = jax.nn.sigmoid(gi[:, H:2 * H] + gh[:, H:2 * H])
                n = jnp.tanh(gi[:, 2 * H:] + r * gh[:, 2 * H:])
                h = (1.0 - z) * n + z * h
                ys[t] = h
            dir_outs.append(jnp.stack(ys, axis=1))            # (B, T, H)
        layer_in = jnp.concatenate(dir_outs, axis=-1)         # (B, T, 2H)
    gru_out = layer_in
    pooled = jnp.tanh(jnp.max(jnp.tanh(gru_out), axis=1))     # (B, 2H)
    return pooled, gru_out


# ----------------------------------- main -------------------------------------
if __name__ == "__main__":
    B, T = 2, 8
    INPUT_SIZE = 16          # input_size
    HIDDEN = 32              # args.hidden_layer
    NUM_LAYERS = 2           # args.dia_layers

    key = jax.random.PRNGKey(0)
    key, kx, kp = jax.random.split(key, 3)
    x = jax.random.normal(kx, (B, T, INPUT_SIZE), jnp.float32)
    params = init_params(kp, INPUT_SIZE, HIDDEN, NUM_LAYERS)

    prepared = prepare_params(params, NUM_LAYERS, HIDDEN, INPUT_SIZE)
    fwd = jax.jit(functools.partial(utterance_net_forward,
                                    num_layers=NUM_LAYERS, hidden=HIDDEN))

    gru_out_con, gru_out = fwd(x, prepared)
    gru_out_con = jax.block_until_ready(gru_out_con)
    gru_out = jax.block_until_ready(gru_out)

    assert gru_out_con.shape == (B, 2 * HIDDEN)
    assert gru_out.shape == (B, T, 2 * HIDDEN)

    ref_con, ref_out = reference_forward(x, params, NUM_LAYERS, HIDDEN)
    np.testing.assert_allclose(np.asarray(gru_out_con), np.asarray(ref_con),
                               rtol=2e-2, atol=2e-2)
    np.testing.assert_allclose(np.asarray(gru_out), np.asarray(ref_out),
                               rtol=2e-2, atol=2e-2)

    print("KERNEL_OK")
</pallas_src>

<mosaic_0001>
module attributes {stable_mosaic.version = 11 : i64} {
  func.func @_bigru_layer_kernel(%arg0: i32, %arg1: memref<8x8x128xbf16, #tpu.memory_space<vmem>>, %arg2: memref<128x384xbf16, #tpu.memory_space<vmem>>, %arg3: memref<128x384xbf16, #tpu.memory_space<vmem>>, %arg4: memref<128x384xbf16, #tpu.memory_space<vmem>>, %arg5: memref<1x384xf32, #tpu.memory_space<vmem>>, %arg6: memref<1x128xf32, #tpu.memory_space<vmem>>, %arg7: memref<8x8x128xf32, #tpu.memory_space<vmem>>) attributes {dimension_semantics = [#tpu.dimension_semantics<arbitrary>], iteration_bounds = array<i64: 1>, scalar_prefetch = 0 : i64, scratch_operands = 0 : i64, tpu.core_type = #tpu.core_type<tc>, window_params = [{pipeline_mode = #tpu.pipeline_mode<synchronous>, transform_indices = @transform_0, window_bounds = array<i64: 8, 8, 128>}, {pipeline_mode = #tpu.pipeline_mode<synchronous>, transform_indices = @transform_1, window_bounds = array<i64: 128, 384>}, {pipeline_mode = #tpu.pipeline_mode<synchronous>, transform_indices = @transform_2, window_bounds = array<i64: 128, 384>}, {pipeline_mode = #tpu.pipeline_mode<synchronous>, transform_indices = @transform_3, window_bounds = array<i64: 128, 384>}, {pipeline_mode = #tpu.pipeline_mode<synchronous>, transform_indices = @transform_4, window_bounds = array<i64: 1, 384>}, {pipeline_mode = #tpu.pipeline_mode<synchronous>, transform_indices = @transform_5, window_bounds = array<i64: 1, 128>}, {pipeline_mode = #tpu.pipeline_mode<synchronous>, transform_indices = @transform_6, window_bounds = array<i64: 8, 8, 128>}]} {
    %c0 = arith.constant 0 : index
    %c0_0 = arith.constant 0 : index
    %0 = vector.load %arg2[%c0, %c0_0] : memref<128x384xbf16, #tpu.memory_space<vmem>>, vector<128x384xbf16>
    %c0_1 = arith.constant 0 : index
    %c0_2 = arith.constant 0 : index
    %1 = vector.load %arg3[%c0_1, %c0_2] : memref<128x384xbf16, #tpu.memory_space<vmem>>, vector<128x384xbf16>
    %c0_3 = arith.constant 0 : index
    %c0_4 = arith.constant 0 : index
    %2 = vector.load %arg4[%c0_3, %c0_4] : memref<128x384xbf16, #tpu.memory_space<vmem>>, vector<128x384xbf16>
    %c0_5 = arith.constant 0 : index
    %c0_6 = arith.constant 0 : index
    %3 = vector.load %arg5[%c0_5, %c0_6] : memref<1x384xf32, #tpu.memory_space<vmem>>, vector<1x384xf32>
    %4 = vector.shape_cast %3 : vector<1x384xf32> to vector<1x384xf32>
    %5 = vector.broadcast %4 : vector<1x384xf32> to vector<8x384xf32>
    %c0_7 = arith.constant 0 : index
    %c0_8 = arith.constant 0 : index
    %6 = vector.load %arg6[%c0_7, %c0_8] : memref<1x128xf32, #tpu.memory_space<vmem>>, vector<1x128xf32>
    %7 = vector.shape_cast %6 : vector<1x128xf32> to vector<1x128xf32>
    %8 = vector.broadcast %7 : vector<1x128xf32> to vector<8x128xf32>
    %cst = arith.constant 0.000000e+00 : f32
    %9 = vector.broadcast %cst : f32 to vector<8x128xf32>
    %c0_9 = arith.constant 0 : index
    %c0_10 = arith.constant 0 : index
    %c0_11 = arith.constant 0 : index
    %10 = vector.load %arg1[%c0_9, %c0_10, %c0_11] : memref<8x8x128xbf16, #tpu.memory_space<vmem>>, vector<1x8x128xbf16>
    %11 = vector.shape_cast %10 : vector<1x8x128xbf16> to vector<8x128xbf16>
    %cst_12 = arith.constant dense<0.000000e+00> : vector<8x384xf32>
    %12 = tpu.matmul %11, %0, %cst_12 {dimension_numbers = #tpu.dot_dimension_numbers<[1], [0], [0], [1], [0, 0, 1, 1], [], []>} : vector<8x128xbf16>, vector<128x384xbf16>, vector<8x384xf32> -> vector<8x384xf32>
    %c7 = arith.constant 7 : index
    %c0_13 = arith.constant 0 : index
    %c0_14 = arith.constant 0 : index
    %13 = vector.load %arg1[%c7, %c0_13, %c0_14] : memref<8x8x128xbf16, #tpu.memory_space<vmem>>, vector<1x8x128xbf16>
    %14 = vector.shape_cast %13 : vector<1x8x128xbf16> to vector<8x128xbf16>
    %cst_15 = arith.constant dense<0.000000e+00> : vector<8x384xf32>
    %15 = tpu.matmul %14, %1, %cst_15 {dimension_numbers = #tpu.dot_dimension_numbers<[1], [0], [0], [1], [0, 0, 1, 1], [], []>} : vector<8x128xbf16>, vector<128x384xbf16>, vector<8x384xf32> -> vector<8x384xf32>
    %16 = arith.addf %12, %15 : vector<8x384xf32>
    %17 = arith.addf %16, %5 : vector<8x384xf32>
    %18 = arith.truncf %9 : vector<8x128xf32> to vector<8x128xbf16>
    %cst_16 = arith.constant dense<0.000000e+00> : vector<8x384xf32>
    %19 = tpu.matmul %18, %2, %cst_16 {dimension_numbers = #tpu.dot_dimension_numbers<[1], [0], [0], [1], [0, 0, 1, 1], [], []>} : vector<8x128xbf16>, vector<128x384xbf16>, vector<8x384xf32> -> vector<8x384xf32>
    %20 = vector.extract_strided_slice %17 {offsets = [0, 0], sizes = [8, 128], strides = [1, 1]} : vector<8x384xf32> to vector<8x128xf32>
    %21 = vector.extract_strided_slice %19 {offsets = [0, 0], sizes = [8, 128], strides = [1, 1]} : vector<8x384xf32> to vector<8x128xf32>
    %22 = arith.addf %20, %21 : vector<8x128xf32>
    %23 = arith.negf %22 : vector<8x128xf32>
    %24 = math.exp %23 : vector<8x128xf32>
    %cst_17 = arith.constant 1.000000e+00 : f32
    %25 = vector.broadcast %cst_17 : f32 to vector<8x128xf32>
    %26 = arith.addf %25, %24 : vector<8x128xf32>
    %27 = arith.divf %25, %26 : vector<8x128xf32>
    %28 = vector.extract_strided_slice %17 {offsets = [0, 128], sizes = [8, 128], strides = [1, 1]} : vector<8x384xf32> to vector<8x128xf32>
    %29 = vector.extract_strided_slice %19 {offsets = [0, 128], sizes = [8, 128], strides = [1, 1]} : vector<8x384xf32> to vector<8x128xf32>
    %30 = arith.addf %28, %29 : vector<8x128xf32>
    %31 = arith.negf %30 : vector<8x128xf32>
    %32 = math.exp %31 : vector<8x128xf32>
    %cst_18 = arith.constant 1.000000e+00 : f32
    %33 = vector.broadcast %cst_18 : f32 to vector<8x128xf32>
    %34 = arith.addf %33, %32 : vector<8x128xf32>
    %35 = arith.divf %33, %34 : vector<8x128xf32>
    %36 = vector.extract_strided_slice %17 {offsets = [0, 256], sizes = [8, 128], strides = [1, 1]} : vector<8x384xf32> to vector<8x128xf32>
    %37 = vector.extract_strided_slice %19 {offsets = [0, 256], sizes = [8, 128], strides = [1, 1]} : vector<8x384xf32> to vector<8x128xf32>
    %38 = arith.addf %37, %8 : vector<8x128xf32>
    %39 = arith.mulf %27, %38 : vector<8x128xf32>
    %40 = arith.addf %36, %39 : vector<8x128xf32>
    %41 = math.tanh %40 : vector<8x128xf32>
    %cst_19 = arith.constant 1.000000e+00 : f32
    %42 = vector.broadcast %cst_19 : f32 to vector<8x128xf32>
    %43 = arith.subf %42, %35 : vector<8x128xf32>
    %44 = arith.mulf %43, %41 : vector<8x128xf32>
    %45 = arith.mulf %35, %9 : vector<8x128xf32>
    %46 = arith.addf %44, %45 : vector<8x128xf32>
    %c0_20 = arith.constant 0 : index
    %c0_21 = arith.constant 0 : index
    %c0_22 = arith.constant 0 : index
    %47 = vector.load %arg7[%c0_20, %c0_21, %c0_22] : memref<8x8x128xf32, #tpu.memory_space<vmem>>, vector<1x8x128xf32>
    %48 = vector.shape_cast %47 : vector<1x8x128xf32> to vector<8x128xf32>
    %49 = vector.shape_cast %46 : vector<8x128xf32> to vector<1x8x128xf32>
    tpu.vector_store %arg7[%c0_20, %c0_21, %c0_22], %49 {strides = array<i32>} : memref<8x8x128xf32, #tpu.memory_space<vmem>>, vector<1x8x128xf32>,
    %c1 = arith.constant 1 : index
    %c0_23 = arith.constant 0 : index
    %c0_24 = arith.constant 0 : index
    %50 = vector.load %arg1[%c1, %c0_23, %c0_24] : memref<8x8x128xbf16, #tpu.memory_space<vmem>>, vector<1x8x128xbf16>
    %51 = vector.shape_cast %50 : vector<1x8x128xbf16> to vector<8x128xbf16>
    %cst_25 = arith.constant dense<0.000000e+00> : vector<8x384xf32>
    %52 = tpu.matmul %51, %0, %cst_25 {dimension_numbers = #tpu.dot_dimension_numbers<[1], [0], [0], [1], [0, 0, 1, 1], [], []>} : vector<8x128xbf16>, vector<128x384xbf16>, vector<8x384xf32> -> vector<8x384xf32>
    %c6 = arith.constant 6 : index
    %c0_26 = arith.constant 0 : index
    %c0_27 = arith.constant 0 : index
    %53 = vector.load %arg1[%c6, %c0_26, %c0_27] : memref<8x8x128xbf16, #tpu.memory_space<vmem>>, vector<1x8x128xbf16>
    %54 = vector.shape_cast %53 : vector<1x8x128xbf16> to vector<8x128xbf16>
    %cst_28 = arith.constant dense<0.000000e+00> : vector<8x384xf32>
    %55 = tpu.matmul %54, %1, %cst_28 {dimension_numbers = #tpu.dot_dimension_numbers<[1], [0], [0], [1], [0, 0, 1, 1], [], []>} : vector<8x128xbf16>, vector<128x384xbf16>, vector<8x384xf32> -> vector<8x384xf32>
    %56 = arith.addf %52, %55 : vector<8x384xf32>
    %57 = arith.addf %56, %5 : vector<8x384xf32>
    %58 = arith.truncf %46 : vector<8x128xf32> to vector<8x128xbf16>
    %cst_29 = arith.constant dense<0.000000e+00> : vector<8x384xf32>
    %59 = tpu.matmul %58, %2, %cst_29 {dimension_numbers = #tpu.dot_dimension_numbers<[1], [0], [0], [1], [0, 0, 1, 1], [], []>} : vector<8x128xbf16>, vector<128x384xbf16>, vector<8x384xf32> -> vector<8x384xf32>
    %60 = vector.extract_strided_slice %57 {offsets = [0, 0], sizes = [8, 128], strides = [1, 1]} : vector<8x384xf32> to vector<8x128xf32>
    %61 = vector.extract_strided_slice %59 {offsets = [0, 0], sizes = [8, 128], strides = [1, 1]} : vector<8x384xf32> to vector<8x128xf32>
    %62 = arith.addf %60, %61 : vector<8x128xf32>
    %63 = arith.negf %62 : vector<8x128xf32>
    %64 = math.exp %63 : vector<8x128xf32>
    %cst_30 = arith.constant 1.000000e+00 : f32
    %65 = vector.broadcast %cst_30 : f32 to vector<8x128xf32>
    %66 = arith.addf %65, %64 : vector<8x128xf32>
    %67 = arith.divf %65, %66 : vector<8x128xf32>
    %68 = vector.extract_strided_slice %57 {offsets = [0, 128], sizes = [8, 128], strides = [1, 1]} : vector<8x384xf32> to vector<8x128xf32>
    %69 = vector.extract_strided_slice %59 {offsets = [0, 128], sizes = [8, 128], strides = [1, 1]} : vector<8x384xf32> to vector<8x128xf32>
    %70 = arith.addf %68, %69 : vector<8x128xf32>
    %71 = arith.negf %70 : vector<8x128xf32>
    %72 = math.exp %71 : vector<8x128xf32>
    %cst_31 = arith.constant 1.000000e+00 : f32
    %73 = vector.broadcast %cst_31 : f32 to vector<8x128xf32>
    %74 = arith.addf %73, %72 : vector<8x128xf32>
    %75 = arith.divf %73, %74 : vector<8x128xf32>
    %76 = vector.extract_strided_slice %57 {offsets = [0, 256], sizes = [8, 128], strides = [1, 1]} : vector<8x384xf32> to vector<8x128xf32>
    %77 = vector.extract_strided_slice %59 {offsets = [0, 256], sizes = [8, 128], strides = [1, 1]} : vector<8x384xf32> to vector<8x128xf32>
    %78 = arith.addf %77, %8 : vector<8x128xf32>
    %79 = arith.mulf %67, %78 : vector<8x128xf32>
    %80 = arith.addf %76, %79 : vector<8x128xf32>
    %81 = math.tanh %80 : vector<8x128xf32>
    %cst_32 = arith.constant 1.000000e+00 : f32
    %82 = vector.broadcast %cst_32 : f32 to vector<8x128xf32>
    %83 = arith.subf %82, %75 : vector<8x128xf32>
    %84 = arith.mulf %83, %81 : vector<8x128xf32>
    %85 = arith.mulf %75, %46 : vector<8x128xf32>
    %86 = arith.addf %84, %85 : vector<8x128xf32>
    %c1_33 = arith.constant 1 : index
    %c0_34 = arith.constant 0 : index
    %c0_35 = arith.constant 0 : index
    %87 = vector.load %arg7[%c1_33, %c0_34, %c0_35] : memref<8x8x128xf32, #tpu.memory_space<vmem>>, vector<1x8x128xf32>
    %88 = vector.shape_cast %87 : vector<1x8x128xf32> to vector<8x128xf32>
    %89 = vector.shape_cast %86 : vector<8x128xf32> to vector<1x8x128xf32>
    tpu.vector_store %arg7[%c1_33, %c0_34, %c0_35], %89 {strides = array<i32>} : memref<8x8x128xf32, #tpu.memory_space<vmem>>, vector<1x8x128xf32>,
    %c2 = arith.constant 2 : index
    %c0_36 = arith.constant 0 : index
    %c0_37 = arith.constant 0 : index
    %90 = vector.load %arg1[%c2, %c0_36, %c0_37] : memref<8x8x128xbf16, #tpu.memory_space<vmem>>, vector<1x8x128xbf16>
    %91 = vector.shape_cast %90 : vector<1x8x128xbf16> to vector<8x128xbf16>
    %cst_38 = arith.constant dense<0.000000e+00> : vector<8x384xf32>
    %92 = tpu.matmul %91, %0, %cst_38 {dimension_numbers = #tpu.dot_dimension_numbers<[1], [0], [0], [1], [0, 0, 1, 1], [], []>} : vector<8x128xbf16>, vector<128x384xbf16>, vector<8x384xf32> -> vector<8x384xf32>
    %c5 = arith.constant 5 : index
    %c0_39 = arith.constant 0 : index
    %c0_40 = arith.constant 0 : index
    %93 = vector.load %arg1[%c5, %c0_39, %c0_40] : memref<8x8x128xbf16, #tpu.memory_space<vmem>>, vector<1x8x128xbf16>
    %94 = vector.shape_cast %93 : vector<1x8x128xbf16> to vector<8x128xbf16>
    %cst_41 = arith.constant dense<0.000000e+00> : vector<8x384xf32>
    %95 = tpu.matmul %94, %1, %cst_41 {dimension_numbers = #tpu.dot_dimension_numbers<[1], [0], [0], [1], [0, 0, 1, 1], [], []>} : vector<8x128xbf16>, vector<128x384xbf16>, vector<8x384xf32> -> vector<8x384xf32>
    %96 = arith.addf %92, %95 : vector<8x384xf32>
    %97 = arith.addf %96, %5 : vector<8x384xf32>
    %98 = arith.truncf %86 : vector<8x128xf32> to vector<8x128xbf16>
    %cst_42 = arith.constant dense<0.000000e+00> : vector<8x384xf32>
    %99 = tpu.matmul %98, %2, %cst_42 {dimension_numbers = #tpu.dot_dimension_numbers<[1], [0], [0], [1], [0, 0, 1, 1], [], []>} : vector<8x128xbf16>, vector<128x384xbf16>, vector<8x384xf32> -> vector<8x384xf32>
    %100 = vector.extract_strided_slice %97 {offsets = [0, 0], sizes = [8, 128], strides = [1, 1]} : vector<8x384xf32> to vector<8x128xf32>
    %101 = vector.extract_strided_slice %99 {offsets = [0, 0], sizes = [8, 128], strides = [1, 1]} : vector<8x384xf32> to vector<8x128xf32>
    %102 = arith.addf %100, %101 : vector<8x128xf32>
    %103 = arith.negf %102 : vector<8x128xf32>
    %104 = math.exp %103 : vector<8x128xf32>
    %cst_43 = arith.constant 1.000000e+00 : f32
    %105 = vector.broadcast %cst_43 : f32 to vector<8x128xf32>
    %106 = arith.addf %105, %104 : vector<8x128xf32>
    %107 = arith.divf %105, %106 : vector<8x128xf32>
    %108 = vector.extract_strided_slice %97 {offsets = [0, 128], sizes = [8, 128], strides = [1, 1]} : vector<8x384xf32> to vector<8x128xf32>
    %109 = vector.extract_strided_slice %99 {offsets = [0, 128], sizes = [8, 128], strides = [1, 1]} : vector<8x384xf32> to vector<8x128xf32>
    %110 = arith.addf %108, %109 : vector<8x128xf32>
    %111 = arith.negf %110 : vector<8x128xf32>
    %112 = math.exp %111 : vector<8x128xf32>
    %cst_44 = arith.constant 1.000000e+00 : f32
    %113 = vector.broadcast %cst_44 : f32 to vector<8x128xf32>
    %114 = arith.addf %113, %112 : vector<8x128xf32>
    %115 = arith.divf %113, %114 : vector<8x128xf32>
    %116 = vector.extract_strided_slice %97 {offsets = [0, 256], sizes = [8, 128], strides = [1, 1]} : vector<8x384xf32> to vector<8x128xf32>
    %117 = vector.extract_strided_slice %99 {offsets = [0, 256], sizes = [8, 128], strides = [1, 1]} : vector<8x384xf32> to vector<8x128xf32>
    %118 = arith.addf %117, %8 : vector<8x128xf32>
    %119 = arith.mulf %107, %118 : vector<8x128xf32>
    %120 = arith.addf %116, %119 : vector<8x128xf32>
    %121 = math.tanh %120 : vector<8x128xf32>
    %cst_45 = arith.constant 1.000000e+00 : f32
    %122 = vector.broadcast %cst_45 : f32 to vector<8x128xf32>
    %123 = arith.subf %122, %115 : vector<8x128xf32>
    %124 = arith.mulf %123, %121 : vector<8x128xf32>
    %125 = arith.mulf %115, %86 : vector<8x128xf32>
    %126 = arith.addf %124, %125 : vector<8x128xf32>
    %c2_46 = arith.constant 2 : index
    %c0_47 = arith.constant 0 : index
    %c0_48 = arith.constant 0 : index
    %127 = vector.load %arg7[%c2_46, %c0_47, %c0_48] : memref<8x8x128xf32, #tpu.memory_space<vmem>>, vector<1x8x128xf32>
    %128 = vector.shape_cast %127 : vector<1x8x128xf32> to vector<8x128xf32>
    %129 = vector.shape_cast %126 : vector<8x128xf32> to vector<1x8x128xf32>
    tpu.vector_store %arg7[%c2_46, %c0_47, %c0_48], %129 {strides = array<i32>} : memref<8x8x128xf32, #tpu.memory_space<vmem>>, vector<1x8x128xf32>,
    %c3 = arith.constant 3 : index
    %c0_49 = arith.constant 0 : index
    %c0_50 = arith.constant 0 : index
    %130 = vector.load %arg1[%c3, %c0_49, %c0_50] : memref<8x8x128xbf16, #tpu.memory_space<vmem>>, vector<1x8x128xbf16>
    %131 = vector.shape_cast %130 : vector<1x8x128xbf16> to vector<8x128xbf16>
    %cst_51 = arith.constant dense<0.000000e+00> : vector<8x384xf32>
    %132 = tpu.matmul %131, %0, %cst_51 {dimension_numbers = #tpu.dot_dimension_numbers<[1], [0], [0], [1], [0, 0, 1, 1], [], []>} : vector<8x128xbf16>, vector<128x384xbf16>, vector<8x384xf32> -> vector<8x384xf32>
    %c4 = arith.constant 4 : index
    %c0_52 = arith.constant 0 : index
    %c0_53 = arith.constant 0 : index
    %133 = vector.load %arg1[%c4, %c0_52, %c0_53] : memref<8x8x128xbf16, #tpu.memory_space<vmem>>, vector<1x8x128xbf16>
    %134 = vector.shape_cast %133 : vector<1x8x128xbf16> to vector<8x128xbf16>
    %cst_54 = arith.constant dense<0.000000e+00> : vector<8x384xf32>
    %135 = tpu.matmul %134, %1, %cst_54 {dimension_numbers = #tpu.dot_dimension_numbers<[1], [0], [0], [1], [0, 0, 1, 1], [], []>} : vector<8x128xbf16>, vector<128x384xbf16>, vector<8x384xf32> -> vector<8x384xf32>
    %136 = arith.addf %132, %135 : vector<8x384xf32>
    %137 = arith.addf %136, %5 : vector<8x384xf32>
    %138 = arith.truncf %126 : vector<8x128xf32> to vector<8x128xbf16>
    %cst_55 = arith.constant dense<0.000000e+00> : vector<8x384xf32>
    %139 = tpu.matmul %138, %2, %cst_55 {dimension_numbers = #tpu.dot_dimension_numbers<[1], [0], [0], [1], [0, 0, 1, 1], [], []>} : vector<8x128xbf16>, vector<128x384xbf16>, vector<8x384xf32> -> vector<8x384xf32>
    %140 = vector.extract_strided_slice %137 {offsets = [0, 0], sizes = [8, 128], strides = [1, 1]} : vector<8x384xf32> to vector<8x128xf32>
    %141 = vector.extract_strided_slice %139 {offsets = [0, 0], sizes = [8, 128], strides = [1, 1]} : vector<8x384xf32> to vector<8x128xf32>
    %142 = arith.addf %140, %141 : vector<8x128xf32>
    %143 = arith.negf %142 : vector<8x128xf32>
    %144 = math.exp %143 : vector<8x128xf32>
    %cst_56 = arith.constant 1.000000e+00 : f32
    %145 = vector.broadcast %cst_56 : f32 to vector<8x128xf32>
    %146 = arith.addf %145, %144 : vector<8x128xf32>
    %147 = arith.divf %145, %146 : vector<8x128xf32>
    %148 = vector.extract_strided_slice %137 {offsets = [0, 128], sizes = [8, 128], strides = [1, 1]} : vector<8x384xf32> to vector<8x128xf32>
    %149 = vector.extract_strided_slice %139 {offsets = [0, 128], sizes = [8, 128], strides = [1, 1]} : vector<8x384xf32> to vector<8x128xf32>
    %150 = arith.addf %148, %149 : vector<8x128xf32>
    %151 = arith.negf %150 : vector<8x128xf32>
    %152 = math.exp %151 : vector<8x128xf32>
    %cst_57 = arith.constant 1.000000e+00 : f32
    %153 = vector.broadcast %cst_57 : f32 to vector<8x128xf32>
    %154 = arith.addf %153, %152 : vector<8x128xf32>
    %155 = arith.divf %153, %154 : vector<8x128xf32>
    %156 = vector.extract_strided_slice %137 {offsets = [0, 256], sizes = [8, 128], strides = [1, 1]} : vector<8x384xf32> to vector<8x128xf32>
    %157 = vector.extract_strided_slice %139 {offsets = [0, 256], sizes = [8, 128], strides = [1, 1]} : vector<8x384xf32> to vector<8x128xf32>
    %158 = arith.addf %157, %8 : vector<8x128xf32>
    %159 = arith.mulf %147, %158 : vector<8x128xf32>
    %160 = arith.addf %156, %159 : vector<8x128xf32>
    %161 = math.tanh %160 : vector<8x128xf32>
    %cst_58 = arith.constant 1.000000e+00 : f32
    %162 = vector.broadcast %cst_58 : f32 to vector<8x128xf32>
    %163 = arith.subf %162, %155 : vector<8x128xf32>
    %164 = arith.mulf %163, %161 : vector<8x128xf32>
    %165 = arith.mulf %155, %126 : vector<8x128xf32>
    %166 = arith.addf %164, %165 : vector<8x128xf32>
    %c3_59 = arith.constant 3 : index
    %c0_60 = arith.constant 0 : index
    %c0_61 = arith.constant 0 : index
    %167 = vector.load %arg7[%c3_59, %c0_60, %c0_61] : memref<8x8x128xf32, #tpu.memory_space<vmem>>, vector<1x8x128xf32>
    %168 = vector.shape_cast %167 : vector<1x8x128xf32> to vector<8x128xf32>
    %169 = vector.shape_cast %166 : vector<8x128xf32> to vector<1x8x128xf32>
    tpu.vector_store %arg7[%c3_59, %c0_60, %c0_61], %169 {strides = array<i32>} : memref<8x8x128xf32, #tpu.memory_space<vmem>>, vector<1x8x128xf32>,
    %c4_62 = arith.constant 4 : index
    %c0_63 = arith.constant 0 : index
    %c0_64 = arith.constant 0 : index
    %170 = vector.load %arg1[%c4_62, %c0_63, %c0_64] : memref<8x8x128xbf16, #tpu.memory_space<vmem>>, vector<1x8x128xbf16>
    %171 = vector.shape_cast %170 : vector<1x8x128xbf16> to vector<8x128xbf16>
    %cst_65 = arith.constant dense<0.000000e+00> : vector<8x384xf32>
    %172 = tpu.matmul %171, %0, %cst_65 {dimension_numbers = #tpu.dot_dimension_numbers<[1], [0], [0], [1], [0, 0, 1, 1], [], []>} : vector<8x128xbf16>, vector<128x384xbf16>, vector<8x384xf32> -> vector<8x384xf32>
    %c3_66 = arith.constant 3 : index
    %c0_67 = arith.constant 0 : index
    %c0_68 = arith.constant 0 : index
    %173 = vector.load %arg1[%c3_66, %c0_67, %c0_68] : memref<8x8x128xbf16, #tpu.memory_space<vmem>>, vector<1x8x128xbf16>
    %174 = vector.shape_cast %173 : vector<1x8x128xbf16> to vector<8x128xbf16>
    %cst_69 = arith.constant dense<0.000000e+00> : vector<8x384xf32>
    %175 = tpu.matmul %174, %1, %cst_69 {dimension_numbers = #tpu.dot_dimension_numbers<[1], [0], [0], [1], [0, 0, 1, 1], [], []>} : vector<8x128xbf16>, vector<128x384xbf16>, vector<8x384xf32> -> vector<8x384xf32>
    %176 = arith.addf %172, %175 : vector<8x384xf32>
    %177 = arith.addf %176, %5 : vector<8x384xf32>
    %178 = arith.truncf %166 : vector<8x128xf32> to vector<8x128xbf16>
    %cst_70 = arith.constant dense<0.000000e+00> : vector<8x384xf32>
    %179 = tpu.matmul %178, %2, %cst_70 {dimension_numbers = #tpu.dot_dimension_numbers<[1], [0], [0], [1], [0, 0, 1, 1], [], []>} : vector<8x128xbf16>, vector<128x384xbf16>, vector<8x384xf32> -> vector<8x384xf32>
    %180 = vector.extract_strided_slice %177 {offsets = [0, 0], sizes = [8, 128], strides = [1, 1]} : vector<8x384xf32> to vector<8x128xf32>
    %181 = vector.extract_strided_slice %179 {offsets = [0, 0], sizes = [8, 128], strides = [1, 1]} : vector<8x384xf32> to vector<8x128xf32>
    %182 = arith.addf %180, %181 : vector<8x128xf32>
    %183 = arith.negf %182 : vector<8x128xf32>
    %184 = math.exp %183 : vector<8x128xf32>
    %cst_71 = arith.constant 1.000000e+00 : f32
    %185 = vector.broadcast %cst_71 : f32 to vector<8x128xf32>
    %186 = arith.addf %185, %184 : vector<8x128xf32>
    %187 = arith.divf %185, %186 : vector<8x128xf32>
    %188 = vector.extract_strided_slice %177 {offsets = [0, 128], sizes = [8, 128], strides = [1, 1]} : vector<8x384xf32> to vector<8x128xf32>
    %189 = vector.extract_strided_slice %179 {offsets = [0, 128], sizes = [8, 128], strides = [1, 1]} : vector<8x384xf32> to vector<8x128xf32>
    %190 = arith.addf %188, %189 : vector<8x128xf32>
    %191 = arith.negf %190 : vector<8x128xf32>
    %192 = math.exp %191 : vector<8x128xf32>
    %cst_72 = arith.constant 1.000000e+00 : f32
    %193 = vector.broadcast %cst_72 : f32 to vector<8x128xf32>
    %194 = arith.addf %193, %192 : vector<8x128xf32>
    %195 = arith.divf %193, %194 : vector<8x128xf32>
    %196 = vector.extract_strided_slice %177 {offsets = [0, 256], sizes = [8, 128], strides = [1, 1]} : vector<8x384xf32> to vector<8x128xf32>
    %197 = vector.extract_strided_slice %179 {offsets = [0, 256], sizes = [8, 128], strides = [1, 1]} : vector<8x384xf32> to vector<8x128xf32>
    %198 = arith.addf %197, %8 : vector<8x128xf32>
    %199 = arith.mulf %187, %198 : vector<8x128xf32>
    %200 = arith.addf %196, %199 : vector<8x128xf32>
    %201 = math.tanh %200 : vector<8x128xf32>
    %cst_73 = arith.constant 1.000000e+00 : f32
    %202 = vector.broadcast %cst_73 : f32 to vector<8x128xf32>
    %203 = arith.subf %202, %195 : vector<8x128xf32>
    %204 = arith.mulf %203, %201 : vector<8x128xf32>
    %205 = arith.mulf %195, %166 : vector<8x128xf32>
    %206 = arith.addf %204, %205 : vector<8x128xf32>
    %c4_74 = arith.constant 4 : index
    %c0_75 = arith.constant 0 : index
    %c0_76 = arith.constant 0 : index
    %207 = vector.load %arg7[%c4_74, %c0_75, %c0_76] : memref<8x8x128xf32, #tpu.memory_space<vmem>>, vector<1x8x128xf32>
    %208 = vector.shape_cast %207 : vector<1x8x128xf32> to vector<8x128xf32>
    %209 = vector.shape_cast %206 : vector<8x128xf32> to vector<1x8x128xf32>
    tpu.vector_store %arg7[%c4_74, %c0_75, %c0_76], %209 {strides = array<i32>} : memref<8x8x128xf32, #tpu.memory_space<vmem>>, vector<1x8x128xf32>,
    %c5_77 = arith.constant 5 : index
    %c0_78 = arith.constant 0 : index
    %c0_79 = arith.constant 0 : index
    %210 = vector.load %arg1[%c5_77, %c0_78, %c0_79] : memref<8x8x128xbf16, #tpu.memory_space<vmem>>, vector<1x8x128xbf16>
    %211 = vector.shape_cast %210 : vector<1x8x128xbf16> to vector<8x128xbf16>
    %cst_80 = arith.constant dense<0.000000e+00> : vector<8x384xf32>
    %212 = tpu.matmul %211, %0, %cst_80 {dimension_numbers = #tpu.dot_dimension_numbers<[1], [0], [0], [1], [0, 0, 1, 1], [], []>} : vector<8x128xbf16>, vector<128x384xbf16>, vector<8x384xf32> -> vector<8x384xf32>
    %c2_81 = arith.constant 2 : index
    %c0_82 = arith.constant 0 : index
    %c0_83 = arith.constant 0 : index
    %213 = vector.load %arg1[%c2_81, %c0_82, %c0_83] : memref<8x8x128xbf16, #tpu.memory_space<vmem>>, vector<1x8x128xbf16>
    %214 = vector.shape_cast %213 : vector<1x8x128xbf16> to vector<8x128xbf16>
    %cst_84 = arith.constant dense<0.000000e+00> : vector<8x384xf32>
    %215 = tpu.matmul %214, %1, %cst_84 {dimension_numbers = #tpu.dot_dimension_numbers<[1], [0], [0], [1], [0, 0, 1, 1], [], []>} : vector<8x128xbf16>, vector<128x384xbf16>, vector<8x384xf32> -> vector<8x384xf32>
    %216 = arith.addf %212, %215 : vector<8x384xf32>
    %217 = arith.addf %216, %5 : vector<8x384xf32>
    %218 = arith.truncf %206 : vector<8x128xf32> to vector<8x128xbf16>
    %cst_85 = arith.constant dense<0.000000e+00> : vector<8x384xf32>
    %219 = tpu.matmul %218, %2, %cst_85 {dimension_numbers = #tpu.dot_dimension_numbers<[1], [0], [0], [1], [0, 0, 1, 1], [], []>} : vector<8x128xbf16>, vector<128x384xbf16>, vector<8x384xf32> -> vector<8x384xf32>
    %220 = vector.extract_strided_slice %217 {offsets = [0, 0], sizes = [8, 128], strides = [1, 1]} : vector<8x384xf32> to vector<8x128xf32>
    %221 = vector.extract_strided_slice %219 {offsets = [0, 0], sizes = [8, 128], strides = [1, 1]} : vector<8x384xf32> to vector<8x128xf32>
    %222 = arith.addf %220, %221 : vector<8x128xf32>
    %223 = arith.negf %222 : vector<8x128xf32>
    %224 = math.exp %223 : vector<8x128xf32>
    %cst_86 = arith.constant 1.000000e+00 : f32
    %225 = vector.broadcast %cst_86 : f32 to vector<8x128xf32>
    %226 = arith.addf %225, %224 : vector<8x128xf32>
    %227 = arith.divf %225, %226 : vector<8x128xf32>
    %228 = vector.extract_strided_slice %217 {offsets = [0, 128], sizes = [8, 128], strides = [1, 1]} : vector<8x384xf32> to vector<8x128xf32>
    %229 = vector.extract_strided_slice %219 {offsets = [0, 128], sizes = [8, 128], strides = [1, 1]} : vector<8x384xf32> to vector<8x128xf32>
    %230 = arith.addf %228, %229 : vector<8x128xf32>
    %231 = arith.negf %230 : vector<8x128xf32>
    %232 = math.exp %231 : vector<8x128xf32>
    %cst_87 = arith.constant 1.000000e+00 : f32
    %233 = vector.broadcast %cst_87 : f32 to vector<8x128xf32>
    %234 = arith.addf %233, %232 : vector<8x128xf32>
    %235 = arith.divf %233, %234 : vector<8x128xf32>
    %236 = vector.extract_strided_slice %217 {offsets = [0, 256], sizes = [8, 128], strides = [1, 1]} : vector<8x384xf32> to vector<8x128xf32>
    %237 = vector.extract_strided_slice %219 {offsets = [0, 256], sizes = [8, 128], strides = [1, 1]} : vector<8x384xf32> to vector<8x128xf32>
    %238 = arith.addf %237, %8 : vector<8x128xf32>
    %239 = arith.mulf %227, %238 : vector<8x128xf32>
    %240 = arith.addf %236, %239 : vector<8x128xf32>
    %241 = math.tanh %240 : vector<8x128xf32>
    %cst_88 = arith.constant 1.000000e+00 : f32
    %242 = vector.broadcast %cst_88 : f32 to vector<8x128xf32>
    %243 = arith.subf %242, %235 : vector<8x128xf32>
    %244 = arith.mulf %243, %241 : vector<8x128xf32>
    %245 = arith.mulf %235, %206 : vector<8x128xf32>
    %246 = arith.addf %244, %245 : vector<8x128xf32>
    %c5_89 = arith.constant 5 : index
    %c0_90 = arith.constant 0 : index
    %c0_91 = arith.constant 0 : index
    %247 = vector.load %arg7[%c5_89, %c0_90, %c0_91] : memref<8x8x128xf32, #tpu.memory_space<vmem>>, vector<1x8x128xf32>
    %248 = vector.shape_cast %247 : vector<1x8x128xf32> to vector<8x128xf32>
    %249 = vector.shape_cast %246 : vector<8x128xf32> to vector<1x8x128xf32>
    tpu.vector_store %arg7[%c5_89, %c0_90, %c0_91], %249 {strides = array<i32>} : memref<8x8x128xf32, #tpu.memory_space<vmem>>, vector<1x8x128xf32>,
    %c6_92 = arith.constant 6 : index
    %c0_93 = arith.constant 0 : index
    %c0_94 = arith.constant 0 : index
    %250 = vector.load %arg1[%c6_92, %c0_93, %c0_94] : memref<8x8x128xbf16, #tpu.memory_space<vmem>>, vector<1x8x128xbf16>
    %251 = vector.shape_cast %250 : vector<1x8x128xbf16> to vector<8x128xbf16>
    %cst_95 = arith.constant dense<0.000000e+00> : vector<8x384xf32>
    %252 = tpu.matmul %251, %0, %cst_95 {dimension_numbers = #tpu.dot_dimension_numbers<[1], [0], [0], [1], [0, 0, 1, 1], [], []>} : vector<8x128xbf16>, vector<128x384xbf16>, vector<8x384xf32> -> vector<8x384xf32>
    %c1_96 = arith.constant 1 : index
    %c0_97 = arith.constant 0 : index
    %c0_98 = arith.constant 0 : index
    %253 = vector.load %arg1[%c1_96, %c0_97, %c0_98] : memref<8x8x128xbf16, #tpu.memory_space<vmem>>, vector<1x8x128xbf16>
    %254 = vector.shape_cast %253 : vector<1x8x128xbf16> to vector<8x128xbf16>
    %cst_99 = arith.constant dense<0.000000e+00> : vector<8x384xf32>
    %255 = tpu.matmul %254, %1, %cst_99 {dimension_numbers = #tpu.dot_dimension_numbers<[1], [0], [0], [1], [0, 0, 1, 1], [], []>} : vector<8x128xbf16>, vector<128x384xbf16>, vector<8x384xf32> -> vector<8x384xf32>
    %256 = arith.addf %252, %255 : vector<8x384xf32>
    %257 = arith.addf %256, %5 : vector<8x384xf32>
    %258 = arith.truncf %246 : vector<8x128xf32> to vector<8x128xbf16>
    %cst_100 = arith.constant dense<0.000000e+00> : vector<8x384xf32>
    %259 = tpu.matmul %258, %2, %cst_100 {dimension_numbers = #tpu.dot_dimension_numbers<[1], [0], [0], [1], [0, 0, 1, 1], [], []>} : vector<8x128xbf16>, vector<128x384xbf16>, vector<8x384xf32> -> vector<8x384xf32>
    %260 = vector.extract_strided_slice %257 {offsets = [0, 0], sizes = [8, 128], strides = [1, 1]} : vector<8x384xf32> to vector<8x128xf32>
    %261 = vector.extract_strided_slice %259 {offsets = [0, 0], sizes = [8, 128], strides = [1, 1]} : vector<8x384xf32> to vector<8x128xf32>
    %262 = arith.addf %260, %261 : vector<8x128xf32>
    %263 = arith.negf %262 : vector<8x128xf32>
    %264 = math.exp %263 : vector<8x128xf32>
    %cst_101 = arith.constant 1.000000e+00 : f32
    %265 = vector.broadcast %cst_101 : f32 to vector<8x128xf32>
    %266 = arith.addf %265, %264 : vector<8x128xf32>
    %267 = arith.divf %265, %266 : vector<8x128xf32>
    %268 = vector.extract_strided_slice %257 {offsets = [0, 128], sizes = [8, 128], strides = [1, 1]} : vector<8x384xf32> to vector<8x128xf32>
    %269 = vector.extract_strided_slice %259 {offsets = [0, 128], sizes = [8, 128], strides = [1, 1]} : vector<8x384xf32> to vector<8x128xf32>
    %270 = arith.addf %268, %269 : vector<8x128xf32>
    %271 = arith.negf %270 : vector<8x128xf32>
    %272 = math.exp %271 : vector<8x128xf32>
    %cst_102 = arith.constant 1.000000e+00 : f32
    %273 = vector.broadcast %cst_102 : f32 to vector<8x128xf32>
    %274 = arith.addf %273, %272 : vector<8x128xf32>
    %275 = arith.divf %273, %274 : vector<8x128xf32>
    %276 = vector.extract_strided_slice %257 {offsets = [0, 256], sizes = [8, 128], strides = [1, 1]} : vector<8x384xf32> to vector<8x128xf32>
    %277 = vector.extract_strided_slice %259 {offsets = [0, 256], sizes = [8, 128], strides = [1, 1]} : vector<8x384xf32> to vector<8x128xf32>
    %278 = arith.addf %277, %8 : vector<8x128xf32>
    %279 = arith.mulf %267, %278 : vector<8x128xf32>
    %280 = arith.addf %276, %279 : vector<8x128xf32>
    %281 = math.tanh %280 : vector<8x128xf32>
    %cst_103 = arith.constant 1.000000e+00 : f32
    %282 = vector.broadcast %cst_103 : f32 to vector<8x128xf32>
    %283 = arith.subf %282, %275 : vector<8x128xf32>
    %284 = arith.mulf %283, %281 : vector<8x128xf32>
    %285 = arith.mulf %275, %246 : vector<8x128xf32>
    %286 = arith.addf %284, %285 : vector<8x128xf32>
    %c6_104 = arith.constant 6 : index
    %c0_105 = arith.constant 0 : index
    %c0_106 = arith.constant 0 : index
    %287 = vector.load %arg7[%c6_104, %c0_105, %c0_106] : memref<8x8x128xf32, #tpu.memory_space<vmem>>, vector<1x8x128xf32>
    %288 = vector.shape_cast %287 : vector<1x8x128xf32> to vector<8x128xf32>
    %289 = vector.shape_cast %286 : vector<8x128xf32> to vector<1x8x128xf32>
    tpu.vector_store %arg7[%c6_104, %c0_105, %c0_106], %289 {strides = array<i32>} : memref<8x8x128xf32, #tpu.memory_space<vmem>>, vector<1x8x128xf32>,
    %c7_107 = arith.constant 7 : index
    %c0_108 = arith.constant 0 : index
    %c0_109 = arith.constant 0 : index
    %290 = vector.load %arg1[%c7_107, %c0_108, %c0_109] : memref<8x8x128xbf16, #tpu.memory_space<vmem>>, vector<1x8x128xbf16>
    %291 = vector.shape_cast %290 : vector<1x8x128xbf16> to vector<8x128xbf16>
    %cst_110 = arith.constant dense<0.000000e+00> : vector<8x384xf32>
    %292 = tpu.matmul %291, %0, %cst_110 {dimension_numbers = #tpu.dot_dimension_numbers<[1], [0], [0], [1], [0, 0, 1, 1], [], []>} : vector<8x128xbf16>, vector<128x384xbf16>, vector<8x384xf32> -> vector<8x384xf32>
    %c0_111 = arith.constant 0 : index
    %c0_112 = arith.constant 0 : index
    %c0_113 = arith.constant 0 : index
    %293 = vector.load %arg1[%c0_111, %c0_112, %c0_113] : memref<8x8x128xbf16, #tpu.memory_space<vmem>>, vector<1x8x128xbf16>
    %294 = vector.shape_cast %293 : vector<1x8x128xbf16> to vector<8x128xbf16>
    %cst_114 = arith.constant dense<0.000000e+00> : vector<8x384xf32>
    %295 = tpu.matmul %294, %1, %cst_114 {dimension_numbers = #tpu.dot_dimension_numbers<[1], [0], [0], [1], [0, 0, 1, 1], [], []>} : vector<8x128xbf16>, vector<128x384xbf16>, vector<8x384xf32> -> vector<8x384xf32>
    %296 = arith.addf %292, %295 : vector<8x384xf32>
    %297 = arith.addf %296, %5 : vector<8x384xf32>
    %298 = arith.truncf %286 : vector<8x128xf32> to vector<8x128xbf16>
    %cst_115 = arith.constant dense<0.000000e+00> : vector<8x384xf32>
    %299 = tpu.matmul %298, %2, %cst_115 {dimension_numbers = #tpu.dot_dimension_numbers<[1], [0], [0], [1], [0, 0, 1, 1], [], []>} : vector<8x128xbf16>, vector<128x384xbf16>, vector<8x384xf32> -> vector<8x384xf32>
    %300 = vector.extract_strided_slice %297 {offsets = [0, 0], sizes = [8, 128], strides = [1, 1]} : vector<8x384xf32> to vector<8x128xf32>
    %301 = vector.extract_strided_slice %299 {offsets = [0, 0], sizes = [8, 128], strides = [1, 1]} : vector<8x384xf32> to vector<8x128xf32>
    %302 = arith.addf %300, %301 : vector<8x128xf32>
    %303 = arith.negf %302 : vector<8x128xf32>
    %304 = math.exp %303 : vector<8x128xf32>
    %cst_116 = arith.constant 1.000000e+00 : f32
    %305 = vector.broadcast %cst_116 : f32 to vector<8x128xf32>
    %306 = arith.addf %305, %304 : vector<8x128xf32>
    %307 = arith.divf %305, %306 : vector<8x128xf32>
    %308 = vector.extract_strided_slice %297 {offsets = [0, 128], sizes = [8, 128], strides = [1, 1]} : vector<8x384xf32> to vector<8x128xf32>
    %309 = vector.extract_strided_slice %299 {offsets = [0, 128], sizes = [8, 128], strides = [1, 1]} : vector<8x384xf32> to vector<8x128xf32>
    %310 = arith.addf %308, %309 : vector<8x128xf32>
    %311 = arith.negf %310 : vector<8x128xf32>
    %312 = math.exp %311 : vector<8x128xf32>
    %cst_117 = arith.constant 1.000000e+00 : f32
    %313 = vector.broadcast %cst_117 : f32 to vector<8x128xf32>
    %314 = arith.addf %313, %312 : vector<8x128xf32>
    %315 = arith.divf %313, %314 : vector<8x128xf32>
    %316 = vector.extract_strided_slice %297 {offsets = [0, 256], sizes = [8, 128], strides = [1, 1]} : vector<8x384xf32> to vector<8x128xf32>
    %317 = vector.extract_strided_slice %299 {offsets = [0, 256], sizes = [8, 128], strides = [1, 1]} : vector<8x384xf32> to vector<8x128xf32>
    %318 = arith.addf %317, %8 : vector<8x128xf32>
    %319 = arith.mulf %307, %318 : vector<8x128xf32>
    %320 = arith.addf %316, %319 : vector<8x128xf32>
    %321 = math.tanh %320 : vector<8x128xf32>
    %cst_118 = arith.constant 1.000000e+00 : f32
    %322 = vector.broadcast %cst_118 : f32 to vector<8x128xf32>
    %323 = arith.subf %322, %315 : vector<8x128xf32>
    %324 = arith.mulf %323, %321 : vector<8x128xf32>
    %325 = arith.mulf %315, %286 : vector<8x128xf32>
    %326 = arith.addf %324, %325 : vector<8x128xf32>
    %c7_119 = arith.constant 7 : index
    %c0_120 = arith.constant 0 : index
    %c0_121 = arith.constant 0 : index
    %327 = vector.load %arg7[%c7_119, %c0_120, %c0_121] : memref<8x8x128xf32, #tpu.memory_space<vmem>>, vector<1x8x128xf32>
    %328 = vector.shape_cast %327 : vector<1x8x128xf32> to vector<8x128xf32>
    %329 = vector.shape_cast %326 : vector<8x128xf32> to vector<1x8x128xf32>
    tpu.vector_store %arg7[%c7_119, %c0_120, %c0_121], %329 {strides = array<i32>} : memref<8x8x128xf32, #tpu.memory_space<vmem>>, vector<1x8x128xf32>,
    return
  }
  func.func @transform_0(%arg0: i32) -> (i32, i32, i32) {
    %c0_i32 = arith.constant 0 : i32
    %c0_i32_0 = arith.constant 0 : i32
    %c0_i32_1 = arith.constant 0 : i32
    %c0_i32_2 = arith.constant 0 : i32
    return %c0_i32, %c0_i32_0, %c0_i32_1 : i32, i32, i32
  }
  func.func @transform_1(%arg0: i32) -> (i32, i32) {
    %c0_i32 = arith.constant 0 : i32
    %c0_i32_0 = arith.constant 0 : i32
    %c0_i32_1 = arith.constant 0 : i32
    return %c0_i32, %c0_i32_0 : i32, i32
  }
  func.func @transform_2(%arg0: i32) -> (i32, i32) {
    %c0_i32 = arith.constant 0 : i32
    %c0_i32_0 = arith.constant 0 : i32
    %c0_i32_1 = arith.constant 0 : i32
    return %c0_i32, %c0_i32_0 : i32, i32
  }
  func.func @transform_3(%arg0: i32) -> (i32, i32) {
    %c0_i32 = arith.constant 0 : i32
    %c0_i32_0 = arith.constant 0 : i32
    %c0_i32_1 = arith.constant 0 : i32
    return %c0_i32, %c0_i32_0 : i32, i32
  }
  func.func @transform_4(%arg0: i32) -> (i32, i32) {
    %c0_i32 = arith.constant 0 : i32
    %c0_i32_0 = arith.constant 0 : i32
    %c0_i32_1 = arith.constant 0 : i32
    return %c0_i32, %c0_i32_0 : i32, i32
  }
  func.func @transform_5(%arg0: i32) -> (i32, i32) {
    %c0_i32 = arith.constant 0 : i32
    %c0_i32_0 = arith.constant 0 : i32
    %c0_i32_1 = arith.constant 0 : i32
    return %c0_i32, %c0_i32_0 : i32, i32
  }
  func.func @transform_6(%arg0: i32) -> (i32, i32, i32) {
    %c0_i32 = arith.constant 0 : i32
    %c0_i32_0 = arith.constant 0 : i32
    %c0_i32_1 = arith.constant 0 : i32
    %c0_i32_2 = arith.constant 0 : i32
    return %c0_i32, %c0_i32_0, %c0_i32_1 : i32, i32, i32
  }
}

module attributes {stable_mosaic.version = 11 : i64} {
  func.func @_bigru_layer_kernel(%arg0: i32, %arg1: memref<8x8x128xbf16, #tpu.memory_space<vmem>>, %arg2: memref<128x384xbf16, #tpu.memory_space<vmem>>, %arg3: memref<128x384xbf16, #tpu.memory_space<vmem>>, %arg4: memref<128x384xbf16, #tpu.memory_space<vmem>>, %arg5: memref<1x384xf32, #tpu.memory_space<vmem>>, %arg6: memref<1x128xf32, #tpu.memory_space<vmem>>, %arg7: memref<8x8x128xf32, #tpu.memory_space<vmem>>, %arg8: memref<8x128xf32, #tpu.memory_space<vmem>>) attributes {dimension_semantics = [#tpu.dimension_semantics<arbitrary>], iteration_bounds = array<i64: 1>, scalar_prefetch = 0 : i64, scratch_operands = 0 : i64, tpu.core_type = #tpu.core_type<tc>, window_params = [{pipeline_mode = #tpu.pipeline_mode<synchronous>, transform_indices = @transform_0, window_bounds = array<i64: 8, 8, 128>}, {pipeline_mode = #tpu.pipeline_mode<synchronous>, transform_indices = @transform_1, window_bounds = array<i64: 128, 384>}, {pipeline_mode = #tpu.pipeline_mode<synchronous>, transform_indices = @transform_2, window_bounds = array<i64: 128, 384>}, {pipeline_mode = #tpu.pipeline_mode<synchronous>, transform_indices = @transform_3, window_bounds = array<i64: 128, 384>}, {pipeline_mode = #tpu.pipeline_mode<synchronous>, transform_indices = @transform_4, window_bounds = array<i64: 1, 384>}, {pipeline_mode = #tpu.pipeline_mode<synchronous>, transform_indices = @transform_5, window_bounds = array<i64: 1, 128>}, {pipeline_mode = #tpu.pipeline_mode<synchronous>, transform_indices = @transform_6, window_bounds = array<i64: 8, 8, 128>}, {pipeline_mode = #tpu.pipeline_mode<synchronous>, transform_indices = @transform_7, window_bounds = array<i64: 8, 128>}]} {
    %c0 = arith.constant 0 : index
    %c0_0 = arith.constant 0 : index
    %0 = vector.load %arg2[%c0, %c0_0] : memref<128x384xbf16, #tpu.memory_space<vmem>>, vector<128x384xbf16>
    %c0_1 = arith.constant 0 : index
    %c0_2 = arith.constant 0 : index
    %1 = vector.load %arg3[%c0_1, %c0_2] : memref<128x384xbf16, #tpu.memory_space<vmem>>, vector<128x384xbf16>
    %c0_3 = arith.constant 0 : index
    %c0_4 = arith.constant 0 : index
    %2 = vector.load %arg4[%c0_3, %c0_4] : memref<128x384xbf16, #tpu.memory_space<vmem>>, vector<128x384xbf16>
    %c0_5 = arith.constant 0 : index
    %c0_6 = arith.constant 0 : index
    %3 = vector.load %arg5[%c0_5, %c0_6] : memref<1x384xf32, #tpu.memory_space<vmem>>, vector<1x384xf32>
    %4 = vector.shape_cast %3 : vector<1x384xf32> to vector<1x384xf32>
    %5 = vector.broadcast %4 : vector<1x384xf32> to vector<8x384xf32>
    %c0_7 = arith.constant 0 : index
    %c0_8 = arith.constant 0 : index
    %6 = vector.load %arg6[%c0_7, %c0_8] : memref<1x128xf32, #tpu.memory_space<vmem>>, vector<1x128xf32>
    %7 = vector.shape_cast %6 : vector<1x128xf32> to vector<1x128xf32>
    %8 = vector.broadcast %7 : vector<1x128xf32> to vector<8x128xf32>
    %cst = arith.constant 0.000000e+00 : f32
    %9 = vector.broadcast %cst : f32 to vector<8x128xf32>
    %cst_9 = arith.constant 0xFF800000 : f32
    %10 = vector.broadcast %cst_9 : f32 to vector<8x128xf32>
    %c0_10 = arith.constant 0 : index
    %c0_11 = arith.constant 0 : index
    %c0_12 = arith.constant 0 : index
    %11 = vector.load %arg1[%c0_10, %c0_11, %c0_12] : memref<8x8x128xbf16, #tpu.memory_space<vmem>>, vector<1x8x128xbf16>
    %12 = vector.shape_cast %11 : vector<1x8x128xbf16> to vector<8x128xbf16>
    %cst_13 = arith.constant dense<0.000000e+00> : vector<8x384xf32>
    %13 = tpu.matmul %12, %0, %cst_13 {dimension_numbers = #tpu.dot_dimension_numbers<[1], [0], [0], [1], [0, 0, 1, 1], [], []>} : vector<8x128xbf16>, vector<128x384xbf16>, vector<8x384xf32> -> vector<8x384xf32>
    %c7 = arith.constant 7 : index
    %c0_14 = arith.constant 0 : index
    %c0_15 = arith.constant 0 : index
    %14 = vector.load %arg1[%c7, %c0_14, %c0_15] : memref<8x8x128xbf16, #tpu.memory_space<vmem>>, vector<1x8x128xbf16>
    %15 = vector.shape_cast %14 : vector<1x8x128xbf16> to vector<8x128xbf16>
    %cst_16 = arith.constant dense<0.000000e+00> : vector<8x384xf32>
    %16 = tpu.matmul %15, %1, %cst_16 {dimension_numbers = #tpu.dot_dimension_numbers<[1], [0], [0], [1], [0, 0, 1, 1], [], []>} : vector<8x128xbf16>, vector<128x384xbf16>, vector<8x384xf32> -> vector<8x384xf32>
    %17 = arith.addf %13, %16 : vector<8x384xf32>
    %18 = arith.addf %17, %5 : vector<8x384xf32>
    %19 = arith.truncf %9 : vector<8x128xf32> to vector<8x128xbf16>
    %cst_17 = arith.constant dense<0.000000e+00> : vector<8x384xf32>
    %20 = tpu.matmul %19, %2, %cst_17 {dimension_numbers = #tpu.dot_dimension_numbers<[1], [0], [0], [1], [0, 0, 1, 1], [], []>} : vector<8x128xbf16>, vector<128x384xbf16>, vector<8x384xf32> -> vector<8x384xf32>
    %21 = vector.extract_strided_slice %18 {offsets = [0, 0], sizes = [8, 128], strides = [1, 1]} : vector<8x384xf32> to vector<8x128xf32>
    %22 = vector.extract_strided_slice %20 {offsets = [0, 0], sizes = [8, 128], strides = [1, 1]} : vector<8x384xf32> to vector<8x128xf32>
    %23 = arith.addf %21, %22 : vector<8x128xf32>
    %24 = arith.negf %23 : vector<8x128xf32>
    %25 = math.exp %24 : vector<8x128xf32>
    %cst_18 = arith.constant 1.000000e+00 : f32
    %26 = vector.broadcast %cst_18 : f32 to vector<8x128xf32>
    %27 = arith.addf %26, %25 : vector<8x128xf32>
    %28 = arith.divf %26, %27 : vector<8x128xf32>
    %29 = vector.extract_strided_slice %18 {offsets = [0, 128], sizes = [8, 128], strides = [1, 1]} : vector<8x384xf32> to vector<8x128xf32>
    %30 = vector.extract_strided_slice %20 {offsets = [0, 128], sizes = [8, 128], strides = [1, 1]} : vector<8x384xf32> to vector<8x128xf32>
    %31 = arith.addf %29, %30 : vector<8x128xf32>
    %32 = arith.negf %31 : vector<8x128xf32>
    %33 = math.exp %32 : vector<8x128xf32>
    %cst_19 = arith.constant 1.000000e+00 : f32
    %34 = vector.broadcast %cst_19 : f32 to vector<8x128xf32>
    %35 = arith.addf %34, %33 : vector<8x128xf32>
    %36 = arith.divf %34, %35 : vector<8x128xf32>
    %37 = vector.extract_strided_slice %18 {offsets = [0, 256], sizes = [8, 128], strides = [1, 1]} : vector<8x384xf32> to vector<8x128xf32>
    %38 = vector.extract_strided_slice %20 {offsets = [0, 256], sizes = [8, 128], strides = [1, 1]} : vector<8x384xf32> to vector<8x128xf32>
    %39 = arith.addf %38, %8 : vector<8x128xf32>
    %40 = arith.mulf %28, %39 : vector<8x128xf32>
    %41 = arith.addf %37, %40 : vector<8x128xf32>
    %42 = math.tanh %41 : vector<8x128xf32>
    %cst_20 = arith.constant 1.000000e+00 : f32
    %43 = vector.broadcast %cst_20 : f32 to vector<8x128xf32>
    %44 = arith.subf %43, %36 : vector<8x128xf32>
    %45 = arith.mulf %44, %42 : vector<8x128xf32>
    %46 = arith.mulf %36, %9 : vector<8x128xf32>
    %47 = arith.addf %45, %46 : vector<8x128xf32>
    %c0_21 = arith.constant 0 : index
    %c0_22 = arith.constant 0 : index
    %c0_23 = arith.constant 0 : index
    %48 = vector.load %arg7[%c0_21, %c0_22, %c0_23] : memref<8x8x128xf32, #tpu.memory_space<vmem>>, vector<1x8x128xf32>
    %49 = vector.shape_cast %48 : vector<1x8x128xf32> to vector<8x128xf32>
    %50 = vector.shape_cast %47 : vector<8x128xf32> to vector<1x8x128xf32>
    tpu.vector_store %arg7[%c0_21, %c0_22, %c0_23], %50 {strides = array<i32>} : memref<8x8x128xf32, #tpu.memory_space<vmem>>, vector<1x8x128xf32>,
    %51 = arith.maximumf %10, %47 : vector<8x128xf32>
    %c1 = arith.constant 1 : index
    %c0_24 = arith.constant 0 : index
    %c0_25 = arith.constant 0 : index
    %52 = vector.load %arg1[%c1, %c0_24, %c0_25] : memref<8x8x128xbf16, #tpu.memory_space<vmem>>, vector<1x8x128xbf16>
    %53 = vector.shape_cast %52 : vector<1x8x128xbf16> to vector<8x128xbf16>
    %cst_26 = arith.constant dense<0.000000e+00> : vector<8x384xf32>
    %54 = tpu.matmul %53, %0, %cst_26 {dimension_numbers = #tpu.dot_dimension_numbers<[1], [0], [0], [1], [0, 0, 1, 1], [], []>} : vector<8x128xbf16>, vector<128x384xbf16>, vector<8x384xf32> -> vector<8x384xf32>
    %c6 = arith.constant 6 : index
    %c0_27 = arith.constant 0 : index
    %c0_28 = arith.constant 0 : index
    %55 = vector.load %arg1[%c6, %c0_27, %c0_28] : memref<8x8x128xbf16, #tpu.memory_space<vmem>>, vector<1x8x128xbf16>
    %56 = vector.shape_cast %55 : vector<1x8x128xbf16> to vector<8x128xbf16>
    %cst_29 = arith.constant dense<0.000000e+00> : vector<8x384xf32>
    %57 = tpu.matmul %56, %1, %cst_29 {dimension_numbers = #tpu.dot_dimension_numbers<[1], [0], [0], [1], [0, 0, 1, 1], [], []>} : vector<8x128xbf16>, vector<128x384xbf16>, vector<8x384xf32> -> vector<8x384xf32>
    %58 = arith.addf %54, %57 : vector<8x384xf32>
    %59 = arith.addf %58, %5 : vector<8x384xf32>
    %60 = arith.truncf %47 : vector<8x128xf32> to vector<8x128xbf16>
    %cst_30 = arith.constant dense<0.000000e+00> : vector<8x384xf32>
    %61 = tpu.matmul %60, %2, %cst_30 {dimension_numbers = #tpu.dot_dimension_numbers<[1], [0], [0], [1], [0, 0, 1, 1], [], []>} : vector<8x128xbf16>, vector<128x384xbf16>, vector<8x384xf32> -> vector<8x384xf32>
    %62 = vector.extract_strided_slice %59 {offsets = [0, 0], sizes = [8, 128], strides = [1, 1]} : vector<8x384xf32> to vector<8x128xf32>
    %63 = vector.extract_strided_slice %61 {offsets = [0, 0], sizes = [8, 128], strides = [1, 1]} : vector<8x384xf32> to vector<8x128xf32>
    %64 = arith.addf %62, %63 : vector<8x128xf32>
    %65 = arith.negf %64 : vector<8x128xf32>
    %66 = math.exp %65 : vector<8x128xf32>
    %cst_31 = arith.constant 1.000000e+00 : f32
    %67 = vector.broadcast %cst_31 : f32 to vector<8x128xf32>
    %68 = arith.addf %67, %66 : vector<8x128xf32>
    %69 = arith.divf %67, %68 : vector<8x128xf32>
    %70 = vector.extract_strided_slice %59 {offsets = [0, 128], sizes = [8, 128], strides = [1, 1]} : vector<8x384xf32> to vector<8x128xf32>
    %71 = vector.extract_strided_slice %61 {offsets = [0, 128], sizes = [8, 128], strides = [1, 1]} : vector<8x384xf32> to vector<8x128xf32>
    %72 = arith.addf %70, %71 : vector<8x128xf32>
    %73 = arith.negf %72 : vector<8x128xf32>
    %74 = math.exp %73 : vector<8x128xf32>
    %cst_32 = arith.constant 1.000000e+00 : f32
    %75 = vector.broadcast %cst_32 : f32 to vector<8x128xf32>
    %76 = arith.addf %75, %74 : vector<8x128xf32>
    %77 = arith.divf %75, %76 : vector<8x128xf32>
    %78 = vector.extract_strided_slice %59 {offsets = [0, 256], sizes = [8, 128], strides = [1, 1]} : vector<8x384xf32> to vector<8x128xf32>
    %79 = vector.extract_strided_slice %61 {offsets = [0, 256], sizes = [8, 128], strides = [1, 1]} : vector<8x384xf32> to vector<8x128xf32>
    %80 = arith.addf %79, %8 : vector<8x128xf32>
    %81 = arith.mulf %69, %80 : vector<8x128xf32>
    %82 = arith.addf %78, %81 : vector<8x128xf32>
    %83 = math.tanh %82 : vector<8x128xf32>
    %cst_33 = arith.constant 1.000000e+00 : f32
    %84 = vector.broadcast %cst_33 : f32 to vector<8x128xf32>
    %85 = arith.subf %84, %77 : vector<8x128xf32>
    %86 = arith.mulf %85, %83 : vector<8x128xf32>
    %87 = arith.mulf %77, %47 : vector<8x128xf32>
    %88 = arith.addf %86, %87 : vector<8x128xf32>
    %c1_34 = arith.constant 1 : index
    %c0_35 = arith.constant 0 : index
    %c0_36 = arith.constant 0 : index
    %89 = vector.load %arg7[%c1_34, %c0_35, %c0_36] : memref<8x8x128xf32, #tpu.memory_space<vmem>>, vector<1x8x128xf32>
    %90 = vector.shape_cast %89 : vector<1x8x128xf32> to vector<8x128xf32>
    %91 = vector.shape_cast %88 : vector<8x128xf32> to vector<1x8x128xf32>
    tpu.vector_store %arg7[%c1_34, %c0_35, %c0_36], %91 {strides = array<i32>} : memref<8x8x128xf32, #tpu.memory_space<vmem>>, vector<1x8x128xf32>,
    %92 = arith.maximumf %51, %88 : vector<8x128xf32>
    %c2 = arith.constant 2 : index
    %c0_37 = arith.constant 0 : index
    %c0_38 = arith.constant 0 : index
    %93 = vector.load %arg1[%c2, %c0_37, %c0_38] : memref<8x8x128xbf16, #tpu.memory_space<vmem>>, vector<1x8x128xbf16>
    %94 = vector.shape_cast %93 : vector<1x8x128xbf16> to vector<8x128xbf16>
    %cst_39 = arith.constant dense<0.000000e+00> : vector<8x384xf32>
    %95 = tpu.matmul %94, %0, %cst_39 {dimension_numbers = #tpu.dot_dimension_numbers<[1], [0], [0], [1], [0, 0, 1, 1], [], []>} : vector<8x128xbf16>, vector<128x384xbf16>, vector<8x384xf32> -> vector<8x384xf32>
    %c5 = arith.constant 5 : index
    %c0_40 = arith.constant 0 : index
    %c0_41 = arith.constant 0 : index
    %96 = vector.load %arg1[%c5, %c0_40, %c0_41] : memref<8x8x128xbf16, #tpu.memory_space<vmem>>, vector<1x8x128xbf16>
    %97 = vector.shape_cast %96 : vector<1x8x128xbf16> to vector<8x128xbf16>
    %cst_42 = arith.constant dense<0.000000e+00> : vector<8x384xf32>
    %98 = tpu.matmul %97, %1, %cst_42 {dimension_numbers = #tpu.dot_dimension_numbers<[1], [0], [0], [1], [0, 0, 1, 1], [], []>} : vector<8x128xbf16>, vector<128x384xbf16>, vector<8x384xf32> -> vector<8x384xf32>
    %99 = arith.addf %95, %98 : vector<8x384xf32>
    %100 = arith.addf %99, %5 : vector<8x384xf32>
    %101 = arith.truncf %88 : vector<8x128xf32> to vector<8x128xbf16>
    %cst_43 = arith.constant dense<0.000000e+00> : vector<8x384xf32>
    %102 = tpu.matmul %101, %2, %cst_43 {dimension_numbers = #tpu.dot_dimension_numbers<[1], [0], [0], [1], [0, 0, 1, 1], [], []>} : vector<8x128xbf16>, vector<128x384xbf16>, vector<8x384xf32> -> vector<8x384xf32>
    %103 = vector.extract_strided_slice %100 {offsets = [0, 0], sizes = [8, 128], strides = [1, 1]} : vector<8x384xf32> to vector<8x128xf32>
    %104 = vector.extract_strided_slice %102 {offsets = [0, 0], sizes = [8, 128], strides = [1, 1]} : vector<8x384xf32> to vector<8x128xf32>
    %105 = arith.addf %103, %104 : vector<8x128xf32>
    %106 = arith.negf %105 : vector<8x128xf32>
    %107 = math.exp %106 : vector<8x128xf32>
    %cst_44 = arith.constant 1.000000e+00 : f32
    %108 = vector.broadcast %cst_44 : f32 to vector<8x128xf32>
    %109 = arith.addf %108, %107 : vector<8x128xf32>
    %110 = arith.divf %108, %109 : vector<8x128xf32>
    %111 = vector.extract_strided_slice %100 {offsets = [0, 128], sizes = [8, 128], strides = [1, 1]} : vector<8x384xf32> to vector<8x128xf32>
    %112 = vector.extract_strided_slice %102 {offsets = [0, 128], sizes = [8, 128], strides = [1, 1]} : vector<8x384xf32> to vector<8x128xf32>
    %113 = arith.addf %111, %112 : vector<8x128xf32>
    %114 = arith.negf %113 : vector<8x128xf32>
    %115 = math.exp %114 : vector<8x128xf32>
    %cst_45 = arith.constant 1.000000e+00 : f32
    %116 = vector.broadcast %cst_45 : f32 to vector<8x128xf32>
    %117 = arith.addf %116, %115 : vector<8x128xf32>
    %118 = arith.divf %116, %117 : vector<8x128xf32>
    %119 = vector.extract_strided_slice %100 {offsets = [0, 256], sizes = [8, 128], strides = [1, 1]} : vector<8x384xf32> to vector<8x128xf32>
    %120 = vector.extract_strided_slice %102 {offsets = [0, 256], sizes = [8, 128], strides = [1, 1]} : vector<8x384xf32> to vector<8x128xf32>
    %121 = arith.addf %120, %8 : vector<8x128xf32>
    %122 = arith.mulf %110, %121 : vector<8x128xf32>
    %123 = arith.addf %119, %122 : vector<8x128xf32>
    %124 = math.tanh %123 : vector<8x128xf32>
    %cst_46 = arith.constant 1.000000e+00 : f32
    %125 = vector.broadcast %cst_46 : f32 to vector<8x128xf32>
    %126 = arith.subf %125, %118 : vector<8x128xf32>
    %127 = arith.mulf %126, %124 : vector<8x128xf32>
    %128 = arith.mulf %118, %88 : vector<8x128xf32>
    %129 = arith.addf %127, %128 : vector<8x128xf32>
    %c2_47 = arith.constant 2 : index
    %c0_48 = arith.constant 0 : index
    %c0_49 = arith.constant 0 : index
    %130 = vector.load %arg7[%c2_47, %c0_48, %c0_49] : memref<8x8x128xf32, #tpu.memory_space<vmem>>, vector<1x8x128xf32>
    %131 = vector.shape_cast %130 : vector<1x8x128xf32> to vector<8x128xf32>
    %132 = vector.shape_cast %129 : vector<8x128xf32> to vector<1x8x128xf32>
    tpu.vector_store %arg7[%c2_47, %c0_48, %c0_49], %132 {strides = array<i32>} : memref<8x8x128xf32, #tpu.memory_space<vmem>>, vector<1x8x128xf32>,
    %133 = arith.maximumf %92, %129 : vector<8x128xf32>
    %c3 = arith.constant 3 : index
    %c0_50 = arith.constant 0 : index
    %c0_51 = arith.constant 0 : index
    %134 = vector.load %arg1[%c3, %c0_50, %c0_51] : memref<8x8x128xbf16, #tpu.memory_space<vmem>>, vector<1x8x128xbf16>
    %135 = vector.shape_cast %134 : vector<1x8x128xbf16> to vector<8x128xbf16>
    %cst_52 = arith.constant dense<0.000000e+00> : vector<8x384xf32>
    %136 = tpu.matmul %135, %0, %cst_52 {dimension_numbers = #tpu.dot_dimension_numbers<[1], [0], [0], [1], [0, 0, 1, 1], [], []>} : vector<8x128xbf16>, vector<128x384xbf16>, vector<8x384xf32> -> vector<8x384xf32>
    %c4 = arith.constant 4 : index
    %c0_53 = arith.constant 0 : index
    %c0_54 = arith.constant 0 : index
    %137 = vector.load %arg1[%c4, %c0_53, %c0_54] : memref<8x8x128xbf16, #tpu.memory_space<vmem>>, vector<1x8x128xbf16>
    %138 = vector.shape_cast %137 : vector<1x8x128xbf16> to vector<8x128xbf16>
    %cst_55 = arith.constant dense<0.000000e+00> : vector<8x384xf32>
    %139 = tpu.matmul %138, %1, %cst_55 {dimension_numbers = #tpu.dot_dimension_numbers<[1], [0], [0], [1], [0, 0, 1, 1], [], []>} : vector<8x128xbf16>, vector<128x384xbf16>, vector<8x384xf32> -> vector<8x384xf32>
    %140 = arith.addf %136, %139 : vector<8x384xf32>
    %141 = arith.addf %140, %5 : vector<8x384xf32>
    %142 = arith.truncf %129 : vector<8x128xf32> to vector<8x128xbf16>
    %cst_56 = arith.constant dense<0.000000e+00> : vector<8x384xf32>
    %143 = tpu.matmul %142, %2, %cst_56 {dimension_numbers = #tpu.dot_dimension_numbers<[1], [0], [0], [1], [0, 0, 1, 1], [], []>} : vector<8x128xbf16>, vector<128x384xbf16>, vector<8x384xf32> -> vector<8x384xf32>
    %144 = vector.extract_strided_slice %141 {offsets = [0, 0], sizes = [8, 128], strides = [1, 1]} : vector<8x384xf32> to vector<8x128xf32>
    %145 = vector.extract_strided_slice %143 {offsets = [0, 0], sizes = [8, 128], strides = [1, 1]} : vector<8x384xf32> to vector<8x128xf32>
    %146 = arith.addf %144, %145 : vector<8x128xf32>
    %147 = arith.negf %146 : vector<8x128xf32>
    %148 = math.exp %147 : vector<8x128xf32>
    %cst_57 = arith.constant 1.000000e+00 : f32
    %149 = vector.broadcast %cst_57 : f32 to vector<8x128xf32>
    %150 = arith.addf %149, %148 : vector<8x128xf32>
    %151 = arith.divf %149, %150 : vector<8x128xf32>
    %152 = vector.extract_strided_slice %141 {offsets = [0, 128], sizes = [8, 128], strides = [1, 1]} : vector<8x384xf32> to vector<8x128xf32>
    %153 = vector.extract_strided_slice %143 {offsets = [0, 128], sizes = [8, 128], strides = [1, 1]} : vector<8x384xf32> to vector<8x128xf32>
    %154 = arith.addf %152, %153 : vector<8x128xf32>
    %155 = arith.negf %154 : vector<8x128xf32>
    %156 = math.exp %155 : vector<8x128xf32>
    %cst_58 = arith.constant 1.000000e+00 : f32
    %157 = vector.broadcast %cst_58 : f32 to vector<8x128xf32>
    %158 = arith.addf %157, %156 : vector<8x128xf32>
    %159 = arith.divf %157, %158 : vector<8x128xf32>
    %160 = vector.extract_strided_slice %141 {offsets = [0, 256], sizes = [8, 128], strides = [1, 1]} : vector<8x384xf32> to vector<8x128xf32>
    %161 = vector.extract_strided_slice %143 {offsets = [0, 256], sizes = [8, 128], strides = [1, 1]} : vector<8x384xf32> to vector<8x128xf32>
    %162 = arith.addf %161, %8 : vector<8x128xf32>
    %163 = arith.mulf %151, %162 : vector<8x128xf32>
    %164 = arith.addf %160, %163 : vector<8x128xf32>
    %165 = math.tanh %164 : vector<8x128xf32>
    %cst_59 = arith.constant 1.000000e+00 : f32
    %166 = vector.broadcast %cst_59 : f32 to vector<8x128xf32>
    %167 = arith.subf %166, %159 : vector<8x128xf32>
    %168 = arith.mulf %167, %165 : vector<8x128xf32>
    %169 = arith.mulf %159, %129 : vector<8x128xf32>
    %170 = arith.addf %168, %169 : vector<8x128xf32>
    %c3_60 = arith.constant 3 : index
    %c0_61 = arith.constant 0 : index
    %c0_62 = arith.constant 0 : index
    %171 = vector.load %arg7[%c3_60, %c0_61, %c0_62] : memref<8x8x128xf32, #tpu.memory_space<vmem>>, vector<1x8x128xf32>
    %172 = vector.shape_cast %171 : vector<1x8x128xf32> to vector<8x128xf32>
    %173 = vector.shape_cast %170 : vector<8x128xf32> to vector<1x8x128xf32>
    tpu.vector_store %arg7[%c3_60, %c0_61, %c0_62], %173 {strides = array<i32>} : memref<8x8x128xf32, #tpu.memory_space<vmem>>, vector<1x8x128xf32>,
    %174 = arith.maximumf %133, %170 : vector<8x128xf32>
    %c4_63 = arith.constant 4 : index
    %c0_64 = arith.constant 0 : index
    %c0_65 = arith.constant 0 : index
    %175 = vector.load %arg1[%c4_63, %c0_64, %c0_65] : memref<8x8x128xbf16, #tpu.memory_space<vmem>>, vector<1x8x128xbf16>
    %176 = vector.shape_cast %175 : vector<1x8x128xbf16> to vector<8x128xbf16>
    %cst_66 = arith.constant dense<0.000000e+00> : vector<8x384xf32>
    %177 = tpu.matmul %176, %0, %cst_66 {dimension_numbers = #tpu.dot_dimension_numbers<[1], [0], [0], [1], [0, 0, 1, 1], [], []>} : vector<8x128xbf16>, vector<128x384xbf16>, vector<8x384xf32> -> vector<8x384xf32>
    %c3_67 = arith.constant 3 : index
    %c0_68 = arith.constant 0 : index
    %c0_69 = arith.constant 0 : index
    %178 = vector.load %arg1[%c3_67, %c0_68, %c0_69] : memref<8x8x128xbf16, #tpu.memory_space<vmem>>, vector<1x8x128xbf16>
    %179 = vector.shape_cast %178 : vector<1x8x128xbf16> to vector<8x128xbf16>
    %cst_70 = arith.constant dense<0.000000e+00> : vector<8x384xf32>
    %180 = tpu.matmul %179, %1, %cst_70 {dimension_numbers = #tpu.dot_dimension_numbers<[1], [0], [0], [1], [0, 0, 1, 1], [], []>} : vector<8x128xbf16>, vector<128x384xbf16>, vector<8x384xf32> -> vector<8x384xf32>
    %181 = arith.addf %177, %180 : vector<8x384xf32>
    %182 = arith.addf %181, %5 : vector<8x384xf32>
    %183 = arith.truncf %170 : vector<8x128xf32> to vector<8x128xbf16>
    %cst_71 = arith.constant dense<0.000000e+00> : vector<8x384xf32>
    %184 = tpu.matmul %183, %2, %cst_71 {dimension_numbers = #tpu.dot_dimension_numbers<[1], [0], [0], [1], [0, 0, 1, 1], [], []>} : vector<8x128xbf16>, vector<128x384xbf16>, vector<8x384xf32> -> vector<8x384xf32>
    %185 = vector.extract_strided_slice %182 {offsets = [0, 0], sizes = [8, 128], strides = [1, 1]} : vector<8x384xf32> to vector<8x128xf32>
    %186 = vector.extract_strided_slice %184 {offsets = [0, 0], sizes = [8, 128], strides = [1, 1]} : vector<8x384xf32> to vector<8x128xf32>
    %187 = arith.addf %185, %186 : vector<8x128xf32>
    %188 = arith.negf %187 : vector<8x128xf32>
    %189 = math.exp %188 : vector<8x128xf32>
    %cst_72 = arith.constant 1.000000e+00 : f32
    %190 = vector.broadcast %cst_72 : f32 to vector<8x128xf32>
    %191 = arith.addf %190, %189 : vector<8x128xf32>
    %192 = arith.divf %190, %191 : vector<8x128xf32>
    %193 = vector.extract_strided_slice %182 {offsets = [0, 128], sizes = [8, 128], strides = [1, 1]} : vector<8x384xf32> to vector<8x128xf32>
    %194 = vector.extract_strided_slice %184 {offsets = [0, 128], sizes = [8, 128], strides = [1, 1]} : vector<8x384xf32> to vector<8x128xf32>
    %195 = arith.addf %193, %194 : vector<8x128xf32>
    %196 = arith.negf %195 : vector<8x128xf32>
    %197 = math.exp %196 : vector<8x128xf32>
    %cst_73 = arith.constant 1.000000e+00 : f32
    %198 = vector.broadcast %cst_73 : f32 to vector<8x128xf32>
    %199 = arith.addf %198, %197 : vector<8x128xf32>
    %200 = arith.divf %198, %199 : vector<8x128xf32>
    %201 = vector.extract_strided_slice %182 {offsets = [0, 256], sizes = [8, 128], strides = [1, 1]} : vector<8x384xf32> to vector<8x128xf32>
    %202 = vector.extract_strided_slice %184 {offsets = [0, 256], sizes = [8, 128], strides = [1, 1]} : vector<8x384xf32> to vector<8x128xf32>
    %203 = arith.addf %202, %8 : vector<8x128xf32>
    %204 = arith.mulf %192, %203 : vector<8x128xf32>
    %205 = arith.addf %201, %204 : vector<8x128xf32>
    %206 = math.tanh %205 : vector<8x128xf32>
    %cst_74 = arith.constant 1.000000e+00 : f32
    %207 = vector.broadcast %cst_74 : f32 to vector<8x128xf32>
    %208 = arith.subf %207, %200 : vector<8x128xf32>
    %209 = arith.mulf %208, %206 : vector<8x128xf32>
    %210 = arith.mulf %200, %170 : vector<8x128xf32>
    %211 = arith.addf %209, %210 : vector<8x128xf32>
    %c4_75 = arith.constant 4 : index
    %c0_76 = arith.constant 0 : index
    %c0_77 = arith.constant 0 : index
    %212 = vector.load %arg7[%c4_75, %c0_76, %c0_77] : memref<8x8x128xf32, #tpu.memory_space<vmem>>, vector<1x8x128xf32>
    %213 = vector.shape_cast %212 : vector<1x8x128xf32> to vector<8x128xf32>
    %214 = vector.shape_cast %211 : vector<8x128xf32> to vector<1x8x128xf32>
    tpu.vector_store %arg7[%c4_75, %c0_76, %c0_77], %214 {strides = array<i32>} : memref<8x8x128xf32, #tpu.memory_space<vmem>>, vector<1x8x128xf32>,
    %215 = arith.maximumf %174, %211 : vector<8x128xf32>
    %c5_78 = arith.constant 5 : index
    %c0_79 = arith.constant 0 : index
    %c0_80 = arith.constant 0 : index
    %216 = vector.load %arg1[%c5_78, %c0_79, %c0_80] : memref<8x8x128xbf16, #tpu.memory_space<vmem>>, vector<1x8x128xbf16>
    %217 = vector.shape_cast %216 : vector<1x8x128xbf16> to vector<8x128xbf16>
    %cst_81 = arith.constant dense<0.000000e+00> : vector<8x384xf32>
    %218 = tpu.matmul %217, %0, %cst_81 {dimension_numbers = #tpu.dot_dimension_numbers<[1], [0], [0], [1], [0, 0, 1, 1], [], []>} : vector<8x128xbf16>, vector<128x384xbf16>, vector<8x384xf32> -> vector<8x384xf32>
    %c2_82 = arith.constant 2 : index
    %c0_83 = arith.constant 0 : index
    %c0_84 = arith.constant 0 : index
    %219 = vector.load %arg1[%c2_82, %c0_83, %c0_84] : memref<8x8x128xbf16, #tpu.memory_space<vmem>>, vector<1x8x128xbf16>
    %220 = vector.shape_cast %219 : vector<1x8x128xbf16> to vector<8x128xbf16>
    %cst_85 = arith.constant dense<0.000000e+00> : vector<8x384xf32>
    %221 = tpu.matmul %220, %1, %cst_85 {dimension_numbers = #tpu.dot_dimension_numbers<[1], [0], [0], [1], [0, 0, 1, 1], [], []>} : vector<8x128xbf16>, vector<128x384xbf16>, vector<8x384xf32> -> vector<8x384xf32>
    %222 = arith.addf %218, %221 : vector<8x384xf32>
    %223 = arith.addf %222, %5 : vector<8x384xf32>
    %224 = arith.truncf %211 : vector<8x128xf32> to vector<8x128xbf16>
    %cst_86 = arith.constant dense<0.000000e+00> : vector<8x384xf32>
    %225 = tpu.matmul %224, %2, %cst_86 {dimension_numbers = #tpu.dot_dimension_numbers<[1], [0], [0], [1], [0, 0, 1, 1], [], []>} : vector<8x128xbf16>, vector<128x384xbf16>, vector<8x384xf32> -> vector<8x384xf32>
    %226 = vector.extract_strided_slice %223 {offsets = [0, 0], sizes = [8, 128], strides = [1, 1]} : vector<8x384xf32> to vector<8x128xf32>
    %227 = vector.extract_strided_slice %225 {offsets = [0, 0], sizes = [8, 128], strides = [1, 1]} : vector<8x384xf32> to vector<8x128xf32>
    %228 = arith.addf %226, %227 : vector<8x128xf32>
    %229 = arith.negf %228 : vector<8x128xf32>
    %230 = math.exp %229 : vector<8x128xf32>
    %cst_87 = arith.constant 1.000000e+00 : f32
    %231 = vector.broadcast %cst_87 : f32 to vector<8x128xf32>
    %232 = arith.addf %231, %230 : vector<8x128xf32>
    %233 = arith.divf %231, %232 : vector<8x128xf32>
    %234 = vector.extract_strided_slice %223 {offsets = [0, 128], sizes = [8, 128], strides = [1, 1]} : vector<8x384xf32> to vector<8x128xf32>
    %235 = vector.extract_strided_slice %225 {offsets = [0, 128], sizes = [8, 128], strides = [1, 1]} : vector<8x384xf32> to vector<8x128xf32>
    %236 = arith.addf %234, %235 : vector<8x128xf32>
    %237 = arith.negf %236 : vector<8x128xf32>
    %238 = math.exp %237 : vector<8x128xf32>
    %cst_88 = arith.constant 1.000000e+00 : f32
    %239 = vector.broadcast %cst_88 : f32 to vector<8x128xf32>
    %240 = arith.addf %239, %238 : vector<8x128xf32>
    %241 = arith.divf %239, %240 : vector<8x128xf32>
    %242 = vector.extract_strided_slice %223 {offsets = [0, 256], sizes = [8, 128], strides = [1, 1]} : vector<8x384xf32> to vector<8x128xf32>
    %243 = vector.extract_strided_slice %225 {offsets = [0, 256], sizes = [8, 128], strides = [1, 1]} : vector<8x384xf32> to vector<8x128xf32>
    %244 = arith.addf %243, %8 : vector<8x128xf32>
    %245 = arith.mulf %233, %244 : vector<8x128xf32>
    %246 = arith.addf %242, %245 : vector<8x128xf32>
    %247 = math.tanh %246 : vector<8x128xf32>
    %cst_89 = arith.constant 1.000000e+00 : f32
    %248 = vector.broadcast %cst_89 : f32 to vector<8x128xf32>
    %249 = arith.subf %248, %241 : vector<8x128xf32>
    %250 = arith.mulf %249, %247 : vector<8x128xf32>
    %251 = arith.mulf %241, %211 : vector<8x128xf32>
    %252 = arith.addf %250, %251 : vector<8x128xf32>
    %c5_90 = arith.constant 5 : index
    %c0_91 = arith.constant 0 : index
    %c0_92 = arith.constant 0 : index
    %253 = vector.load %arg7[%c5_90, %c0_91, %c0_92] : memref<8x8x128xf32, #tpu.memory_space<vmem>>, vector<1x8x128xf32>
    %254 = vector.shape_cast %253 : vector<1x8x128xf32> to vector<8x128xf32>
    %255 = vector.shape_cast %252 : vector<8x128xf32> to vector<1x8x128xf32>
    tpu.vector_store %arg7[%c5_90, %c0_91, %c0_92], %255 {strides = array<i32>} : memref<8x8x128xf32, #tpu.memory_space<vmem>>, vector<1x8x128xf32>,
    %256 = arith.maximumf %215, %252 : vector<8x128xf32>
    %c6_93 = arith.constant 6 : index
    %c0_94 = arith.constant 0 : index
    %c0_95 = arith.constant 0 : index
    %257 = vector.load %arg1[%c6_93, %c0_94, %c0_95] : memref<8x8x128xbf16, #tpu.memory_space<vmem>>, vector<1x8x128xbf16>
    %258 = vector.shape_cast %257 : vector<1x8x128xbf16> to vector<8x128xbf16>
    %cst_96 = arith.constant dense<0.000000e+00> : vector<8x384xf32>
    %259 = tpu.matmul %258, %0, %cst_96 {dimension_numbers = #tpu.dot_dimension_numbers<[1], [0], [0], [1], [0, 0, 1, 1], [], []>} : vector<8x128xbf16>, vector<128x384xbf16>, vector<8x384xf32> -> vector<8x384xf32>
    %c1_97 = arith.constant 1 : index
    %c0_98 = arith.constant 0 : index
    %c0_99 = arith.constant 0 : index
    %260 = vector.load %arg1[%c1_97, %c0_98, %c0_99] : memref<8x8x128xbf16, #tpu.memory_space<vmem>>, vector<1x8x128xbf16>
    %261 = vector.shape_cast %260 : vector<1x8x128xbf16> to vector<8x128xbf16>
    %cst_100 = arith.constant dense<0.000000e+00> : vector<8x384xf32>
    %262 = tpu.matmul %261, %1, %cst_100 {dimension_numbers = #tpu.dot_dimension_numbers<[1], [0], [0], [1], [0, 0, 1, 1], [], []>} : vector<8x128xbf16>, vector<128x384xbf16>, vector<8x384xf32> -> vector<8x384xf32>
    %263 = arith.addf %259, %262 : vector<8x384xf32>
    %264 = arith.addf %263, %5 : vector<8x384xf32>
    %265 = arith.truncf %252 : vector<8x128xf32> to vector<8x128xbf16>
    %cst_101 = arith.constant dense<0.000000e+00> : vector<8x384xf32>
    %266 = tpu.matmul %265, %2, %cst_101 {dimension_numbers = #tpu.dot_dimension_numbers<[1], [0], [0], [1], [0, 0, 1, 1], [], []>} : vector<8x128xbf16>, vector<128x384xbf16>, vector<8x384xf32> -> vector<8x384xf32>
    %267 = vector.extract_strided_slice %264 {offsets = [0, 0], sizes = [8, 128], strides = [1, 1]} : vector<8x384xf32> to vector<8x128xf32>
    %268 = vector.extract_strided_slice %266 {offsets = [0, 0], sizes = [8, 128], strides = [1, 1]} : vector<8x384xf32> to vector<8x128xf32>
    %269 = arith.addf %267, %268 : vector<8x128xf32>
    %270 = arith.negf %269 : vector<8x128xf32>
    %271 = math.exp %270 : vector<8x128xf32>
    %cst_102 = arith.constant 1.000000e+00 : f32
    %272 = vector.broadcast %cst_102 : f32 to vector<8x128xf32>
    %273 = arith.addf %272, %271 : vector<8x128xf32>
    %274 = arith.divf %272, %273 : vector<8x128xf32>
    %275 = vector.extract_strided_slice %264 {offsets = [0, 128], sizes = [8, 128], strides = [1, 1]} : vector<8x384xf32> to vector<8x128xf32>
    %276 = vector.extract_strided_slice %266 {offsets = [0, 128], sizes = [8, 128], strides = [1, 1]} : vector<8x384xf32> to vector<8x128xf32>
    %277 = arith.addf %275, %276 : vector<8x128xf32>
    %278 = arith.negf %277 : vector<8x128xf32>
    %279 = math.exp %278 : vector<8x128xf32>
    %cst_103 = arith.constant 1.000000e+00 : f32
    %280 = vector.broadcast %cst_103 : f32 to vector<8x128xf32>
    %281 = arith.addf %280, %279 : vector<8x128xf32>
    %282 = arith.divf %280, %281 : vector<8x128xf32>
    %283 = vector.extract_strided_slice %264 {offsets = [0, 256], sizes = [8, 128], strides = [1, 1]} : vector<8x384xf32> to vector<8x128xf32>
    %284 = vector.extract_strided_slice %266 {offsets = [0, 256], sizes = [8, 128], strides = [1, 1]} : vector<8x384xf32> to vector<8x128xf32>
    %285 = arith.addf %284, %8 : vector<8x128xf32>
    %286 = arith.mulf %274, %285 : vector<8x128xf32>
    %287 = arith.addf %283, %286 : vector<8x128xf32>
    %288 = math.tanh %287 : vector<8x128xf32>
    %cst_104 = arith.constant 1.000000e+00 : f32
    %289 = vector.broadcast %cst_104 : f32 to vector<8x128xf32>
    %290 = arith.subf %289, %282 : vector<8x128xf32>
    %291 = arith.mulf %290, %288 : vector<8x128xf32>
    %292 = arith.mulf %282, %252 : vector<8x128xf32>
    %293 = arith.addf %291, %292 : vector<8x128xf32>
    %c6_105 = arith.constant 6 : index
    %c0_106 = arith.constant 0 : index
    %c0_107 = arith.constant 0 : index
    %294 = vector.load %arg7[%c6_105, %c0_106, %c0_107] : memref<8x8x128xf32, #tpu.memory_space<vmem>>, vector<1x8x128xf32>
    %295 = vector.shape_cast %294 : vector<1x8x128xf32> to vector<8x128xf32>
    %296 = vector.shape_cast %293 : vector<8x128xf32> to vector<1x8x128xf32>
    tpu.vector_store %arg7[%c6_105, %c0_106, %c0_107], %296 {strides = array<i32>} : memref<8x8x128xf32, #tpu.memory_space<vmem>>, vector<1x8x128xf32>,
    %297 = arith.maximumf %256, %293 : vector<8x128xf32>
    %c7_108 = arith.constant 7 : index
    %c0_109 = arith.constant 0 : index
    %c0_110 = arith.constant 0 : index
    %298 = vector.load %arg1[%c7_108, %c0_109, %c0_110] : memref<8x8x128xbf16, #tpu.memory_space<vmem>>, vector<1x8x128xbf16>
    %299 = vector.shape_cast %298 : vector<1x8x128xbf16> to vector<8x128xbf16>
    %cst_111 = arith.constant dense<0.000000e+00> : vector<8x384xf32>
    %300 = tpu.matmul %299, %0, %cst_111 {dimension_numbers = #tpu.dot_dimension_numbers<[1], [0], [0], [1], [0, 0, 1, 1], [], []>} : vector<8x128xbf16>, vector<128x384xbf16>, vector<8x384xf32> -> vector<8x384xf32>
    %c0_112 = arith.constant 0 : index
    %c0_113 = arith.constant 0 : index
    %c0_114 = arith.constant 0 : index
    %301 = vector.load %arg1[%c0_112, %c0_113, %c0_114] : memref<8x8x128xbf16, #tpu.memory_space<vmem>>, vector<1x8x128xbf16>
    %302 = vector.shape_cast %301 : vector<1x8x128xbf16> to vector<8x128xbf16>
    %cst_115 = arith.constant dense<0.000000e+00> : vector<8x384xf32>
    %303 = tpu.matmul %302, %1, %cst_115 {dimension_numbers = #tpu.dot_dimension_numbers<[1], [0], [0], [1], [0, 0, 1, 1], [], []>} : vector<8x128xbf16>, vector<128x384xbf16>, vector<8x384xf32> -> vector<8x384xf32>
    %304 = arith.addf %300, %303 : vector<8x384xf32>
    %305 = arith.addf %304, %5 : vector<8x384xf32>
    %306 = arith.truncf %293 : vector<8x128xf32> to vector<8x128xbf16>
    %cst_116 = arith.constant dense<0.000000e+00> : vector<8x384xf32>
    %307 = tpu.matmul %306, %2, %cst_116 {dimension_numbers = #tpu.dot_dimension_numbers<[1], [0], [0], [1], [0, 0, 1, 1], [], []>} : vector<8x128xbf16>, vector<128x384xbf16>, vector<8x384xf32> -> vector<8x384xf32>
    %308 = vector.extract_strided_slice %305 {offsets = [0, 0], sizes = [8, 128], strides = [1, 1]} : vector<8x384xf32> to vector<8x128xf32>
    %309 = vector.extract_strided_slice %307 {offsets = [0, 0], sizes = [8, 128], strides = [1, 1]} : vector<8x384xf32> to vector<8x128xf32>
    %310 = arith.addf %308, %309 : vector<8x128xf32>
    %311 = arith.negf %310 : vector<8x128xf32>
    %312 = math.exp %311 : vector<8x128xf32>
    %cst_117 = arith.constant 1.000000e+00 : f32
    %313 = vector.broadcast %cst_117 : f32 to vector<8x128xf32>
    %314 = arith.addf %313, %312 : vector<8x128xf32>
    %315 = arith.divf %313, %314 : vector<8x128xf32>
    %316 = vector.extract_strided_slice %305 {offsets = [0, 128], sizes = [8, 128], strides = [1, 1]} : vector<8x384xf32> to vector<8x128xf32>
    %317 = vector.extract_strided_slice %307 {offsets = [0, 128], sizes = [8, 128], strides = [1, 1]} : vector<8x384xf32> to vector<8x128xf32>
    %318 = arith.addf %316, %317 : vector<8x128xf32>
    %319 = arith.negf %318 : vector<8x128xf32>
    %320 = math.exp %319 : vector<8x128xf32>
    %cst_118 = arith.constant 1.000000e+00 : f32
    %321 = vector.broadcast %cst_118 : f32 to vector<8x128xf32>
    %322 = arith.addf %321, %320 : vector<8x128xf32>
    %323 = arith.divf %321, %322 : vector<8x128xf32>
    %324 = vector.extract_strided_slice %305 {offsets = [0, 256], sizes = [8, 128], strides = [1, 1]} : vector<8x384xf32> to vector<8x128xf32>
    %325 = vector.extract_strided_slice %307 {offsets = [0, 256], sizes = [8, 128], strides = [1, 1]} : vector<8x384xf32> to vector<8x128xf32>
    %326 = arith.addf %325, %8 : vector<8x128xf32>
    %327 = arith.mulf %315, %326 : vector<8x128xf32>
    %328 = arith.addf %324, %327 : vector<8x128xf32>
    %329 = math.tanh %328 : vector<8x128xf32>
    %cst_119 = arith.constant 1.000000e+00 : f32
    %330 = vector.broadcast %cst_119 : f32 to vector<8x128xf32>
    %331 = arith.subf %330, %323 : vector<8x128xf32>
    %332 = arith.mulf %331, %329 : vector<8x128xf32>
    %333 = arith.mulf %323, %293 : vector<8x128xf32>
    %334 = arith.addf %332, %333 : vector<8x128xf32>
    %c7_120 = arith.constant 7 : index
    %c0_121 = arith.constant 0 : index
    %c0_122 = arith.constant 0 : index
    %335 = vector.load %arg7[%c7_120, %c0_121, %c0_122] : memref<8x8x128xf32, #tpu.memory_space<vmem>>, vector<1x8x128xf32>
    %336 = vector.shape_cast %335 : vector<1x8x128xf32> to vector<8x128xf32>
    %337 = vector.shape_cast %334 : vector<8x128xf32> to vector<1x8x128xf32>
    tpu.vector_store %arg7[%c7_120, %c0_121, %c0_122], %337 {strides = array<i32>} : memref<8x8x128xf32, #tpu.memory_space<vmem>>, vector<1x8x128xf32>,
    %338 = arith.maximumf %297, %334 : vector<8x128xf32>
    %339 = math.tanh %338 : vector<8x128xf32>
    %340 = math.tanh %339 : vector<8x128xf32>
    %c0_123 = arith.constant 0 : index
    %c0_124 = arith.constant 0 : index
    %341 = vector.load %arg8[%c0_123, %c0_124] : memref<8x128xf32, #tpu.memory_space<vmem>>, vector<8x128xf32>
    tpu.vector_store %arg8[%c0_123, %c0_124], %340 {strides = array<i32>} : memref<8x128xf32, #tpu.memory_space<vmem>>, vector<8x128xf32>,
    return
  }
  func.func @transform_0(%arg0: i32) -> (i32, i32, i32) {
    %c0_i32 = arith.constant 0 : i32
    %c0_i32_0 = arith.constant 0 : i32
    %c0_i32_1 = arith.constant 0 : i32
    %c0_i32_2 = arith.constant 0 : i32
    return %c0_i32, %c0_i32_0, %c0_i32_1 : i32, i32, i32
  }
  func.func @transform_1(%arg0: i32) -> (i32, i32) {
    %c0_i32 = arith.constant 0 : i32
    %c0_i32_0 = arith.constant 0 : i32
    %c0_i32_1 = arith.constant 0 : i32
    return %c0_i32, %c0_i32_0 : i32, i32
  }
  func.func @transform_2(%arg0: i32) -> (i32, i32) {
    %c0_i32 = arith.constant 0 : i32
    %c0_i32_0 = arith.constant 0 : i32
    %c0_i32_1 = arith.constant 0 : i32
    return %c0_i32, %c0_i32_0 : i32, i32
  }
  func.func @transform_3(%arg0: i32) -> (i32, i32) {
    %c0_i32 = arith.constant 0 : i32
    %c0_i32_0 = arith.constant 0 : i32
    %c0_i32_1 = arith.constant 0 : i32
    return %c0_i32, %c0_i32_0 : i32, i32
  }
  func.func @transform_4(%arg0: i32) -> (i32, i32) {
    %c0_i32 = arith.constant 0 : i32
    %c0_i32_0 = arith.constant 0 : i32
    %c0_i32_1 = arith.constant 0 : i32
    return %c0_i32, %c0_i32_0 : i32, i32
  }
  func.func @transform_5(%arg0: i32) -> (i32, i32) {
    %c0_i32 = arith.constant 0 : i32
    %c0_i32_0 = arith.constant 0 : i32
    %c0_i32_1 = arith.constant 0 : i32
    return %c0_i32, %c0_i32_0 : i32, i32
  }
  func.func @transform_6(%arg0: i32) -> (i32, i32, i32) {
    %c0_i32 = arith.constant 0 : i32
    %c0_i32_0 = arith.constant 0 : i32
    %c0_i32_1 = arith.constant 0 : i32
    %c0_i32_2 = arith.constant 0 : i32
    return %c0_i32, %c0_i32_0, %c0_i32_1 : i32, i32, i32
  }
  func.func @transform_7(%arg0: i32) -> (i32, i32) {
    %c0_i32 = arith.constant 0 : i32
    %c0_i32_0 = arith.constant 0 : i32
    %c0_i32_1 = arith.constant 0 : i32
    return %c0_i32, %c0_i32_0 : i32, i32
  }
}

</mosaic_0001>

<llo_original>
// kernel: utterance_net_forward.2
$region0: #{utterance_net_forward.2}
  #allocation0 [shape = 'u32[]', space=smem, size = 0x4, offset = 0x4, fixed_abs, tag = 'smem constant byte address 0x4 - core index']
  #allocation1 [shape = 'u32[144,128]{1,0:T(1,128)}', space=vmem, size = 0x12000, scoped, tag = 'internal scratch']
  %s0 = inlined_call_operand.vmem [shape: bf16[8,8,128], index: 0, kind: input, shape index: {}]
  %s1 = inlined_call_operand.hbm [shape: bf16[128,384], index: 1, kind: input, shape index: {}]
  %s2 = inlined_call_operand.hbm [shape: bf16[128,384], index: 2, kind: input, shape index: {}]
  %s3 = inlined_call_operand.hbm [shape: bf16[128,384], index: 3, kind: input, shape index: {}]
  %s4 = inlined_call_operand.vmem [shape: f32[1,384], index: 4, kind: input, shape index: {}]
  %s5 = inlined_call_operand.vmem [shape: f32[1,128], index: 5, kind: input, shape index: {}]
  %s6 = inlined_call_operand.vmem [shape: f32[8,8,128], index: 6, kind: output, shape index: {}]
  %s7 = sld [smem:[#allocation0]]
  $region46: #{utterance_net_forward.2} parent=0
    _
  %s9 = ssub.s32 1, %s7
  %s10 = scalar_select 0, %s9, %s7
  $region1: #{utterance_net_forward.2} parent=0
    #allocation2 [shape = 'u8[98304]{0}', space=vmem, size = 0x18000, scoped, tag = 'input window, operand 1, single buffered']
    #allocation3 [shape = 's32[1]{0}', space=sflag, size = 0x4, scoped, tag = 'scoped memory for utterance_net_forward.2']
    #allocation4 [shape = 'u8[98304]{0}', space=vmem, size = 0x18000, scoped, tag = 'input window, operand 2, single buffered']
    #allocation5 [shape = 's32[1]{0}', space=sflag, size = 0x4, scoped, tag = 'scoped memory for utterance_net_forward.2']
    #allocation6 [shape = 'u8[98304]{0}', space=vmem, size = 0x18000, scoped, tag = 'input window, operand 3, single buffered']
    %11 = vsyncpa [#allocation3], 0
    %12 = vsyncpa [#allocation5], 0
    // Predicated region
    $region2: #{utterance_net_forward.2} parent=1 // pred_check
      _
    $region3: #{utterance_net_forward.2} parent=1 // pred_check_branch
      %14 = sbr.rel (0) target = $region5
    $region4: #{utterance_net_forward.2} parent=1 // pred_region
      _
    $region5: #{utterance_net_forward.2} parent=1 // pred_fallthru
      _
    // Predicated region
    $region6: #{utterance_net_forward.2} parent=1 // pred_check
      _
    $region7: #{utterance_net_forward.2} parent=1 // pred_check_branch
      %16 = sbr.rel (0) target = $region9
    $region8: #{utterance_net_forward.2} parent=1 // pred_region
      %s18 = ssub.s32 3072, 3072
      %19 = vsyncadd [#allocation3], %s18
      %s20 = sshll.u32 [#allocation2], 4
      %s21 = int_to_ptr.vmem [resolvable:$true] %s20
      %26 = dma.hbm_to_vmem [thread:$0]  %s1, 3072, %s21, [#allocation3], 192, 192, 12
    $region9: #{utterance_net_forward.2} parent=1 // pred_fallthru
      _
    // Predicated region
    $region10: #{utterance_net_forward.2} parent=1 // pred_check
      _
    $region11: #{utterance_net_forward.2} parent=1 // pred_check_branch
      %28 = sbr.rel (0) target = $region13
    $region12: #{utterance_net_forward.2} parent=1 // pred_region
      %s30 = ssub.s32 3072, 3072
      %31 = vsyncadd [#allocation5], %s30
      %s32 = sshll.u32 [#allocation4], 4
      %s33 = int_to_ptr.vmem [resolvable:$true] %s32
      %38 = dma.hbm_to_vmem [thread:$0]  %s2, 3072, %s33, [#allocation5], 192, 192, 12
    $region13: #{utterance_net_forward.2} parent=1 // pred_fallthru
      _
    // Predicated region
    $region14: #{utterance_net_forward.2} parent=1 // pred_check
      _
    $region15: #{utterance_net_forward.2} parent=1 // pred_check_branch
      %40 = sbr.rel (0) target = $region17
    $region16: #{utterance_net_forward.2} parent=1 // pred_region
      %s42 = ssub.s32 3072, 3072
      %43 = vsyncadd [#allocation5], %s42
      %s44 = sshll.u32 [#allocation6], 4
      %s45 = int_to_ptr.vmem [resolvable:$true] %s44
      %50 = dma.hbm_to_vmem [thread:$0]  %s3, 3072, %s45, [#allocation5], 192, 192, 12
    $region17: #{utterance_net_forward.2} parent=1 // pred_fallthru
      _
    // Predicated region
    $region18: #{utterance_net_forward.2} parent=1 // pred_check
      _
    $region19: #{utterance_net_forward.2} parent=1 // pred_check_branch
      %52 = sbr.rel (0) target = $region21
    $region20: #{utterance_net_forward.2} parent=1 // pred_region
      _
    $region21: #{utterance_net_forward.2} parent=1 // pred_fallthru
      _
    // Predicated region
    $region22: #{utterance_net_forward.2} parent=1 // pred_check
      _
    $region23: #{utterance_net_forward.2} parent=1 // pred_check_branch
      %54 = sbr.rel (0) target = $region25
    $region24: #{utterance_net_forward.2} parent=1 // pred_region
      _
    $region25: #{utterance_net_forward.2} parent=1 // pred_fallthru
      _
    // Predicated region
    $region26: #{utterance_net_forward.2} parent=1 // pred_check
      _
    $region27: #{utterance_net_forward.2} parent=1 // pred_check_branch
      %56 = sbr.rel (0) target = $region29
    $region28: #{utterance_net_forward.2} parent=1 // pred_region
      %57 = dma.done [#allocation3], 3072
    $region29: #{utterance_net_forward.2} parent=1 // pred_fallthru
      _
    // Predicated region
    $region30: #{utterance_net_forward.2} parent=1 // pred_check
      _
    $region31: #{utterance_net_forward.2} parent=1 // pred_check_branch
      %59 = sbr.rel (0) target = $region33
    $region32: #{utterance_net_forward.2} parent=1 // pred_region
      %60 = dma.done [#allocation5], 3072
    $region33: #{utterance_net_forward.2} parent=1 // pred_fallthru
      _
    // Predicated region
    $region34: #{utterance_net_forward.2} parent=1 // pred_check
      _
    $region35: #{utterance_net_forward.2} parent=1 // pred_check_branch
      %62 = sbr.rel (0) target = $region37
    $region36: #{utterance_net_forward.2} parent=1 // pred_region
      %63 = dma.done [#allocation5], 3072
    $region37: #{utterance_net_forward.2} parent=1 // pred_fallthru
      _
    %v65 = vld [vmem:[#allocation2] sm:$0xff]
    %v66 = vld [vmem:[#allocation2 + $0x8] sm:$0xf]
    %v67 = vld [vmem:[#allocation2 + $0xc] sm:$0xff]
    %v68 = vld [vmem:[#allocation2 + $0x14] sm:$0xf]
    %v69 = vld [vmem:[#allocation2 + $0x18] sm:$0xff]
    %v70 = vld [vmem:[#allocation2 + $0x20] sm:$0xf]
    %v71 = vld [vmem:[#allocation2 + $0x24] sm:$0xff]
    %v72 = vld [vmem:[#allocation2 + $0x2c] sm:$0xf]
    %v73 = vld [vmem:[#allocation2 + $0x30] sm:$0xff]
    %v74 = vld [vmem:[#allocation2 + $0x38] sm:$0xf]
    %v75 = vld [vmem:[#allocation2 + $0x3c] sm:$0xff]
    %v76 = vld [vmem:[#allocation2 + $0x44] sm:$0xf]
    %v77 = vld [vmem:[#allocation2 + $0x48] sm:$0xff]
    %v78 = vld [vmem:[#allocation2 + $0x50] sm:$0xf]
    %v79 = vld [vmem:[#allocation2 + $0x54] sm:$0xff]
    %v80 = vld [vmem:[#allocation2 + $0x5c] sm:$0xf]
    %v81 = vld [vmem:[#allocation2 + $0x60] sm:$0xff]
    %v82 = vld [vmem:[#allocation2 + $0x68] sm:$0xf]
    %v83 = vld [vmem:[#allocation2 + $0x6c] sm:$0xff]
    %v84 = vld [vmem:[#allocation2 + $0x74] sm:$0xf]
    %v85 = vld [vmem:[#allocation2 + $0x78] sm:$0xff]
    %v86 = vld [vmem:[#allocation2 + $0x80] sm:$0xf]
    %v87 = vld [vmem:[#allocation2 + $0x84] sm:$0xff]
    %v88 = vld [vmem:[#allocation2 + $0x8c] sm:$0xf]
    %v89 = vld [vmem:[#allocation2 + $0x90] sm:$0xff]
    %v90 = vld [vmem:[#allocation2 + $0x98] sm:$0xf]
    %v91 = vld [vmem:[#allocation2 + $0x9c] sm:$0xff]
    %v92 = vld [vmem:[#allocation2 + $0xa4] sm:$0xf]
    %v93 = vld [vmem:[#allocation2 + $0xa8] sm:$0xff]
    %v94 = vld [vmem:[#allocation2 + $0xb0] sm:$0xf]
    %v95 = vld [vmem:[#allocation2 + $0xb4] sm:$0xff]
    %v96 = vld [vmem:[#allocation2 + $0xbc] sm:$0xf]
    %v97 = vld [vmem:[#allocation4] sm:$0xff]
    %v98 = vld [vmem:[#allocation4 + $0x8] sm:$0xf]
    %v99 = vld [vmem:[#allocation4 + $0xc] sm:$0xff]
    %v100 = vld [vmem:[#allocation4 + $0x14] sm:$0xf]
    %v101 = vld [vmem:[#allocation4 + $0x18] sm:$0xff]
    %v102 = vld [vmem:[#allocation4 + $0x20] sm:$0xf]
    %v103 = vld [vmem:[#allocation4 + $0x24] sm:$0xff]
    %v104 = vld [vmem:[#allocation4 + $0x2c] sm:$0xf]
    %v105 = vld [vmem:[#allocation4 + $0x30] sm:$0xff]
    %v106 = vld [vmem:[#allocation4 + $0x38] sm:$0xf]
    %v107 = vld [vmem:[#allocation4 + $0x3c] sm:$0xff]
    %v108 = vld [vmem:[#allocation4 + $0x44] sm:$0xf]
    %v109 = vld [vmem:[#allocation4 + $0x48] sm:$0xff]
    %v110 = vld [vmem:[#allocation4 + $0x50] sm:$0xf]
    %v111 = vld [vmem:[#allocation4 + $0x54] sm:$0xff]
    %v112 = vld [vmem:[#allocation4 + $0x5c] sm:$0xf]
    %v113 = vld [vmem:[#allocation4 + $0x60] sm:$0xff]
    %v114 = vld [vmem:[#allocation4 + $0x68] sm:$0xf]
    %v115 = vld [vmem:[#allocation4 + $0x6c] sm:$0xff]
    %v116 = vld [vmem:[#allocation4 + $0x74] sm:$0xf]
    %v117 = vld [vmem:[#allocation4 + $0x78] sm:$0xff]
    %v118 = vld [vmem:[#allocation4 + $0x80] sm:$0xf]
    %v119 = vld [vmem:[#allocation4 + $0x84] sm:$0xff]
    %v120 = vld [vmem:[#allocation4 + $0x8c] sm:$0xf]
    %v121 = vld [vmem:[#allocation4 + $0x90] sm:$0xff]
    %v122 = vld [vmem:[#allocation4 + $0x98] sm:$0xf]
    %v123 = vld [vmem:[#allocation4 + $0x9c] sm:$0xff]
    %v124 = vld [vmem:[#allocation4 + $0xa4] sm:$0xf]
    %v125 = vld [vmem:[#allocation4 + $0xa8] sm:$0xff]
    %v126 = vld [vmem:[#allocation4 + $0xb0] sm:$0xf]
    %v127 = vld [vmem:[#allocation4 + $0xb4] sm:$0xff]
    %v128 = vld [vmem:[#allocation4 + $0xbc] sm:$0xf]
    %v129 = vld [vmem:[#allocation6] sm:$0xff]
    %v130 = vld [vmem:[#allocation6 + $0x8] sm:$0xf]
    %v131 = vld [vmem:[#allocation6 + $0xc] sm:$0xff]
    %v132 = vld [vmem:[#allocation6 + $0x14] sm:$0xf]
    %v133 = vld [vmem:[#allocation6 + $0x18] sm:$0xff]
    %v134 = vld [vmem:[#allocation6 + $0x20] sm:$0xf]
    %v135 = vld [vmem:[#allocation6 + $0x24] sm:$0xff]
    %v136 = vld [vmem:[#allocation6 + $0x2c] sm:$0xf]
    %v137 = vld [vmem:[#allocation6 + $0x30] sm:$0xff]
    %v138 = vld [vmem:[#allocation6 + $0x38] sm:$0xf]
    %v139 = vld [vmem:[#allocation6 + $0x3c] sm:$0xff]
    %v140 = vld [vmem:[#allocation6 + $0x44] sm:$0xf]
    %v141 = vld [vmem:[#allocation6 + $0x48] sm:$0xff]
    %v142 = vld [vmem:[#allocation6 + $0x50] sm:$0xf]
    %v143 = vld [vmem:[#allocation6 + $0x54] sm:$0xff]
    %v144 = vld [vmem:[#allocation6 + $0x5c] sm:$0xf]
    %v145 = vld [vmem:[#allocation6 + $0x60] sm:$0xff]
    %v146 = vld [vmem:[#allocation6 + $0x68] sm:$0xf]
    %v147 = vld [vmem:[#allocation6 + $0x6c] sm:$0xff]
    %v148 = vld [vmem:[#allocation6 + $0x74] sm:$0xf]
    %v149 = vld [vmem:[#allocation6 + $0x78] sm:$0xff]
    %v150 = vld [vmem:[#allocation6 + $0x80] sm:$0xf]
    %v151 = vld [vmem:[#allocation6 + $0x84] sm:$0xff]
    %v152 = vld [vmem:[#allocation6 + $0x8c] sm:$0xf]
    %v153 = vld [vmem:[#allocation6 + $0x90] sm:$0xff]
    %v154 = vld [vmem:[#allocation6 + $0x98] sm:$0xf]
    %v155 = vld [vmem:[#allocation6 + $0x9c] sm:$0xff]
    %v156 = vld [vmem:[#allocation6 + $0xa4] sm:$0xf]
    %v157 = vld [vmem:[#allocation6 + $0xa8] sm:$0xff]
    %v158 = vld [vmem:[#allocation6 + $0xb0] sm:$0xf]
    %v159 = vld [vmem:[#allocation6 + $0xb4] sm:$0xff]
    %v160 = vld [vmem:[#allocation6 + $0xbc] sm:$0xf]
    %v161 = vld [vmem:[%s4] sm:$0x7]
    %v163 = vlaneseq
    %v164 = vshrl.u32 %v163, 7
    %v165 = vsub.s32 0, %v164
    %v166 = vrot.slane %v161, %v165
    %v167 = vlaneseq
    %v168 = vshrl.u32 %v167, 7
    %v169 = vsub.s32 1, %v168
    %v170 = vrot.slane %v161, %v169
    %v171 = vlaneseq
    %v172 = vshrl.u32 %v171, 7
    %v173 = vsub.s32 2, %v172
    %v174 = vrot.slane %v161, %v173
    %v178 = vld [vmem:[%s5] sm:$0x1]
    %v180 = vlaneseq
    %v181 = vshrl.u32 %v180, 7
    %v182 = vsub.s32 0, %v181
    %v183 = vrot.slane %v178, %v182
    %v185 = vld [vmem:[%s0] sm:$0xf]
    %s186 = scalar_lea.vmem %s0, 28
    %v187 = vld [vmem:[%s186] sm:$0xf]
    %v220 = vunpack.c.l.b16 %v97
    %v221 = vunpack.c.h.b16 %v97
    %v222 = vunpack.c.l.b16 %v98
    %v223 = vunpack.c.l.b16 %v99
    %v224 = vunpack.c.h.b16 %v99
    %v225 = vunpack.c.l.b16 %v100
    %v226 = vunpack.c.l.b16 %v101
    %v227 = vunpack.c.h.b16 %v101
    %v228 = vunpack.c.l.b16 %v102
    %v229 = vunpack.c.l.b16 %v103
    %v230 = vunpack.c.h.b16 %v103
    %v231 = vunpack.c.l.b16 %v104
    %v232 = vunpack.c.l.b16 %v105
    %v233 = vunpack.c.h.b16 %v105
    %v234 = vunpack.c.l.b16 %v106
    %v235 = vunpack.c.l.b16 %v107
    %v236 = vunpack.c.h.b16 %v107
    %v237 = vunpack.c.l.b16 %v108
    %v238 = vunpack.c.l.b16 %v109
    %v239 = vunpack.c.h.b16 %v109
    %v240 = vunpack.c.l.b16 %v110
    %v241 = vunpack.c.l.b16 %v111
    %v242 = vunpack.c.h.b16 %v111
    %v243 = vunpack.c.l.b16 %v112
    %v244 = vunpack.c.l.b16 %v113
    %v245 = vunpack.c.h.b16 %v113
    %v246 = vunpack.c.l.b16 %v114
    %v247 = vunpack.c.l.b16 %v115
    %v248 = vunpack.c.h.b16 %v115
    %v249 = vunpack.c.l.b16 %v116
    %v250 = vunpack.c.l.b16 %v117
    %v251 = vunpack.c.h.b16 %v117
    %v252 = vunpack.c.l.b16 %v118
    %v253 = vunpack.c.l.b16 %v119
    %v254 = vunpack.c.h.b16 %v119
    %v255 = vunpack.c.l.b16 %v120
    %v256 = vunpack.c.l.b16 %v121
    %v257 = vunpack.c.h.b16 %v121
    %v258 = vunpack.c.l.b16 %v122
    %v259 = vunpack.c.l.b16 %v123
    %v260 = vunpack.c.h.b16 %v123
    %v261 = vunpack.c.l.b16 %v124
    %v262 = vunpack.c.l.b16 %v125
    %v263 = vunpack.c.h.b16 %v125
    %v264 = vunpack.c.l.b16 %v126
    %v265 = vunpack.c.l.b16 %v127
    %v266 = vunpack.c.h.b16 %v127
    %v267 = vunpack.c.l.b16 %v128
    %v268 = vpack.c.b16 %v223, %v220
    %v269 = vpack.c.b16 %v224, %v221
    %v270 = vpack.c.b16 %v225, %v222
    %v271 = vpack.c.b16 %v229, %v226
    %v272 = vpack.c.b16 %v230, %v227
    %v273 = vpack.c.b16 %v231, %v228
    %v274 = vpack.c.b16 %v235, %v232
    %v275 = vpack.c.b16 %v236, %v233
    %v276 = vpack.c.b16 %v237, %v234
    %v277 = vpack.c.b16 %v241, %v238
    %v278 = vpack.c.b16 %v242, %v239
    %v279 = vpack.c.b16 %v243, %v240
    %v280 = vpack.c.b16 %v247, %v244
    %v281 = vpack.c.b16 %v248, %v245
    %v282 = vpack.c.b16 %v249, %v246
    %v283 = vpack.c.b16 %v253, %v250
    %v284 = vpack.c.b16 %v254, %v251
    %v285 = vpack.c.b16 %v255, %v252
    %v286 = vpack.c.b16 %v259, %v256
    %v287 = vpack.c.b16 %v260, %v257
    %v288 = vpack.c.b16 %v261, %v258
    %v289 = vpack.c.b16 %v265, %v262
    %v290 = vpack.c.b16 %v266, %v263
    %v291 = vpack.c.b16 %v267, %v264
    %316 = vmatprep.subr.bf16.mxu0 %v269
    %317 = vmatpush1.bf16.msra.mxu0 %v268
    %318 = vmatprep.subr.bf16.mxu0 %v272
    %319 = vmatpush1.bf16.msra.mxu0 %v271
    %320 = vmatprep.subr.bf16.mxu0 %v275
    %321 = vmatpush1.bf16.msra.mxu0 %v274
    %322 = vmatprep.subr.bf16.mxu0 %v278
    %323 = vmatpush1.bf16.msra.mxu0 %v277
    %324 = vmatprep.subr.bf16.mxu0 %v281
    %325 = vmatpush1.bf16.msra.mxu0 %v280
    %326 = vmatprep.subr.bf16.mxu0 %v284
    %327 = vmatpush1.bf16.msra.mxu0 %v283
    %328 = vmatprep.subr.bf16.mxu0 %v287
    %329 = vmatpush1.bf16.msra.mxu0 %v286
    %330 = vmatprep.subr.bf16.mxu0 %v290
    %331 = vmatpush1.bf16.msra.mxu0 %v289
    %332 = vmatprep.subr.bf16.mxu0 0
    %333 = vmatpush1.bf16.msra.mxu0 0
    %334 = vmatprep.subr.bf16.mxu0 0
    %335 = vmatpush1.bf16.msra.mxu0 0
    %336 = vmatprep.subr.bf16.mxu0 0
    %337 = vmatpush1.bf16.msra.mxu0 0
    %338 = vmatprep.subr.bf16.mxu0 0
    %339 = vmatpush1.bf16.msra.mxu0 0
    %340 = vmatprep.subr.bf16.mxu0 0
    %341 = vmatpush1.bf16.msra.mxu0 0
    %342 = vmatprep.subr.bf16.mxu0 0
    %343 = vmatpush1.bf16.msra.mxu0 0
    %344 = vmatprep.subr.bf16.mxu0 0
    %345 = vmatpush1.bf16.msra.mxu0 0
    %346 = vmatprep.subr.bf16.mxu0 0
    %347 = vmatpush1.bf16.msra.mxu0 0
    %348 = vmatprep.mubr.bf16.mxu0 0
    %349 = vmatmul.mubr.bf16.gmra.mrb[0].mxu0 %v187
    %v350 = vpop.f32.mrb[0].mxu0
    %v351 = vadd.f32 0.0, %v350
    %v352 = vpop.f32.mrb[0].mxu0
    %v353 = vadd.f32 0.0, %v352
    %v354 = vpop.f32.mrb[0].mxu0
    %v355 = vpop.f32.mrb[0].mxu0
    %356 = vdwg.mxu0
    %357 = vmatprep.subr.bf16.mxu0 0
    %358 = vmatpush1.bf16.msra.mxu0 %v270
    %359 = vmatprep.subr.bf16.mxu0 0
    %360 = vmatpush1.bf16.msra.mxu0 %v273
    %361 = vmatprep.subr.bf16.mxu0 0
    %362 = vmatpush1.bf16.msra.mxu0 %v276
    %363 = vmatprep.subr.bf16.mxu0 0
    %364 = vmatpush1.bf16.msra.mxu0 %v279
    %365 = vmatprep.subr.bf16.mxu0 0
    %366 = vmatpush1.bf16.msra.mxu0 %v282
    %367 = vmatprep.subr.bf16.mxu0 0
    %368 = vmatpush1.bf16.msra.mxu0 %v285
    %369 = vmatprep.subr.bf16.mxu0 0
    %370 = vmatpush1.bf16.msra.mxu0 %v288
    %371 = vmatprep.subr.bf16.mxu0 0
    %372 = vmatpush1.bf16.msra.mxu0 %v291
    %373 = vmatprep.subr.bf16.mxu0 0
    %374 = vmatpush1.bf16.msra.mxu0 0
    %375 = vmatprep.subr.bf16.mxu0 0
    %376 = vmatpush1.bf16.msra.mxu0 0
    %377 = vmatprep.subr.bf16.mxu0 0
    %378 = vmatpush1.bf16.msra.mxu0 0
    %379 = vmatprep.subr.bf16.mxu0 0
    %380 = vmatpush1.bf16.msra.mxu0 0
    %381 = vmatprep.subr.bf16.mxu0 0
    %382 = vmatpush1.bf16.msra.mxu0 0
    %383 = vmatprep.subr.bf16.mxu0 0
    %384 = vmatpush1.bf16.msra.mxu0 0
    %385 = vmatprep.subr.bf16.mxu0 0
    %386 = vmatpush1.bf16.msra.mxu0 0
    %387 = vmatprep.subr.bf16.mxu0 0
    %388 = vmatpush1.bf16.msra.mxu0 0
    %389 = vmatprep.mubr.bf16.mxu0 0
    %390 = vmatmul.mubr.bf16.gmra.mrb[0].mxu0 %v187
    %v391 = vpop.f32.mrb[0].mxu0
    %v392 = vadd.f32 0.0, %v391
    %v393 = vpop.f32.mrb[0].mxu0
    %v394 = vpop.f32.mrb[0].mxu0
    %v395 = vpop.f32.mrb[0].mxu0
    %396 = vdwg.mxu0
    %v429 = vunpack.c.l.b16 %v65
    %v430 = vunpack.c.h.b16 %v65
    %v431 = vunpack.c.l.b16 %v66
    %v432 = vunpack.c.l.b16 %v67
    %v433 = vunpack.c.h.b16 %v67
    %v434 = vunpack.c.l.b16 %v68
    %v435 = vunpack.c.l.b16 %v69
    %v436 = vunpack.c.h.b16 %v69
    %v437 = vunpack.c.l.b16 %v70
    %v438 = vunpack.c.l.b16 %v71
    %v439 = vunpack.c.h.b16 %v71
    %v440 = vunpack.c.l.b16 %v72
    %v441 = vunpack.c.l.b16 %v73
    %v442 = vunpack.c.h.b16 %v73
    %v443 = vunpack.c.l.b16 %v74
    %v444 = vunpack.c.l.b16 %v75
    %v445 = vunpack.c.h.b16 %v75
    %v446 = vunpack.c.l.b16 %v76
    %v447 = vunpack.c.l.b16 %v77
    %v448 = vunpack.c.h.b16 %v77
    %v449 = vunpack.c.l.b16 %v78
    %v450 = vunpack.c.l.b16 %v79
    %v451 = vunpack.c.h.b16 %v79
    %v452 = vunpack.c.l.b16 %v80
    %v453 = vunpack.c.l.b16 %v81
    %v454 = vunpack.c.h.b16 %v81
    %v455 = vunpack.c.l.b16 %v82
    %v456 = vunpack.c.l.b16 %v83
    %v457 = vunpack.c.h.b16 %v83
    %v458 = vunpack.c.l.b16 %v84
    %v459 = vunpack.c.l.b16 %v85
    %v460 = vunpack.c.h.b16 %v85
    %v461 = vunpack.c.l.b16 %v86
    %v462 = vunpack.c.l.b16 %v87
    %v463 = vunpack.c.h.b16 %v87
    %v464 = vunpack.c.l.b16 %v88
    %v465 = vunpack.c.l.b16 %v89
    %v466 = vunpack.c.h.b16 %v89
    %v467 = vunpack.c.l.b16 %v90
    %v468 = vunpack.c.l.b16 %v91
    %v469 = vunpack.c.h.b16 %v91
    %v470 = vunpack.c.l.b16 %v92
    %v471 = vunpack.c.l.b16 %v93
    %v472 = vunpack.c.h.b16 %v93
    %v473 = vunpack.c.l.b16 %v94
    %v474 = vunpack.c.l.b16 %v95
    %v475 = vunpack.c.h.b16 %v95
    %v476 = vunpack.c.l.b16 %v96
    %v477 = vpack.c.b16 %v432, %v429
    %v478 = vpack.c.b16 %v433, %v430
    %v479 = vpack.c.b16 %v434, %v431
    %v480 = vpack.c.b16 %v438, %v435
    %v481 = vpack.c.b16 %v439, %v436
    %v482 = vpack.c.b16 %v440, %v437
    %v483 = vpack.c.b16 %v444, %v441
    %v484 = vpack.c.b16 %v445, %v442
    %v485 = vpack.c.b16 %v446, %v443
    %v486 = vpack.c.b16 %v450, %v447
    %v487 = vpack.c.b16 %v451, %v448
    %v488 = vpack.c.b16 %v452, %v449
    %v489 = vpack.c.b16 %v456, %v453
    %v490 = vpack.c.b16 %v457, %v454
    %v491 = vpack.c.b16 %v458, %v455
    %v492 = vpack.c.b16 %v462, %v459
    %v493 = vpack.c.b16 %v463, %v460
    %v494 = vpack.c.b16 %v464, %v461
    %v495 = vpack.c.b16 %v468, %v465
    %v496 = vpack.c.b16 %v469, %v466
    %v497 = vpack.c.b16 %v470, %v467
    %v498 = vpack.c.b16 %v474, %v471
    %v499 = vpack.c.b16 %v475, %v472
    %v500 = vpack.c.b16 %v476, %v473
    %525 = vmatprep.subr.bf16.mxu0 %v478
    %526 = vmatpush1.bf16.msra.mxu0 %v477
    %527 = vmatprep.subr.bf16.mxu0 %v481
    %528 = vmatpush1.bf16.msra.mxu0 %v480
    %529 = vmatprep.subr.bf16.mxu0 %v484
    %530 = vmatpush1.bf16.msra.mxu0 %v483
    %531 = vmatprep.subr.bf16.mxu0 %v487
    %532 = vmatpush1.bf16.msra.mxu0 %v486
    %533 = vmatprep.subr.bf16.mxu0 %v490
    %534 = vmatpush1.bf16.msra.mxu0 %v489
    %535 = vmatprep.subr.bf16.mxu0 %v493
    %536 = vmatpush1.bf16.msra.mxu0 %v492
    %537 = vmatprep.subr.bf16.mxu0 %v496
    %538 = vmatpush1.bf16.msra.mxu0 %v495
    %539 = vmatprep.subr.bf16.mxu0 %v499
    %540 = vmatpush1.bf16.msra.mxu0 %v498
    %541 = vmatprep.subr.bf16.mxu0 0
    %542 = vmatpush1.bf16.msra.mxu0 0
    %543 = vmatprep.subr.bf16.mxu0 0
    %544 = vmatpush1.bf16.msra.mxu0 0
    %545 = vmatprep.subr.bf16.mxu0 0
    %546 = vmatpush1.bf16.msra.mxu0 0
    %547 = vmatprep.subr.bf16.mxu0 0
    %548 = vmatpush1.bf16.msra.mxu0 0
    %549 = vmatprep.subr.bf16.mxu0 0
    %550 = vmatpush1.bf16.msra.mxu0 0
    %551 = vmatprep.subr.bf16.mxu0 0
    %552 = vmatpush1.bf16.msra.mxu0 0
    %553 = vmatprep.subr.bf16.mxu0 0
    %554 = vmatpush1.bf16.msra.mxu0 0
    %555 = vmatprep.subr.bf16.mxu0 0
    %556 = vmatpush1.bf16.msra.mxu0 0
    %557 = vmatprep.mubr.bf16.mxu0 0
    %558 = vmatmul.mubr.bf16.gmra.mrb[0].mxu0 %v185
    %v559 = vpop.f32.mrb[0].mxu0
    %v560 = vadd.f32 %v351, %v559
    %v561 = vpop.f32.mrb[0].mxu0
    %v562 = vadd.f32 %v353, %v561
    %v563 = vpop.f32.mrb[0].mxu0
    %v564 = vpop.f32.mrb[0].mxu0
    %565 = vdwg.mxu0
    %566 = vmatprep.subr.bf16.mxu0 0
    %567 = vmatpush1.bf16.msra.mxu0 %v479
    %568 = vmatprep.subr.bf16.mxu0 0
    %569 = vmatpush1.bf16.msra.mxu0 %v482
    %570 = vmatprep.subr.bf16.mxu0 0
    %571 = vmatpush1.bf16.msra.mxu0 %v485
    %572 = vmatprep.subr.bf16.mxu0 0
    %573 = vmatpush1.bf16.msra.mxu0 %v488
    %574 = vmatprep.subr.bf16.mxu0 0
    %575 = vmatpush1.bf16.msra.mxu0 %v491
    %576 = vmatprep.subr.bf16.mxu0 0
    %577 = vmatpush1.bf16.msra.mxu0 %v494
    %578 = vmatprep.subr.bf16.mxu0 0
    %579 = vmatpush1.bf16.msra.mxu0 %v497
    %580 = vmatprep.subr.bf16.mxu0 0
    %581 = vmatpush1.bf16.msra.mxu0 %v500
    %582 = vmatprep.subr.bf16.mxu0 0
    %583 = vmatpush1.bf16.msra.mxu0 0
    %584 = vmatprep.subr.bf16.mxu0 0
    %585 = vmatpush1.bf16.msra.mxu0 0
    %586 = vmatprep.subr.bf16.mxu0 0
    %587 = vmatpush1.bf16.msra.mxu0 0
    %588 = vmatprep.subr.bf16.mxu0 0
    %589 = vmatpush1.bf16.msra.mxu0 0
    %590 = vmatprep.subr.bf16.mxu0 0
    %591 = vmatpush1.bf16.msra.mxu0 0
    %592 = vmatprep.subr.bf16.mxu0 0
    %593 = vmatpush1.bf16.msra.mxu0 0
    %594 = vmatprep.subr.bf16.mxu0 0
    %595 = vmatpush1.bf16.msra.mxu0 0
    %596 = vmatprep.subr.bf16.mxu0 0
    %597 = vmatpush1.bf16.msra.mxu0 0
    %598 = vmatprep.mubr.bf16.mxu0 0
    %599 = vmatmul.mubr.bf16.gmra.mrb[0].mxu0 %v185
    %v600 = vpop.f32.mrb[0].mxu0
    %v601 = vadd.f32 %v392, %v600
    %v602 = vpop.f32.mrb[0].mxu0
    %v603 = vpop.f32.mrb[0].mxu0
    %v604 = vpop.f32.mrb[0].mxu0
    %605 = vdwg.mxu0
    %v606 = vadd.f32 %v560, %v166
    %v607 = vadd.f32 %v562, %v170
    %v608 = vadd.f32 %v601, %v174
    %v641 = vunpack.c.l.b16 %v129
    %v642 = vunpack.c.h.b16 %v129
    %v643 = vunpack.c.l.b16 %v130
    %v644 = vunpack.c.l.b16 %v131
    %v645 = vunpack.c.h.b16 %v131
    %v646 = vunpack.c.l.b16 %v132
    %v647 = vunpack.c.l.b16 %v133
    %v648 = vunpack.c.h.b16 %v133
    %v649 = vunpack.c.l.b16 %v134
    %v650 = vunpack.c.l.b16 %v135
    %v651 = vunpack.c.h.b16 %v135
    %v652 = vunpack.c.l.b16 %v136
    %v653 = vunpack.c.l.b16 %v137
    %v654 = vunpack.c.h.b16 %v137
    %v655 = vunpack.c.l.b16 %v138
    %v656 = vunpack.c.l.b16 %v139
    %v657 = vunpack.c.h.b16 %v139
    %v658 = vunpack.c.l.b16 %v140
    %v659 = vunpack.c.l.b16 %v141
    %v660 = vunpack.c.h.b16 %v141
    %v661 = vunpack.c.l.b16 %v142
    %v662 = vunpack.c.l.b16 %v143
    %v663 = vunpack.c.h.b16 %v143
    %v664 = vunpack.c.l.b16 %v144
    %v665 = vunpack.c.l.b16 %v145
    %v666 = vunpack.c.h.b16 %v145
    %v667 = vunpack.c.l.b16 %v146
    %v668 = vunpack.c.l.b16 %v147
    %v669 = vunpack.c.h.b16 %v147
    %v670 = vunpack.c.l.b16 %v148
    %v671 = vunpack.c.l.b16 %v149
    %v672 = vunpack.c.h.b16 %v149
    %v673 = vunpack.c.l.b16 %v150
    %v674 = vunpack.c.l.b16 %v151
    %v675 = vunpack.c.h.b16 %v151
    %v676 = vunpack.c.l.b16 %v152
    %v677 = vunpack.c.l.b16 %v153
    %v678 = vunpack.c.h.b16 %v153
    %v679 = vunpack.c.l.b16 %v154
    %v680 = vunpack.c.l.b16 %v155
    %v681 = vunpack.c.h.b16 %v155
    %v682 = vunpack.c.l.b16 %v156
    %v683 = vunpack.c.l.b16 %v157
    %v684 = vunpack.c.h.b16 %v157
    %v685 = vunpack.c.l.b16 %v158
    %v686 = vunpack.c.l.b16 %v159
    %v687 = vunpack.c.h.b16 %v159
    %v688 = vunpack.c.l.b16 %v160
    %v689 = vpack.c.b16 %v644, %v641
    %v690 = vpack.c.b16 %v645, %v642
    %v691 = vpack.c.b16 %v646, %v643
    %v692 = vpack.c.b16 %v650, %v647
    %v693 = vpack.c.b16 %v651, %v648
    %v694 = vpack.c.b16 %v652, %v649
    %v695 = vpack.c.b16 %v656, %v653
    %v696 = vpack.c.b16 %v657, %v654
    %v697 = vpack.c.b16 %v658, %v655
    %v698 = vpack.c.b16 %v662, %v659
    %v699 = vpack.c.b16 %v663, %v660
    %v700 = vpack.c.b16 %v664, %v661
    %v701 = vpack.c.b16 %v668, %v665
    %v702 = vpack.c.b16 %v669, %v666
    %v703 = vpack.c.b16 %v670, %v667
    %v704 = vpack.c.b16 %v674, %v671
    %v705 = vpack.c.b16 %v675, %v672
    %v706 = vpack.c.b16 %v676, %v673
    %v707 = vpack.c.b16 %v680, %v677
    %v708 = vpack.c.b16 %v681, %v678
    %v709 = vpack.c.b16 %v682, %v679
    %v710 = vpack.c.b16 %v686, %v683
    %v711 = vpack.c.b16 %v687, %v684
    %v712 = vpack.c.b16 %v688, %v685
    %737 = vmatprep.subr.bf16.mxu0 %v690
    %738 = vmatpush1.bf16.msra.mxu0 %v689
    %739 = vmatprep.subr.bf16.mxu0 %v693
    %740 = vmatpush1.bf16.msra.mxu0 %v692
    %741 = vmatprep.subr.bf16.mxu0 %v696
    %742 = vmatpush1.bf16.msra.mxu0 %v695
    %743 = vmatprep.subr.bf16.mxu0 %v699
    %744 = vmatpush1.bf16.msra.mxu0 %v698
    %745 = vmatprep.subr.bf16.mxu0 %v702
    %746 = vmatpush1.bf16.msra.mxu0 %v701
    %747 = vmatprep.subr.bf16.mxu0 %v705
    %748 = vmatpush1.bf16.msra.mxu0 %v704
    %749 = vmatprep.subr.bf16.mxu0 %v708
    %750 = vmatpush1.bf16.msra.mxu0 %v707
    %751 = vmatprep.subr.bf16.mxu0 %v711
    %752 = vmatpush1.bf16.msra.mxu0 %v710
    %753 = vmatprep.subr.bf16.mxu0 0
    %754 = vmatpush1.bf16.msra.mxu0 0
    %755 = vmatprep.subr.bf16.mxu0 0
    %756 = vmatpush1.bf16.msra.mxu0 0
    %757 = vmatprep.subr.bf16.mxu0 0
    %758 = vmatpush1.bf16.msra.mxu0 0
    %759 = vmatprep.subr.bf16.mxu0 0
    %760 = vmatpush1.bf16.msra.mxu0 0
    %761 = vmatprep.subr.bf16.mxu0 0
    %762 = vmatpush1.bf16.msra.mxu0 0
    %763 = vmatprep.subr.bf16.mxu0 0
    %764 = vmatpush1.bf16.msra.mxu0 0
    %765 = vmatprep.subr.bf16.mxu0 0
    %766 = vmatpush1.bf16.msra.mxu0 0
    %767 = vmatprep.subr.bf16.mxu0 0
    %768 = vmatpush1.bf16.msra.mxu0 0
    %769 = vmatprep.mubr.bf16.mxu0 0
    %770 = vmatmul.mubr.bf16.gmra.mrb[0].mxu0 0
    %v771 = vpop.f32.mrb[0].mxu0
    %v772 = vadd.f32 0.0, %v771
    %v773 = vpop.f32.mrb[0].mxu0
    %v774 = vadd.f32 0.0, %v773
    %v775 = vpop.f32.mrb[0].mxu0
    %v776 = vpop.f32.mrb[0].mxu0
    %777 = vdwg.mxu0
    %778 = vmatprep.subr.bf16.mxu0 0
    %779 = vmatpush1.bf16.msra.mxu0 %v691
    %780 = vmatprep.subr.bf16.mxu0 0
    %781 = vmatpush1.bf16.msra.mxu0 %v694
    %782 = vmatprep.subr.bf16.mxu0 0
    %783 = vmatpush1.bf16.msra.mxu0 %v697
    %784 = vmatprep.subr.bf16.mxu0 0
    %785 = vmatpush1.bf16.msra.mxu0 %v700
    %786 = vmatprep.subr.bf16.mxu0 0
    %787 = vmatpush1.bf16.msra.mxu0 %v703
    %788 = vmatprep.subr.bf16.mxu0 0
    %789 = vmatpush1.bf16.msra.mxu0 %v706
    %790 = vmatprep.subr.bf16.mxu0 0
    %791 = vmatpush1.bf16.msra.mxu0 %v709
    %792 = vmatprep.subr.bf16.mxu0 0
    %793 = vmatpush1.bf16.msra.mxu0 %v712
    %794 = vmatprep.subr.bf16.mxu0 0
    %795 = vmatpush1.bf16.msra.mxu0 0
    %796 = vmatprep.subr.bf16.mxu0 0
    %797 = vmatpush1.bf16.msra.mxu0 0
    %798 = vmatprep.subr.bf16.mxu0 0
    %799 = vmatpush1.bf16.msra.mxu0 0
    %800 = vmatprep.subr.bf16.mxu0 0
    %801 = vmatpush1.bf16.msra.mxu0 0
    %802 = vmatprep.subr.bf16.mxu0 0
    %803 = vmatpush1.bf16.msra.mxu0 0
    %804 = vmatprep.subr.bf16.mxu0 0
    %805 = vmatpush1.bf16.msra.mxu0 0
    %806 = vmatprep.subr.bf16.mxu0 0
    %807 = vmatpush1.bf16.msra.mxu0 0
    %808 = vmatprep.subr.bf16.mxu0 0
    %809 = vmatpush1.bf16.msra.mxu0 0
    %810 = vmatprep.mubr.bf16.mxu0 0
    %811 = vmatmul.mubr.bf16.gmra.mrb[0].mxu0 0
    %v812 = vpop.f32.mrb[0].mxu0
    %v813 = vadd.f32 0.0, %v812
    %v814 = vpop.f32.mrb[0].mxu0
    %v815 = vpop.f32.mrb[0].mxu0
    %v816 = vpop.f32.mrb[0].mxu0
    %817 = vdwg.mxu0
    %v818 = vadd.f32 %v606, %v772
    %v819 = vxor.u32 %v818, 2147483648
    %v820 = vmul.f32 %v819, 1.442695
    %v821 = vpow.pop %v820
    %v822 = vadd.f32 %v821, 1.0
    %v823 = vrcp.pop %v822
    %v824 = vmul.f32 1.0, %v823
    %v825 = vadd.f32 %v607, %v774
    %v826 = vxor.u32 %v825, 2147483648
    %v827 = vmul.f32 %v826, 1.442695
    %v828 = vpow.pop %v827
    %v829 = vadd.f32 %v828, 1.0
    %v830 = vrcp.pop %v829
    %v831 = vmul.f32 1.0, %v830
    %v832 = vadd.f32 %v813, %v183
    %v833 = vmul.f32 %v824, %v832
    %v834 = vadd.f32 %v608, %v833
    %v835 = vtanh.pop %v834
    %v836 = vsub.f32 1.0, %v831
    %v837 = vmul.f32 %v836, %v835
    %v838 = vmul.f32 %v831, 0.0
    %v839 = vadd.f32 %v837, %v838
    %840 = vst [vmem:[%s6] sm:$0xff] %v839
    %s841 = scalar_lea.vmem %s0, 4
    %v842 = vld [vmem:[%s841] sm:$0xf]
    %s843 = scalar_lea.vmem %s0, 24
    %v844 = vld [vmem:[%s843] sm:$0xf]
    %845 = vmatprep.subr.bf16.mxu0 %v269
    %846 = vmatpush1.bf16.msra.mxu0 %v268
    %847 = vmatprep.subr.bf16.mxu0 %v272
    %848 = vmatpush1.bf16.msra.mxu0 %v271
    %849 = vmatprep.subr.bf16.mxu0 %v275
    %850 = vmatpush1.bf16.msra.mxu0 %v274
    %851 = vmatprep.subr.bf16.mxu0 %v278
    %852 = vmatpush1.bf16.msra.mxu0 %v277
    %853 = vmatprep.subr.bf16.mxu0 %v281
    %854 = vmatpush1.bf16.msra.mxu0 %v280
    %855 = vmatprep.subr.bf16.mxu0 %v284
    %856 = vmatpush1.bf16.msra.mxu0 %v283
    %857 = vmatprep.subr.bf16.mxu0 %v287
    %858 = vmatpush1.bf16.msra.mxu0 %v286
    %859 = vmatprep.subr.bf16.mxu0 %v290
    %860 = vmatpush1.bf16.msra.mxu0 %v289
    %861 = vmatprep.subr.bf16.mxu0 0
    %862 = vmatpush1.bf16.msra.mxu0 0
    %863 = vmatprep.subr.bf16.mxu0 0
    %864 = vmatpush1.bf16.msra.mxu0 0
    %865 = vmatprep.subr.bf16.mxu0 0
    %866 = vmatpush1.bf16.msra.mxu0 0
    %867 = vmatprep.subr.bf16.mxu0 0
    %868 = vmatpush1.bf16.msra.mxu0 0
    %869 = vmatprep.subr.bf16.mxu0 0
    %870 = vmatpush1.bf16.msra.mxu0 0
    %871 = vmatprep.subr.bf16.mxu0 0
    %872 = vmatpush1.bf16.msra.mxu0 0
    %873 = vmatprep.subr.bf16.mxu0 0
    %874 = vmatpush1.bf16.msra.mxu0 0
    %875 = vmatprep.subr.bf16.mxu0 0
    %876 = vmatpush1.bf16.msra.mxu0 0
    %877 = vmatprep.mubr.bf16.mxu0 0
    %878 = vmatmul.mubr.bf16.gmra.mrb[0].mxu0 %v844
    %v879 = vpop.f32.mrb[0].mxu0
    %v880 = vadd.f32 0.0, %v879
    %v881 = vpop.f32.mrb[0].mxu0
    %v882 = vadd.f32 0.0, %v881
    %v883 = vpop.f32.mrb[0].mxu0
    %v884 = vpop.f32.mrb[0].mxu0
    %885 = vdwg.mxu0
    %886 = vmatprep.subr.bf16.mxu0 0
    %887 = vmatpush1.bf16.msra.mxu0 %v270
    %888 = vmatprep.subr.bf16.mxu0 0
    %889 = vmatpush1.bf16.msra.mxu0 %v273
    %890 = vmatprep.subr.bf16.mxu0 0
    %891 = vmatpush1.bf16.msra.mxu0 %v276
    %892 = vmatprep.subr.bf16.mxu0 0
    %893 = vmatpush1.bf16.msra.mxu0 %v279
    %894 = vmatprep.subr.bf16.mxu0 0
    %895 = vmatpush1.bf16.msra.mxu0 %v282
    %896 = vmatprep.subr.bf16.mxu0 0
    %897 = vmatpush1.bf16.msra.mxu0 %v285
    %898 = vmatprep.subr.bf16.mxu0 0
    %899 = vmatpush1.bf16.msra.mxu0 %v288
    %900 = vmatprep.subr.bf16.mxu0 0
    %901 = vmatpush1.bf16.msra.mxu0 %v291
    %902 = vmatprep.subr.bf16.mxu0 0
    %903 = vmatpush1.bf16.msra.mxu0 0
    %904 = vmatprep.subr.bf16.mxu0 0
    %905 = vmatpush1.bf16.msra.mxu0 0
    %906 = vmatprep.subr.bf16.mxu0 0
    %907 = vmatpush1.bf16.msra.mxu0 0
    %908 = vmatprep.subr.bf16.mxu0 0
    %909 = vmatpush1.bf16.msra.mxu0 0
    %910 = vmatprep.subr.bf16.mxu0 0
    %911 = vmatpush1.bf16.msra.mxu0 0
    %912 = vmatprep.subr.bf16.mxu0 0
    %913 = vmatpush1.bf16.msra.mxu0 0
    %914 = vmatprep.subr.bf16.mxu0 0
    %915 = vmatpush1.bf16.msra.mxu0 0
    %916 = vmatprep.subr.bf16.mxu0 0
    %917 = vmatpush1.bf16.msra.mxu0 0
    %918 = vmatprep.mubr.bf16.mxu0 0
    %919 = vmatmul.mubr.bf16.gmra.mrb[0].mxu0 %v844
    %v920 = vpop.f32.mrb[0].mxu0
    %v921 = vadd.f32 0.0, %v920
    %v922 = vpop.f32.mrb[0].mxu0
    %v923 = vpop.f32.mrb[0].mxu0
    %v924 = vpop.f32.mrb[0].mxu0
    %925 = vdwg.mxu0
    %926 = vmatprep.subr.bf16.mxu0 %v478
    %927 = vmatpush1.bf16.msra.mxu0 %v477
    %928 = vmatprep.subr.bf16.mxu0 %v481
    %929 = vmatpush1.bf16.msra.mxu0 %v480
    %930 = vmatprep.subr.bf16.mxu0 %v484
    %931 = vmatpush1.bf16.msra.mxu0 %v483
    %932 = vmatprep.subr.bf16.mxu0 %v487
    %933 = vmatpush1.bf16.msra.mxu0 %v486
    %934 = vmatprep.subr.bf16.mxu0 %v490
    %935 = vmatpush1.bf16.msra.mxu0 %v489
    %936 = vmatprep.subr.bf16.mxu0 %v493
    %937 = vmatpush1.bf16.msra.mxu0 %v492
    %938 = vmatprep.subr.bf16.mxu0 %v496
    %939 = vmatpush1.bf16.msra.mxu0 %v495
    %940 = vmatprep.subr.bf16.mxu0 %v499
    %941 = vmatpush1.bf16.msra.mxu0 %v498
    %942 = vmatprep.subr.bf16.mxu0 0
    %943 = vmatpush1.bf16.msra.mxu0 0
    %944 = vmatprep.subr.bf16.mxu0 0
    %945 = vmatpush1.bf16.msra.mxu0 0
    %946 = vmatprep.subr.bf16.mxu0 0
    %947 = vmatpush1.bf16.msra.mxu0 0
    %948 = vmatprep.subr.bf16.mxu0 0
    %949 = vmatpush1.bf16.msra.mxu0 0
    %950 = vmatprep.subr.bf16.mxu0 0
    %951 = vmatpush1.bf16.msra.mxu0 0
    %952 = vmatprep.subr.bf16.mxu0 0
    %953 = vmatpush1.bf16.msra.mxu0 0
    %954 = vmatprep.subr.bf16.mxu0 0
    %955 = vmatpush1.bf16.msra.mxu0 0
    %956 = vmatprep.subr.bf16.mxu0 0
    %957 = vmatpush1.bf16.msra.mxu0 0
    %958 = vmatprep.mubr.bf16.mxu0 0
    %959 = vmatmul.mubr.bf16.gmra.mrb[0].mxu0 %v842
    %v960 = vpop.f32.mrb[0].mxu0
    %v961 = vadd.f32 %v880, %v960
    %v962 = vpop.f32.mrb[0].mxu0
    %v963 = vadd.f32 %v882, %v962
    %v964 = vpop.f32.mrb[0].mxu0
    %v965 = vpop.f32.mrb[0].mxu0
    %966 = vdwg.mxu0
    %967 = vmatprep.subr.bf16.mxu0 0
    %968 = vmatpush1.bf16.msra.mxu0 %v479
    %969 = vmatprep.subr.bf16.mxu0 0
    %970 = vmatpush1.bf16.msra.mxu0 %v482
    %971 = vmatprep.subr.bf16.mxu0 0
    %972 = vmatpush1.bf16.msra.mxu0 %v485
    %973 = vmatprep.subr.bf16.mxu0 0
    %974 = vmatpush1.bf16.msra.mxu0 %v488
    %975 = vmatprep.subr.bf16.mxu0 0
    %976 = vmatpush1.bf16.msra.mxu0 %v491
    %977 = vmatprep.subr.bf16.mxu0 0
    %978 = vmatpush1.bf16.msra.mxu0 %v494
    %979 = vmatprep.subr.bf16.mxu0 0
    %980 = vmatpush1.bf16.msra.mxu0 %v497
    %981 = vmatprep.subr.bf16.mxu0 0
    %982 = vmatpush1.bf16.msra.mxu0 %v500
    %983 = vmatprep.subr.bf16.mxu0 0
    %984 = vmatpush1.bf16.msra.mxu0 0
    %985 = vmatprep.subr.bf16.mxu0 0
    %986 = vmatpush1.bf16.msra.mxu0 0
    %987 = vmatprep.subr.bf16.mxu0 0
    %988 = vmatpush1.bf16.msra.mxu0 0
    %989 = vmatprep.subr.bf16.mxu0 0
    %990 = vmatpush1.bf16.msra.mxu0 0
    %991 = vmatprep.subr.bf16.mxu0 0
    %992 = vmatpush1.bf16.msra.mxu0 0
    %993 = vmatprep.subr.bf16.mxu0 0
    %994 = vmatpush1.bf16.msra.mxu0 0
    %995 = vmatprep.subr.bf16.mxu0 0
    %996 = vmatpush1.bf16.msra.mxu0 0
    %997 = vmatprep.subr.bf16.mxu0 0
    %998 = vmatpush1.bf16.msra.mxu0 0
    %999 = vmatprep.mubr.bf16.mxu0 0
    %1000 = vmatmul.mubr.bf16.gmra.mrb[0].mxu0 %v842
    %v1001 = vpop.f32.mrb[0].mxu0
    %v1002 = vadd.f32 %v921, %v1001
    %v1003 = vpop.f32.mrb[0].mxu0
    %v1004 = vpop.f32.mrb[0].mxu0
    %v1005 = vpop.f32.mrb[0].mxu0
    %1006 = vdwg.mxu0
    %v1007 = vadd.f32 %v961, %v166
    %v1008 = vadd.f32 %v963, %v170
    %v1009 = vadd.f32 %v1002, %v174
    %v1010 = vpack.c.bf16 %v839, %v839
    %1011 = vmatprep.subr.bf16.mxu0 %v690
    %1012 = vmatpush1.bf16.msra.mxu0 %v689
    %1013 = vmatprep.subr.bf16.mxu0 %v693
    %1014 = vmatpush1.bf16.msra.mxu0 %v692
    %1015 = vmatprep.subr.bf16.mxu0 %v696
    %1016 = vmatpush1.bf16.msra.mxu0 %v695
    %1017 = vmatprep.subr.bf16.mxu0 %v699
    %1018 = vmatpush1.bf16.msra.mxu0 %v698
    %1019 = vmatprep.subr.bf16.mxu0 %v702
    %1020 = vmatpush1.bf16.msra.mxu0 %v701
    %1021 = vmatprep.subr.bf16.mxu0 %v705
    %1022 = vmatpush1.bf16.msra.mxu0 %v704
    %1023 = vmatprep.subr.bf16.mxu0 %v708
    %1024 = vmatpush1.bf16.msra.mxu0 %v707
    %1025 = vmatprep.subr.bf16.mxu0 %v711
    %1026 = vmatpush1.bf16.msra.mxu0 %v710
    %1027 = vmatprep.subr.bf16.mxu0 0
    %1028 = vmatpush1.bf16.msra.mxu0 0
    %1029 = vmatprep.subr.bf16.mxu0 0
    %1030 = vmatpush1.bf16.msra.mxu0 0
    %1031 = vmatprep.subr.bf16.mxu0 0
    %1032 = vmatpush1.bf16.msra.mxu0 0
    %1033 = vmatprep.subr.bf16.mxu0 0
    %1034 = vmatpush1.bf16.msra.mxu0 0
    %1035 = vmatprep.subr.bf16.mxu0 0
    %1036 = vmatpush1.bf16.msra.mxu0 0
    %1037 = vmatprep.subr.bf16.mxu0 0
    %1038 = vmatpush1.bf16.msra.mxu0 0
    %1039 = vmatprep.subr.bf16.mxu0 0
    %1040 = vmatpush1.bf16.msra.mxu0 0
    %1041 = vmatprep.subr.bf16.mxu0 0
    %1042 = vmatpush1.bf16.msra.mxu0 0
    %1043 = vmatprep.mubr.bf16.mxu0 0
    %1044 = vmatmul.mubr.bf16.gmra.mrb[0].mxu0 %v1010
    %v1045 = vpop.f32.mrb[0].mxu0
    %v1046 = vadd.f32 0.0, %v1045
    %v1047 = vpop.f32.mrb[0].mxu0
    %v1048 = vadd.f32 0.0, %v1047
    %v1049 = vpop.f32.mrb[0].mxu0
    %v1050 = vpop.f32.mrb[0].mxu0
    %1051 = vdwg.mxu0
    %1052 = vmatprep.subr.bf16.mxu0 0
    %1053 = vmatpush1.bf16.msra.mxu0 %v691
    %1054 = vmatprep.subr.bf16.mxu0 0
    %1055 = vmatpush1.bf16.msra.mxu0 %v694
    %1056 = vmatprep.subr.bf16.mxu0 0
    %1057 = vmatpush1.bf16.msra.mxu0 %v697
    %1058 = vmatprep.subr.bf16.mxu0 0
    %1059 = vmatpush1.bf16.msra.mxu0 %v700
    %1060 = vmatprep.subr.bf16.mxu0 0
    %1061 = vmatpush1.bf16.msra.mxu0 %v703
    %1062 = vmatprep.subr.bf16.mxu0 0
    %1063 = vmatpush1.bf16.msra.mxu0 %v706
    %1064 = vmatprep.subr.bf16.mxu0 0
    %1065 = vmatpush1.bf16.msra.mxu0 %v709
    %1066 = vmatprep.subr.bf16.mxu0 0
    %1067 = vmatpush1.bf16.msra.mxu0 %v712
    %1068 = vmatprep.subr.bf16.mxu0 0
    %1069 = vmatpush1.bf16.msra.mxu0 0
    %1070 = vmatprep.subr.bf16.mxu0 0
    %1071 = vmatpush1.bf16.msra.mxu0 0
    %1072 = vmatprep.subr.bf16.mxu0 0
    %1073 = vmatpush1.bf16.msra.mxu0 0
    %1074 = vmatprep.subr.bf16.mxu0 0
    %1075 = vmatpush1.bf16.msra.mxu0 0
    %1076 = vmatprep.subr.bf16.mxu0 0
    %1077 = vmatpush1.bf16.msra.mxu0 0
    %1078 = vmatprep.subr.bf16.mxu0 0
    %1079 = vmatpush1.bf16.msra.mxu0 0
    %1080 = vmatprep.subr.bf16.mxu0 0
    %1081 = vmatpush1.bf16.msra.mxu0 0
    %1082 = vmatprep.subr.bf16.mxu0 0
    %1083 = vmatpush1.bf16.msra.mxu0 0
    %1084 = vmatprep.mubr.bf16.mxu0 0
    %1085 = vmatmul.mubr.bf16.gmra.mrb[0].mxu0 %v1010
    %v1086 = vpop.f32.mrb[0].mxu0
    %v1087 = vadd.f32 0.0, %v1086
    %v1088 = vpop.f32.mrb[0].mxu0
    %v1089 = vpop.f32.mrb[0].mxu0
    %v1090 = vpop.f32.mrb[0].mxu0
    %1091 = vdwg.mxu0
    %v1092 = vadd.f32 %v1007, %v1046
    %v1093 = vxor.u32 %v1092, 2147483648
    %v1094 = vmul.f32 %v1093, 1.442695
    %v1095 = vpow.pop %v1094
    %v1096 = vadd.f32 %v1095, 1.0
    %v1097 = vrcp.pop %v1096
    %v1098 = vmul.f32 1.0, %v1097
    %v1099 = vadd.f32 %v1008, %v1048
    %v1100 = vxor.u32 %v1099, 2147483648
    %v1101 = vmul.f32 %v1100, 1.442695
    %v1102 = vpow.pop %v1101
    %v1103 = vadd.f32 %v1102, 1.0
    %v1104 = vrcp.pop %v1103
    %v1105 = vmul.f32 1.0, %v1104
    %v1106 = vadd.f32 %v1087, %v183
    %v1107 = vmul.f32 %v1098, %v1106
    %v1108 = vadd.f32 %v1009, %v1107
    %v1109 = vtanh.pop %v1108
    %v1110 = vsub.f32 1.0, %v1105
    %v1111 = vmul.f32 %v1110, %v1109
    %v1112 = vmul.f32 %v1105, %v839
    %v1113 = vadd.f32 %v1111, %v1112
    %s1114 = scalar_lea.vmem %s6, 8
    %1115 = vst [vmem:[%s1114] sm:$0xff] %v1113
    %s1116 = scalar_lea.vmem %s0, 8
    %v1117 = vld [vmem:[%s1116] sm:$0xf]
    %s1118 = scalar_lea.vmem %s0, 20
    %v1119 = vld [vmem:[%s1118] sm:$0xf]
    %1120 = vmatprep.subr.bf16.mxu0 %v269
    %1121 = vmatpush1.bf16.msra.mxu0 %v268
    %1122 = vmatprep.subr.bf16.mxu0 %v272
    %1123 = vmatpush1.bf16.msra.mxu0 %v271
    %1124 = vmatprep.subr.bf16.mxu0 %v275
    %1125 = vmatpush1.bf16.msra.mxu0 %v274
    %1126 = vmatprep.subr.bf16.mxu0 %v278
    %1127 = vmatpush1.bf16.msra.mxu0 %v277
    %1128 = vmatprep.subr.bf16.mxu0 %v281
    %1129 = vmatpush1.bf16.msra.mxu0 %v280
    %1130 = vmatprep.subr.bf16.mxu0 %v284
    %1131 = vmatpush1.bf16.msra.mxu0 %v283
    %1132 = vmatprep.subr.bf16.mxu0 %v287
    %1133 = vmatpush1.bf16.msra.mxu0 %v286
    %1134 = vmatprep.subr.bf16.mxu0 %v290
    %1135 = vmatpush1.bf16.msra.mxu0 %v289
    %1136 = vmatprep.subr.bf16.mxu0 0
    %1137 = vmatpush1.bf16.msra.mxu0 0
    %1138 = vmatprep.subr.bf16.mxu0 0
    %1139 = vmatpush1.bf16.msra.mxu0 0
    %1140 = vmatprep.subr.bf16.mxu0 0
    %1141 = vmatpush1.bf16.msra.mxu0 0
    %1142 = vmatprep.subr.bf16.mxu0 0
    %1143 = vmatpush1.bf16.msra.mxu0 0
    %1144 = vmatprep.subr.bf16.mxu0 0
    %1145 = vmatpush1.bf16.msra.mxu0 0
    %1146 = vmatprep.subr.bf16.mxu0 0
    %1147 = vmatpush1.bf16.msra.mxu0 0
    %1148 = vmatprep.subr.bf16.mxu0 0
    %1149 = vmatpush1.bf16.msra.mxu0 0
    %1150 = vmatprep.subr.bf16.mxu0 0
    %1151 = vmatpush1.bf16.msra.mxu0 0
    %1152 = vmatprep.mubr.bf16.mxu0 0
    %1153 = vmatmul.mubr.bf16.gmra.mrb[0].mxu0 %v1119
    %v1154 = vpop.f32.mrb[0].mxu0
    %v1155 = vadd.f32 0.0, %v1154
    %v1156 = vpop.f32.mrb[0].mxu0
    %v1157 = vadd.f32 0.0, %v1156
    %v1158 = vpop.f32.mrb[0].mxu0
    %v1159 = vpop.f32.mrb[0].mxu0
    %1160 = vdwg.mxu0
    %1161 = vmatprep.subr.bf16.mxu0 0
    %1162 = vmatpush1.bf16.msra.mxu0 %v270
    %1163 = vmatprep.subr.bf16.mxu0 0
    %1164 = vmatpush1.bf16.msra.mxu0 %v273
    %1165 = vmatprep.subr.bf16.mxu0 0
    %1166 = vmatpush1.bf16.msra.mxu0 %v276
    %1167 = vmatprep.subr.bf16.mxu0 0
    %1168 = vmatpush1.bf16.msra.mxu0 %v279
    %1169 = vmatprep.subr.bf16.mxu0 0
    %1170 = vmatpush1.bf16.msra.mxu0 %v282
    %1171 = vmatprep.subr.bf16.mxu0 0
    %1172 = vmatpush1.bf16.msra.mxu0 %v285
    %1173 = vmatprep.subr.bf16.mxu0 0
    %1174 = vmatpush1.bf16.msra.mxu0 %v288
    %1175 = vmatprep.subr.bf16.mxu0 0
    %1176 = vmatpush1.bf16.msra.mxu0 %v291
    %1177 = vmatprep.subr.bf16.mxu0 0
    %1178 = vmatpush1.bf16.msra.mxu0 0
    %1179 = vmatprep.subr.bf16.mxu0 0
    %1180 = vmatpush1.bf16.msra.mxu0 0
    %1181 = vmatprep.subr.bf16.mxu0 0
    %1182 = vmatpush1.bf16.msra.mxu0 0
    %1183 = vmatprep.subr.bf16.mxu0 0
    %1184 = vmatpush1.bf16.msra.mxu0 0
    %1185 = vmatprep.subr.bf16.mxu0 0
    %1186 = vmatpush1.bf16.msra.mxu0 0
    %1187 = vmatprep.subr.bf16.mxu0 0
    %1188 = vmatpush1.bf16.msra.mxu0 0
    %1189 = vmatprep.subr.bf16.mxu0 0
    %1190 = vmatpush1.bf16.msra.mxu0 0
    %1191 = vmatprep.subr.bf16.mxu0 0
    %1192 = vmatpush1.bf16.msra.mxu0 0
    %1193 = vmatprep.mubr.bf16.mxu0 0
    %1194 = vmatmul.mubr.bf16.gmra.mrb[0].mxu0 %v1119
    %v1195 = vpop.f32.mrb[0].mxu0
    %v1196 = vadd.f32 0.0, %v1195
    %v1197 = vpop.f32.mrb[0].mxu0
    %v1198 = vpop.f32.mrb[0].mxu0
    %v1199 = vpop.f32.mrb[0].mxu0
    %1200 = vdwg.mxu0
    %1201 = vmatprep.subr.bf16.mxu0 %v478
    %1202 = vmatpush1.bf16.msra.mxu0 %v477
    %1203 = vmatprep.subr.bf16.mxu0 %v481
    %1204 = vmatpush1.bf16.msra.mxu0 %v480
    %1205 = vmatprep.subr.bf16.mxu0 %v484
    %1206 = vmatpush1.bf16.msra.mxu0 %v483
    %1207 = vmatprep.subr.bf16.mxu0 %v487
    %1208 = vmatpush1.bf16.msra.mxu0 %v486
    %1209 = vmatprep.subr.bf16.mxu0 %v490
    %1210 = vmatpush1.bf16.msra.mxu0 %v489
    %1211 = vmatprep.subr.bf16.mxu0 %v493
    %1212 = vmatpush1.bf16.msra.mxu0 %v492
    %1213 = vmatprep.subr.bf16.mxu0 %v496
    %1214 = vmatpush1.bf16.msra.mxu0 %v495
    %1215 = vmatprep.subr.bf16.mxu0 %v499
    %1216 = vmatpush1.bf16.msra.mxu0 %v498
    %1217 = vmatprep.subr.bf16.mxu0 0
    %1218 = vmatpush1.bf16.msra.mxu0 0
    %1219 = vmatprep.subr.bf16.mxu0 0
    %1220 = vmatpush1.bf16.msra.mxu0 0
    %1221 = vmatprep.subr.bf16.mxu0 0
    %1222 = vmatpush1.bf16.msra.mxu0 0
    %1223 = vmatprep.subr.bf16.mxu0 0
    %1224 = vmatpush1.bf16.msra.mxu0 0
    %1225 = vmatprep.subr.bf16.mxu0 0
    %1226 = vmatpush1.bf16.msra.mxu0 0
    %1227 = vmatprep.subr.bf16.mxu0 0
    %1228 = vmatpush1.bf16.msra.mxu0 0
    %1229 = vmatprep.subr.bf16.mxu0 0
    %1230 = vmatpush1.bf16.msra.mxu0 0
    %1231 = vmatprep.subr.bf16.mxu0 0
    %1232 = vmatpush1.bf16.msra.mxu0 0
    %1233 = vmatprep.mubr.bf16.mxu0 0
    %1234 = vmatmul.mubr.bf16.gmra.mrb[0].mxu0 %v1117
    %v1235 = vpop.f32.mrb[0].mxu0
    %v1236 = vadd.f32 %v1155, %v1235
    %v1237 = vpop.f32.mrb[0].mxu0
    %v1238 = vadd.f32 %v1157, %v1237
    %v1239 = vpop.f32.mrb[0].mxu0
    %v1240 = vpop.f32.mrb[0].mxu0
    %1241 = vdwg.mxu0
    %1242 = vmatprep.subr.bf16.mxu0 0
    %1243 = vmatpush1.bf16.msra.mxu0 %v479
    %1244 = vmatprep.subr.bf16.mxu0 0
    %1245 = vmatpush1.bf16.msra.mxu0 %v482
    %1246 = vmatprep.subr.bf16.mxu0 0
    %1247 = vmatpush1.bf16.msra.mxu0 %v485
    %1248 = vmatprep.subr.bf16.mxu0 0
    %1249 = vmatpush1.bf16.msra.mxu0 %v488
    %1250 = vmatprep.subr.bf16.mxu0 0
    %1251 = vmatpush1.bf16.msra.mxu0 %v491
    %1252 = vmatprep.subr.bf16.mxu0 0
    %1253 = vmatpush1.bf16.msra.mxu0 %v494
    %1254 = vmatprep.subr.bf16.mxu0 0
    %1255 = vmatpush1.bf16.msra.mxu0 %v497
    %1256 = vmatprep.subr.bf16.mxu0 0
    %1257 = vmatpush1.bf16.msra.mxu0 %v500
    %1258 = vmatprep.subr.bf16.mxu0 0
    %1259 = vmatpush1.bf16.msra.mxu0 0
    %1260 = vmatprep.subr.bf16.mxu0 0
    %1261 = vmatpush1.bf16.msra.mxu0 0
    %1262 = vmatprep.subr.bf16.mxu0 0
    %1263 = vmatpush1.bf16.msra.mxu0 0
    %1264 = vmatprep.subr.bf16.mxu0 0
    %1265 = vmatpush1.bf16.msra.mxu0 0
    %1266 = vmatprep.subr.bf16.mxu0 0
    %1267 = vmatpush1.bf16.msra.mxu0 0
    %1268 = vmatprep.subr.bf16.mxu0 0
    %1269 = vmatpush1.bf16.msra.mxu0 0
    %1270 = vmatprep.subr.bf16.mxu0 0
    %1271 = vmatpush1.bf16.msra.mxu0 0
    %1272 = vmatprep.subr.bf16.mxu0 0
    %1273 = vmatpush1.bf16.msra.mxu0 0
    %1274 = vmatprep.mubr.bf16.mxu0 0
    %1275 = vmatmul.mubr.bf16.gmra.mrb[0].mxu0 %v1117
    %v1276 = vpop.f32.mrb[0].mxu0
    %v1277 = vadd.f32 %v1196, %v1276
    %v1278 = vpop.f32.mrb[0].mxu0
    %v1279 = vpop.f32.mrb[0].mxu0
    %v1280 = vpop.f32.mrb[0].mxu0
    %1281 = vdwg.mxu0
    %v1282 = vadd.f32 %v1236, %v166
    %v1283 = vadd.f32 %v1238, %v170
    %v1284 = vadd.f32 %v1277, %v174
    %v1285 = vpack.c.bf16 %v1113, %v1113
    %1286 = vmatprep.subr.bf16.mxu0 %v690
    %1287 = vmatpush1.bf16.msra.mxu0 %v689
    %1288 = vmatprep.subr.bf16.mxu0 %v693
    %1289 = vmatpush1.bf16.msra.mxu0 %v692
    %1290 = vmatprep.subr.bf16.mxu0 %v696
    %1291 = vmatpush1.bf16.msra.mxu0 %v695
    %1292 = vmatprep.subr.bf16.mxu0 %v699
    %1293 = vmatpush1.bf16.msra.mxu0 %v698
    %1294 = vmatprep.subr.bf16.mxu0 %v702
    %1295 = vmatpush1.bf16.msra.mxu0 %v701
    %1296 = vmatprep.subr.bf16.mxu0 %v705
    %1297 = vmatpush1.bf16.msra.mxu0 %v704
    %1298 = vmatprep.subr.bf16.mxu0 %v708
    %1299 = vmatpush1.bf16.msra.mxu0 %v707
    %1300 = vmatprep.subr.bf16.mxu0 %v711
    %1301 = vmatpush1.bf16.msra.mxu0 %v710
    %1302 = vmatprep.subr.bf16.mxu0 0
    %1303 = vmatpush1.bf16.msra.mxu0 0
    %1304 = vmatprep.subr.bf16.mxu0 0
    %1305 = vmatpush1.bf16.msra.mxu0 0
    %1306 = vmatprep.subr.bf16.mxu0 0
    %1307 = vmatpush1.bf16.msra.mxu0 0
    %1308 = vmatprep.subr.bf16.mxu0 0
    %1309 = vmatpush1.bf16.msra.mxu0 0
    %1310 = vmatprep.subr.bf16.mxu0 0
    %1311 = vmatpush1.bf16.msra.mxu0 0
    %1312 = vmatprep.subr.bf16.mxu0 0
    %1313 = vmatpush1.bf16.msra.mxu0 0
    %1314 = vmatprep.subr.bf16.mxu0 0
    %1315 = vmatpush1.bf16.msra.mxu0 0
    %1316 = vmatprep.subr.bf16.mxu0 0
    %1317 = vmatpush1.bf16.msra.mxu0 0
    %1318 = vmatprep.mubr.bf16.mxu0 0
    %1319 = vmatmul.mubr.bf16.gmra.mrb[0].mxu0 %v1285
    %v1320 = vpop.f32.mrb[0].mxu0
    %v1321 = vadd.f32 0.0, %v1320
    %v1322 = vpop.f32.mrb[0].mxu0
    %v1323 = vadd.f32 0.0, %v1322
    %v1324 = vpop.f32.mrb[0].mxu0
    %v1325 = vpop.f32.mrb[0].mxu0
    %1326 = vdwg.mxu0
    %1327 = vmatprep.subr.bf16.mxu0 0
    %1328 = vmatpush1.bf16.msra.mxu0 %v691
    %1329 = vmatprep.subr.bf16.mxu0 0
    %1330 = vmatpush1.bf16.msra.mxu0 %v694
    %1331 = vmatprep.subr.bf16.mxu0 0
    %1332 = vmatpush1.bf16.msra.mxu0 %v697
    %1333 = vmatprep.subr.bf16.mxu0 0
    %1334 = vmatpush1.bf16.msra.mxu0 %v700
    %1335 = vmatprep.subr.bf16.mxu0 0
    %1336 = vmatpush1.bf16.msra.mxu0 %v703
    %1337 = vmatprep.subr.bf16.mxu0 0
    %1338 = vmatpush1.bf16.msra.mxu0 %v706
    %1339 = vmatprep.subr.bf16.mxu0 0
    %1340 = vmatpush1.bf16.msra.mxu0 %v709
    %1341 = vmatprep.subr.bf16.mxu0 0
    %1342 = vmatpush1.bf16.msra.mxu0 %v712
    %1343 = vmatprep.subr.bf16.mxu0 0
    %1344 = vmatpush1.bf16.msra.mxu0 0
    %1345 = vmatprep.subr.bf16.mxu0 0
    %1346 = vmatpush1.bf16.msra.mxu0 0
    %1347 = vmatprep.subr.bf16.mxu0 0
    %1348 = vmatpush1.bf16.msra.mxu0 0
    %1349 = vmatprep.subr.bf16.mxu0 0
    %1350 = vmatpush1.bf16.msra.mxu0 0
    %1351 = vmatprep.subr.bf16.mxu0 0
    %1352 = vmatpush1.bf16.msra.mxu0 0
    %1353 = vmatprep.subr.bf16.mxu0 0
    %1354 = vmatpush1.bf16.msra.mxu0 0
    %1355 = vmatprep.subr.bf16.mxu0 0
    %1356 = vmatpush1.bf16.msra.mxu0 0
    %1357 = vmatprep.subr.bf16.mxu0 0
    %1358 = vmatpush1.bf16.msra.mxu0 0
    %1359 = vmatprep.mubr.bf16.mxu0 0
    %1360 = vmatmul.mubr.bf16.gmra.mrb[0].mxu0 %v1285
    %v1361 = vpop.f32.mrb[0].mxu0
    %v1362 = vadd.f32 0.0, %v1361
    %v1363 = vpop.f32.mrb[0].mxu0
    %v1364 = vpop.f32.mrb[0].mxu0
    %v1365 = vpop.f32.mrb[0].mxu0
    %1366 = vdwg.mxu0
    %v1367 = vadd.f32 %v1282, %v1321
    %v1368 = vxor.u32 %v1367, 2147483648
    %v1369 = vmul.f32 %v1368, 1.442695
    %v1370 = vpow.pop %v1369
    %v1371 = vadd.f32 %v1370, 1.0
    %v1372 = vrcp.pop %v1371
    %v1373 = vmul.f32 1.0, %v1372
    %v1374 = vadd.f32 %v1283, %v1323
    %v1375 = vxor.u32 %v1374, 2147483648
    %v1376 = vmul.f32 %v1375, 1.442695
    %v1377 = vpow.pop %v1376
    %v1378 = vadd.f32 %v1377, 1.0
    %v1379 = vrcp.pop %v1378
    %v1380 = vmul.f32 1.0, %v1379
    %v1381 = vadd.f32 %v1362, %v183
    %v1382 = vmul.f32 %v1373, %v1381
    %v1383 = vadd.f32 %v1284, %v1382
    %v1384 = vtanh.pop %v1383
    %v1385 = vsub.f32 1.0, %v1380
    %v1386 = vmul.f32 %v1385, %v1384
    %v1387 = vmul.f32 %v1380, %v1113
    %v1388 = vadd.f32 %v1386, %v1387
    %s1389 = scalar_lea.vmem %s6, 16
    %1390 = vst [vmem:[%s1389] sm:$0xff] %v1388
    %s1391 = scalar_lea.vmem %s0, 12
    %v1392 = vld [vmem:[%s1391] sm:$0xf]
    %s1393 = scalar_lea.vmem %s0, 16
    %v1394 = vld [vmem:[%s1393] sm:$0xf]
    %1395 = vmatprep.subr.bf16.mxu0 %v269
    %1396 = vmatpush1.bf16.msra.mxu0 %v268
    %1397 = vmatprep.subr.bf16.mxu0 %v272
    %1398 = vmatpush1.bf16.msra.mxu0 %v271
    %1399 = vmatprep.subr.bf16.mxu0 %v275
    %1400 = vmatpush1.bf16.msra.mxu0 %v274
    %1401 = vmatprep.subr.bf16.mxu0 %v278
    %1402 = vmatpush1.bf16.msra.mxu0 %v277
    %1403 = vmatprep.subr.bf16.mxu0 %v281
    %1404 = vmatpush1.bf16.msra.mxu0 %v280
    %1405 = vmatprep.subr.bf16.mxu0 %v284
    %1406 = vmatpush1.bf16.msra.mxu0 %v283
    %1407 = vmatprep.subr.bf16.mxu0 %v287
    %1408 = vmatpush1.bf16.msra.mxu0 %v286
    %1409 = vmatprep.subr.bf16.mxu0 %v290
    %1410 = vmatpush1.bf16.msra.mxu0 %v289
    %1411 = vmatprep.subr.bf16.mxu0 0
    %1412 = vmatpush1.bf16.msra.mxu0 0
    %1413 = vmatprep.subr.bf16.mxu0 0
    %1414 = vmatpush1.bf16.msra.mxu0 0
    %1415 = vmatprep.subr.bf16.mxu0 0
    %1416 = vmatpush1.bf16.msra.mxu0 0
    %1417 = vmatprep.subr.bf16.mxu0 0
    %1418 = vmatpush1.bf16.msra.mxu0 0
    %1419 = vmatprep.subr.bf16.mxu0 0
    %1420 = vmatpush1.bf16.msra.mxu0 0
    %1421 = vmatprep.subr.bf16.mxu0 0
    %1422 = vmatpush1.bf16.msra.mxu0 0
    %1423 = vmatprep.subr.bf16.mxu0 0
    %1424 = vmatpush1.bf16.msra.mxu0 0
    %1425 = vmatprep.subr.bf16.mxu0 0
    %1426 = vmatpush1.bf16.msra.mxu0 0
    %1427 = vmatprep.mubr.bf16.mxu0 0
    %1428 = vmatmul.mubr.bf16.gmra.mrb[0].mxu0 %v1394
    %v1429 = vpop.f32.mrb[0].mxu0
    %v1430 = vadd.f32 0.0, %v1429
    %v1431 = vpop.f32.mrb[0].mxu0
    %v1432 = vadd.f32 0.0, %v1431
    %v1433 = vpop.f32.mrb[0].mxu0
    %v1434 = vpop.f32.mrb[0].mxu0
    %1435 = vdwg.mxu0
    %1436 = vmatprep.subr.bf16.mxu0 0
    %1437 = vmatpush1.bf16.msra.mxu0 %v270
    %1438 = vmatprep.subr.bf16.mxu0 0
    %1439 = vmatpush1.bf16.msra.mxu0 %v273
    %1440 = vmatprep.subr.bf16.mxu0 0
    %1441 = vmatpush1.bf16.msra.mxu0 %v276
    %1442 = vmatprep.subr.bf16.mxu0 0
    %1443 = vmatpush1.bf16.msra.mxu0 %v279
    %1444 = vmatprep.subr.bf16.mxu0 0
    %1445 = vmatpush1.bf16.msra.mxu0 %v282
    %1446 = vmatprep.subr.bf16.mxu0 0
    %1447 = vmatpush1.bf16.msra.mxu0 %v285
    %1448 = vmatprep.subr.bf16.mxu0 0
    %1449 = vmatpush1.bf16.msra.mxu0 %v288
    %1450 = vmatprep.subr.bf16.mxu0 0
    %1451 = vmatpush1.bf16.msra.mxu0 %v291
    %1452 = vmatprep.subr.bf16.mxu0 0
    %1453 = vmatpush1.bf16.msra.mxu0 0
    %1454 = vmatprep.subr.bf16.mxu0 0
    %1455 = vmatpush1.bf16.msra.mxu0 0
    %1456 = vmatprep.subr.bf16.mxu0 0
    %1457 = vmatpush1.bf16.msra.mxu0 0
    %1458 = vmatprep.subr.bf16.mxu0 0
    %1459 = vmatpush1.bf16.msra.mxu0 0
    %1460 = vmatprep.subr.bf16.mxu0 0
    %1461 = vmatpush1.bf16.msra.mxu0 0
    %1462 = vmatprep.subr.bf16.mxu0 0
    %1463 = vmatpush1.bf16.msra.mxu0 0
    %1464 = vmatprep.subr.bf16.mxu0 0
    %1465 = vmatpush1.bf16.msra.mxu0 0
    %1466 = vmatprep.subr.bf16.mxu0 0
    %1467 = vmatpush1.bf16.msra.mxu0 0
    %1468 = vmatprep.mubr.bf16.mxu0 0
    %1469 = vmatmul.mubr.bf16.gmra.mrb[0].mxu0 %v1394
    %v1470 = vpop.f32.mrb[0].mxu0
    %v1471 = vadd.f32 0.0, %v1470
    %v1472 = vpop.f32.mrb[0].mxu0
    %v1473 = vpop.f32.mrb[0].mxu0
    %v1474 = vpop.f32.mrb[0].mxu0
    %1475 = vdwg.mxu0
    %1476 = vmatprep.subr.bf16.mxu0 %v478
    %1477 = vmatpush1.bf16.msra.mxu0 %v477
    %1478 = vmatprep.subr.bf16.mxu0 %v481
    %1479 = vmatpush1.bf16.msra.mxu0 %v480
    %1480 = vmatprep.subr.bf16.mxu0 %v484
    %1481 = vmatpush1.bf16.msra.mxu0 %v483
    %1482 = vmatprep.subr.bf16.mxu0 %v487
    %1483 = vmatpush1.bf16.msra.mxu0 %v486
    %1484 = vmatprep.subr.bf16.mxu0 %v490
    %1485 = vmatpush1.bf16.msra.mxu0 %v489
    %1486 = vmatprep.subr.bf16.mxu0 %v493
    %1487 = vmatpush1.bf16.msra.mxu0 %v492
    %1488 = vmatprep.subr.bf16.mxu0 %v496
    %1489 = vmatpush1.bf16.msra.mxu0 %v495
    %1490 = vmatprep.subr.bf16.mxu0 %v499
    %1491 = vmatpush1.bf16.msra.mxu0 %v498
    %1492 = vmatprep.subr.bf16.mxu0 0
    %1493 = vmatpush1.bf16.msra.mxu0 0
    %1494 = vmatprep.subr.bf16.mxu0 0
    %1495 = vmatpush1.bf16.msra.mxu0 0
    %1496 = vmatprep.subr.bf16.mxu0 0
    %1497 = vmatpush1.bf16.msra.mxu0 0
    %1498 = vmatprep.subr.bf16.mxu0 0
    %1499 = vmatpush1.bf16.msra.mxu0 0
    %1500 = vmatprep.subr.bf16.mxu0 0
    %1501 = vmatpush1.bf16.msra.mxu0 0
    %1502 = vmatprep.subr.bf16.mxu0 0
    %1503 = vmatpush1.bf16.msra.mxu0 0
    %1504 = vmatprep.subr.bf16.mxu0 0
    %1505 = vmatpush1.bf16.msra.mxu0 0
    %1506 = vmatprep.subr.bf16.mxu0 0
    %1507 = vmatpush1.bf16.msra.mxu0 0
    %1508 = vmatprep.mubr.bf16.mxu0 0
    %1509 = vmatmul.mubr.bf16.gmra.mrb[0].mxu0 %v1392
    %v1510 = vpop.f32.mrb[0].mxu0
    %v1511 = vadd.f32 %v1430, %v1510
    %v1512 = vpop.f32.mrb[0].mxu0
    %v1513 = vadd.f32 %v1432, %v1512
    %v1514 = vpop.f32.mrb[0].mxu0
    %v1515 = vpop.f32.mrb[0].mxu0
    %1516 = vdwg.mxu0
    %1517 = vmatprep.subr.bf16.mxu0 0
    %1518 = vmatpush1.bf16.msra.mxu0 %v479
    %1519 = vmatprep.subr.bf16.mxu0 0
    %1520 = vmatpush1.bf16.msra.mxu0 %v482
    %1521 = vmatprep.subr.bf16.mxu0 0
    %1522 = vmatpush1.bf16.msra.mxu0 %v485
    %1523 = vmatprep.subr.bf16.mxu0 0
    %1524 = vmatpush1.bf16.msra.mxu0 %v488
    %1525 = vmatprep.subr.bf16.mxu0 0
    %1526 = vmatpush1.bf16.msra.mxu0 %v491
    %1527 = vmatprep.subr.bf16.mxu0 0
    %1528 = vmatpush1.bf16.msra.mxu0 %v494
    %1529 = vmatprep.subr.bf16.mxu0 0
    %1530 = vmatpush1.bf16.msra.mxu0 %v497
    %1531 = vmatprep.subr.bf16.mxu0 0
    %1532 = vmatpush1.bf16.msra.mxu0 %v500
    %1533 = vmatprep.subr.bf16.mxu0 0
    %1534 = vmatpush1.bf16.msra.mxu0 0
    %1535 = vmatprep.subr.bf16.mxu0 0
    %1536 = vmatpush1.bf16.msra.mxu0 0
    %1537 = vmatprep.subr.bf16.mxu0 0
    %1538 = vmatpush1.bf16.msra.mxu0 0
    %1539 = vmatprep.subr.bf16.mxu0 0
    %1540 = vmatpush1.bf16.msra.mxu0 0
    %1541 = vmatprep.subr.bf16.mxu0 0
    %1542 = vmatpush1.bf16.msra.mxu0 0
    %1543 = vmatprep.subr.bf16.mxu0 0
    %1544 = vmatpush1.bf16.msra.mxu0 0
    %1545 = vmatprep.subr.bf16.mxu0 0
    %1546 = vmatpush1.bf16.msra.mxu0 0
    %1547 = vmatprep.subr.bf16.mxu0 0
    %1548 = vmatpush1.bf16.msra.mxu0 0
    %1549 = vmatprep.mubr.bf16.mxu0 0
    %1550 = vmatmul.mubr.bf16.gmra.mrb[0].mxu0 %v1392
    %v1551 = vpop.f32.mrb[0].mxu0
    %v1552 = vadd.f32 %v1471, %v1551
    %v1553 = vpop.f32.mrb[0].mxu0
    %v1554 = vpop.f32.mrb[0].mxu0
    %v1555 = vpop.f32.mrb[0].mxu0
    %1556 = vdwg.mxu0
    %v1557 = vadd.f32 %v1511, %v166
    %v1558 = vadd.f32 %v1513, %v170
    %v1559 = vadd.f32 %v1552, %v174
    %v1560 = vpack.c.bf16 %v1388, %v1388
    %1561 = vmatprep.subr.bf16.mxu0 %v690
    %1562 = vmatpush1.bf16.msra.mxu0 %v689
    %1563 = vmatprep.subr.bf16.mxu0 %v693
    %1564 = vmatpush1.bf16.msra.mxu0 %v692
    %1565 = vmatprep.subr.bf16.mxu0 %v696
    %1566 = vmatpush1.bf16.msra.mxu0 %v695
    %1567 = vmatprep.subr.bf16.mxu0 %v699
    %1568 = vmatpush1.bf16.msra.mxu0 %v698
    %1569 = vmatprep.subr.bf16.mxu0 %v702
    %1570 = vmatpush1.bf16.msra.mxu0 %v701
    %1571 = vmatprep.subr.bf16.mxu0 %v705
    %1572 = vmatpush1.bf16.msra.mxu0 %v704
    %1573 = vmatprep.subr.bf16.mxu0 %v708
    %1574 = vmatpush1.bf16.msra.mxu0 %v707
    %1575 = vmatprep.subr.bf16.mxu0 %v711
    %1576 = vmatpush1.bf16.msra.mxu0 %v710
    %1577 = vmatprep.subr.bf16.mxu0 0
    %1578 = vmatpush1.bf16.msra.mxu0 0
    %1579 = vmatprep.subr.bf16.mxu0 0
    %1580 = vmatpush1.bf16.msra.mxu0 0
    %1581 = vmatprep.subr.bf16.mxu0 0
    %1582 = vmatpush1.bf16.msra.mxu0 0
    %1583 = vmatprep.subr.bf16.mxu0 0
    %1584 = vmatpush1.bf16.msra.mxu0 0
    %1585 = vmatprep.subr.bf16.mxu0 0
    %1586 = vmatpush1.bf16.msra.mxu0 0
    %1587 = vmatprep.subr.bf16.mxu0 0
    %1588 = vmatpush1.bf16.msra.mxu0 0
    %1589 = vmatprep.subr.bf16.mxu0 0
    %1590 = vmatpush1.bf16.msra.mxu0 0
    %1591 = vmatprep.subr.bf16.mxu0 0
    %1592 = vmatpush1.bf16.msra.mxu0 0
    %1593 = vmatprep.mubr.bf16.mxu0 0
    %1594 = vmatmul.mubr.bf16.gmra.mrb[0].mxu0 %v1560
    %v1595 = vpop.f32.mrb[0].mxu0
    %v1596 = vadd.f32 0.0, %v1595
    %v1597 = vpop.f32.mrb[0].mxu0
    %v1598 = vadd.f32 0.0, %v1597
    %v1599 = vpop.f32.mrb[0].mxu0
    %v1600 = vpop.f32.mrb[0].mxu0
    %1601 = vdwg.mxu0
    %1602 = vmatprep.subr.bf16.mxu0 0
    %1603 = vmatpush1.bf16.msra.mxu0 %v691
    %1604 = vmatprep.subr.bf16.mxu0 0
    %1605 = vmatpush1.bf16.msra.mxu0 %v694
    %1606 = vmatprep.subr.bf16.mxu0 0
    %1607 = vmatpush1.bf16.msra.mxu0 %v697
    %1608 = vmatprep.subr.bf16.mxu0 0
    %1609 = vmatpush1.bf16.msra.mxu0 %v700
    %1610 = vmatprep.subr.bf16.mxu0 0
    %1611 = vmatpush1.bf16.msra.mxu0 %v703
    %1612 = vmatprep.subr.bf16.mxu0 0
    %1613 = vmatpush1.bf16.msra.mxu0 %v706
    %1614 = vmatprep.subr.bf16.mxu0 0
    %1615 = vmatpush1.bf16.msra.mxu0 %v709
    %1616 = vmatprep.subr.bf16.mxu0 0
    %1617 = vmatpush1.bf16.msra.mxu0 %v712
    %1618 = vmatprep.subr.bf16.mxu0 0
    %1619 = vmatpush1.bf16.msra.mxu0 0
    %1620 = vmatprep.subr.bf16.mxu0 0
    %1621 = vmatpush1.bf16.msra.mxu0 0
    %1622 = vmatprep.subr.bf16.mxu0 0
    %1623 = vmatpush1.bf16.msra.mxu0 0
    %1624 = vmatprep.subr.bf16.mxu0 0
    %1625 = vmatpush1.bf16.msra.mxu0 0
    %1626 = vmatprep.subr.bf16.mxu0 0
    %1627 = vmatpush1.bf16.msra.mxu0 0
    %1628 = vmatprep.subr.bf16.mxu0 0
    %1629 = vmatpush1.bf16.msra.mxu0 0
    %1630 = vmatprep.subr.bf16.mxu0 0
    %1631 = vmatpush1.bf16.msra.mxu0 0
    %1632 = vmatprep.subr.bf16.mxu0 0
    %1633 = vmatpush1.bf16.msra.mxu0 0
    %1634 = vmatprep.mubr.bf16.mxu0 0
    %1635 = vmatmul.mubr.bf16.gmra.mrb[0].mxu0 %v1560
    %v1636 = vpop.f32.mrb[0].mxu0
    %v1637 = vadd.f32 0.0, %v1636
    %v1638 = vpop.f32.mrb[0].mxu0
    %v1639 = vpop.f32.mrb[0].mxu0
    %v1640 = vpop.f32.mrb[0].mxu0
    %1641 = vdwg.mxu0
    %v1642 = vadd.f32 %v1557, %v1596
    %v1643 = vxor.u32 %v1642, 2147483648
    %v1644 = vmul.f32 %v1643, 1.442695
    %v1645 = vpow.pop %v1644
    %v1646 = vadd.f32 %v1645, 1.0
    %v1647 = vrcp.pop %v1646
    %v1648 = vmul.f32 1.0, %v1647
    %v1649 = vadd.f32 %v1558, %v1598
    %v1650 = vxor.u32 %v1649, 2147483648
    %v1651 = vmul.f32 %v1650, 1.442695
    %v1652 = vpow.pop %v1651
    %v1653 = vadd.f32 %v1652, 1.0
    %v1654 = vrcp.pop %v1653
    %v1655 = vmul.f32 1.0, %v1654
    %v1656 = vadd.f32 %v1637, %v183
    %v1657 = vmul.f32 %v1648, %v1656
    %v1658 = vadd.f32 %v1559, %v1657
    %v1659 = vtanh.pop %v1658
    %v1660 = vsub.f32 1.0, %v1655
    %v1661 = vmul.f32 %v1660, %v1659
    %v1662 = vmul.f32 %v1655, %v1388
    %v1663 = vadd.f32 %v1661, %v1662
    %s1664 = scalar_lea.vmem %s6, 24
    %1665 = vst [vmem:[%s1664] sm:$0xff] %v1663
    %v1666 = vld [vmem:[%s1393] sm:$0xf]
    %v1667 = vld [vmem:[%s1391] sm:$0xf]
    %1668 = vmatprep.subr.bf16.mxu0 %v269
    %1669 = vmatpush1.bf16.msra.mxu0 %v268
    %1670 = vmatprep.subr.bf16.mxu0 %v272
    %1671 = vmatpush1.bf16.msra.mxu0 %v271
    %1672 = vmatprep.subr.bf16.mxu0 %v275
    %1673 = vmatpush1.bf16.msra.mxu0 %v274
    %1674 = vmatprep.subr.bf16.mxu0 %v278
    %1675 = vmatpush1.bf16.msra.mxu0 %v277
    %1676 = vmatprep.subr.bf16.mxu0 %v281
    %1677 = vmatpush1.bf16.msra.mxu0 %v280
    %1678 = vmatprep.subr.bf16.mxu0 %v284
    %1679 = vmatpush1.bf16.msra.mxu0 %v283
    %1680 = vmatprep.subr.bf16.mxu0 %v287
    %1681 = vmatpush1.bf16.msra.mxu0 %v286
    %1682 = vmatprep.subr.bf16.mxu0 %v290
    %1683 = vmatpush1.bf16.msra.mxu0 %v289
    %1684 = vmatprep.subr.bf16.mxu0 0
    %1685 = vmatpush1.bf16.msra.mxu0 0
    %1686 = vmatprep.subr.bf16.mxu0 0
    %1687 = vmatpush1.bf16.msra.mxu0 0
    %1688 = vmatprep.subr.bf16.mxu0 0
    %1689 = vmatpush1.bf16.msra.mxu0 0
    %1690 = vmatprep.subr.bf16.mxu0 0
    %1691 = vmatpush1.bf16.msra.mxu0 0
    %1692 = vmatprep.subr.bf16.mxu0 0
    %1693 = vmatpush1.bf16.msra.mxu0 0
    %1694 = vmatprep.subr.bf16.mxu0 0
    %1695 = vmatpush1.bf16.msra.mxu0 0
    %1696 = vmatprep.subr.bf16.mxu0 0
    %1697 = vmatpush1.bf16.msra.mxu0 0
    %1698 = vmatprep.subr.bf16.mxu0 0
    %1699 = vmatpush1.bf16.msra.mxu0 0
    %1700 = vmatprep.mubr.bf16.mxu0 0
    %1701 = vmatmul.mubr.bf16.gmra.mrb[0].mxu0 %v1667
    %v1702 = vpop.f32.mrb[0].mxu0
    %v1703 = vadd.f32 0.0, %v1702
    %v1704 = vpop.f32.mrb[0].mxu0
    %v1705 = vadd.f32 0.0, %v1704
    %v1706 = vpop.f32.mrb[0].mxu0
    %v1707 = vpop.f32.mrb[0].mxu0
    %1708 = vdwg.mxu0
    %1709 = vmatprep.subr.bf16.mxu0 0
    %1710 = vmatpush1.bf16.msra.mxu0 %v270
    %1711 = vmatprep.subr.bf16.mxu0 0
    %1712 = vmatpush1.bf16.msra.mxu0 %v273
    %1713 = vmatprep.subr.bf16.mxu0 0
    %1714 = vmatpush1.bf16.msra.mxu0 %v276
    %1715 = vmatprep.subr.bf16.mxu0 0
    %1716 = vmatpush1.bf16.msra.mxu0 %v279
    %1717 = vmatprep.subr.bf16.mxu0 0
    %1718 = vmatpush1.bf16.msra.mxu0 %v282
    %1719 = vmatprep.subr.bf16.mxu0 0
    %1720 = vmatpush1.bf16.msra.mxu0 %v285
    %1721 = vmatprep.subr.bf16.mxu0 0
    %1722 = vmatpush1.bf16.msra.mxu0 %v288
    %1723 = vmatprep.subr.bf16.mxu0 0
    %1724 = vmatpush1.bf16.msra.mxu0 %v291
    %1725 = vmatprep.subr.bf16.mxu0 0
    %1726 = vmatpush1.bf16.msra.mxu0 0
    %1727 = vmatprep.subr.bf16.mxu0 0
    %1728 = vmatpush1.bf16.msra.mxu0 0
    %1729 = vmatprep.subr.bf16.mxu0 0
    %1730 = vmatpush1.bf16.msra.mxu0 0
    %1731 = vmatprep.subr.bf16.mxu0 0
    %1732 = vmatpush1.bf16.msra.mxu0 0
    %1733 = vmatprep.subr.bf16.mxu0 0
    %1734 = vmatpush1.bf16.msra.mxu0 0
    %1735 = vmatprep.subr.bf16.mxu0 0
    %1736 = vmatpush1.bf16.msra.mxu0 0
    %1737 = vmatprep.subr.bf16.mxu0 0
    %1738 = vmatpush1.bf16.msra.mxu0 0
    %1739 = vmatprep.subr.bf16.mxu0 0
    %1740 = vmatpush1.bf16.msra.mxu0 0
    %1741 = vmatprep.mubr.bf16.mxu0 0
    %1742 = vmatmul.mubr.bf16.gmra.mrb[0].mxu0 %v1667
    %v1743 = vpop.f32.mrb[0].mxu0
    %v1744 = vadd.f32 0.0, %v1743
    %v1745 = vpop.f32.mrb[0].mxu0
    %v1746 = vpop.f32.mrb[0].mxu0
    %v1747 = vpop.f32.mrb[0].mxu0
    %1748 = vdwg.mxu0
    %1749 = vmatprep.subr.bf16.mxu0 %v478
    %1750 = vmatpush1.bf16.msra.mxu0 %v477
    %1751 = vmatprep.subr.bf16.mxu0 %v481
    %1752 = vmatpush1.bf16.msra.mxu0 %v480
    %1753 = vmatprep.subr.bf16.mxu0 %v484
    %1754 = vmatpush1.bf16.msra.mxu0 %v483
    %1755 = vmatprep.subr.bf16.mxu0 %v487
    %1756 = vmatpush1.bf16.msra.mxu0 %v486
    %1757 = vmatprep.subr.bf16.mxu0 %v490
    %1758 = vmatpush1.bf16.msra.mxu0 %v489
    %1759 = vmatprep.subr.bf16.mxu0 %v493
    %1760 = vmatpush1.bf16.msra.mxu0 %v492
    %1761 = vmatprep.subr.bf16.mxu0 %v496
    %1762 = vmatpush1.bf16.msra.mxu0 %v495
    %1763 = vmatprep.subr.bf16.mxu0 %v499
    %1764 = vmatpush1.bf16.msra.mxu0 %v498
    %1765 = vmatprep.subr.bf16.mxu0 0
    %1766 = vmatpush1.bf16.msra.mxu0 0
    %1767 = vmatprep.subr.bf16.mxu0 0
    %1768 = vmatpush1.bf16.msra.mxu0 0
    %1769 = vmatprep.subr.bf16.mxu0 0
    %1770 = vmatpush1.bf16.msra.mxu0 0
    %1771 = vmatprep.subr.bf16.mxu0 0
    %1772 = vmatpush1.bf16.msra.mxu0 0
    %1773 = vmatprep.subr.bf16.mxu0 0
    %1774 = vmatpush1.bf16.msra.mxu0 0
    %1775 = vmatprep.subr.bf16.mxu0 0
    %1776 = vmatpush1.bf16.msra.mxu0 0
    %1777 = vmatprep.subr.bf16.mxu0 0
    %1778 = vmatpush1.bf16.msra.mxu0 0
    %1779 = vmatprep.subr.bf16.mxu0 0
    %1780 = vmatpush1.bf16.msra.mxu0 0
    %1781 = vmatprep.mubr.bf16.mxu0 0
    %1782 = vmatmul.mubr.bf16.gmra.mrb[0].mxu0 %v1666
    %v1783 = vpop.f32.mrb[0].mxu0
    %v1784 = vadd.f32 %v1703, %v1783
    %v1785 = vpop.f32.mrb[0].mxu0
    %v1786 = vadd.f32 %v1705, %v1785
    %v1787 = vpop.f32.mrb[0].mxu0
    %v1788 = vpop.f32.mrb[0].mxu0
    %1789 = vdwg.mxu0
    %1790 = vmatprep.subr.bf16.mxu0 0
    %1791 = vmatpush1.bf16.msra.mxu0 %v479
    %1792 = vmatprep.subr.bf16.mxu0 0
    %1793 = vmatpush1.bf16.msra.mxu0 %v482
    %1794 = vmatprep.subr.bf16.mxu0 0
    %1795 = vmatpush1.bf16.msra.mxu0 %v485
    %1796 = vmatprep.subr.bf16.mxu0 0
    %1797 = vmatpush1.bf16.msra.mxu0 %v488
    %1798 = vmatprep.subr.bf16.mxu0 0
    %1799 = vmatpush1.bf16.msra.mxu0 %v491
    %1800 = vmatprep.subr.bf16.mxu0 0
    %1801 = vmatpush1.bf16.msra.mxu0 %v494
    %1802 = vmatprep.subr.bf16.mxu0 0
    %1803 = vmatpush1.bf16.msra.mxu0 %v497
    %1804 = vmatprep.subr.bf16.mxu0 0
    %1805 = vmatpush1.bf16.msra.mxu0 %v500
    %1806 = vmatprep.subr.bf16.mxu0 0
    %1807 = vmatpush1.bf16.msra.mxu0 0
    %1808 = vmatprep.subr.bf16.mxu0 0
    %1809 = vmatpush1.bf16.msra.mxu0 0
    %1810 = vmatprep.subr.bf16.mxu0 0
    %1811 = vmatpush1.bf16.msra.mxu0 0
    %1812 = vmatprep.subr.bf16.mxu0 0
    %1813 = vmatpush1.bf16.msra.mxu0 0
    %1814 = vmatprep.subr.bf16.mxu0 0
    %1815 = vmatpush1.bf16.msra.mxu0 0
    %1816 = vmatprep.subr.bf16.mxu0 0
    %1817 = vmatpush1.bf16.msra.mxu0 0
    %1818 = vmatprep.subr.bf16.mxu0 0
    %1819 = vmatpush1.bf16.msra.mxu0 0
    %1820 = vmatprep.subr.bf16.mxu0 0
    %1821 = vmatpush1.bf16.msra.mxu0 0
    %1822 = vmatprep.mubr.bf16.mxu0 0
    %1823 = vmatmul.mubr.bf16.gmra.mrb[0].mxu0 %v1666
    %v1824 = vpop.f32.mrb[0].mxu0
    %v1825 = vadd.f32 %v1744, %v1824
    %v1826 = vpop.f32.mrb[0].mxu0
    %v1827 = vpop.f32.mrb[0].mxu0
    %v1828 = vpop.f32.mrb[0].mxu0
    %1829 = vdwg.mxu0
    %v1830 = vadd.f32 %v1784, %v166
    %v1831 = vadd.f32 %v1786, %v170
    %v1832 = vadd.f32 %v1825, %v174
    %v1833 = vpack.c.bf16 %v1663, %v1663
    %1834 = vmatprep.subr.bf16.mxu0 %v690
    %1835 = vmatpush1.bf16.msra.mxu0 %v689
    %1836 = vmatprep.subr.bf16.mxu0 %v693
    %1837 = vmatpush1.bf16.msra.mxu0 %v692
    %1838 = vmatprep.subr.bf16.mxu0 %v696
    %1839 = vmatpush1.bf16.msra.mxu0 %v695
    %1840 = vmatprep.subr.bf16.mxu0 %v699
    %1841 = vmatpush1.bf16.msra.mxu0 %v698
    %1842 = vmatprep.subr.bf16.mxu0 %v702
    %1843 = vmatpush1.bf16.msra.mxu0 %v701
    %1844 = vmatprep.subr.bf16.mxu0 %v705
    %1845 = vmatpush1.bf16.msra.mxu0 %v704
    %1846 = vmatprep.subr.bf16.mxu0 %v708
    %1847 = vmatpush1.bf16.msra.mxu0 %v707
    %1848 = vmatprep.subr.bf16.mxu0 %v711
    %1849 = vmatpush1.bf16.msra.mxu0 %v710
    %1850 = vmatprep.subr.bf16.mxu0 0
    %1851 = vmatpush1.bf16.msra.mxu0 0
    %1852 = vmatprep.subr.bf16.mxu0 0
    %1853 = vmatpush1.bf16.msra.mxu0 0
    %1854 = vmatprep.subr.bf16.mxu0 0
    %1855 = vmatpush1.bf16.msra.mxu0 0
    %1856 = vmatprep.subr.bf16.mxu0 0
    %1857 = vmatpush1.bf16.msra.mxu0 0
    %1858 = vmatprep.subr.bf16.mxu0 0
    %1859 = vmatpush1.bf16.msra.mxu0 0
    %1860 = vmatprep.subr.bf16.mxu0 0
    %1861 = vmatpush1.bf16.msra.mxu0 0
    %1862 = vmatprep.subr.bf16.mxu0 0
    %1863 = vmatpush1.bf16.msra.mxu0 0
    %1864 = vmatprep.subr.bf16.mxu0 0
    %1865 = vmatpush1.bf16.msra.mxu0 0
    %1866 = vmatprep.mubr.bf16.mxu0 0
    %1867 = vmatmul.mubr.bf16.gmra.mrb[0].mxu0 %v1833
    %v1868 = vpop.f32.mrb[0].mxu0
    %v1869 = vadd.f32 0.0, %v1868
    %v1870 = vpop.f32.mrb[0].mxu0
    %v1871 = vadd.f32 0.0, %v1870
    %v1872 = vpop.f32.mrb[0].mxu0
    %v1873 = vpop.f32.mrb[0].mxu0
    %1874 = vdwg.mxu0
    %1875 = vmatprep.subr.bf16.mxu0 0
    %1876 = vmatpush1.bf16.msra.mxu0 %v691
    %1877 = vmatprep.subr.bf16.mxu0 0
    %1878 = vmatpush1.bf16.msra.mxu0 %v694
    %1879 = vmatprep.subr.bf16.mxu0 0
    %1880 = vmatpush1.bf16.msra.mxu0 %v697
    %1881 = vmatprep.subr.bf16.mxu0 0
    %1882 = vmatpush1.bf16.msra.mxu0 %v700
    %1883 = vmatprep.subr.bf16.mxu0 0
    %1884 = vmatpush1.bf16.msra.mxu0 %v703
    %1885 = vmatprep.subr.bf16.mxu0 0
    %1886 = vmatpush1.bf16.msra.mxu0 %v706
    %1887 = vmatprep.subr.bf16.mxu0 0
    %1888 = vmatpush1.bf16.msra.mxu0 %v709
    %1889 = vmatprep.subr.bf16.mxu0 0
    %1890 = vmatpush1.bf16.msra.mxu0 %v712
    %1891 = vmatprep.subr.bf16.mxu0 0
    %1892 = vmatpush1.bf16.msra.mxu0 0
    %1893 = vmatprep.subr.bf16.mxu0 0
    %1894 = vmatpush1.bf16.msra.mxu0 0
    %1895 = vmatprep.subr.bf16.mxu0 0
    %1896 = vmatpush1.bf16.msra.mxu0 0
    %1897 = vmatprep.subr.bf16.mxu0 0
    %1898 = vmatpush1.bf16.msra.mxu0 0
    %1899 = vmatprep.subr.bf16.mxu0 0
    %1900 = vmatpush1.bf16.msra.mxu0 0
    %1901 = vmatprep.subr.bf16.mxu0 0
    %1902 = vmatpush1.bf16.msra.mxu0 0
    %1903 = vmatprep.subr.bf16.mxu0 0
    %1904 = vmatpush1.bf16.msra.mxu0 0
    %1905 = vmatprep.subr.bf16.mxu0 0
    %1906 = vmatpush1.bf16.msra.mxu0 0
    %1907 = vmatprep.mubr.bf16.mxu0 0
    %1908 = vmatmul.mubr.bf16.gmra.mrb[0].mxu0 %v1833
    %v1909 = vpop.f32.mrb[0].mxu0
    %v1910 = vadd.f32 0.0, %v1909
    %v1911 = vpop.f32.mrb[0].mxu0
    %v1912 = vpop.f32.mrb[0].mxu0
    %v1913 = vpop.f32.mrb[0].mxu0
    %1914 = vdwg.mxu0
    %v1915 = vadd.f32 %v1830, %v1869
    %v1916 = vxor.u32 %v1915, 2147483648
    %v1917 = vmul.f32 %v1916, 1.442695
    %v1918 = vpow.pop %v1917
    %v1919 = vadd.f32 %v1918, 1.0
    %v1920 = vrcp.pop %v1919
    %v1921 = vmul.f32 1.0, %v1920
    %v1922 = vadd.f32 %v1831, %v1871
    %v1923 = vxor.u32 %v1922, 2147483648
    %v1924 = vmul.f32 %v1923, 1.442695
    %v1925 = vpow.pop %v1924
    %v1926 = vadd.f32 %v1925, 1.0
    %v1927 = vrcp.pop %v1926
    %v1928 = vmul.f32 1.0, %v1927
    %v1929 = vadd.f32 %v1910, %v183
    %v1930 = vmul.f32 %v1921, %v1929
    %v1931 = vadd.f32 %v1832, %v1930
    %v1932 = vtanh.pop %v1931
    %v1933 = vsub.f32 1.0, %v1928
    %v1934 = vmul.f32 %v1933, %v1932
    %v1935 = vmul.f32 %v1928, %v1663
    %v1936 = vadd.f32 %v1934, %v1935
    %s1937 = scalar_lea.vmem %s6, 32
    %1938 = vst [vmem:[%s1937] sm:$0xff] %v1936
    %v1939 = vld [vmem:[%s1118] sm:$0xf]
    %v1940 = vld [vmem:[%s1116] sm:$0xf]
    %1941 = vmatprep.subr.bf16.mxu0 %v269
    %1942 = vmatpush1.bf16.msra.mxu0 %v268
    %1943 = vmatprep.subr.bf16.mxu0 %v272
    %1944 = vmatpush1.bf16.msra.mxu0 %v271
    %1945 = vmatprep.subr.bf16.mxu0 %v275
    %1946 = vmatpush1.bf16.msra.mxu0 %v274
    %1947 = vmatprep.subr.bf16.mxu0 %v278
    %1948 = vmatpush1.bf16.msra.mxu0 %v277
    %1949 = vmatprep.subr.bf16.mxu0 %v281
    %1950 = vmatpush1.bf16.msra.mxu0 %v280
    %1951 = vmatprep.subr.bf16.mxu0 %v284
    %1952 = vmatpush1.bf16.msra.mxu0 %v283
    %1953 = vmatprep.subr.bf16.mxu0 %v287
    %1954 = vmatpush1.bf16.msra.mxu0 %v286
    %1955 = vmatprep.subr.bf16.mxu0 %v290
    %1956 = vmatpush1.bf16.msra.mxu0 %v289
    %1957 = vmatprep.subr.bf16.mxu0 0
    %1958 = vmatpush1.bf16.msra.mxu0 0
    %1959 = vmatprep.subr.bf16.mxu0 0
    %1960 = vmatpush1.bf16.msra.mxu0 0
    %1961 = vmatprep.subr.bf16.mxu0 0
    %1962 = vmatpush1.bf16.msra.mxu0 0
    %1963 = vmatprep.subr.bf16.mxu0 0
    %1964 = vmatpush1.bf16.msra.mxu0 0
    %1965 = vmatprep.subr.bf16.mxu0 0
    %1966 = vmatpush1.bf16.msra.mxu0 0
    %1967 = vmatprep.subr.bf16.mxu0 0
    %1968 = vmatpush1.bf16.msra.mxu0 0
    %1969 = vmatprep.subr.bf16.mxu0 0
    %1970 = vmatpush1.bf16.msra.mxu0 0
    %1971 = vmatprep.subr.bf16.mxu0 0
    %1972 = vmatpush1.bf16.msra.mxu0 0
    %1973 = vmatprep.mubr.bf16.mxu0 0
    %1974 = vmatmul.mubr.bf16.gmra.mrb[0].mxu0 %v1940
    %v1975 = vpop.f32.mrb[0].mxu0
    %v1976 = vadd.f32 0.0, %v1975
    %v1977 = vpop.f32.mrb[0].mxu0
    %v1978 = vadd.f32 0.0, %v1977
    %v1979 = vpop.f32.mrb[0].mxu0
    %v1980 = vpop.f32.mrb[0].mxu0
    %1981 = vdwg.mxu0
    %1982 = vmatprep.subr.bf16.mxu0 0
    %1983 = vmatpush1.bf16.msra.mxu0 %v270
    %1984 = vmatprep.subr.bf16.mxu0 0
    %1985 = vmatpush1.bf16.msra.mxu0 %v273
    %1986 = vmatprep.subr.bf16.mxu0 0
    %1987 = vmatpush1.bf16.msra.mxu0 %v276
    %1988 = vmatprep.subr.bf16.mxu0 0
    %1989 = vmatpush1.bf16.msra.mxu0 %v279
    %1990 = vmatprep.subr.bf16.mxu0 0
    %1991 = vmatpush1.bf16.msra.mxu0 %v282
    %1992 = vmatprep.subr.bf16.mxu0 0
    %1993 = vmatpush1.bf16.msra.mxu0 %v285
    %1994 = vmatprep.subr.bf16.mxu0 0
    %1995 = vmatpush1.bf16.msra.mxu0 %v288
    %1996 = vmatprep.subr.bf16.mxu0 0
    %1997 = vmatpush1.bf16.msra.mxu0 %v291
    %1998 = vmatprep.subr.bf16.mxu0 0
    %1999 = vmatpush1.bf16.msra.mxu0 0
    %2000 = vmatprep.subr.bf16.mxu0 0
    %2001 = vmatpush1.bf16.msra.mxu0 0
    %2002 = vmatprep.subr.bf16.mxu0 0
    %2003 = vmatpush1.bf16.msra.mxu0 0
    %2004 = vmatprep.subr.bf16.mxu0 0
    %2005 = vmatpush1.bf16.msra.mxu0 0
    %2006 = vmatprep.subr.bf16.mxu0 0
    %2007 = vmatpush1.bf16.msra.mxu0 0
    %2008 = vmatprep.subr.bf16.mxu0 0
    %2009 = vmatpush1.bf16.msra.mxu0 0
    %2010 = vmatprep.subr.bf16.mxu0 0
    %2011 = vmatpush1.bf16.msra.mxu0 0
    %2012 = vmatprep.subr.bf16.mxu0 0
    %2013 = vmatpush1.bf16.msra.mxu0 0
    %2014 = vmatprep.mubr.bf16.mxu0 0
    %2015 = vmatmul.mubr.bf16.gmra.mrb[0].mxu0 %v1940
    %v2016 = vpop.f32.mrb[0].mxu0
    %v2017 = vadd.f32 0.0, %v2016
    %v2018 = vpop.f32.mrb[0].mxu0
    %v2019 = vpop.f32.mrb[0].mxu0
    %v2020 = vpop.f32.mrb[0].mxu0
    %2021 = vdwg.mxu0
    %2022 = vmatprep.subr.bf16.mxu0 %v478
    %2023 = vmatpush1.bf16.msra.mxu0 %v477
    %2024 = vmatprep.subr.bf16.mxu0 %v481
    %2025 = vmatpush1.bf16.msra.mxu0 %v480
    %2026 = vmatprep.subr.bf16.mxu0 %v484
    %2027 = vmatpush1.bf16.msra.mxu0 %v483
    %2028 = vmatprep.subr.bf16.mxu0 %v487
    %2029 = vmatpush1.bf16.msra.mxu0 %v486
    %2030 = vmatprep.subr.bf16.mxu0 %v490
    %2031 = vmatpush1.bf16.msra.mxu0 %v489
    %2032 = vmatprep.subr.bf16.mxu0 %v493
    %2033 = vmatpush1.bf16.msra.mxu0 %v492
    %2034 = vmatprep.subr.bf16.mxu0 %v496
    %2035 = vmatpush1.bf16.msra.mxu0 %v495
    %2036 = vmatprep.subr.bf16.mxu0 %v499
    %2037 = vmatpush1.bf16.msra.mxu0 %v498
    %2038 = vmatprep.subr.bf16.mxu0 0
    %2039 = vmatpush1.bf16.msra.mxu0 0
    %2040 = vmatprep.subr.bf16.mxu0 0
    %2041 = vmatpush1.bf16.msra.mxu0 0
    %2042 = vmatprep.subr.bf16.mxu0 0
    %2043 = vmatpush1.bf16.msra.mxu0 0
    %2044 = vmatprep.subr.bf16.mxu0 0
    %2045 = vmatpush1.bf16.msra.mxu0 0
    %2046 = vmatprep.subr.bf16.mxu0 0
    %2047 = vmatpush1.bf16.msra.mxu0 0
    %2048 = vmatprep.subr.bf16.mxu0 0
    %2049 = vmatpush1.bf16.msra.mxu0 0
    %2050 = vmatprep.subr.bf16.mxu0 0
    %2051 = vmatpush1.bf16.msra.mxu0 0
    %2052 = vmatprep.subr.bf16.mxu0 0
    %2053 = vmatpush1.bf16.msra.mxu0 0
    %2054 = vmatprep.mubr.bf16.mxu0 0
    %2055 = vmatmul.mubr.bf16.gmra.mrb[0].mxu0 %v1939
    %v2056 = vpop.f32.mrb[0].mxu0
    %v2057 = vadd.f32 %v1976, %v2056
    %v2058 = vpop.f32.mrb[0].mxu0
    %v2059 = vadd.f32 %v1978, %v2058
    %v2060 = vpop.f32.mrb[0].mxu0
    %v2061 = vpop.f32.mrb[0].mxu0
    %2062 = vdwg.mxu0
    %2063 = vmatprep.subr.bf16.mxu0 0
    %2064 = vmatpush1.bf16.msra.mxu0 %v479
    %2065 = vmatprep.subr.bf16.mxu0 0
    %2066 = vmatpush1.bf16.msra.mxu0 %v482
    %2067 = vmatprep.subr.bf16.mxu0 0
    %2068 = vmatpush1.bf16.msra.mxu0 %v485
    %2069 = vmatprep.subr.bf16.mxu0 0
    %2070 = vmatpush1.bf16.msra.mxu0 %v488
    %2071 = vmatprep.subr.bf16.mxu0 0
    %2072 = vmatpush1.bf16.msra.mxu0 %v491
    %2073 = vmatprep.subr.bf16.mxu0 0
    %2074 = vmatpush1.bf16.msra.mxu0 %v494
    %2075 = vmatprep.subr.bf16.mxu0 0
    %2076 = vmatpush1.bf16.msra.mxu0 %v497
    %2077 = vmatprep.subr.bf16.mxu0 0
    %2078 = vmatpush1.bf16.msra.mxu0 %v500
    %2079 = vmatprep.subr.bf16.mxu0 0
    %2080 = vmatpush1.bf16.msra.mxu0 0
    %2081 = vmatprep.subr.bf16.mxu0 0
    %2082 = vmatpush1.bf16.msra.mxu0 0
    %2083 = vmatprep.subr.bf16.mxu0 0
    %2084 = vmatpush1.bf16.msra.mxu0 0
    %2085 = vmatprep.subr.bf16.mxu0 0
    %2086 = vmatpush1.bf16.msra.mxu0 0
    %2087 = vmatprep.subr.bf16.mxu0 0
    %2088 = vmatpush1.bf16.msra.mxu0 0
    %2089 = vmatprep.subr.bf16.mxu0 0
    %2090 = vmatpush1.bf16.msra.mxu0 0
    %2091 = vmatprep.subr.bf16.mxu0 0
    %2092 = vmatpush1.bf16.msra.mxu0 0
    %2093 = vmatprep.subr.bf16.mxu0 0
    %2094 = vmatpush1.bf16.msra.mxu0 0
    %2095 = vmatprep.mubr.bf16.mxu0 0
    %2096 = vmatmul.mubr.bf16.gmra.mrb[0].mxu0 %v1939
    %v2097 = vpop.f32.mrb[0].mxu0
    %v2098 = vadd.f32 %v2017, %v2097
    %v2099 = vpop.f32.mrb[0].mxu0
    %v2100 = vpop.f32.mrb[0].mxu0
    %v2101 = vpop.f32.mrb[0].mxu0
    %2102 = vdwg.mxu0
    %v2103 = vadd.f32 %v2057, %v166
    %v2104 = vadd.f32 %v2059, %v170
    %v2105 = vadd.f32 %v2098, %v174
    %v2106 = vpack.c.bf16 %v1936, %v1936
    %2107 = vmatprep.subr.bf16.mxu0 %v690
    %2108 = vmatpush1.bf16.msra.mxu0 %v689
    %2109 = vmatprep.subr.bf16.mxu0 %v693
    %2110 = vmatpush1.bf16.msra.mxu0 %v692
    %2111 = vmatprep.subr.bf16.mxu0 %v696
    %2112 = vmatpush1.bf16.msra.mxu0 %v695
    %2113 = vmatprep.subr.bf16.mxu0 %v699
    %2114 = vmatpush1.bf16.msra.mxu0 %v698
    %2115 = vmatprep.subr.bf16.mxu0 %v702
    %2116 = vmatpush1.bf16.msra.mxu0 %v701
    %2117 = vmatprep.subr.bf16.mxu0 %v705
    %2118 = vmatpush1.bf16.msra.mxu0 %v704
    %2119 = vmatprep.subr.bf16.mxu0 %v708
    %2120 = vmatpush1.bf16.msra.mxu0 %v707
    %2121 = vmatprep.subr.bf16.mxu0 %v711
    %2122 = vmatpush1.bf16.msra.mxu0 %v710
    %2123 = vmatprep.subr.bf16.mxu0 0
    %2124 = vmatpush1.bf16.msra.mxu0 0
    %2125 = vmatprep.subr.bf16.mxu0 0
    %2126 = vmatpush1.bf16.msra.mxu0 0
    %2127 = vmatprep.subr.bf16.mxu0 0
    %2128 = vmatpush1.bf16.msra.mxu0 0
    %2129 = vmatprep.subr.bf16.mxu0 0
    %2130 = vmatpush1.bf16.msra.mxu0 0
    %2131 = vmatprep.subr.bf16.mxu0 0
    %2132 = vmatpush1.bf16.msra.mxu0 0
    %2133 = vmatprep.subr.bf16.mxu0 0
    %2134 = vmatpush1.bf16.msra.mxu0 0
    %2135 = vmatprep.subr.bf16.mxu0 0
    %2136 = vmatpush1.bf16.msra.mxu0 0
    %2137 = vmatprep.subr.bf16.mxu0 0
    %2138 = vmatpush1.bf16.msra.mxu0 0
    %2139 = vmatprep.mubr.bf16.mxu0 0
    %2140 = vmatmul.mubr.bf16.gmra.mrb[0].mxu0 %v2106
    %v2141 = vpop.f32.mrb[0].mxu0
    %v2142 = vadd.f32 0.0, %v2141
    %v2143 = vpop.f32.mrb[0].mxu0
    %v2144 = vadd.f32 0.0, %v2143
    %v2145 = vpop.f32.mrb[0].mxu0
    %v2146 = vpop.f32.mrb[0].mxu0
    %2147 = vdwg.mxu0
    %2148 = vmatprep.subr.bf16.mxu0 0
    %2149 = vmatpush1.bf16.msra.mxu0 %v691
    %2150 = vmatprep.subr.bf16.mxu0 0
    %2151 = vmatpush1.bf16.msra.mxu0 %v694
    %2152 = vmatprep.subr.bf16.mxu0 0
    %2153 = vmatpush1.bf16.msra.mxu0 %v697
    %2154 = vmatprep.subr.bf16.mxu0 0
    %2155 = vmatpush1.bf16.msra.mxu0 %v700
    %2156 = vmatprep.subr.bf16.mxu0 0
    %2157 = vmatpush1.bf16.msra.mxu0 %v703
    %2158 = vmatprep.subr.bf16.mxu0 0
    %2159 = vmatpush1.bf16.msra.mxu0 %v706
    %2160 = vmatprep.subr.bf16.mxu0 0
    %2161 = vmatpush1.bf16.msra.mxu0 %v709
    %2162 = vmatprep.subr.bf16.mxu0 0
    %2163 = vmatpush1.bf16.msra.mxu0 %v712
    %2164 = vmatprep.subr.bf16.mxu0 0
    %2165 = vmatpush1.bf16.msra.mxu0 0
    %2166 = vmatprep.subr.bf16.mxu0 0
    %2167 = vmatpush1.bf16.msra.mxu0 0
    %2168 = vmatprep.subr.bf16.mxu0 0
    %2169 = vmatpush1.bf16.msra.mxu0 0
    %2170 = vmatprep.subr.bf16.mxu0 0
    %2171 = vmatpush1.bf16.msra.mxu0 0
    %2172 = vmatprep.subr.bf16.mxu0 0
    %2173 = vmatpush1.bf16.msra.mxu0 0
    %2174 = vmatprep.subr.bf16.mxu0 0
    %2175 = vmatpush1.bf16.msra.mxu0 0
    %2176 = vmatprep.subr.bf16.mxu0 0
    %2177 = vmatpush1.bf16.msra.mxu0 0
    %2178 = vmatprep.subr.bf16.mxu0 0
    %2179 = vmatpush1.bf16.msra.mxu0 0
    %2180 = vmatprep.mubr.bf16.mxu0 0
    %2181 = vmatmul.mubr.bf16.gmra.mrb[0].mxu0 %v2106
    %v2182 = vpop.f32.mrb[0].mxu0
    %v2183 = vadd.f32 0.0, %v2182
    %v2184 = vpop.f32.mrb[0].mxu0
    %v2185 = vpop.f32.mrb[0].mxu0
    %v2186 = vpop.f32.mrb[0].mxu0
    %2187 = vdwg.mxu0
    %v2188 = vadd.f32 %v2103, %v2142
    %v2189 = vxor.u32 %v2188, 2147483648
    %v2190 = vmul.f32 %v2189, 1.442695
    %v2191 = vpow.pop %v2190
    %v2192 = vadd.f32 %v2191, 1.0
    %v2193 = vrcp.pop %v2192
    %v2194 = vmul.f32 1.0, %v2193
    %v2195 = vadd.f32 %v2104, %v2144
    %v2196 = vxor.u32 %v2195, 2147483648
    %v2197 = vmul.f32 %v2196, 1.442695
    %v2198 = vpow.pop %v2197
    %v2199 = vadd.f32 %v2198, 1.0
    %v2200 = vrcp.pop %v2199
    %v2201 = vmul.f32 1.0, %v2200
    %v2202 = vadd.f32 %v2183, %v183
    %v2203 = vmul.f32 %v2194, %v2202
    %v2204 = vadd.f32 %v2105, %v2203
    %v2205 = vtanh.pop %v2204
    %v2206 = vsub.f32 1.0, %v2201
    %v2207 = vmul.f32 %v2206, %v2205
    %v2208 = vmul.f32 %v2201, %v1936
    %v2209 = vadd.f32 %v2207, %v2208
    %s2210 = scalar_lea.vmem %s6, 40
    %2211 = vst [vmem:[%s2210] sm:$0xff] %v2209
    %v2212 = vld [vmem:[%s843] sm:$0xf]
    %v2213 = vld [vmem:[%s841] sm:$0xf]
    %2214 = vmatprep.subr.bf16.mxu0 %v269
    %2215 = vmatpush1.bf16.msra.mxu0 %v268
    %2216 = vmatprep.subr.bf16.mxu0 %v272
    %2217 = vmatpush1.bf16.msra.mxu0 %v271
    %2218 = vmatprep.subr.bf16.mxu0 %v275
    %2219 = vmatpush1.bf16.msra.mxu0 %v274
    %2220 = vmatprep.subr.bf16.mxu0 %v278
    %2221 = vmatpush1.bf16.msra.mxu0 %v277
    %2222 = vmatprep.subr.bf16.mxu0 %v281
    %2223 = vmatpush1.bf16.msra.mxu0 %v280
    %2224 = vmatprep.subr.bf16.mxu0 %v284
    %2225 = vmatpush1.bf16.msra.mxu0 %v283
    %2226 = vmatprep.subr.bf16.mxu0 %v287
    %2227 = vmatpush1.bf16.msra.mxu0 %v286
    %2228 = vmatprep.subr.bf16.mxu0 %v290
    %2229 = vmatpush1.bf16.msra.mxu0 %v289
    %2230 = vmatprep.subr.bf16.mxu0 0
    %2231 = vmatpush1.bf16.msra.mxu0 0
    %2232 = vmatprep.subr.bf16.mxu0 0
    %2233 = vmatpush1.bf16.msra.mxu0 0
    %2234 = vmatprep.subr.bf16.mxu0 0
    %2235 = vmatpush1.bf16.msra.mxu0 0
    %2236 = vmatprep.subr.bf16.mxu0 0
    %2237 = vmatpush1.bf16.msra.mxu0 0
    %2238 = vmatprep.subr.bf16.mxu0 0
    %2239 = vmatpush1.bf16.msra.mxu0 0
    %2240 = vmatprep.subr.bf16.mxu0 0
    %2241 = vmatpush1.bf16.msra.mxu0 0
    %2242 = vmatprep.subr.bf16.mxu0 0
    %2243 = vmatpush1.bf16.msra.mxu0 0
    %2244 = vmatprep.subr.bf16.mxu0 0
    %2245 = vmatpush1.bf16.msra.mxu0 0
    %2246 = vmatprep.mubr.bf16.mxu0 0
    %2247 = vmatmul.mubr.bf16.gmra.mrb[0].mxu0 %v2213
    %v2248 = vpop.f32.mrb[0].mxu0
    %v2249 = vadd.f32 0.0, %v2248
    %v2250 = vpop.f32.mrb[0].mxu0
    %v2251 = vadd.f32 0.0, %v2250
    %v2252 = vpop.f32.mrb[0].mxu0
    %v2253 = vpop.f32.mrb[0].mxu0
    %2254 = vdwg.mxu0
    %2255 = vmatprep.subr.bf16.mxu0 0
    %2256 = vmatpush1.bf16.msra.mxu0 %v270
    %2257 = vmatprep.subr.bf16.mxu0 0
    %2258 = vmatpush1.bf16.msra.mxu0 %v273
    %2259 = vmatprep.subr.bf16.mxu0 0
    %2260 = vmatpush1.bf16.msra.mxu0 %v276
    %2261 = vmatprep.subr.bf16.mxu0 0
    %2262 = vmatpush1.bf16.msra.mxu0 %v279
    %2263 = vmatprep.subr.bf16.mxu0 0
    %2264 = vmatpush1.bf16.msra.mxu0 %v282
    %2265 = vmatprep.subr.bf16.mxu0 0
    %2266 = vmatpush1.bf16.msra.mxu0 %v285
    %2267 = vmatprep.subr.bf16.mxu0 0
    %2268 = vmatpush1.bf16.msra.mxu0 %v288
    %2269 = vmatprep.subr.bf16.mxu0 0
    %2270 = vmatpush1.bf16.msra.mxu0 %v291
    %2271 = vmatprep.subr.bf16.mxu0 0
    %2272 = vmatpush1.bf16.msra.mxu0 0
    %2273 = vmatprep.subr.bf16.mxu0 0
    %2274 = vmatpush1.bf16.msra.mxu0 0
    %2275 = vmatprep.subr.bf16.mxu0 0
    %2276 = vmatpush1.bf16.msra.mxu0 0
    %2277 = vmatprep.subr.bf16.mxu0 0
    %2278 = vmatpush1.bf16.msra.mxu0 0
    %2279 = vmatprep.subr.bf16.mxu0 0
    %2280 = vmatpush1.bf16.msra.mxu0 0
    %2281 = vmatprep.subr.bf16.mxu0 0
    %2282 = vmatpush1.bf16.msra.mxu0 0
    %2283 = vmatprep.subr.bf16.mxu0 0
    %2284 = vmatpush1.bf16.msra.mxu0 0
    %2285 = vmatprep.subr.bf16.mxu0 0
    %2286 = vmatpush1.bf16.msra.mxu0 0
    %2287 = vmatprep.mubr.bf16.mxu0 0
    %2288 = vmatmul.mubr.bf16.gmra.mrb[0].mxu0 %v2213
    %v2289 = vpop.f32.mrb[0].mxu0
    %v2290 = vadd.f32 0.0, %v2289
    %v2291 = vpop.f32.mrb[0].mxu0
    %v2292 = vpop.f32.mrb[0].mxu0
    %v2293 = vpop.f32.mrb[0].mxu0
    %2294 = vdwg.mxu0
    %2295 = vmatprep.subr.bf16.mxu0 %v478
    %2296 = vmatpush1.bf16.msra.mxu0 %v477
    %2297 = vmatprep.subr.bf16.mxu0 %v481
    %2298 = vmatpush1.bf16.msra.mxu0 %v480
    %2299 = vmatprep.subr.bf16.mxu0 %v484
    %2300 = vmatpush1.bf16.msra.mxu0 %v483
    %2301 = vmatprep.subr.bf16.mxu0 %v487
    %2302 = vmatpush1.bf16.msra.mxu0 %v486
    %2303 = vmatprep.subr.bf16.mxu0 %v490
    %2304 = vmatpush1.bf16.msra.mxu0 %v489
    %2305 = vmatprep.subr.bf16.mxu0 %v493
    %2306 = vmatpush1.bf16.msra.mxu0 %v492
    %2307 = vmatprep.subr.bf16.mxu0 %v496
    %2308 = vmatpush1.bf16.msra.mxu0 %v495
    %2309 = vmatprep.subr.bf16.mxu0 %v499
    %2310 = vmatpush1.bf16.msra.mxu0 %v498
    %2311 = vmatprep.subr.bf16.mxu0 0
    %2312 = vmatpush1.bf16.msra.mxu0 0
    %2313 = vmatprep.subr.bf16.mxu0 0
    %2314 = vmatpush1.bf16.msra.mxu0 0
    %2315 = vmatprep.subr.bf16.mxu0 0
    %2316 = vmatpush1.bf16.msra.mxu0 0
    %2317 = vmatprep.subr.bf16.mxu0 0
    %2318 = vmatpush1.bf16.msra.mxu0 0
    %2319 = vmatprep.subr.bf16.mxu0 0
    %2320 = vmatpush1.bf16.msra.mxu0 0
    %2321 = vmatprep.subr.bf16.mxu0 0
    %2322 = vmatpush1.bf16.msra.mxu0 0
    %2323 = vmatprep.subr.bf16.mxu0 0
    %2324 = vmatpush1.bf16.msra.mxu0 0
    %2325 = vmatprep.subr.bf16.mxu0 0
    %2326 = vmatpush1.bf16.msra.mxu0 0
    %2327 = vmatprep.mubr.bf16.mxu0 0
    %2328 = vmatmul.mubr.bf16.gmra.mrb[0].mxu0 %v2212
    %v2329 = vpop.f32.mrb[0].mxu0
    %v2330 = vadd.f32 %v2249, %v2329
    %v2331 = vpop.f32.mrb[0].mxu0
    %v2332 = vadd.f32 %v2251, %v2331
    %v2333 = vpop.f32.mrb[0].mxu0
    %v2334 = vpop.f32.mrb[0].mxu0
    %2335 = vdwg.mxu0
    %2336 = vmatprep.subr.bf16.mxu0 0
    %2337 = vmatpush1.bf16.msra.mxu0 %v479
    %2338 = vmatprep.subr.bf16.mxu0 0
    %2339 = vmatpush1.bf16.msra.mxu0 %v482
    %2340 = vmatprep.subr.bf16.mxu0 0
    %2341 = vmatpush1.bf16.msra.mxu0 %v485
    %2342 = vmatprep.subr.bf16.mxu0 0
    %2343 = vmatpush1.bf16.msra.mxu0 %v488
    %2344 = vmatprep.subr.bf16.mxu0 0
    %2345 = vmatpush1.bf16.msra.mxu0 %v491
    %2346 = vmatprep.subr.bf16.mxu0 0
    %2347 = vmatpush1.bf16.msra.mxu0 %v494
    %2348 = vmatprep.subr.bf16.mxu0 0
    %2349 = vmatpush1.bf16.msra.mxu0 %v497
    %2350 = vmatprep.subr.bf16.mxu0 0
    %2351 = vmatpush1.bf16.msra.mxu0 %v500
    %2352 = vmatprep.subr.bf16.mxu0 0
    %2353 = vmatpush1.bf16.msra.mxu0 0
    %2354 = vmatprep.subr.bf16.mxu0 0
    %2355 = vmatpush1.bf16.msra.mxu0 0
    %2356 = vmatprep.subr.bf16.mxu0 0
    %2357 = vmatpush1.bf16.msra.mxu0 0
    %2358 = vmatprep.subr.bf16.mxu0 0
    %2359 = vmatpush1.bf16.msra.mxu0 0
    %2360 = vmatprep.subr.bf16.mxu0 0
    %2361 = vmatpush1.bf16.msra.mxu0 0
    %2362 = vmatprep.subr.bf16.mxu0 0
    %2363 = vmatpush1.bf16.msra.mxu0 0
    %2364 = vmatprep.subr.bf16.mxu0 0
    %2365 = vmatpush1.bf16.msra.mxu0 0
    %2366 = vmatprep.subr.bf16.mxu0 0
    %2367 = vmatpush1.bf16.msra.mxu0 0
    %2368 = vmatprep.mubr.bf16.mxu0 0
    %2369 = vmatmul.mubr.bf16.gmra.mrb[0].mxu0 %v2212
    %v2370 = vpop.f32.mrb[0].mxu0
    %v2371 = vadd.f32 %v2290, %v2370
    %v2372 = vpop.f32.mrb[0].mxu0
    %v2373 = vpop.f32.mrb[0].mxu0
    %v2374 = vpop.f32.mrb[0].mxu0
    %2375 = vdwg.mxu0
    %v2376 = vadd.f32 %v2330, %v166
    %v2377 = vadd.f32 %v2332, %v170
    %v2378 = vadd.f32 %v2371, %v174
    %v2379 = vpack.c.bf16 %v2209, %v2209
    %2380 = vmatprep.subr.bf16.mxu0 %v690
    %2381 = vmatpush1.bf16.msra.mxu0 %v689
    %2382 = vmatprep.subr.bf16.mxu0 %v693
    %2383 = vmatpush1.bf16.msra.mxu0 %v692
    %2384 = vmatprep.subr.bf16.mxu0 %v696
    %2385 = vmatpush1.bf16.msra.mxu0 %v695
    %2386 = vmatprep.subr.bf16.mxu0 %v699
    %2387 = vmatpush1.bf16.msra.mxu0 %v698
    %2388 = vmatprep.subr.bf16.mxu0 %v702
    %2389 = vmatpush1.bf16.msra.mxu0 %v701
    %2390 = vmatprep.subr.bf16.mxu0 %v705
    %2391 = vmatpush1.bf16.msra.mxu0 %v704
    %2392 = vmatprep.subr.bf16.mxu0 %v708
    %2393 = vmatpush1.bf16.msra.mxu0 %v707
    %2394 = vmatprep.subr.bf16.mxu0 %v711
    %2395 = vmatpush1.bf16.msra.mxu0 %v710
    %2396 = vmatprep.subr.bf16.mxu0 0
    %2397 = vmatpush1.bf16.msra.mxu0 0
    %2398 = vmatprep.subr.bf16.mxu0 0
    %2399 = vmatpush1.bf16.msra.mxu0 0
    %2400 = vmatprep.subr.bf16.mxu0 0
    %2401 = vmatpush1.bf16.msra.mxu0 0
    %2402 = vmatprep.subr.bf16.mxu0 0
    %2403 = vmatpush1.bf16.msra.mxu0 0
    %2404 = vmatprep.subr.bf16.mxu0 0
    %2405 = vmatpush1.bf16.msra.mxu0 0
    %2406 = vmatprep.subr.bf16.mxu0 0
    %2407 = vmatpush1.bf16.msra.mxu0 0
    %2408 = vmatprep.subr.bf16.mxu0 0
    %2409 = vmatpush1.bf16.msra.mxu0 0
    %2410 = vmatprep.subr.bf16.mxu0 0
    %2411 = vmatpush1.bf16.msra.mxu0 0
    %2412 = vmatprep.mubr.bf16.mxu0 0
    %2413 = vmatmul.mubr.bf16.gmra.mrb[0].mxu0 %v2379
    %v2414 = vpop.f32.mrb[0].mxu0
    %v2415 = vadd.f32 0.0, %v2414
    %v2416 = vpop.f32.mrb[0].mxu0
    %v2417 = vadd.f32 0.0, %v2416
    %v2418 = vpop.f32.mrb[0].mxu0
    %v2419 = vpop.f32.mrb[0].mxu0
    %2420 = vdwg.mxu0
    %2421 = vmatprep.subr.bf16.mxu0 0
    %2422 = vmatpush1.bf16.msra.mxu0 %v691
    %2423 = vmatprep.subr.bf16.mxu0 0
    %2424 = vmatpush1.bf16.msra.mxu0 %v694
    %2425 = vmatprep.subr.bf16.mxu0 0
    %2426 = vmatpush1.bf16.msra.mxu0 %v697
    %2427 = vmatprep.subr.bf16.mxu0 0
    %2428 = vmatpush1.bf16.msra.mxu0 %v700
    %2429 = vmatprep.subr.bf16.mxu0 0
    %2430 = vmatpush1.bf16.msra.mxu0 %v703
    %2431 = vmatprep.subr.bf16.mxu0 0
    %2432 = vmatpush1.bf16.msra.mxu0 %v706
    %2433 = vmatprep.subr.bf16.mxu0 0
    %2434 = vmatpush1.bf16.msra.mxu0 %v709
    %2435 = vmatprep.subr.bf16.mxu0 0
    %2436 = vmatpush1.bf16.msra.mxu0 %v712
    %2437 = vmatprep.subr.bf16.mxu0 0
    %2438 = vmatpush1.bf16.msra.mxu0 0
    %2439 = vmatprep.subr.bf16.mxu0 0
    %2440 = vmatpush1.bf16.msra.mxu0 0
    %2441 = vmatprep.subr.bf16.mxu0 0
    %2442 = vmatpush1.bf16.msra.mxu0 0
    %2443 = vmatprep.subr.bf16.mxu0 0
    %2444 = vmatpush1.bf16.msra.mxu0 0
    %2445 = vmatprep.subr.bf16.mxu0 0
    %2446 = vmatpush1.bf16.msra.mxu0 0
    %2447 = vmatprep.subr.bf16.mxu0 0
    %2448 = vmatpush1.bf16.msra.mxu0 0
    %2449 = vmatprep.subr.bf16.mxu0 0
    %2450 = vmatpush1.bf16.msra.mxu0 0
    %2451 = vmatprep.subr.bf16.mxu0 0
    %2452 = vmatpush1.bf16.msra.mxu0 0
    %2453 = vmatprep.mubr.bf16.mxu0 0
    %2454 = vmatmul.mubr.bf16.gmra.mrb[0].mxu0 %v2379
    %v2455 = vpop.f32.mrb[0].mxu0
    %v2456 = vadd.f32 0.0, %v2455
    %v2457 = vpop.f32.mrb[0].mxu0
    %v2458 = vpop.f32.mrb[0].mxu0
    %v2459 = vpop.f32.mrb[0].mxu0
    %2460 = vdwg.mxu0
    %v2461 = vadd.f32 %v2376, %v2415
    %v2462 = vxor.u32 %v2461, 2147483648
    %v2463 = vmul.f32 %v2462, 1.442695
    %v2464 = vpow.pop %v2463
    %v2465 = vadd.f32 %v2464, 1.0
    %v2466 = vrcp.pop %v2465
    %v2467 = vmul.f32 1.0, %v2466
    %v2468 = vadd.f32 %v2377, %v2417
    %v2469 = vxor.u32 %v2468, 2147483648
    %v2470 = vmul.f32 %v2469, 1.442695
    %v2471 = vpow.pop %v2470
    %v2472 = vadd.f32 %v2471, 1.0
    %v2473 = vrcp.pop %v2472
    %v2474 = vmul.f32 1.0, %v2473
    %v2475 = vadd.f32 %v2456, %v183
    %v2476 = vmul.f32 %v2467, %v2475
    %v2477 = vadd.f32 %v2378, %v2476
    %v2478 = vtanh.pop %v2477
    %v2479 = vsub.f32 1.0, %v2474
    %v2480 = vmul.f32 %v2479, %v2478
    %v2481 = vmul.f32 %v2474, %v2209
    %v2482 = vadd.f32 %v2480, %v2481
    %s2483 = scalar_lea.vmem %s6, 48
    %2484 = vst [vmem:[%s2483] sm:$0xff] %v2482
    %v2485 = vld [vmem:[%s186] sm:$0xf]
    %v2486 = vld [vmem:[%s0] sm:$0xf]
    %2487 = vmatprep.subr.bf16.mxu0 %v269
    %2488 = vmatpush1.bf16.msra.mxu0 %v268
    %2489 = vmatprep.subr.bf16.mxu0 %v272
    %2490 = vmatpush1.bf16.msra.mxu0 %v271
    %2491 = vmatprep.subr.bf16.mxu0 %v275
    %2492 = vmatpush1.bf16.msra.mxu0 %v274
    %2493 = vmatprep.subr.bf16.mxu0 %v278
    %2494 = vmatpush1.bf16.msra.mxu0 %v277
    %2495 = vmatprep.subr.bf16.mxu0 %v281
    %2496 = vmatpush1.bf16.msra.mxu0 %v280
    %2497 = vmatprep.subr.bf16.mxu0 %v284
    %2498 = vmatpush1.bf16.msra.mxu0 %v283
    %2499 = vmatprep.subr.bf16.mxu0 %v287
    %2500 = vmatpush1.bf16.msra.mxu0 %v286
    %2501 = vmatprep.subr.bf16.mxu0 %v290
    %2502 = vmatpush1.bf16.msra.mxu0 %v289
    %2503 = vmatprep.subr.bf16.mxu0 0
    %2504 = vmatpush1.bf16.msra.mxu0 0
    %2505 = vmatprep.subr.bf16.mxu0 0
    %2506 = vmatpush1.bf16.msra.mxu0 0
    %2507 = vmatprep.subr.bf16.mxu0 0
    %2508 = vmatpush1.bf16.msra.mxu0 0
    %2509 = vmatprep.subr.bf16.mxu0 0
    %2510 = vmatpush1.bf16.msra.mxu0 0
    %2511 = vmatprep.subr.bf16.mxu0 0
    %2512 = vmatpush1.bf16.msra.mxu0 0
    %2513 = vmatprep.subr.bf16.mxu0 0
    %2514 = vmatpush1.bf16.msra.mxu0 0
    %2515 = vmatprep.subr.bf16.mxu0 0
    %2516 = vmatpush1.bf16.msra.mxu0 0
    %2517 = vmatprep.subr.bf16.mxu0 0
    %2518 = vmatpush1.bf16.msra.mxu0 0
    %2519 = vmatprep.mubr.bf16.mxu0 0
    %2520 = vmatmul.mubr.bf16.gmra.mrb[0].mxu0 %v2486
    %v2521 = vpop.f32.mrb[0].mxu0
    %v2522 = vadd.f32 0.0, %v2521
    %v2523 = vpop.f32.mrb[0].mxu0
    %v2524 = vadd.f32 0.0, %v2523
    %v2525 = vpop.f32.mrb[0].mxu0
    %v2526 = vpop.f32.mrb[0].mxu0
    %2527 = vdwg.mxu0
    %2528 = vmatprep.subr.bf16.mxu0 0
    %2529 = vmatpush1.bf16.msra.mxu0 %v270
    %2530 = vmatprep.subr.bf16.mxu0 0
    %2531 = vmatpush1.bf16.msra.mxu0 %v273
    %2532 = vmatprep.subr.bf16.mxu0 0
    %2533 = vmatpush1.bf16.msra.mxu0 %v276
    %2534 = vmatprep.subr.bf16.mxu0 0
    %2535 = vmatpush1.bf16.msra.mxu0 %v279
    %2536 = vmatprep.subr.bf16.mxu0 0
    %2537 = vmatpush1.bf16.msra.mxu0 %v282
    %2538 = vmatprep.subr.bf16.mxu0 0
    %2539 = vmatpush1.bf16.msra.mxu0 %v285
    %2540 = vmatprep.subr.bf16.mxu0 0
    %2541 = vmatpush1.bf16.msra.mxu0 %v288
    %2542 = vmatprep.subr.bf16.mxu0 0
    %2543 = vmatpush1.bf16.msra.mxu0 %v291
    %2544 = vmatprep.subr.bf16.mxu0 0
    %2545 = vmatpush1.bf16.msra.mxu0 0
    %2546 = vmatprep.subr.bf16.mxu0 0
    %2547 = vmatpush1.bf16.msra.mxu0 0
    %2548 = vmatprep.subr.bf16.mxu0 0
    %2549 = vmatpush1.bf16.msra.mxu0 0
    %2550 = vmatprep.subr.bf16.mxu0 0
    %2551 = vmatpush1.bf16.msra.mxu0 0
    %2552 = vmatprep.subr.bf16.mxu0 0
    %2553 = vmatpush1.bf16.msra.mxu0 0
    %2554 = vmatprep.subr.bf16.mxu0 0
    %2555 = vmatpush1.bf16.msra.mxu0 0
    %2556 = vmatprep.subr.bf16.mxu0 0
    %2557 = vmatpush1.bf16.msra.mxu0 0
    %2558 = vmatprep.subr.bf16.mxu0 0
    %2559 = vmatpush1.bf16.msra.mxu0 0
    %2560 = vmatprep.mubr.bf16.mxu0 0
    %2561 = vmatmul.mubr.bf16.gmra.mrb[0].mxu0 %v2486
    %v2562 = vpop.f32.mrb[0].mxu0
    %v2563 = vadd.f32 0.0, %v2562
    %v2564 = vpop.f32.mrb[0].mxu0
    %v2565 = vpop.f32.mrb[0].mxu0
    %v2566 = vpop.f32.mrb[0].mxu0
    %2567 = vdwg.mxu0
    %2568 = vmatprep.subr.bf16.mxu0 %v478
    %2569 = vmatpush1.bf16.msra.mxu0 %v477
    %2570 = vmatprep.subr.bf16.mxu0 %v481
    %2571 = vmatpush1.bf16.msra.mxu0 %v480
    %2572 = vmatprep.subr.bf16.mxu0 %v484
    %2573 = vmatpush1.bf16.msra.mxu0 %v483
    %2574 = vmatprep.subr.bf16.mxu0 %v487
    %2575 = vmatpush1.bf16.msra.mxu0 %v486
    %2576 = vmatprep.subr.bf16.mxu0 %v490
    %2577 = vmatpush1.bf16.msra.mxu0 %v489
    %2578 = vmatprep.subr.bf16.mxu0 %v493
    %2579 = vmatpush1.bf16.msra.mxu0 %v492
    %2580 = vmatprep.subr.bf16.mxu0 %v496
    %2581 = vmatpush1.bf16.msra.mxu0 %v495
    %2582 = vmatprep.subr.bf16.mxu0 %v499
    %2583 = vmatpush1.bf16.msra.mxu0 %v498
    %2584 = vmatprep.subr.bf16.mxu0 0
    %2585 = vmatpush1.bf16.msra.mxu0 0
    %2586 = vmatprep.subr.bf16.mxu0 0
    %2587 = vmatpush1.bf16.msra.mxu0 0
    %2588 = vmatprep.subr.bf16.mxu0 0
    %2589 = vmatpush1.bf16.msra.mxu0 0
    %2590 = vmatprep.subr.bf16.mxu0 0
    %2591 = vmatpush1.bf16.msra.mxu0 0
    %2592 = vmatprep.subr.bf16.mxu0 0
    %2593 = vmatpush1.bf16.msra.mxu0 0
    %2594 = vmatprep.subr.bf16.mxu0 0
    %2595 = vmatpush1.bf16.msra.mxu0 0
    %2596 = vmatprep.subr.bf16.mxu0 0
    %2597 = vmatpush1.bf16.msra.mxu0 0
    %2598 = vmatprep.subr.bf16.mxu0 0
    %2599 = vmatpush1.bf16.msra.mxu0 0
    %2600 = vmatprep.mubr.bf16.mxu0 0
    %2601 = vmatmul.mubr.bf16.gmra.mrb[0].mxu0 %v2485
    %v2602 = vpop.f32.mrb[0].mxu0
    %v2603 = vadd.f32 %v2522, %v2602
    %v2604 = vpop.f32.mrb[0].mxu0
    %v2605 = vadd.f32 %v2524, %v2604
    %v2606 = vpop.f32.mrb[0].mxu0
    %v2607 = vpop.f32.mrb[0].mxu0
    %2608 = vdwg.mxu0
    %2609 = vmatprep.subr.bf16.mxu0 0
    %2610 = vmatpush1.bf16.msra.mxu0 %v479
    %2611 = vmatprep.subr.bf16.mxu0 0
    %2612 = vmatpush1.bf16.msra.mxu0 %v482
    %2613 = vmatprep.subr.bf16.mxu0 0
    %2614 = vmatpush1.bf16.msra.mxu0 %v485
    %2615 = vmatprep.subr.bf16.mxu0 0
    %2616 = vmatpush1.bf16.msra.mxu0 %v488
    %2617 = vmatprep.subr.bf16.mxu0 0
    %2618 = vmatpush1.bf16.msra.mxu0 %v491
    %2619 = vmatprep.subr.bf16.mxu0 0
    %2620 = vmatpush1.bf16.msra.mxu0 %v494
    %2621 = vmatprep.subr.bf16.mxu0 0
    %2622 = vmatpush1.bf16.msra.mxu0 %v497
    %2623 = vmatprep.subr.bf16.mxu0 0
    %2624 = vmatpush1.bf16.msra.mxu0 %v500
    %2625 = vmatprep.subr.bf16.mxu0 0
    %2626 = vmatpush1.bf16.msra.mxu0 0
    %2627 = vmatprep.subr.bf16.mxu0 0
    %2628 = vmatpush1.bf16.msra.mxu0 0
    %2629 = vmatprep.subr.bf16.mxu0 0
    %2630 = vmatpush1.bf16.msra.mxu0 0
    %2631 = vmatprep.subr.bf16.mxu0 0
    %2632 = vmatpush1.bf16.msra.mxu0 0
    %2633 = vmatprep.subr.bf16.mxu0 0
    %2634 = vmatpush1.bf16.msra.mxu0 0
    %2635 = vmatprep.subr.bf16.mxu0 0
    %2636 = vmatpush1.bf16.msra.mxu0 0
    %2637 = vmatprep.subr.bf16.mxu0 0
    %2638 = vmatpush1.bf16.msra.mxu0 0
    %2639 = vmatprep.subr.bf16.mxu0 0
    %2640 = vmatpush1.bf16.msra.mxu0 0
    %2641 = vmatprep.mubr.bf16.mxu0 0
    %2642 = vmatmul.mubr.bf16.gmra.mrb[0].mxu0 %v2485
    %v2643 = vpop.f32.mrb[0].mxu0
    %v2644 = vadd.f32 %v2563, %v2643
    %v2645 = vpop.f32.mrb[0].mxu0
    %v2646 = vpop.f32.mrb[0].mxu0
    %v2647 = vpop.f32.mrb[0].mxu0
    %2648 = vdwg.mxu0
    %v2649 = vadd.f32 %v2603, %v166
    %v2650 = vadd.f32 %v2605, %v170
    %v2651 = vadd.f32 %v2644, %v174
    %v2652 = vpack.c.bf16 %v2482, %v2482
    %2653 = vmatprep.subr.bf16.mxu0 %v690
    %2654 = vmatpush1.bf16.msra.mxu0 %v689
    %2655 = vmatprep.subr.bf16.mxu0 %v693
    %2656 = vmatpush1.bf16.msra.mxu0 %v692
    %2657 = vmatprep.subr.bf16.mxu0 %v696
    %2658 = vmatpush1.bf16.msra.mxu0 %v695
    %2659 = vmatprep.subr.bf16.mxu0 %v699
    %2660 = vmatpush1.bf16.msra.mxu0 %v698
    %2661 = vmatprep.subr.bf16.mxu0 %v702
    %2662 = vmatpush1.bf16.msra.mxu0 %v701
    %2663 = vmatprep.subr.bf16.mxu0 %v705
    %2664 = vmatpush1.bf16.msra.mxu0 %v704
    %2665 = vmatprep.subr.bf16.mxu0 %v708
    %2666 = vmatpush1.bf16.msra.mxu0 %v707
    %2667 = vmatprep.subr.bf16.mxu0 %v711
    %2668 = vmatpush1.bf16.msra.mxu0 %v710
    %2669 = vmatprep.subr.bf16.mxu0 0
    %2670 = vmatpush1.bf16.msra.mxu0 0
    %2671 = vmatprep.subr.bf16.mxu0 0
    %2672 = vmatpush1.bf16.msra.mxu0 0
    %2673 = vmatprep.subr.bf16.mxu0 0
    %2674 = vmatpush1.bf16.msra.mxu0 0
    %2675 = vmatprep.subr.bf16.mxu0 0
    %2676 = vmatpush1.bf16.msra.mxu0 0
    %2677 = vmatprep.subr.bf16.mxu0 0
    %2678 = vmatpush1.bf16.msra.mxu0 0
    %2679 = vmatprep.subr.bf16.mxu0 0
    %2680 = vmatpush1.bf16.msra.mxu0 0
    %2681 = vmatprep.subr.bf16.mxu0 0
    %2682 = vmatpush1.bf16.msra.mxu0 0
    %2683 = vmatprep.subr.bf16.mxu0 0
    %2684 = vmatpush1.bf16.msra.mxu0 0
    %2685 = vmatprep.mubr.bf16.mxu0 0
    %2686 = vmatmul.mubr.bf16.gmra.mrb[0].mxu0 %v2652
    %v2687 = vpop.f32.mrb[0].mxu0
    %v2688 = vadd.f32 0.0, %v2687
    %v2689 = vpop.f32.mrb[0].mxu0
    %v2690 = vadd.f32 0.0, %v2689
    %v2691 = vpop.f32.mrb[0].mxu0
    %v2692 = vpop.f32.mrb[0].mxu0
    %2693 = vdwg.mxu0
    %2694 = vmatprep.subr.bf16.mxu0 0
    %2695 = vmatpush1.bf16.msra.mxu0 %v691
    %2696 = vmatprep.subr.bf16.mxu0 0
    %2697 = vmatpush1.bf16.msra.mxu0 %v694
    %2698 = vmatprep.subr.bf16.mxu0 0
    %2699 = vmatpush1.bf16.msra.mxu0 %v697
    %2700 = vmatprep.subr.bf16.mxu0 0
    %2701 = vmatpush1.bf16.msra.mxu0 %v700
    %2702 = vmatprep.subr.bf16.mxu0 0
    %2703 = vmatpush1.bf16.msra.mxu0 %v703
    %2704 = vmatprep.subr.bf16.mxu0 0
    %2705 = vmatpush1.bf16.msra.mxu0 %v706
    %2706 = vmatprep.subr.bf16.mxu0 0
    %2707 = vmatpush1.bf16.msra.mxu0 %v709
    %2708 = vmatprep.subr.bf16.mxu0 0
    %2709 = vmatpush1.bf16.msra.mxu0 %v712
    %2710 = vmatprep.subr.bf16.mxu0 0
    %2711 = vmatpush1.bf16.msra.mxu0 0
    %2712 = vmatprep.subr.bf16.mxu0 0
    %2713 = vmatpush1.bf16.msra.mxu0 0
    %2714 = vmatprep.subr.bf16.mxu0 0
    %2715 = vmatpush1.bf16.msra.mxu0 0
    %2716 = vmatprep.subr.bf16.mxu0 0
    %2717 = vmatpush1.bf16.msra.mxu0 0
    %2718 = vmatprep.subr.bf16.mxu0 0
    %2719 = vmatpush1.bf16.msra.mxu0 0
    %2720 = vmatprep.subr.bf16.mxu0 0
    %2721 = vmatpush1.bf16.msra.mxu0 0
    %2722 = vmatprep.subr.bf16.mxu0 0
    %2723 = vmatpush1.bf16.msra.mxu0 0
    %2724 = vmatprep.subr.bf16.mxu0 0
    %2725 = vmatpush1.bf16.msra.mxu0 0
    %2726 = vmatprep.mubr.bf16.mxu0 0
    %2727 = vmatmul.mubr.bf16.gmra.mrb[0].mxu0 %v2652
    %v2728 = vpop.f32.mrb[0].mxu0
    %v2729 = vadd.f32 0.0, %v2728
    %v2730 = vpop.f32.mrb[0].mxu0
    %v2731 = vpop.f32.mrb[0].mxu0
    %v2732 = vpop.f32.mrb[0].mxu0
    %2733 = vdwg.mxu0
    %v2734 = vadd.f32 %v2649, %v2688
    %v2735 = vxor.u32 %v2734, 2147483648
    %v2736 = vmul.f32 %v2735, 1.442695
    %v2737 = vpow.pop %v2736
    %v2738 = vadd.f32 %v2737, 1.0
    %v2739 = vrcp.pop %v2738
    %v2740 = vmul.f32 1.0, %v2739
    %v2741 = vadd.f32 %v2650, %v2690
    %v2742 = vxor.u32 %v2741, 2147483648
    %v2743 = vmul.f32 %v2742, 1.442695
    %v2744 = vpow.pop %v2743
    %v2745 = vadd.f32 %v2744, 1.0
    %v2746 = vrcp.pop %v2745
    %v2747 = vmul.f32 1.0, %v2746
    %v2748 = vadd.f32 %v2729, %v183
    %v2749 = vmul.f32 %v2740, %v2748
    %v2750 = vadd.f32 %v2651, %v2749
    %v2751 = vtanh.pop %v2750
    %v2752 = vsub.f32 1.0, %v2747
    %v2753 = vmul.f32 %v2752, %v2751
    %v2754 = vmul.f32 %v2747, %v2482
    %v2755 = vadd.f32 %v2753, %v2754
    %s2756 = scalar_lea.vmem %s6, 56
    %2757 = vst [vmem:[%s2756] sm:$0xff] %v2755
    // Predicated region
    $region38: #{utterance_net_forward.2} parent=1 // pred_check
      _
    $region39: #{utterance_net_forward.2} parent=1 // pred_check_branch
      %2759 = sbr.rel (0) target = $region41
    $region40: #{utterance_net_forward.2} parent=1 // pred_region
      _
    $region41: #{utterance_net_forward.2} parent=1 // pred_fallthru
      _
    // Predicated region
    $region42: #{utterance_net_forward.2} parent=1 // pred_check
      _
    $region43: #{utterance_net_forward.2} parent=1 // pred_check_branch
      %2761 = sbr.rel (0) target = $region45
    $region44: #{utterance_net_forward.2} parent=1 // pred_region
      _
    $region45: #{utterance_net_forward.2} parent=1 // pred_fallthru
      _
    %2762 = vsyncpa [#allocation3], 1
    %2763 = vsyncpa [#allocation5], 1

// kernel: utterance_net_forward.3
$region0: #{utterance_net_forward.3}
  #allocation0 [shape = 'u32[]', space=smem, size = 0x4, offset = 0x4, fixed_abs, tag = 'smem constant byte address 0x4 - core index']
  #allocation1 [shape = 'u32[144,128]{1,0:T(1,128)}', space=vmem, size = 0x12000, scoped, tag = 'internal scratch']
  %s0 = inlined_call_operand.vmem [shape: bf16[8,8,128], index: 0, kind: input, shape index: {}]
  %s1 = inlined_call_operand.vmem [shape: bf16[128,384], index: 1, kind: input, shape index: {}]
  %s2 = inlined_call_operand.vmem [shape: bf16[128,384], index: 2, kind: input, shape index: {}]
  %s3 = inlined_call_operand.vmem [shape: bf16[128,384], index: 3, kind: input, shape index: {}]
  %s4 = inlined_call_operand.vmem [shape: f32[1,384], index: 4, kind: input, shape index: {}]
  %s5 = inlined_call_operand.vmem [shape: f32[1,128], index: 5, kind: input, shape index: {}]
  %s6 = inlined_call_operand.vmem [shape: f32[8,8,128], index: 6, kind: output, shape index: {0}]
  %s7 = inlined_call_operand.vmem [shape: f32[8,128], index: 7, kind: output, shape index: {1}]
  %8 = xla_tuple %s6, %s7
  %s9 = sld [smem:[#allocation0]]
  $region42: #{utterance_net_forward.3} parent=0
    _
  %s11 = ssub.s32 1, %s9
  %s12 = scalar_select 0, %s11, %s9
  // Predicated region
  $region2: #{utterance_net_forward.3} parent=0 // pred_check
    _
  $region3: #{utterance_net_forward.3} parent=0 // pred_check_branch
    %14 = sbr.rel (0) target = $region5
  $region4: #{utterance_net_forward.3} parent=0 // pred_region
    _
  $region5: #{utterance_net_forward.3} parent=0 // pred_fallthru
    _
  // Predicated region
  $region6: #{utterance_net_forward.3} parent=0 // pred_check
    _
  $region7: #{utterance_net_forward.3} parent=0 // pred_check_branch
    %16 = sbr.rel (0) target = $region9
  $region8: #{utterance_net_forward.3} parent=0 // pred_region
    _
  $region9: #{utterance_net_forward.3} parent=0 // pred_fallthru
    _
  // Predicated region
  $region10: #{utterance_net_forward.3} parent=0 // pred_check
    _
  $region11: #{utterance_net_forward.3} parent=0 // pred_check_branch
    %18 = sbr.rel (0) target = $region13
  $region12: #{utterance_net_forward.3} parent=0 // pred_region
    _
  $region13: #{utterance_net_forward.3} parent=0 // pred_fallthru
    _
  // Predicated region
  $region14: #{utterance_net_forward.3} parent=0 // pred_check
    _
  $region15: #{utterance_net_forward.3} parent=0 // pred_check_branch
    %20 = sbr.rel (0) target = $region17
  $region16: #{utterance_net_forward.3} parent=0 // pred_region
    _
  $region17: #{utterance_net_forward.3} parent=0 // pred_fallthru
    _
  // Predicated region
  $region18: #{utterance_net_forward.3} parent=0 // pred_check
    _
  $region19: #{utterance_net_forward.3} parent=0 // pred_check_branch
    %22 = sbr.rel (0) target = $region21
  $region20: #{utterance_net_forward.3} parent=0 // pred_region
    _
  $region21: #{utterance_net_forward.3} parent=0 // pred_fallthru
    _
  // Predicated region
  $region22: #{utterance_net_forward.3} parent=0 // pred_check
    _
  $region23: #{utterance_net_forward.3} parent=0 // pred_check_branch
    %24 = sbr.rel (0) target = $region25
  $region24: #{utterance_net_forward.3} parent=0 // pred_region
    _
  $region25: #{utterance_net_forward.3} parent=0 // pred_fallthru
    _
  %v26 = vld [vmem:[%s1] sm:$0xff]
  %v27 = vld [vmem:[%s1 + $0x8] sm:$0xf]
  %v28 = vld [vmem:[%s1 + $0xc] sm:$0xff]
  %v29 = vld [vmem:[%s1 + $0x14] sm:$0xf]
  %v30 = vld [vmem:[%s1 + $0x18] sm:$0xff]
  %v31 = vld [vmem:[%s1 + $0x20] sm:$0xf]
  %v32 = vld [vmem:[%s1 + $0x24] sm:$0xff]
  %v33 = vld [vmem:[%s1 + $0x2c] sm:$0xf]
  %v34 = vld [vmem:[%s1 + $0x30] sm:$0xff]
  %v35 = vld [vmem:[%s1 + $0x38] sm:$0xf]
  %v36 = vld [vmem:[%s1 + $0x3c] sm:$0xff]
  %v37 = vld [vmem:[%s1 + $0x44] sm:$0xf]
  %v38 = vld [vmem:[%s1 + $0x48] sm:$0xff]
  %v39 = vld [vmem:[%s1 + $0x50] sm:$0xf]
  %v40 = vld [vmem:[%s1 + $0x54] sm:$0xff]
  %v41 = vld [vmem:[%s1 + $0x5c] sm:$0xf]
  %v42 = vld [vmem:[%s1 + $0x60] sm:$0xff]
  %v43 = vld [vmem:[%s1 + $0x68] sm:$0xf]
  %v44 = vld [vmem:[%s1 + $0x6c] sm:$0xff]
  %v45 = vld [vmem:[%s1 + $0x74] sm:$0xf]
  %v46 = vld [vmem:[%s1 + $0x78] sm:$0xff]
  %v47 = vld [vmem:[%s1 + $0x80] sm:$0xf]
  %v48 = vld [vmem:[%s1 + $0x84] sm:$0xff]
  %v49 = vld [vmem:[%s1 + $0x8c] sm:$0xf]
  %v50 = vld [vmem:[%s1 + $0x90] sm:$0xff]
  %v51 = vld [vmem:[%s1 + $0x98] sm:$0xf]
  %v52 = vld [vmem:[%s1 + $0x9c] sm:$0xff]
  %v53 = vld [vmem:[%s1 + $0xa4] sm:$0xf]
  %v54 = vld [vmem:[%s1 + $0xa8] sm:$0xff]
  %v55 = vld [vmem:[%s1 + $0xb0] sm:$0xf]
  %v56 = vld [vmem:[%s1 + $0xb4] sm:$0xff]
  %v57 = vld [vmem:[%s1 + $0xbc] sm:$0xf]
  %v58 = vld [vmem:[%s2] sm:$0xff]
  %v59 = vld [vmem:[%s2 + $0x8] sm:$0xf]
  %v60 = vld [vmem:[%s2 + $0xc] sm:$0xff]
  %v61 = vld [vmem:[%s2 + $0x14] sm:$0xf]
  %v62 = vld [vmem:[%s2 + $0x18] sm:$0xff]
  %v63 = vld [vmem:[%s2 + $0x20] sm:$0xf]
  %v64 = vld [vmem:[%s2 + $0x24] sm:$0xff]
  %v65 = vld [vmem:[%s2 + $0x2c] sm:$0xf]
  %v66 = vld [vmem:[%s2 + $0x30] sm:$0xff]
  %v67 = vld [vmem:[%s2 + $0x38] sm:$0xf]
  %v68 = vld [vmem:[%s2 + $0x3c] sm:$0xff]
  %v69 = vld [vmem:[%s2 + $0x44] sm:$0xf]
  %v70 = vld [vmem:[%s2 + $0x48] sm:$0xff]
  %v71 = vld [vmem:[%s2 + $0x50] sm:$0xf]
  %v72 = vld [vmem:[%s2 + $0x54] sm:$0xff]
  %v73 = vld [vmem:[%s2 + $0x5c] sm:$0xf]
  %v74 = vld [vmem:[%s2 + $0x60] sm:$0xff]
  %v75 = vld [vmem:[%s2 + $0x68] sm:$0xf]
  %v76 = vld [vmem:[%s2 + $0x6c] sm:$0xff]
  %v77 = vld [vmem:[%s2 + $0x74] sm:$0xf]
  %v78 = vld [vmem:[%s2 + $0x78] sm:$0xff]
  %v79 = vld [vmem:[%s2 + $0x80] sm:$0xf]
  %v80 = vld [vmem:[%s2 + $0x84] sm:$0xff]
  %v81 = vld [vmem:[%s2 + $0x8c] sm:$0xf]
  %v82 = vld [vmem:[%s2 + $0x90] sm:$0xff]
  %v83 = vld [vmem:[%s2 + $0x98] sm:$0xf]
  %v84 = vld [vmem:[%s2 + $0x9c] sm:$0xff]
  %v85 = vld [vmem:[%s2 + $0xa4] sm:$0xf]
  %v86 = vld [vmem:[%s2 + $0xa8] sm:$0xff]
  %v87 = vld [vmem:[%s2 + $0xb0] sm:$0xf]
  %v88 = vld [vmem:[%s2 + $0xb4] sm:$0xff]
  %v89 = vld [vmem:[%s2 + $0xbc] sm:$0xf]
  %v90 = vld [vmem:[%s3] sm:$0xff]
  %v91 = vld [vmem:[%s3 + $0x8] sm:$0xf]
  %v92 = vld [vmem:[%s3 + $0xc] sm:$0xff]
  %v93 = vld [vmem:[%s3 + $0x14] sm:$0xf]
  %v94 = vld [vmem:[%s3 + $0x18] sm:$0xff]
  %v95 = vld [vmem:[%s3 + $0x20] sm:$0xf]
  %v96 = vld [vmem:[%s3 + $0x24] sm:$0xff]
  %v97 = vld [vmem:[%s3 + $0x2c] sm:$0xf]
  %v98 = vld [vmem:[%s3 + $0x30] sm:$0xff]
  %v99 = vld [vmem:[%s3 + $0x38] sm:$0xf]
  %v100 = vld [vmem:[%s3 + $0x3c] sm:$0xff]
  %v101 = vld [vmem:[%s3 + $0x44] sm:$0xf]
  %v102 = vld [vmem:[%s3 + $0x48] sm:$0xff]
  %v103 = vld [vmem:[%s3 + $0x50] sm:$0xf]
  %v104 = vld [vmem:[%s3 + $0x54] sm:$0xff]
  %v105 = vld [vmem:[%s3 + $0x5c] sm:$0xf]
  %v106 = vld [vmem:[%s3 + $0x60] sm:$0xff]
  %v107 = vld [vmem:[%s3 + $0x68] sm:$0xf]
  %v108 = vld [vmem:[%s3 + $0x6c] sm:$0xff]
  %v109 = vld [vmem:[%s3 + $0x74] sm:$0xf]
  %v110 = vld [vmem:[%s3 + $0x78] sm:$0xff]
  %v111 = vld [vmem:[%s3 + $0x80] sm:$0xf]
  %v112 = vld [vmem:[%s3 + $0x84] sm:$0xff]
  %v113 = vld [vmem:[%s3 + $0x8c] sm:$0xf]
  %v114 = vld [vmem:[%s3 + $0x90] sm:$0xff]
  %v115 = vld [vmem:[%s3 + $0x98] sm:$0xf]
  %v116 = vld [vmem:[%s3 + $0x9c] sm:$0xff]
  %v117 = vld [vmem:[%s3 + $0xa4] sm:$0xf]
  %v118 = vld [vmem:[%s3 + $0xa8] sm:$0xff]
  %v119 = vld [vmem:[%s3 + $0xb0] sm:$0xf]
  %v120 = vld [vmem:[%s3 + $0xb4] sm:$0xff]
  %v121 = vld [vmem:[%s3 + $0xbc] sm:$0xf]
  %v122 = vld [vmem:[%s4] sm:$0x7]
  %v124 = vlaneseq
  %v125 = vshrl.u32 %v124, 7
  %v126 = vsub.s32 0, %v125
  %v127 = vrot.slane %v122, %v126
  %v128 = vlaneseq
  %v129 = vshrl.u32 %v128, 7
  %v130 = vsub.s32 1, %v129
  %v131 = vrot.slane %v122, %v130
  %v132 = vlaneseq
  %v133 = vshrl.u32 %v132, 7
  %v134 = vsub.s32 2, %v133
  %v135 = vrot.slane %v122, %v134
  %v139 = vld [vmem:[%s5] sm:$0x1]
  %v141 = vlaneseq
  %v142 = vshrl.u32 %v141, 7
  %v143 = vsub.s32 0, %v142
  %v144 = vrot.slane %v139, %v143
  %v146 = vld [vmem:[%s0] sm:$0xf]
  %s147 = scalar_lea.vmem %s0, 28
  %v148 = vld [vmem:[%s147] sm:$0xf]
  %v181 = vunpack.c.l.b16 %v58
  %v182 = vunpack.c.h.b16 %v58
  %v183 = vunpack.c.l.b16 %v59
  %v184 = vunpack.c.l.b16 %v60
  %v185 = vunpack.c.h.b16 %v60
  %v186 = vunpack.c.l.b16 %v61
  %v187 = vunpack.c.l.b16 %v62
  %v188 = vunpack.c.h.b16 %v62
  %v189 = vunpack.c.l.b16 %v63
  %v190 = vunpack.c.l.b16 %v64
  %v191 = vunpack.c.h.b16 %v64
  %v192 = vunpack.c.l.b16 %v65
  %v193 = vunpack.c.l.b16 %v66
  %v194 = vunpack.c.h.b16 %v66
  %v195 = vunpack.c.l.b16 %v67
  %v196 = vunpack.c.l.b16 %v68
  %v197 = vunpack.c.h.b16 %v68
  %v198 = vunpack.c.l.b16 %v69
  %v199 = vunpack.c.l.b16 %v70
  %v200 = vunpack.c.h.b16 %v70
  %v201 = vunpack.c.l.b16 %v71
  %v202 = vunpack.c.l.b16 %v72
  %v203 = vunpack.c.h.b16 %v72
  %v204 = vunpack.c.l.b16 %v73
  %v205 = vunpack.c.l.b16 %v74
  %v206 = vunpack.c.h.b16 %v74
  %v207 = vunpack.c.l.b16 %v75
  %v208 = vunpack.c.l.b16 %v76
  %v209 = vunpack.c.h.b16 %v76
  %v210 = vunpack.c.l.b16 %v77
  %v211 = vunpack.c.l.b16 %v78
  %v212 = vunpack.c.h.b16 %v78
  %v213 = vunpack.c.l.b16 %v79
  %v214 = vunpack.c.l.b16 %v80
  %v215 = vunpack.c.h.b16 %v80
  %v216 = vunpack.c.l.b16 %v81
  %v217 = vunpack.c.l.b16 %v82
  %v218 = vunpack.c.h.b16 %v82
  %v219 = vunpack.c.l.b16 %v83
  %v220 = vunpack.c.l.b16 %v84
  %v221 = vunpack.c.h.b16 %v84
  %v222 = vunpack.c.l.b16 %v85
  %v223 = vunpack.c.l.b16 %v86
  %v224 = vunpack.c.h.b16 %v86
  %v225 = vunpack.c.l.b16 %v87
  %v226 = vunpack.c.l.b16 %v88
  %v227 = vunpack.c.h.b16 %v88
  %v228 = vunpack.c.l.b16 %v89
  %v229 = vpack.c.b16 %v184, %v181
  %v230 = vpack.c.b16 %v185, %v182
  %v231 = vpack.c.b16 %v186, %v183
  %v232 = vpack.c.b16 %v190, %v187
  %v233 = vpack.c.b16 %v191, %v188
  %v234 = vpack.c.b16 %v192, %v189
  %v235 = vpack.c.b16 %v196, %v193
  %v236 = vpack.c.b16 %v197, %v194
  %v237 = vpack.c.b16 %v198, %v195
  %v238 = vpack.c.b16 %v202, %v199
  %v239 = vpack.c.b16 %v203, %v200
  %v240 = vpack.c.b16 %v204, %v201
  %v241 = vpack.c.b16 %v208, %v205
  %v242 = vpack.c.b16 %v209, %v206
  %v243 = vpack.c.b16 %v210, %v207
  %v244 = vpack.c.b16 %v214, %v211
  %v245 = vpack.c.b16 %v215, %v212
  %v246 = vpack.c.b16 %v216, %v213
  %v247 = vpack.c.b16 %v220, %v217
  %v248 = vpack.c.b16 %v221, %v218
  %v249 = vpack.c.b16 %v222, %v219
  %v250 = vpack.c.b16 %v226, %v223
  %v251 = vpack.c.b16 %v227, %v224
  %v252 = vpack.c.b16 %v228, %v225
  %277 = vmatprep.subr.bf16.mxu0 %v230
  %278 = vmatpush1.bf16.msra.mxu0 %v229
  %279 = vmatprep.subr.bf16.mxu0 %v233
  %280 = vmatpush1.bf16.msra.mxu0 %v232
  %281 = vmatprep.subr.bf16.mxu0 %v236
  %282 = vmatpush1.bf16.msra.mxu0 %v235
  %283 = vmatprep.subr.bf16.mxu0 %v239
  %284 = vmatpush1.bf16.msra.mxu0 %v238
  %285 = vmatprep.subr.bf16.mxu0 %v242
  %286 = vmatpush1.bf16.msra.mxu0 %v241
  %287 = vmatprep.subr.bf16.mxu0 %v245
  %288 = vmatpush1.bf16.msra.mxu0 %v244
  %289 = vmatprep.subr.bf16.mxu0 %v248
  %290 = vmatpush1.bf16.msra.mxu0 %v247
  %291 = vmatprep.subr.bf16.mxu0 %v251
  %292 = vmatpush1.bf16.msra.mxu0 %v250
  %293 = vmatprep.subr.bf16.mxu0 0
  %294 = vmatpush1.bf16.msra.mxu0 0
  %295 = vmatprep.subr.bf16.mxu0 0
  %296 = vmatpush1.bf16.msra.mxu0 0
  %297 = vmatprep.subr.bf16.mxu0 0
  %298 = vmatpush1.bf16.msra.mxu0 0
  %299 = vmatprep.subr.bf16.mxu0 0
  %300 = vmatpush1.bf16.msra.mxu0 0
  %301 = vmatprep.subr.bf16.mxu0 0
  %302 = vmatpush1.bf16.msra.mxu0 0
  %303 = vmatprep.subr.bf16.mxu0 0
  %304 = vmatpush1.bf16.msra.mxu0 0
  %305 = vmatprep.subr.bf16.mxu0 0
  %306 = vmatpush1.bf16.msra.mxu0 0
  %307 = vmatprep.subr.bf16.mxu0 0
  %308 = vmatpush1.bf16.msra.mxu0 0
  %309 = vmatprep.mubr.bf16.mxu0 0
  %310 = vmatmul.mubr.bf16.gmra.mrb[0].mxu0 %v148
  %v311 = vpop.f32.mrb[0].mxu0
  %v312 = vadd.f32 0.0, %v311
  %v313 = vpop.f32.mrb[0].mxu0
  %v314 = vadd.f32 0.0, %v313
  %v315 = vpop.f32.mrb[0].mxu0
  %v316 = vpop.f32.mrb[0].mxu0
  %317 = vdwg.mxu0
  %318 = vmatprep.subr.bf16.mxu0 0
  %319 = vmatpush1.bf16.msra.mxu0 %v231
  %320 = vmatprep.subr.bf16.mxu0 0
  %321 = vmatpush1.bf16.msra.mxu0 %v234
  %322 = vmatprep.subr.bf16.mxu0 0
  %323 = vmatpush1.bf16.msra.mxu0 %v237
  %324 = vmatprep.subr.bf16.mxu0 0
  %325 = vmatpush1.bf16.msra.mxu0 %v240
  %326 = vmatprep.subr.bf16.mxu0 0
  %327 = vmatpush1.bf16.msra.mxu0 %v243
  %328 = vmatprep.subr.bf16.mxu0 0
  %329 = vmatpush1.bf16.msra.mxu0 %v246
  %330 = vmatprep.subr.bf16.mxu0 0
  %331 = vmatpush1.bf16.msra.mxu0 %v249
  %332 = vmatprep.subr.bf16.mxu0 0
  %333 = vmatpush1.bf16.msra.mxu0 %v252
  %334 = vmatprep.subr.bf16.mxu0 0
  %335 = vmatpush1.bf16.msra.mxu0 0
  %336 = vmatprep.subr.bf16.mxu0 0
  %337 = vmatpush1.bf16.msra.mxu0 0
  %338 = vmatprep.subr.bf16.mxu0 0
  %339 = vmatpush1.bf16.msra.mxu0 0
  %340 = vmatprep.subr.bf16.mxu0 0
  %341 = vmatpush1.bf16.msra.mxu0 0
  %342 = vmatprep.subr.bf16.mxu0 0
  %343 = vmatpush1.bf16.msra.mxu0 0
  %344 = vmatprep.subr.bf16.mxu0 0
  %345 = vmatpush1.bf16.msra.mxu0 0
  %346 = vmatprep.subr.bf16.mxu0 0
  %347 = vmatpush1.bf16.msra.mxu0 0
  %348 = vmatprep.subr.bf16.mxu0 0
  %349 = vmatpush1.bf16.msra.mxu0 0
  %350 = vmatprep.mubr.bf16.mxu0 0
  %351 = vmatmul.mubr.bf16.gmra.mrb[0].mxu0 %v148
  %v352 = vpop.f32.mrb[0].mxu0
  %v353 = vadd.f32 0.0, %v352
  %v354 = vpop.f32.mrb[0].mxu0
  %v355 = vpop.f32.mrb[0].mxu0
  %v356 = vpop.f32.mrb[0].mxu0
  %357 = vdwg.mxu0
  %v390 = vunpack.c.l.b16 %v26
  %v391 = vunpack.c.h.b16 %v26
  %v392 = vunpack.c.l.b16 %v27
  %v393 = vunpack.c.l.b16 %v28
  %v394 = vunpack.c.h.b16 %v28
  %v395 = vunpack.c.l.b16 %v29
  %v396 = vunpack.c.l.b16 %v30
  %v397 = vunpack.c.h.b16 %v30
  %v398 = vunpack.c.l.b16 %v31
  %v399 = vunpack.c.l.b16 %v32
  %v400 = vunpack.c.h.b16 %v32
  %v401 = vunpack.c.l.b16 %v33
  %v402 = vunpack.c.l.b16 %v34
  %v403 = vunpack.c.h.b16 %v34
  %v404 = vunpack.c.l.b16 %v35
  %v405 = vunpack.c.l.b16 %v36
  %v406 = vunpack.c.h.b16 %v36
  %v407 = vunpack.c.l.b16 %v37
  %v408 = vunpack.c.l.b16 %v38
  %v409 = vunpack.c.h.b16 %v38
  %v410 = vunpack.c.l.b16 %v39
  %v411 = vunpack.c.l.b16 %v40
  %v412 = vunpack.c.h.b16 %v40
  %v413 = vunpack.c.l.b16 %v41
  %v414 = vunpack.c.l.b16 %v42
  %v415 = vunpack.c.h.b16 %v42
  %v416 = vunpack.c.l.b16 %v43
  %v417 = vunpack.c.l.b16 %v44
  %v418 = vunpack.c.h.b16 %v44
  %v419 = vunpack.c.l.b16 %v45
  %v420 = vunpack.c.l.b16 %v46
  %v421 = vunpack.c.h.b16 %v46
  %v422 = vunpack.c.l.b16 %v47
  %v423 = vunpack.c.l.b16 %v48
  %v424 = vunpack.c.h.b16 %v48
  %v425 = vunpack.c.l.b16 %v49
  %v426 = vunpack.c.l.b16 %v50
  %v427 = vunpack.c.h.b16 %v50
  %v428 = vunpack.c.l.b16 %v51
  %v429 = vunpack.c.l.b16 %v52
  %v430 = vunpack.c.h.b16 %v52
  %v431 = vunpack.c.l.b16 %v53
  %v432 = vunpack.c.l.b16 %v54
  %v433 = vunpack.c.h.b16 %v54
  %v434 = vunpack.c.l.b16 %v55
  %v435 = vunpack.c.l.b16 %v56
  %v436 = vunpack.c.h.b16 %v56
  %v437 = vunpack.c.l.b16 %v57
  %v438 = vpack.c.b16 %v393, %v390
  %v439 = vpack.c.b16 %v394, %v391
  %v440 = vpack.c.b16 %v395, %v392
  %v441 = vpack.c.b16 %v399, %v396
  %v442 = vpack.c.b16 %v400, %v397
  %v443 = vpack.c.b16 %v401, %v398
  %v444 = vpack.c.b16 %v405, %v402
  %v445 = vpack.c.b16 %v406, %v403
  %v446 = vpack.c.b16 %v407, %v404
  %v447 = vpack.c.b16 %v411, %v408
  %v448 = vpack.c.b16 %v412, %v409
  %v449 = vpack.c.b16 %v413, %v410
  %v450 = vpack.c.b16 %v417, %v414
  %v451 = vpack.c.b16 %v418, %v415
  %v452 = vpack.c.b16 %v419, %v416
  %v453 = vpack.c.b16 %v423, %v420
  %v454 = vpack.c.b16 %v424, %v421
  %v455 = vpack.c.b16 %v425, %v422
  %v456 = vpack.c.b16 %v429, %v426
  %v457 = vpack.c.b16 %v430, %v427
  %v458 = vpack.c.b16 %v431, %v428
  %v459 = vpack.c.b16 %v435, %v432
  %v460 = vpack.c.b16 %v436, %v433
  %v461 = vpack.c.b16 %v437, %v434
  %486 = vmatprep.subr.bf16.mxu0 %v439
  %487 = vmatpush1.bf16.msra.mxu0 %v438
  %488 = vmatprep.subr.bf16.mxu0 %v442
  %489 = vmatpush1.bf16.msra.mxu0 %v441
  %490 = vmatprep.subr.bf16.mxu0 %v445
  %491 = vmatpush1.bf16.msra.mxu0 %v444
  %492 = vmatprep.subr.bf16.mxu0 %v448
  %493 = vmatpush1.bf16.msra.mxu0 %v447
  %494 = vmatprep.subr.bf16.mxu0 %v451
  %495 = vmatpush1.bf16.msra.mxu0 %v450
  %496 = vmatprep.subr.bf16.mxu0 %v454
  %497 = vmatpush1.bf16.msra.mxu0 %v453
  %498 = vmatprep.subr.bf16.mxu0 %v457
  %499 = vmatpush1.bf16.msra.mxu0 %v456
  %500 = vmatprep.subr.bf16.mxu0 %v460
  %501 = vmatpush1.bf16.msra.mxu0 %v459
  %502 = vmatprep.subr.bf16.mxu0 0
  %503 = vmatpush1.bf16.msra.mxu0 0
  %504 = vmatprep.subr.bf16.mxu0 0
  %505 = vmatpush1.bf16.msra.mxu0 0
  %506 = vmatprep.subr.bf16.mxu0 0
  %507 = vmatpush1.bf16.msra.mxu0 0
  %508 = vmatprep.subr.bf16.mxu0 0
  %509 = vmatpush1.bf16.msra.mxu0 0
  %510 = vmatprep.subr.bf16.mxu0 0
  %511 = vmatpush1.bf16.msra.mxu0 0
  %512 = vmatprep.subr.bf16.mxu0 0
  %513 = vmatpush1.bf16.msra.mxu0 0
  %514 = vmatprep.subr.bf16.mxu0 0
  %515 = vmatpush1.bf16.msra.mxu0 0
  %516 = vmatprep.subr.bf16.mxu0 0
  %517 = vmatpush1.bf16.msra.mxu0 0
  %518 = vmatprep.mubr.bf16.mxu0 0
  %519 = vmatmul.mubr.bf16.gmra.mrb[0].mxu0 %v146
  %v520 = vpop.f32.mrb[0].mxu0
  %v521 = vadd.f32 %v312, %v520
  %v522 = vpop.f32.mrb[0].mxu0
  %v523 = vadd.f32 %v314, %v522
  %v524 = vpop.f32.mrb[0].mxu0
  %v525 = vpop.f32.mrb[0].mxu0
  %526 = vdwg.mxu0
  %527 = vmatprep.subr.bf16.mxu0 0
  %528 = vmatpush1.bf16.msra.mxu0 %v440
  %529 = vmatprep.subr.bf16.mxu0 0
  %530 = vmatpush1.bf16.msra.mxu0 %v443
  %531 = vmatprep.subr.bf16.mxu0 0
  %532 = vmatpush1.bf16.msra.mxu0 %v446
  %533 = vmatprep.subr.bf16.mxu0 0
  %534 = vmatpush1.bf16.msra.mxu0 %v449
  %535 = vmatprep.subr.bf16.mxu0 0
  %536 = vmatpush1.bf16.msra.mxu0 %v452
  %537 = vmatprep.subr.bf16.mxu0 0
  %538 = vmatpush1.bf16.msra.mxu0 %v455
  %539 = vmatprep.subr.bf16.mxu0 0
  %540 = vmatpush1.bf16.msra.mxu0 %v458
  %541 = vmatprep.subr.bf16.mxu0 0
  %542 = vmatpush1.bf16.msra.mxu0 %v461
  %543 = vmatprep.subr.bf16.mxu0 0
  %544 = vmatpush1.bf16.msra.mxu0 0
  %545 = vmatprep.subr.bf16.mxu0 0
  %546 = vmatpush1.bf16.msra.mxu0 0
  %547 = vmatprep.subr.bf16.mxu0 0
  %548 = vmatpush1.bf16.msra.mxu0 0
  %549 = vmatprep.subr.bf16.mxu0 0
  %550 = vmatpush1.bf16.msra.mxu0 0
  %551 = vmatprep.subr.bf16.mxu0 0
  %552 = vmatpush1.bf16.msra.mxu0 0
  %553 = vmatprep.subr.bf16.mxu0 0
  %554 = vmatpush1.bf16.msra.mxu0 0
  %555 = vmatprep.subr.bf16.mxu0 0
  %556 = vmatpush1.bf16.msra.mxu0 0
  %557 = vmatprep.subr.bf16.mxu0 0
  %558 = vmatpush1.bf16.msra.mxu0 0
  %559 = vmatprep.mubr.bf16.mxu0 0
  %560 = vmatmul.mubr.bf16.gmra.mrb[0].mxu0 %v146
  %v561 = vpop.f32.mrb[0].mxu0
  %v562 = vadd.f32 %v353, %v561
  %v563 = vpop.f32.mrb[0].mxu0
  %v564 = vpop.f32.mrb[0].mxu0
  %v565 = vpop.f32.mrb[0].mxu0
  %566 = vdwg.mxu0
  %v567 = vadd.f32 %v521, %v127
  %v568 = vadd.f32 %v523, %v131
  %v569 = vadd.f32 %v562, %v135
  %v602 = vunpack.c.l.b16 %v90
  %v603 = vunpack.c.h.b16 %v90
  %v604 = vunpack.c.l.b16 %v91
  %v605 = vunpack.c.l.b16 %v92
  %v606 = vunpack.c.h.b16 %v92
  %v607 = vunpack.c.l.b16 %v93
  %v608 = vunpack.c.l.b16 %v94
  %v609 = vunpack.c.h.b16 %v94
  %v610 = vunpack.c.l.b16 %v95
  %v611 = vunpack.c.l.b16 %v96
  %v612 = vunpack.c.h.b16 %v96
  %v613 = vunpack.c.l.b16 %v97
  %v614 = vunpack.c.l.b16 %v98
  %v615 = vunpack.c.h.b16 %v98
  %v616 = vunpack.c.l.b16 %v99
  %v617 = vunpack.c.l.b16 %v100
  %v618 = vunpack.c.h.b16 %v100
  %v619 = vunpack.c.l.b16 %v101
  %v620 = vunpack.c.l.b16 %v102
  %v621 = vunpack.c.h.b16 %v102
  %v622 = vunpack.c.l.b16 %v103
  %v623 = vunpack.c.l.b16 %v104
  %v624 = vunpack.c.h.b16 %v104
  %v625 = vunpack.c.l.b16 %v105
  %v626 = vunpack.c.l.b16 %v106
  %v627 = vunpack.c.h.b16 %v106
  %v628 = vunpack.c.l.b16 %v107
  %v629 = vunpack.c.l.b16 %v108
  %v630 = vunpack.c.h.b16 %v108
  %v631 = vunpack.c.l.b16 %v109
  %v632 = vunpack.c.l.b16 %v110
  %v633 = vunpack.c.h.b16 %v110
  %v634 = vunpack.c.l.b16 %v111
  %v635 = vunpack.c.l.b16 %v112
  %v636 = vunpack.c.h.b16 %v112
  %v637 = vunpack.c.l.b16 %v113
  %v638 = vunpack.c.l.b16 %v114
  %v639 = vunpack.c.h.b16 %v114
  %v640 = vunpack.c.l.b16 %v115
  %v641 = vunpack.c.l.b16 %v116
  %v642 = vunpack.c.h.b16 %v116
  %v643 = vunpack.c.l.b16 %v117
  %v644 = vunpack.c.l.b16 %v118
  %v645 = vunpack.c.h.b16 %v118
  %v646 = vunpack.c.l.b16 %v119
  %v647 = vunpack.c.l.b16 %v120
  %v648 = vunpack.c.h.b16 %v120
  %v649 = vunpack.c.l.b16 %v121
  %v650 = vpack.c.b16 %v605, %v602
  %v651 = vpack.c.b16 %v606, %v603
  %v652 = vpack.c.b16 %v607, %v604
  %v653 = vpack.c.b16 %v611, %v608
  %v654 = vpack.c.b16 %v612, %v609
  %v655 = vpack.c.b16 %v613, %v610
  %v656 = vpack.c.b16 %v617, %v614
  %v657 = vpack.c.b16 %v618, %v615
  %v658 = vpack.c.b16 %v619, %v616
  %v659 = vpack.c.b16 %v623, %v620
  %v660 = vpack.c.b16 %v624, %v621
  %v661 = vpack.c.b16 %v625, %v622
  %v662 = vpack.c.b16 %v629, %v626
  %v663 = vpack.c.b16 %v630, %v627
  %v664 = vpack.c.b16 %v631, %v628
  %v665 = vpack.c.b16 %v635, %v632
  %v666 = vpack.c.b16 %v636, %v633
  %v667 = vpack.c.b16 %v637, %v634
  %v668 = vpack.c.b16 %v641, %v638
  %v669 = vpack.c.b16 %v642, %v639
  %v670 = vpack.c.b16 %v643, %v640
  %v671 = vpack.c.b16 %v647, %v644
  %v672 = vpack.c.b16 %v648, %v645
  %v673 = vpack.c.b16 %v649, %v646
  %698 = vmatprep.subr.bf16.mxu0 %v651
  %699 = vmatpush1.bf16.msra.mxu0 %v650
  %700 = vmatprep.subr.bf16.mxu0 %v654
  %701 = vmatpush1.bf16.msra.mxu0 %v653
  %702 = vmatprep.subr.bf16.mxu0 %v657
  %703 = vmatpush1.bf16.msra.mxu0 %v656
  %704 = vmatprep.subr.bf16.mxu0 %v660
  %705 = vmatpush1.bf16.msra.mxu0 %v659
  %706 = vmatprep.subr.bf16.mxu0 %v663
  %707 = vmatpush1.bf16.msra.mxu0 %v662
  %708 = vmatprep.subr.bf16.mxu0 %v666
  %709 = vmatpush1.bf16.msra.mxu0 %v665
  %710 = vmatprep.subr.bf16.mxu0 %v669
  %711 = vmatpush1.bf16.msra.mxu0 %v668
  %712 = vmatprep.subr.bf16.mxu0 %v672
  %713 = vmatpush1.bf16.msra.mxu0 %v671
  %714 = vmatprep.subr.bf16.mxu0 0
  %715 = vmatpush1.bf16.msra.mxu0 0
  %716 = vmatprep.subr.bf16.mxu0 0
  %717 = vmatpush1.bf16.msra.mxu0 0
  %718 = vmatprep.subr.bf16.mxu0 0
  %719 = vmatpush1.bf16.msra.mxu0 0
  %720 = vmatprep.subr.bf16.mxu0 0
  %721 = vmatpush1.bf16.msra.mxu0 0
  %722 = vmatprep.subr.bf16.mxu0 0
  %723 = vmatpush1.bf16.msra.mxu0 0
  %724 = vmatprep.subr.bf16.mxu0 0
  %725 = vmatpush1.bf16.msra.mxu0 0
  %726 = vmatprep.subr.bf16.mxu0 0
  %727 = vmatpush1.bf16.msra.mxu0 0
  %728 = vmatprep.subr.bf16.mxu0 0
  %729 = vmatpush1.bf16.msra.mxu0 0
  %730 = vmatprep.mubr.bf16.mxu0 0
  %731 = vmatmul.mubr.bf16.gmra.mrb[0].mxu0 0
  %v732 = vpop.f32.mrb[0].mxu0
  %v733 = vadd.f32 0.0, %v732
  %v734 = vpop.f32.mrb[0].mxu0
  %v735 = vadd.f32 0.0, %v734
  %v736 = vpop.f32.mrb[0].mxu0
  %v737 = vpop.f32.mrb[0].mxu0
  %738 = vdwg.mxu0
  %739 = vmatprep.subr.bf16.mxu0 0
  %740 = vmatpush1.bf16.msra.mxu0 %v652
  %741 = vmatprep.subr.bf16.mxu0 0
  %742 = vmatpush1.bf16.msra.mxu0 %v655
  %743 = vmatprep.subr.bf16.mxu0 0
  %744 = vmatpush1.bf16.msra.mxu0 %v658
  %745 = vmatprep.subr.bf16.mxu0 0
  %746 = vmatpush1.bf16.msra.mxu0 %v661
  %747 = vmatprep.subr.bf16.mxu0 0
  %748 = vmatpush1.bf16.msra.mxu0 %v664
  %749 = vmatprep.subr.bf16.mxu0 0
  %750 = vmatpush1.bf16.msra.mxu0 %v667
  %751 = vmatprep.subr.bf16.mxu0 0
  %752 = vmatpush1.bf16.msra.mxu0 %v670
  %753 = vmatprep.subr.bf16.mxu0 0
  %754 = vmatpush1.bf16.msra.mxu0 %v673
  %755 = vmatprep.subr.bf16.mxu0 0
  %756 = vmatpush1.bf16.msra.mxu0 0
  %757 = vmatprep.subr.bf16.mxu0 0
  %758 = vmatpush1.bf16.msra.mxu0 0
  %759 = vmatprep.subr.bf16.mxu0 0
  %760 = vmatpush1.bf16.msra.mxu0 0
  %761 = vmatprep.subr.bf16.mxu0 0
  %762 = vmatpush1.bf16.msra.mxu0 0
  %763 = vmatprep.subr.bf16.mxu0 0
  %764 = vmatpush1.bf16.msra.mxu0 0
  %765 = vmatprep.subr.bf16.mxu0 0
  %766 = vmatpush1.bf16.msra.mxu0 0
  %767 = vmatprep.subr.bf16.mxu0 0
  %768 = vmatpush1.bf16.msra.mxu0 0
  %769 = vmatprep.subr.bf16.mxu0 0
  %770 = vmatpush1.bf16.msra.mxu0 0
  %771 = vmatprep.mubr.bf16.mxu0 0
  %772 = vmatmul.mubr.bf16.gmra.mrb[0].mxu0 0
  %v773 = vpop.f32.mrb[0].mxu0
  %v774 = vadd.f32 0.0, %v773
  %v775 = vpop.f32.mrb[0].mxu0
  %v776 = vpop.f32.mrb[0].mxu0
  %v777 = vpop.f32.mrb[0].mxu0
  %778 = vdwg.mxu0
  %v779 = vadd.f32 %v567, %v733
  %v780 = vxor.u32 %v779, 2147483648
  %v781 = vmul.f32 %v780, 1.442695
  %v782 = vpow.pop %v781
  %v783 = vadd.f32 %v782, 1.0
  %v784 = vrcp.pop %v783
  %v785 = vmul.f32 1.0, %v784
  %v786 = vadd.f32 %v568, %v735
  %v787 = vxor.u32 %v786, 2147483648
  %v788 = vmul.f32 %v787, 1.442695
  %v789 = vpow.pop %v788
  %v790 = vadd.f32 %v789, 1.0
  %v791 = vrcp.pop %v790
  %v792 = vmul.f32 1.0, %v791
  %v793 = vadd.f32 %v774, %v144
  %v794 = vmul.f32 %v785, %v793
  %v795 = vadd.f32 %v569, %v794
  %v796 = vtanh.pop %v795
  %v797 = vsub.f32 1.0, %v792
  %v798 = vmul.f32 %v797, %v796
  %v799 = vmul.f32 %v792, 0.0
  %v800 = vadd.f32 %v798, %v799
  %801 = vst [vmem:[%s6] sm:$0xff] %v800
  %s802 = scalar_lea.vmem %s0, 4
  %v803 = vld [vmem:[%s802] sm:$0xf]
  %s804 = scalar_lea.vmem %s0, 24
  %v805 = vld [vmem:[%s804] sm:$0xf]
  %806 = vmatprep.subr.bf16.mxu0 %v230
  %807 = vmatpush1.bf16.msra.mxu0 %v229
  %808 = vmatprep.subr.bf16.mxu0 %v233
  %809 = vmatpush1.bf16.msra.mxu0 %v232
  %810 = vmatprep.subr.bf16.mxu0 %v236
  %811 = vmatpush1.bf16.msra.mxu0 %v235
  %812 = vmatprep.subr.bf16.mxu0 %v239
  %813 = vmatpush1.bf16.msra.mxu0 %v238
  %814 = vmatprep.subr.bf16.mxu0 %v242
  %815 = vmatpush1.bf16.msra.mxu0 %v241
  %816 = vmatprep.subr.bf16.mxu0 %v245
  %817 = vmatpush1.bf16.msra.mxu0 %v244
  %818 = vmatprep.subr.bf16.mxu0 %v248
  %819 = vmatpush1.bf16.msra.mxu0 %v247
  %820 = vmatprep.subr.bf16.mxu0 %v251
  %821 = vmatpush1.bf16.msra.mxu0 %v250
  %822 = vmatprep.subr.bf16.mxu0 0
  %823 = vmatpush1.bf16.msra.mxu0 0
  %824 = vmatprep.subr.bf16.mxu0 0
  %825 = vmatpush1.bf16.msra.mxu0 0
  %826 = vmatprep.subr.bf16.mxu0 0
  %827 = vmatpush1.bf16.msra.mxu0 0
  %828 = vmatprep.subr.bf16.mxu0 0
  %829 = vmatpush1.bf16.msra.mxu0 0
  %830 = vmatprep.subr.bf16.mxu0 0
  %831 = vmatpush1.bf16.msra.mxu0 0
  %832 = vmatprep.subr.bf16.mxu0 0
  %833 = vmatpush1.bf16.msra.mxu0 0
  %834 = vmatprep.subr.bf16.mxu0 0
  %835 = vmatpush1.bf16.msra.mxu0 0
  %836 = vmatprep.subr.bf16.mxu0 0
  %837 = vmatpush1.bf16.msra.mxu0 0
  %838 = vmatprep.mubr.bf16.mxu0 0
  %839 = vmatmul.mubr.bf16.gmra.mrb[0].mxu0 %v805
  %v840 = vpop.f32.mrb[0].mxu0
  %v841 = vadd.f32 0.0, %v840
  %v842 = vpop.f32.mrb[0].mxu0
  %v843 = vadd.f32 0.0, %v842
  %v844 = vpop.f32.mrb[0].mxu0
  %v845 = vpop.f32.mrb[0].mxu0
  %846 = vdwg.mxu0
  %847 = vmatprep.subr.bf16.mxu0 0
  %848 = vmatpush1.bf16.msra.mxu0 %v231
  %849 = vmatprep.subr.bf16.mxu0 0
  %850 = vmatpush1.bf16.msra.mxu0 %v234
  %851 = vmatprep.subr.bf16.mxu0 0
  %852 = vmatpush1.bf16.msra.mxu0 %v237
  %853 = vmatprep.subr.bf16.mxu0 0
  %854 = vmatpush1.bf16.msra.mxu0 %v240
  %855 = vmatprep.subr.bf16.mxu0 0
  %856 = vmatpush1.bf16.msra.mxu0 %v243
  %857 = vmatprep.subr.bf16.mxu0 0
  %858 = vmatpush1.bf16.msra.mxu0 %v246
  %859 = vmatprep.subr.bf16.mxu0 0
  %860 = vmatpush1.bf16.msra.mxu0 %v249
  %861 = vmatprep.subr.bf16.mxu0 0
  %862 = vmatpush1.bf16.msra.mxu0 %v252
  %863 = vmatprep.subr.bf16.mxu0 0
  %864 = vmatpush1.bf16.msra.mxu0 0
  %865 = vmatprep.subr.bf16.mxu0 0
  %866 = vmatpush1.bf16.msra.mxu0 0
  %867 = vmatprep.subr.bf16.mxu0 0
  %868 = vmatpush1.bf16.msra.mxu0 0
  %869 = vmatprep.subr.bf16.mxu0 0
  %870 = vmatpush1.bf16.msra.mxu0 0
  %871 = vmatprep.subr.bf16.mxu0 0
  %872 = vmatpush1.bf16.msra.mxu0 0
  %873 = vmatprep.subr.bf16.mxu0 0
  %874 = vmatpush1.bf16.msra.mxu0 0
  %875 = vmatprep.subr.bf16.mxu0 0
  %876 = vmatpush1.bf16.msra.mxu0 0
  %877 = vmatprep.subr.bf16.mxu0 0
  %878 = vmatpush1.bf16.msra.mxu0 0
  %879 = vmatprep.mubr.bf16.mxu0 0
  %880 = vmatmul.mubr.bf16.gmra.mrb[0].mxu0 %v805
  %v881 = vpop.f32.mrb[0].mxu0
  %v882 = vadd.f32 0.0, %v881
  %v883 = vpop.f32.mrb[0].mxu0
  %v884 = vpop.f32.mrb[0].mxu0
  %v885 = vpop.f32.mrb[0].mxu0
  %886 = vdwg.mxu0
  %887 = vmatprep.subr.bf16.mxu0 %v439
  %888 = vmatpush1.bf16.msra.mxu0 %v438
  %889 = vmatprep.subr.bf16.mxu0 %v442
  %890 = vmatpush1.bf16.msra.mxu0 %v441
  %891 = vmatprep.subr.bf16.mxu0 %v445
  %892 = vmatpush1.bf16.msra.mxu0 %v444
  %893 = vmatprep.subr.bf16.mxu0 %v448
  %894 = vmatpush1.bf16.msra.mxu0 %v447
  %895 = vmatprep.subr.bf16.mxu0 %v451
  %896 = vmatpush1.bf16.msra.mxu0 %v450
  %897 = vmatprep.subr.bf16.mxu0 %v454
  %898 = vmatpush1.bf16.msra.mxu0 %v453
  %899 = vmatprep.subr.bf16.mxu0 %v457
  %900 = vmatpush1.bf16.msra.mxu0 %v456
  %901 = vmatprep.subr.bf16.mxu0 %v460
  %902 = vmatpush1.bf16.msra.mxu0 %v459
  %903 = vmatprep.subr.bf16.mxu0 0
  %904 = vmatpush1.bf16.msra.mxu0 0
  %905 = vmatprep.subr.bf16.mxu0 0
  %906 = vmatpush1.bf16.msra.mxu0 0
  %907 = vmatprep.subr.bf16.mxu0 0
  %908 = vmatpush1.bf16.msra.mxu0 0
  %909 = vmatprep.subr.bf16.mxu0 0
  %910 = vmatpush1.bf16.msra.mxu0 0
  %911 = vmatprep.subr.bf16.mxu0 0
  %912 = vmatpush1.bf16.msra.mxu0 0
  %913 = vmatprep.subr.bf16.mxu0 0
  %914 = vmatpush1.bf16.msra.mxu0 0
  %915 = vmatprep.subr.bf16.mxu0 0
  %916 = vmatpush1.bf16.msra.mxu0 0
  %917 = vmatprep.subr.bf16.mxu0 0
  %918 = vmatpush1.bf16.msra.mxu0 0
  %919 = vmatprep.mubr.bf16.mxu0 0
  %920 = vmatmul.mubr.bf16.gmra.mrb[0].mxu0 %v803
  %v921 = vpop.f32.mrb[0].mxu0
  %v922 = vadd.f32 %v841, %v921
  %v923 = vpop.f32.mrb[0].mxu0
  %v924 = vadd.f32 %v843, %v923
  %v925 = vpop.f32.mrb[0].mxu0
  %v926 = vpop.f32.mrb[0].mxu0
  %927 = vdwg.mxu0
  %928 = vmatprep.subr.bf16.mxu0 0
  %929 = vmatpush1.bf16.msra.mxu0 %v440
  %930 = vmatprep.subr.bf16.mxu0 0
  %931 = vmatpush1.bf16.msra.mxu0 %v443
  %932 = vmatprep.subr.bf16.mxu0 0
  %933 = vmatpush1.bf16.msra.mxu0 %v446
  %934 = vmatprep.subr.bf16.mxu0 0
  %935 = vmatpush1.bf16.msra.mxu0 %v449
  %936 = vmatprep.subr.bf16.mxu0 0
  %937 = vmatpush1.bf16.msra.mxu0 %v452
  %938 = vmatprep.subr.bf16.mxu0 0
  %939 = vmatpush1.bf16.msra.mxu0 %v455
  %940 = vmatprep.subr.bf16.mxu0 0
  %941 = vmatpush1.bf16.msra.mxu0 %v458
  %942 = vmatprep.subr.bf16.mxu0 0
  %943 = vmatpush1.bf16.msra.mxu0 %v461
  %944 = vmatprep.subr.bf16.mxu0 0
  %945 = vmatpush1.bf16.msra.mxu0 0
  %946 = vmatprep.subr.bf16.mxu0 0
  %947 = vmatpush1.bf16.msra.mxu0 0
  %948 = vmatprep.subr.bf16.mxu0 0
  %949 = vmatpush1.bf16.msra.mxu0 0
  %950 = vmatprep.subr.bf16.mxu0 0
  %951 = vmatpush1.bf16.msra.mxu0 0
  %952 = vmatprep.subr.bf16.mxu0 0
  %953 = vmatpush1.bf16.msra.mxu0 0
  %954 = vmatprep.subr.bf16.mxu0 0
  %955 = vmatpush1.bf16.msra.mxu0 0
  %956 = vmatprep.subr.bf16.mxu0 0
  %957 = vmatpush1.bf16.msra.mxu0 0
  %958 = vmatprep.subr.bf16.mxu0 0
  %959 = vmatpush1.bf16.msra.mxu0 0
  %960 = vmatprep.mubr.bf16.mxu0 0
  %961 = vmatmul.mubr.bf16.gmra.mrb[0].mxu0 %v803
  %v962 = vpop.f32.mrb[0].mxu0
  %v963 = vadd.f32 %v882, %v962
  %v964 = vpop.f32.mrb[0].mxu0
  %v965 = vpop.f32.mrb[0].mxu0
  %v966 = vpop.f32.mrb[0].mxu0
  %967 = vdwg.mxu0
  %v968 = vadd.f32 %v922, %v127
  %v969 = vadd.f32 %v924, %v131
  %v970 = vadd.f32 %v963, %v135
  %v971 = vpack.c.bf16 %v800, %v800
  %972 = vmatprep.subr.bf16.mxu0 %v651
  %973 = vmatpush1.bf16.msra.mxu0 %v650
  %974 = vmatprep.subr.bf16.mxu0 %v654
  %975 = vmatpush1.bf16.msra.mxu0 %v653
  %976 = vmatprep.subr.bf16.mxu0 %v657
  %977 = vmatpush1.bf16.msra.mxu0 %v656
  %978 = vmatprep.subr.bf16.mxu0 %v660
  %979 = vmatpush1.bf16.msra.mxu0 %v659
  %980 = vmatprep.subr.bf16.mxu0 %v663
  %981 = vmatpush1.bf16.msra.mxu0 %v662
  %982 = vmatprep.subr.bf16.mxu0 %v666
  %983 = vmatpush1.bf16.msra.mxu0 %v665
  %984 = vmatprep.subr.bf16.mxu0 %v669
  %985 = vmatpush1.bf16.msra.mxu0 %v668
  %986 = vmatprep.subr.bf16.mxu0 %v672
  %987 = vmatpush1.bf16.msra.mxu0 %v671
  %988 = vmatprep.subr.bf16.mxu0 0
  %989 = vmatpush1.bf16.msra.mxu0 0
  %990 = vmatprep.subr.bf16.mxu0 0
  %991 = vmatpush1.bf16.msra.mxu0 0
  %992 = vmatprep.subr.bf16.mxu0 0
  %993 = vmatpush1.bf16.msra.mxu0 0
  %994 = vmatprep.subr.bf16.mxu0 0
  %995 = vmatpush1.bf16.msra.mxu0 0
  %996 = vmatprep.subr.bf16.mxu0 0
  %997 = vmatpush1.bf16.msra.mxu0 0
  %998 = vmatprep.subr.bf16.mxu0 0
  %999 = vmatpush1.bf16.msra.mxu0 0
  %1000 = vmatprep.subr.bf16.mxu0 0
  %1001 = vmatpush1.bf16.msra.mxu0 0
  %1002 = vmatprep.subr.bf16.mxu0 0
  %1003 = vmatpush1.bf16.msra.mxu0 0
  %1004 = vmatprep.mubr.bf16.mxu0 0
  %1005 = vmatmul.mubr.bf16.gmra.mrb[0].mxu0 %v971
  %v1006 = vpop.f32.mrb[0].mxu0
  %v1007 = vadd.f32 0.0, %v1006
  %v1008 = vpop.f32.mrb[0].mxu0
  %v1009 = vadd.f32 0.0, %v1008
  %v1010 = vpop.f32.mrb[0].mxu0
  %v1011 = vpop.f32.mrb[0].mxu0
  %1012 = vdwg.mxu0
  %1013 = vmatprep.subr.bf16.mxu0 0
  %1014 = vmatpush1.bf16.msra.mxu0 %v652
  %1015 = vmatprep.subr.bf16.mxu0 0
  %1016 = vmatpush1.bf16.msra.mxu0 %v655
  %1017 = vmatprep.subr.bf16.mxu0 0
  %1018 = vmatpush1.bf16.msra.mxu0 %v658
  %1019 = vmatprep.subr.bf16.mxu0 0
  %1020 = vmatpush1.bf16.msra.mxu0 %v661
  %1021 = vmatprep.subr.bf16.mxu0 0
  %1022 = vmatpush1.bf16.msra.mxu0 %v664
  %1023 = vmatprep.subr.bf16.mxu0 0
  %1024 = vmatpush1.bf16.msra.mxu0 %v667
  %1025 = vmatprep.subr.bf16.mxu0 0
  %1026 = vmatpush1.bf16.msra.mxu0 %v670
  %1027 = vmatprep.subr.bf16.mxu0 0
  %1028 = vmatpush1.bf16.msra.mxu0 %v673
  %1029 = vmatprep.subr.bf16.mxu0 0
  %1030 = vmatpush1.bf16.msra.mxu0 0
  %1031 = vmatprep.subr.bf16.mxu0 0
  %1032 = vmatpush1.bf16.msra.mxu0 0
  %1033 = vmatprep.subr.bf16.mxu0 0
  %1034 = vmatpush1.bf16.msra.mxu0 0
  %1035 = vmatprep.subr.bf16.mxu0 0
  %1036 = vmatpush1.bf16.msra.mxu0 0
  %1037 = vmatprep.subr.bf16.mxu0 0
  %1038 = vmatpush1.bf16.msra.mxu0 0
  %1039 = vmatprep.subr.bf16.mxu0 0
  %1040 = vmatpush1.bf16.msra.mxu0 0
  %1041 = vmatprep.subr.bf16.mxu0 0
  %1042 = vmatpush1.bf16.msra.mxu0 0
  %1043 = vmatprep.subr.bf16.mxu0 0
  %1044 = vmatpush1.bf16.msra.mxu0 0
  %1045 = vmatprep.mubr.bf16.mxu0 0
  %1046 = vmatmul.mubr.bf16.gmra.mrb[0].mxu0 %v971
  %v1047 = vpop.f32.mrb[0].mxu0
  %v1048 = vadd.f32 0.0, %v1047
  %v1049 = vpop.f32.mrb[0].mxu0
  %v1050 = vpop.f32.mrb[0].mxu0
  %v1051 = vpop.f32.mrb[0].mxu0
  %1052 = vdwg.mxu0
  %v1053 = vadd.f32 %v968, %v1007
  %v1054 = vxor.u32 %v1053, 2147483648
  %v1055 = vmul.f32 %v1054, 1.442695
  %v1056 = vpow.pop %v1055
  %v1057 = vadd.f32 %v1056, 1.0
  %v1058 = vrcp.pop %v1057
  %v1059 = vmul.f32 1.0, %v1058
  %v1060 = vadd.f32 %v969, %v1009
  %v1061 = vxor.u32 %v1060, 2147483648
  %v1062 = vmul.f32 %v1061, 1.442695
  %v1063 = vpow.pop %v1062
  %v1064 = vadd.f32 %v1063, 1.0
  %v1065 = vrcp.pop %v1064
  %v1066 = vmul.f32 1.0, %v1065
  %v1067 = vadd.f32 %v1048, %v144
  %v1068 = vmul.f32 %v1059, %v1067
  %v1069 = vadd.f32 %v970, %v1068
  %v1070 = vtanh.pop %v1069
  %v1071 = vsub.f32 1.0, %v1066
  %v1072 = vmul.f32 %v1071, %v1070
  %v1073 = vmul.f32 %v1066, %v800
  %v1074 = vadd.f32 %v1072, %v1073
  %s1075 = scalar_lea.vmem %s6, 8
  %1076 = vst [vmem:[%s1075] sm:$0xff] %v1074
  %v1077 = vmax.f32 %v800, %v1074
  %s1078 = scalar_lea.vmem %s0, 8
  %v1079 = vld [vmem:[%s1078] sm:$0xf]
  %s1080 = scalar_lea.vmem %s0, 20
  %v1081 = vld [vmem:[%s1080] sm:$0xf]
  %1082 = vmatprep.subr.bf16.mxu0 %v230
  %1083 = vmatpush1.bf16.msra.mxu0 %v229
  %1084 = vmatprep.subr.bf16.mxu0 %v233
  %1085 = vmatpush1.bf16.msra.mxu0 %v232
  %1086 = vmatprep.subr.bf16.mxu0 %v236
  %1087 = vmatpush1.bf16.msra.mxu0 %v235
  %1088 = vmatprep.subr.bf16.mxu0 %v239
  %1089 = vmatpush1.bf16.msra.mxu0 %v238
  %1090 = vmatprep.subr.bf16.mxu0 %v242
  %1091 = vmatpush1.bf16.msra.mxu0 %v241
  %1092 = vmatprep.subr.bf16.mxu0 %v245
  %1093 = vmatpush1.bf16.msra.mxu0 %v244
  %1094 = vmatprep.subr.bf16.mxu0 %v248
  %1095 = vmatpush1.bf16.msra.mxu0 %v247
  %1096 = vmatprep.subr.bf16.mxu0 %v251
  %1097 = vmatpush1.bf16.msra.mxu0 %v250
  %1098 = vmatprep.subr.bf16.mxu0 0
  %1099 = vmatpush1.bf16.msra.mxu0 0
  %1100 = vmatprep.subr.bf16.mxu0 0
  %1101 = vmatpush1.bf16.msra.mxu0 0
  %1102 = vmatprep.subr.bf16.mxu0 0
  %1103 = vmatpush1.bf16.msra.mxu0 0
  %1104 = vmatprep.subr.bf16.mxu0 0
  %1105 = vmatpush1.bf16.msra.mxu0 0
  %1106 = vmatprep.subr.bf16.mxu0 0
  %1107 = vmatpush1.bf16.msra.mxu0 0
  %1108 = vmatprep.subr.bf16.mxu0 0
  %1109 = vmatpush1.bf16.msra.mxu0 0
  %1110 = vmatprep.subr.bf16.mxu0 0
  %1111 = vmatpush1.bf16.msra.mxu0 0
  %1112 = vmatprep.subr.bf16.mxu0 0
  %1113 = vmatpush1.bf16.msra.mxu0 0
  %1114 = vmatprep.mubr.bf16.mxu0 0
  %1115 = vmatmul.mubr.bf16.gmra.mrb[0].mxu0 %v1081
  %v1116 = vpop.f32.mrb[0].mxu0
  %v1117 = vadd.f32 0.0, %v1116
  %v1118 = vpop.f32.mrb[0].mxu0
  %v1119 = vadd.f32 0.0, %v1118
  %v1120 = vpop.f32.mrb[0].mxu0
  %v1121 = vpop.f32.mrb[0].mxu0
  %1122 = vdwg.mxu0
  %1123 = vmatprep.subr.bf16.mxu0 0
  %1124 = vmatpush1.bf16.msra.mxu0 %v231
  %1125 = vmatprep.subr.bf16.mxu0 0
  %1126 = vmatpush1.bf16.msra.mxu0 %v234
  %1127 = vmatprep.subr.bf16.mxu0 0
  %1128 = vmatpush1.bf16.msra.mxu0 %v237
  %1129 = vmatprep.subr.bf16.mxu0 0
  %1130 = vmatpush1.bf16.msra.mxu0 %v240
  %1131 = vmatprep.subr.bf16.mxu0 0
  %1132 = vmatpush1.bf16.msra.mxu0 %v243
  %1133 = vmatprep.subr.bf16.mxu0 0
  %1134 = vmatpush1.bf16.msra.mxu0 %v246
  %1135 = vmatprep.subr.bf16.mxu0 0
  %1136 = vmatpush1.bf16.msra.mxu0 %v249
  %1137 = vmatprep.subr.bf16.mxu0 0
  %1138 = vmatpush1.bf16.msra.mxu0 %v252
  %1139 = vmatprep.subr.bf16.mxu0 0
  %1140 = vmatpush1.bf16.msra.mxu0 0
  %1141 = vmatprep.subr.bf16.mxu0 0
  %1142 = vmatpush1.bf16.msra.mxu0 0
  %1143 = vmatprep.subr.bf16.mxu0 0
  %1144 = vmatpush1.bf16.msra.mxu0 0
  %1145 = vmatprep.subr.bf16.mxu0 0
  %1146 = vmatpush1.bf16.msra.mxu0 0
  %1147 = vmatprep.subr.bf16.mxu0 0
  %1148 = vmatpush1.bf16.msra.mxu0 0
  %1149 = vmatprep.subr.bf16.mxu0 0
  %1150 = vmatpush1.bf16.msra.mxu0 0
  %1151 = vmatprep.subr.bf16.mxu0 0
  %1152 = vmatpush1.bf16.msra.mxu0 0
  %1153 = vmatprep.subr.bf16.mxu0 0
  %1154 = vmatpush1.bf16.msra.mxu0 0
  %1155 = vmatprep.mubr.bf16.mxu0 0
  %1156 = vmatmul.mubr.bf16.gmra.mrb[0].mxu0 %v1081
  %v1157 = vpop.f32.mrb[0].mxu0
  %v1158 = vadd.f32 0.0, %v1157
  %v1159 = vpop.f32.mrb[0].mxu0
  %v1160 = vpop.f32.mrb[0].mxu0
  %v1161 = vpop.f32.mrb[0].mxu0
  %1162 = vdwg.mxu0
  %1163 = vmatprep.subr.bf16.mxu0 %v439
  %1164 = vmatpush1.bf16.msra.mxu0 %v438
  %1165 = vmatprep.subr.bf16.mxu0 %v442
  %1166 = vmatpush1.bf16.msra.mxu0 %v441
  %1167 = vmatprep.subr.bf16.mxu0 %v445
  %1168 = vmatpush1.bf16.msra.mxu0 %v444
  %1169 = vmatprep.subr.bf16.mxu0 %v448
  %1170 = vmatpush1.bf16.msra.mxu0 %v447
  %1171 = vmatprep.subr.bf16.mxu0 %v451
  %1172 = vmatpush1.bf16.msra.mxu0 %v450
  %1173 = vmatprep.subr.bf16.mxu0 %v454
  %1174 = vmatpush1.bf16.msra.mxu0 %v453
  %1175 = vmatprep.subr.bf16.mxu0 %v457
  %1176 = vmatpush1.bf16.msra.mxu0 %v456
  %1177 = vmatprep.subr.bf16.mxu0 %v460
  %1178 = vmatpush1.bf16.msra.mxu0 %v459
  %1179 = vmatprep.subr.bf16.mxu0 0
  %1180 = vmatpush1.bf16.msra.mxu0 0
  %1181 = vmatprep.subr.bf16.mxu0 0
  %1182 = vmatpush1.bf16.msra.mxu0 0
  %1183 = vmatprep.subr.bf16.mxu0 0
  %1184 = vmatpush1.bf16.msra.mxu0 0
  %1185 = vmatprep.subr.bf16.mxu0 0
  %1186 = vmatpush1.bf16.msra.mxu0 0
  %1187 = vmatprep.subr.bf16.mxu0 0
  %1188 = vmatpush1.bf16.msra.mxu0 0
  %1189 = vmatprep.subr.bf16.mxu0 0
  %1190 = vmatpush1.bf16.msra.mxu0 0
  %1191 = vmatprep.subr.bf16.mxu0 0
  %1192 = vmatpush1.bf16.msra.mxu0 0
  %1193 = vmatprep.subr.bf16.mxu0 0
  %1194 = vmatpush1.bf16.msra.mxu0 0
  %1195 = vmatprep.mubr.bf16.mxu0 0
  %1196 = vmatmul.mubr.bf16.gmra.mrb[0].mxu0 %v1079
  %v1197 = vpop.f32.mrb[0].mxu0
  %v1198 = vadd.f32 %v1117, %v1197
  %v1199 = vpop.f32.mrb[0].mxu0
  %v1200 = vadd.f32 %v1119, %v1199
  %v1201 = vpop.f32.mrb[0].mxu0
  %v1202 = vpop.f32.mrb[0].mxu0
  %1203 = vdwg.mxu0
  %1204 = vmatprep.subr.bf16.mxu0 0
  %1205 = vmatpush1.bf16.msra.mxu0 %v440
  %1206 = vmatprep.subr.bf16.mxu0 0
  %1207 = vmatpush1.bf16.msra.mxu0 %v443
  %1208 = vmatprep.subr.bf16.mxu0 0
  %1209 = vmatpush1.bf16.msra.mxu0 %v446
  %1210 = vmatprep.subr.bf16.mxu0 0
  %1211 = vmatpush1.bf16.msra.mxu0 %v449
  %1212 = vmatprep.subr.bf16.mxu0 0
  %1213 = vmatpush1.bf16.msra.mxu0 %v452
  %1214 = vmatprep.subr.bf16.mxu0 0
  %1215 = vmatpush1.bf16.msra.mxu0 %v455
  %1216 = vmatprep.subr.bf16.mxu0 0
  %1217 = vmatpush1.bf16.msra.mxu0 %v458
  %1218 = vmatprep.subr.bf16.mxu0 0
  %1219 = vmatpush1.bf16.msra.mxu0 %v461
  %1220 = vmatprep.subr.bf16.mxu0 0
  %1221 = vmatpush1.bf16.msra.mxu0 0
  %1222 = vmatprep.subr.bf16.mxu0 0
  %1223 = vmatpush1.bf16.msra.mxu0 0
  %1224 = vmatprep.subr.bf16.mxu0 0
  %1225 = vmatpush1.bf16.msra.mxu0 0
  %1226 = vmatprep.subr.bf16.mxu0 0
  %1227 = vmatpush1.bf16.msra.mxu0 0
  %1228 = vmatprep.subr.bf16.mxu0 0
  %1229 = vmatpush1.bf16.msra.mxu0 0
  %1230 = vmatprep.subr.bf16.mxu0 0
  %1231 = vmatpush1.bf16.msra.mxu0 0
  %1232 = vmatprep.subr.bf16.mxu0 0
  %1233 = vmatpush1.bf16.msra.mxu0 0
  %1234 = vmatprep.subr.bf16.mxu0 0
  %1235 = vmatpush1.bf16.msra.mxu0 0
  %1236 = vmatprep.mubr.bf16.mxu0 0
  %1237 = vmatmul.mubr.bf16.gmra.mrb[0].mxu0 %v1079
  %v1238 = vpop.f32.mrb[0].mxu0
  %v1239 = vadd.f32 %v1158, %v1238
  %v1240 = vpop.f32.mrb[0].mxu0
  %v1241 = vpop.f32.mrb[0].mxu0
  %v1242 = vpop.f32.mrb[0].mxu0
  %1243 = vdwg.mxu0
  %v1244 = vadd.f32 %v1198, %v127
  %v1245 = vadd.f32 %v1200, %v131
  %v1246 = vadd.f32 %v1239, %v135
  %v1247 = vpack.c.bf16 %v1074, %v1074
  %1248 = vmatprep.subr.bf16.mxu0 %v651
  %1249 = vmatpush1.bf16.msra.mxu0 %v650
  %1250 = vmatprep.subr.bf16.mxu0 %v654
  %1251 = vmatpush1.bf16.msra.mxu0 %v653
  %1252 = vmatprep.subr.bf16.mxu0 %v657
  %1253 = vmatpush1.bf16.msra.mxu0 %v656
  %1254 = vmatprep.subr.bf16.mxu0 %v660
  %1255 = vmatpush1.bf16.msra.mxu0 %v659
  %1256 = vmatprep.subr.bf16.mxu0 %v663
  %1257 = vmatpush1.bf16.msra.mxu0 %v662
  %1258 = vmatprep.subr.bf16.mxu0 %v666
  %1259 = vmatpush1.bf16.msra.mxu0 %v665
  %1260 = vmatprep.subr.bf16.mxu0 %v669
  %1261 = vmatpush1.bf16.msra.mxu0 %v668
  %1262 = vmatprep.subr.bf16.mxu0 %v672
  %1263 = vmatpush1.bf16.msra.mxu0 %v671
  %1264 = vmatprep.subr.bf16.mxu0 0
  %1265 = vmatpush1.bf16.msra.mxu0 0
  %1266 = vmatprep.subr.bf16.mxu0 0
  %1267 = vmatpush1.bf16.msra.mxu0 0
  %1268 = vmatprep.subr.bf16.mxu0 0
  %1269 = vmatpush1.bf16.msra.mxu0 0
  %1270 = vmatprep.subr.bf16.mxu0 0
  %1271 = vmatpush1.bf16.msra.mxu0 0
  %1272 = vmatprep.subr.bf16.mxu0 0
  %1273 = vmatpush1.bf16.msra.mxu0 0
  %1274 = vmatprep.subr.bf16.mxu0 0
  %1275 = vmatpush1.bf16.msra.mxu0 0
  %1276 = vmatprep.subr.bf16.mxu0 0
  %1277 = vmatpush1.bf16.msra.mxu0 0
  %1278 = vmatprep.subr.bf16.mxu0 0
  %1279 = vmatpush1.bf16.msra.mxu0 0
  %1280 = vmatprep.mubr.bf16.mxu0 0
  %1281 = vmatmul.mubr.bf16.gmra.mrb[0].mxu0 %v1247
  %v1282 = vpop.f32.mrb[0].mxu0
  %v1283 = vadd.f32 0.0, %v1282
  %v1284 = vpop.f32.mrb[0].mxu0
  %v1285 = vadd.f32 0.0, %v1284
  %v1286 = vpop.f32.mrb[0].mxu0
  %v1287 = vpop.f32.mrb[0].mxu0
  %1288 = vdwg.mxu0
  %1289 = vmatprep.subr.bf16.mxu0 0
  %1290 = vmatpush1.bf16.msra.mxu0 %v652
  %1291 = vmatprep.subr.bf16.mxu0 0
  %1292 = vmatpush1.bf16.msra.mxu0 %v655
  %1293 = vmatprep.subr.bf16.mxu0 0
  %1294 = vmatpush1.bf16.msra.mxu0 %v658
  %1295 = vmatprep.subr.bf16.mxu0 0
  %1296 = vmatpush1.bf16.msra.mxu0 %v661
  %1297 = vmatprep.subr.bf16.mxu0 0
  %1298 = vmatpush1.bf16.msra.mxu0 %v664
  %1299 = vmatprep.subr.bf16.mxu0 0
  %1300 = vmatpush1.bf16.msra.mxu0 %v667
  %1301 = vmatprep.subr.bf16.mxu0 0
  %1302 = vmatpush1.bf16.msra.mxu0 %v670
  %1303 = vmatprep.subr.bf16.mxu0 0
  %1304 = vmatpush1.bf16.msra.mxu0 %v673
  %1305 = vmatprep.subr.bf16.mxu0 0
  %1306 = vmatpush1.bf16.msra.mxu0 0
  %1307 = vmatprep.subr.bf16.mxu0 0
  %1308 = vmatpush1.bf16.msra.mxu0 0
  %1309 = vmatprep.subr.bf16.mxu0 0
  %1310 = vmatpush1.bf16.msra.mxu0 0
  %1311 = vmatprep.subr.bf16.mxu0 0
  %1312 = vmatpush1.bf16.msra.mxu0 0
  %1313 = vmatprep.subr.bf16.mxu0 0
  %1314 = vmatpush1.bf16.msra.mxu0 0
  %1315 = vmatprep.subr.bf16.mxu0 0
  %1316 = vmatpush1.bf16.msra.mxu0 0
  %1317 = vmatprep.subr.bf16.mxu0 0
  %1318 = vmatpush1.bf16.msra.mxu0 0
  %1319 = vmatprep.subr.bf16.mxu0 0
  %1320 = vmatpush1.bf16.msra.mxu0 0
  %1321 = vmatprep.mubr.bf16.mxu0 0
  %1322 = vmatmul.mubr.bf16.gmra.mrb[0].mxu0 %v1247
  %v1323 = vpop.f32.mrb[0].mxu0
  %v1324 = vadd.f32 0.0, %v1323
  %v1325 = vpop.f32.mrb[0].mxu0
  %v1326 = vpop.f32.mrb[0].mxu0
  %v1327 = vpop.f32.mrb[0].mxu0
  %1328 = vdwg.mxu0
  %v1329 = vadd.f32 %v1244, %v1283
  %v1330 = vxor.u32 %v1329, 2147483648
  %v1331 = vmul.f32 %v1330, 1.442695
  %v1332 = vpow.pop %v1331
  %v1333 = vadd.f32 %v1332, 1.0
  %v1334 = vrcp.pop %v1333
  %v1335 = vmul.f32 1.0, %v1334
  %v1336 = vadd.f32 %v1245, %v1285
  %v1337 = vxor.u32 %v1336, 2147483648
  %v1338 = vmul.f32 %v1337, 1.442695
  %v1339 = vpow.pop %v1338
  %v1340 = vadd.f32 %v1339, 1.0
  %v1341 = vrcp.pop %v1340
  %v1342 = vmul.f32 1.0, %v1341
  %v1343 = vadd.f32 %v1324, %v144
  %v1344 = vmul.f32 %v1335, %v1343
  %v1345 = vadd.f32 %v1246, %v1344
  %v1346 = vtanh.pop %v1345
  %v1347 = vsub.f32 1.0, %v1342
  %v1348 = vmul.f32 %v1347, %v1346
  %v1349 = vmul.f32 %v1342, %v1074
  %v1350 = vadd.f32 %v1348, %v1349
  %s1351 = scalar_lea.vmem %s6, 16
  %1352 = vst [vmem:[%s1351] sm:$0xff] %v1350
  %v1353 = vmax.f32 %v1077, %v1350
  %s1354 = scalar_lea.vmem %s0, 12
  %v1355 = vld [vmem:[%s1354] sm:$0xf]
  %s1356 = scalar_lea.vmem %s0, 16
  %v1357 = vld [vmem:[%s1356] sm:$0xf]
  %1358 = vmatprep.subr.bf16.mxu0 %v230
  %1359 = vmatpush1.bf16.msra.mxu0 %v229
  %1360 = vmatprep.subr.bf16.mxu0 %v233
  %1361 = vmatpush1.bf16.msra.mxu0 %v232
  %1362 = vmatprep.subr.bf16.mxu0 %v236
  %1363 = vmatpush1.bf16.msra.mxu0 %v235
  %1364 = vmatprep.subr.bf16.mxu0 %v239
  %1365 = vmatpush1.bf16.msra.mxu0 %v238
  %1366 = vmatprep.subr.bf16.mxu0 %v242
  %1367 = vmatpush1.bf16.msra.mxu0 %v241
  %1368 = vmatprep.subr.bf16.mxu0 %v245
  %1369 = vmatpush1.bf16.msra.mxu0 %v244
  %1370 = vmatprep.subr.bf16.mxu0 %v248
  %1371 = vmatpush1.bf16.msra.mxu0 %v247
  %1372 = vmatprep.subr.bf16.mxu0 %v251
  %1373 = vmatpush1.bf16.msra.mxu0 %v250
  %1374 = vmatprep.subr.bf16.mxu0 0
  %1375 = vmatpush1.bf16.msra.mxu0 0
  %1376 = vmatprep.subr.bf16.mxu0 0
  %1377 = vmatpush1.bf16.msra.mxu0 0
  %1378 = vmatprep.subr.bf16.mxu0 0
  %1379 = vmatpush1.bf16.msra.mxu0 0
  %1380 = vmatprep.subr.bf16.mxu0 0
  %1381 = vmatpush1.bf16.msra.mxu0 0
  %1382 = vmatprep.subr.bf16.mxu0 0
  %1383 = vmatpush1.bf16.msra.mxu0 0
  %1384 = vmatprep.subr.bf16.mxu0 0
  %1385 = vmatpush1.bf16.msra.mxu0 0
  %1386 = vmatprep.subr.bf16.mxu0 0
  %1387 = vmatpush1.bf16.msra.mxu0 0
  %1388 = vmatprep.subr.bf16.mxu0 0
  %1389 = vmatpush1.bf16.msra.mxu0 0
  %1390 = vmatprep.mubr.bf16.mxu0 0
  %1391 = vmatmul.mubr.bf16.gmra.mrb[0].mxu0 %v1357
  %v1392 = vpop.f32.mrb[0].mxu0
  %v1393 = vadd.f32 0.0, %v1392
  %v1394 = vpop.f32.mrb[0].mxu0
  %v1395 = vadd.f32 0.0, %v1394
  %v1396 = vpop.f32.mrb[0].mxu0
  %v1397 = vpop.f32.mrb[0].mxu0
  %1398 = vdwg.mxu0
  %1399 = vmatprep.subr.bf16.mxu0 0
  %1400 = vmatpush1.bf16.msra.mxu0 %v231
  %1401 = vmatprep.subr.bf16.mxu0 0
  %1402 = vmatpush1.bf16.msra.mxu0 %v234
  %1403 = vmatprep.subr.bf16.mxu0 0
  %1404 = vmatpush1.bf16.msra.mxu0 %v237
  %1405 = vmatprep.subr.bf16.mxu0 0
  %1406 = vmatpush1.bf16.msra.mxu0 %v240
  %1407 = vmatprep.subr.bf16.mxu0 0
  %1408 = vmatpush1.bf16.msra.mxu0 %v243
  %1409 = vmatprep.subr.bf16.mxu0 0
  %1410 = vmatpush1.bf16.msra.mxu0 %v246
  %1411 = vmatprep.subr.bf16.mxu0 0
  %1412 = vmatpush1.bf16.msra.mxu0 %v249
  %1413 = vmatprep.subr.bf16.mxu0 0
  %1414 = vmatpush1.bf16.msra.mxu0 %v252
  %1415 = vmatprep.subr.bf16.mxu0 0
  %1416 = vmatpush1.bf16.msra.mxu0 0
  %1417 = vmatprep.subr.bf16.mxu0 0
  %1418 = vmatpush1.bf16.msra.mxu0 0
  %1419 = vmatprep.subr.bf16.mxu0 0
  %1420 = vmatpush1.bf16.msra.mxu0 0
  %1421 = vmatprep.subr.bf16.mxu0 0
  %1422 = vmatpush1.bf16.msra.mxu0 0
  %1423 = vmatprep.subr.bf16.mxu0 0
  %1424 = vmatpush1.bf16.msra.mxu0 0
  %1425 = vmatprep.subr.bf16.mxu0 0
  %1426 = vmatpush1.bf16.msra.mxu0 0
  %1427 = vmatprep.subr.bf16.mxu0 0
  %1428 = vmatpush1.bf16.msra.mxu0 0
  %1429 = vmatprep.subr.bf16.mxu0 0
  %1430 = vmatpush1.bf16.msra.mxu0 0
  %1431 = vmatprep.mubr.bf16.mxu0 0
  %1432 = vmatmul.mubr.bf16.gmra.mrb[0].mxu0 %v1357
  %v1433 = vpop.f32.mrb[0].mxu0
  %v1434 = vadd.f32 0.0, %v1433
  %v1435 = vpop.f32.mrb[0].mxu0
  %v1436 = vpop.f32.mrb[0].mxu0
  %v1437 = vpop.f32.mrb[0].mxu0
  %1438 = vdwg.mxu0
  %1439 = vmatprep.subr.bf16.mxu0 %v439
  %1440 = vmatpush1.bf16.msra.mxu0 %v438
  %1441 = vmatprep.subr.bf16.mxu0 %v442
  %1442 = vmatpush1.bf16.msra.mxu0 %v441
  %1443 = vmatprep.subr.bf16.mxu0 %v445
  %1444 = vmatpush1.bf16.msra.mxu0 %v444
  %1445 = vmatprep.subr.bf16.mxu0 %v448
  %1446 = vmatpush1.bf16.msra.mxu0 %v447
  %1447 = vmatprep.subr.bf16.mxu0 %v451
  %1448 = vmatpush1.bf16.msra.mxu0 %v450
  %1449 = vmatprep.subr.bf16.mxu0 %v454
  %1450 = vmatpush1.bf16.msra.mxu0 %v453
  %1451 = vmatprep.subr.bf16.mxu0 %v457
  %1452 = vmatpush1.bf16.msra.mxu0 %v456
  %1453 = vmatprep.subr.bf16.mxu0 %v460
  %1454 = vmatpush1.bf16.msra.mxu0 %v459
  %1455 = vmatprep.subr.bf16.mxu0 0
  %1456 = vmatpush1.bf16.msra.mxu0 0
  %1457 = vmatprep.subr.bf16.mxu0 0
  %1458 = vmatpush1.bf16.msra.mxu0 0
  %1459 = vmatprep.subr.bf16.mxu0 0
  %1460 = vmatpush1.bf16.msra.mxu0 0
  %1461 = vmatprep.subr.bf16.mxu0 0
  %1462 = vmatpush1.bf16.msra.mxu0 0
  %1463 = vmatprep.subr.bf16.mxu0 0
  %1464 = vmatpush1.bf16.msra.mxu0 0
  %1465 = vmatprep.subr.bf16.mxu0 0
  %1466 = vmatpush1.bf16.msra.mxu0 0
  %1467 = vmatprep.subr.bf16.mxu0 0
  %1468 = vmatpush1.bf16.msra.mxu0 0
  %1469 = vmatprep.subr.bf16.mxu0 0
  %1470 = vmatpush1.bf16.msra.mxu0 0
  %1471 = vmatprep.mubr.bf16.mxu0 0
  %1472 = vmatmul.mubr.bf16.gmra.mrb[0].mxu0 %v1355
  %v1473 = vpop.f32.mrb[0].mxu0
  %v1474 = vadd.f32 %v1393, %v1473
  %v1475 = vpop.f32.mrb[0].mxu0
  %v1476 = vadd.f32 %v1395, %v1475
  %v1477 = vpop.f32.mrb[0].mxu0
  %v1478 = vpop.f32.mrb[0].mxu0
  %1479 = vdwg.mxu0
  %1480 = vmatprep.subr.bf16.mxu0 0
  %1481 = vmatpush1.bf16.msra.mxu0 %v440
  %1482 = vmatprep.subr.bf16.mxu0 0
  %1483 = vmatpush1.bf16.msra.mxu0 %v443
  %1484 = vmatprep.subr.bf16.mxu0 0
  %1485 = vmatpush1.bf16.msra.mxu0 %v446
  %1486 = vmatprep.subr.bf16.mxu0 0
  %1487 = vmatpush1.bf16.msra.mxu0 %v449
  %1488 = vmatprep.subr.bf16.mxu0 0
  %1489 = vmatpush1.bf16.msra.mxu0 %v452
  %1490 = vmatprep.subr.bf16.mxu0 0
  %1491 = vmatpush1.bf16.msra.mxu0 %v455
  %1492 = vmatprep.subr.bf16.mxu0 0
  %1493 = vmatpush1.bf16.msra.mxu0 %v458
  %1494 = vmatprep.subr.bf16.mxu0 0
  %1495 = vmatpush1.bf16.msra.mxu0 %v461
  %1496 = vmatprep.subr.bf16.mxu0 0
  %1497 = vmatpush1.bf16.msra.mxu0 0
  %1498 = vmatprep.subr.bf16.mxu0 0
  %1499 = vmatpush1.bf16.msra.mxu0 0
  %1500 = vmatprep.subr.bf16.mxu0 0
  %1501 = vmatpush1.bf16.msra.mxu0 0
  %1502 = vmatprep.subr.bf16.mxu0 0
  %1503 = vmatpush1.bf16.msra.mxu0 0
  %1504 = vmatprep.subr.bf16.mxu0 0
  %1505 = vmatpush1.bf16.msra.mxu0 0
  %1506 = vmatprep.subr.bf16.mxu0 0
  %1507 = vmatpush1.bf16.msra.mxu0 0
  %1508 = vmatprep.subr.bf16.mxu0 0
  %1509 = vmatpush1.bf16.msra.mxu0 0
  %1510 = vmatprep.subr.bf16.mxu0 0
  %1511 = vmatpush1.bf16.msra.mxu0 0
  %1512 = vmatprep.mubr.bf16.mxu0 0
  %1513 = vmatmul.mubr.bf16.gmra.mrb[0].mxu0 %v1355
  %v1514 = vpop.f32.mrb[0].mxu0
  %v1515 = vadd.f32 %v1434, %v1514
  %v1516 = vpop.f32.mrb[0].mxu0
  %v1517 = vpop.f32.mrb[0].mxu0
  %v1518 = vpop.f32.mrb[0].mxu0
  %1519 = vdwg.mxu0
  %v1520 = vadd.f32 %v1474, %v127
  %v1521 = vadd.f32 %v1476, %v131
  %v1522 = vadd.f32 %v1515, %v135
  %v1523 = vpack.c.bf16 %v1350, %v1350
  %1524 = vmatprep.subr.bf16.mxu0 %v651
  %1525 = vmatpush1.bf16.msra.mxu0 %v650
  %1526 = vmatprep.subr.bf16.mxu0 %v654
  %1527 = vmatpush1.bf16.msra.mxu0 %v653
  %1528 = vmatprep.subr.bf16.mxu0 %v657
  %1529 = vmatpush1.bf16.msra.mxu0 %v656
  %1530 = vmatprep.subr.bf16.mxu0 %v660
  %1531 = vmatpush1.bf16.msra.mxu0 %v659
  %1532 = vmatprep.subr.bf16.mxu0 %v663
  %1533 = vmatpush1.bf16.msra.mxu0 %v662
  %1534 = vmatprep.subr.bf16.mxu0 %v666
  %1535 = vmatpush1.bf16.msra.mxu0 %v665
  %1536 = vmatprep.subr.bf16.mxu0 %v669
  %1537 = vmatpush1.bf16.msra.mxu0 %v668
  %1538 = vmatprep.subr.bf16.mxu0 %v672
  %1539 = vmatpush1.bf16.msra.mxu0 %v671
  %1540 = vmatprep.subr.bf16.mxu0 0
  %1541 = vmatpush1.bf16.msra.mxu0 0
  %1542 = vmatprep.subr.bf16.mxu0 0
  %1543 = vmatpush1.bf16.msra.mxu0 0
  %1544 = vmatprep.subr.bf16.mxu0 0
  %1545 = vmatpush1.bf16.msra.mxu0 0
  %1546 = vmatprep.subr.bf16.mxu0 0
  %1547 = vmatpush1.bf16.msra.mxu0 0
  %1548 = vmatprep.subr.bf16.mxu0 0
  %1549 = vmatpush1.bf16.msra.mxu0 0
  %1550 = vmatprep.subr.bf16.mxu0 0
  %1551 = vmatpush1.bf16.msra.mxu0 0
  %1552 = vmatprep.subr.bf16.mxu0 0
  %1553 = vmatpush1.bf16.msra.mxu0 0
  %1554 = vmatprep.subr.bf16.mxu0 0
  %1555 = vmatpush1.bf16.msra.mxu0 0
  %1556 = vmatprep.mubr.bf16.mxu0 0
  %1557 = vmatmul.mubr.bf16.gmra.mrb[0].mxu0 %v1523
  %v1558 = vpop.f32.mrb[0].mxu0
  %v1559 = vadd.f32 0.0, %v1558
  %v1560 = vpop.f32.mrb[0].mxu0
  %v1561 = vadd.f32 0.0, %v1560
  %v1562 = vpop.f32.mrb[0].mxu0
  %v1563 = vpop.f32.mrb[0].mxu0
  %1564 = vdwg.mxu0
  %1565 = vmatprep.subr.bf16.mxu0 0
  %1566 = vmatpush1.bf16.msra.mxu0 %v652
  %1567 = vmatprep.subr.bf16.mxu0 0
  %1568 = vmatpush1.bf16.msra.mxu0 %v655
  %1569 = vmatprep.subr.bf16.mxu0 0
  %1570 = vmatpush1.bf16.msra.mxu0 %v658
  %1571 = vmatprep.subr.bf16.mxu0 0
  %1572 = vmatpush1.bf16.msra.mxu0 %v661
  %1573 = vmatprep.subr.bf16.mxu0 0
  %1574 = vmatpush1.bf16.msra.mxu0 %v664
  %1575 = vmatprep.subr.bf16.mxu0 0
  %1576 = vmatpush1.bf16.msra.mxu0 %v667
  %1577 = vmatprep.subr.bf16.mxu0 0
  %1578 = vmatpush1.bf16.msra.mxu0 %v670
  %1579 = vmatprep.subr.bf16.mxu0 0
  %1580 = vmatpush1.bf16.msra.mxu0 %v673
  %1581 = vmatprep.subr.bf16.mxu0 0
  %1582 = vmatpush1.bf16.msra.mxu0 0
  %1583 = vmatprep.subr.bf16.mxu0 0
  %1584 = vmatpush1.bf16.msra.mxu0 0
  %1585 = vmatprep.subr.bf16.mxu0 0
  %1586 = vmatpush1.bf16.msra.mxu0 0
  %1587 = vmatprep.subr.bf16.mxu0 0
  %1588 = vmatpush1.bf16.msra.mxu0 0
  %1589 = vmatprep.subr.bf16.mxu0 0
  %1590 = vmatpush1.bf16.msra.mxu0 0
  %1591 = vmatprep.subr.bf16.mxu0 0
  %1592 = vmatpush1.bf16.msra.mxu0 0
  %1593 = vmatprep.subr.bf16.mxu0 0
  %1594 = vmatpush1.bf16.msra.mxu0 0
  %1595 = vmatprep.subr.bf16.mxu0 0
  %1596 = vmatpush1.bf16.msra.mxu0 0
  %1597 = vmatprep.mubr.bf16.mxu0 0
  %1598 = vmatmul.mubr.bf16.gmra.mrb[0].mxu0 %v1523
  %v1599 = vpop.f32.mrb[0].mxu0
  %v1600 = vadd.f32 0.0, %v1599
  %v1601 = vpop.f32.mrb[0].mxu0
  %v1602 = vpop.f32.mrb[0].mxu0
  %v1603 = vpop.f32.mrb[0].mxu0
  %1604 = vdwg.mxu0
  %v1605 = vadd.f32 %v1520, %v1559
  %v1606 = vxor.u32 %v1605, 2147483648
  %v1607 = vmul.f32 %v1606, 1.442695
  %v1608 = vpow.pop %v1607
  %v1609 = vadd.f32 %v1608, 1.0
  %v1610 = vrcp.pop %v1609
  %v1611 = vmul.f32 1.0, %v1610
  %v1612 = vadd.f32 %v1521, %v1561
  %v1613 = vxor.u32 %v1612, 2147483648
  %v1614 = vmul.f32 %v1613, 1.442695
  %v1615 = vpow.pop %v1614
  %v1616 = vadd.f32 %v1615, 1.0
  %v1617 = vrcp.pop %v1616
  %v1618 = vmul.f32 1.0, %v1617
  %v1619 = vadd.f32 %v1600, %v144
  %v1620 = vmul.f32 %v1611, %v1619
  %v1621 = vadd.f32 %v1522, %v1620
  %v1622 = vtanh.pop %v1621
  %v1623 = vsub.f32 1.0, %v1618
  %v1624 = vmul.f32 %v1623, %v1622
  %v1625 = vmul.f32 %v1618, %v1350
  %v1626 = vadd.f32 %v1624, %v1625
  %s1627 = scalar_lea.vmem %s6, 24
  %1628 = vst [vmem:[%s1627] sm:$0xff] %v1626
  %v1629 = vmax.f32 %v1353, %v1626
  %v1630 = vld [vmem:[%s1356] sm:$0xf]
  %v1631 = vld [vmem:[%s1354] sm:$0xf]
  %1632 = vmatprep.subr.bf16.mxu0 %v230
  %1633 = vmatpush1.bf16.msra.mxu0 %v229
  %1634 = vmatprep.subr.bf16.mxu0 %v233
  %1635 = vmatpush1.bf16.msra.mxu0 %v232
  %1636 = vmatprep.subr.bf16.mxu0 %v236
  %1637 = vmatpush1.bf16.msra.mxu0 %v235
  %1638 = vmatprep.subr.bf16.mxu0 %v239
  %1639 = vmatpush1.bf16.msra.mxu0 %v238
  %1640 = vmatprep.subr.bf16.mxu0 %v242
  %1641 = vmatpush1.bf16.msra.mxu0 %v241
  %1642 = vmatprep.subr.bf16.mxu0 %v245
  %1643 = vmatpush1.bf16.msra.mxu0 %v244
  %1644 = vmatprep.subr.bf16.mxu0 %v248
  %1645 = vmatpush1.bf16.msra.mxu0 %v247
  %1646 = vmatprep.subr.bf16.mxu0 %v251
  %1647 = vmatpush1.bf16.msra.mxu0 %v250
  %1648 = vmatprep.subr.bf16.mxu0 0
  %1649 = vmatpush1.bf16.msra.mxu0 0
  %1650 = vmatprep.subr.bf16.mxu0 0
  %1651 = vmatpush1.bf16.msra.mxu0 0
  %1652 = vmatprep.subr.bf16.mxu0 0
  %1653 = vmatpush1.bf16.msra.mxu0 0
  %1654 = vmatprep.subr.bf16.mxu0 0
  %1655 = vmatpush1.bf16.msra.mxu0 0
  %1656 = vmatprep.subr.bf16.mxu0 0
  %1657 = vmatpush1.bf16.msra.mxu0 0
  %1658 = vmatprep.subr.bf16.mxu0 0
  %1659 = vmatpush1.bf16.msra.mxu0 0
  %1660 = vmatprep.subr.bf16.mxu0 0
  %1661 = vmatpush1.bf16.msra.mxu0 0
  %1662 = vmatprep.subr.bf16.mxu0 0
  %1663 = vmatpush1.bf16.msra.mxu0 0
  %1664 = vmatprep.mubr.bf16.mxu0 0
  %1665 = vmatmul.mubr.bf16.gmra.mrb[0].mxu0 %v1631
  %v1666 = vpop.f32.mrb[0].mxu0
  %v1667 = vadd.f32 0.0, %v1666
  %v1668 = vpop.f32.mrb[0].mxu0
  %v1669 = vadd.f32 0.0, %v1668
  %v1670 = vpop.f32.mrb[0].mxu0
  %v1671 = vpop.f32.mrb[0].mxu0
  %1672 = vdwg.mxu0
  %1673 = vmatprep.subr.bf16.mxu0 0
  %1674 = vmatpush1.bf16.msra.mxu0 %v231
  %1675 = vmatprep.subr.bf16.mxu0 0
  %1676 = vmatpush1.bf16.msra.mxu0 %v234
  %1677 = vmatprep.subr.bf16.mxu0 0
  %1678 = vmatpush1.bf16.msra.mxu0 %v237
  %1679 = vmatprep.subr.bf16.mxu0 0
  %1680 = vmatpush1.bf16.msra.mxu0 %v240
  %1681 = vmatprep.subr.bf16.mxu0 0
  %1682 = vmatpush1.bf16.msra.mxu0 %v243
  %1683 = vmatprep.subr.bf16.mxu0 0
  %1684 = vmatpush1.bf16.msra.mxu0 %v246
  %1685 = vmatprep.subr.bf16.mxu0 0
  %1686 = vmatpush1.bf16.msra.mxu0 %v249
  %1687 = vmatprep.subr.bf16.mxu0 0
  %1688 = vmatpush1.bf16.msra.mxu0 %v252
  %1689 = vmatprep.subr.bf16.mxu0 0
  %1690 = vmatpush1.bf16.msra.mxu0 0
  %1691 = vmatprep.subr.bf16.mxu0 0
  %1692 = vmatpush1.bf16.msra.mxu0 0
  %1693 = vmatprep.subr.bf16.mxu0 0
  %1694 = vmatpush1.bf16.msra.mxu0 0
  %1695 = vmatprep.subr.bf16.mxu0 0
  %1696 = vmatpush1.bf16.msra.mxu0 0
  %1697 = vmatprep.subr.bf16.mxu0 0
  %1698 = vmatpush1.bf16.msra.mxu0 0
  %1699 = vmatprep.subr.bf16.mxu0 0
  %1700 = vmatpush1.bf16.msra.mxu0 0
  %1701 = vmatprep.subr.bf16.mxu0 0
  %1702 = vmatpush1.bf16.msra.mxu0 0
  %1703 = vmatprep.subr.bf16.mxu0 0
  %1704 = vmatpush1.bf16.msra.mxu0 0
  %1705 = vmatprep.mubr.bf16.mxu0 0
  %1706 = vmatmul.mubr.bf16.gmra.mrb[0].mxu0 %v1631
  %v1707 = vpop.f32.mrb[0].mxu0
  %v1708 = vadd.f32 0.0, %v1707
  %v1709 = vpop.f32.mrb[0].mxu0
  %v1710 = vpop.f32.mrb[0].mxu0
  %v1711 = vpop.f32.mrb[0].mxu0
  %1712 = vdwg.mxu0
  %1713 = vmatprep.subr.bf16.mxu0 %v439
  %1714 = vmatpush1.bf16.msra.mxu0 %v438
  %1715 = vmatprep.subr.bf16.mxu0 %v442
  %1716 = vmatpush1.bf16.msra.mxu0 %v441
  %1717 = vmatprep.subr.bf16.mxu0 %v445
  %1718 = vmatpush1.bf16.msra.mxu0 %v444
  %1719 = vmatprep.subr.bf16.mxu0 %v448
  %1720 = vmatpush1.bf16.msra.mxu0 %v447
  %1721 = vmatprep.subr.bf16.mxu0 %v451
  %1722 = vmatpush1.bf16.msra.mxu0 %v450
  %1723 = vmatprep.subr.bf16.mxu0 %v454
  %1724 = vmatpush1.bf16.msra.mxu0 %v453
  %1725 = vmatprep.subr.bf16.mxu0 %v457
  %1726 = vmatpush1.bf16.msra.mxu0 %v456
  %1727 = vmatprep.subr.bf16.mxu0 %v460
  %1728 = vmatpush1.bf16.msra.mxu0 %v459
  %1729 = vmatprep.subr.bf16.mxu0 0
  %1730 = vmatpush1.bf16.msra.mxu0 0
  %1731 = vmatprep.subr.bf16.mxu0 0
  %1732 = vmatpush1.bf16.msra.mxu0 0
  %1733 = vmatprep.subr.bf16.mxu0 0
  %1734 = vmatpush1.bf16.msra.mxu0 0
  %1735 = vmatprep.subr.bf16.mxu0 0
  %1736 = vmatpush1.bf16.msra.mxu0 0
  %1737 = vmatprep.subr.bf16.mxu0 0
  %1738 = vmatpush1.bf16.msra.mxu0 0
  %1739 = vmatprep.subr.bf16.mxu0 0
  %1740 = vmatpush1.bf16.msra.mxu0 0
  %1741 = vmatprep.subr.bf16.mxu0 0
  %1742 = vmatpush1.bf16.msra.mxu0 0
  %1743 = vmatprep.subr.bf16.mxu0 0
  %1744 = vmatpush1.bf16.msra.mxu0 0
  %1745 = vmatprep.mubr.bf16.mxu0 0
  %1746 = vmatmul.mubr.bf16.gmra.mrb[0].mxu0 %v1630
  %v1747 = vpop.f32.mrb[0].mxu0
  %v1748 = vadd.f32 %v1667, %v1747
  %v1749 = vpop.f32.mrb[0].mxu0
  %v1750 = vadd.f32 %v1669, %v1749
  %v1751 = vpop.f32.mrb[0].mxu0
  %v1752 = vpop.f32.mrb[0].mxu0
  %1753 = vdwg.mxu0
  %1754 = vmatprep.subr.bf16.mxu0 0
  %1755 = vmatpush1.bf16.msra.mxu0 %v440
  %1756 = vmatprep.subr.bf16.mxu0 0
  %1757 = vmatpush1.bf16.msra.mxu0 %v443
  %1758 = vmatprep.subr.bf16.mxu0 0
  %1759 = vmatpush1.bf16.msra.mxu0 %v446
  %1760 = vmatprep.subr.bf16.mxu0 0
  %1761 = vmatpush1.bf16.msra.mxu0 %v449
  %1762 = vmatprep.subr.bf16.mxu0 0
  %1763 = vmatpush1.bf16.msra.mxu0 %v452
  %1764 = vmatprep.subr.bf16.mxu0 0
  %1765 = vmatpush1.bf16.msra.mxu0 %v455
  %1766 = vmatprep.subr.bf16.mxu0 0
  %1767 = vmatpush1.bf16.msra.mxu0 %v458
  %1768 = vmatprep.subr.bf16.mxu0 0
  %1769 = vmatpush1.bf16.msra.mxu0 %v461
  %1770 = vmatprep.subr.bf16.mxu0 0
  %1771 = vmatpush1.bf16.msra.mxu0 0
  %1772 = vmatprep.subr.bf16.mxu0 0
  %1773 = vmatpush1.bf16.msra.mxu0 0
  %1774 = vmatprep.subr.bf16.mxu0 0
  %1775 = vmatpush1.bf16.msra.mxu0 0
  %1776 = vmatprep.subr.bf16.mxu0 0
  %1777 = vmatpush1.bf16.msra.mxu0 0
  %1778 = vmatprep.subr.bf16.mxu0 0
  %1779 = vmatpush1.bf16.msra.mxu0 0
  %1780 = vmatprep.subr.bf16.mxu0 0
  %1781 = vmatpush1.bf16.msra.mxu0 0
  %1782 = vmatprep.subr.bf16.mxu0 0
  %1783 = vmatpush1.bf16.msra.mxu0 0
  %1784 = vmatprep.subr.bf16.mxu0 0
  %1785 = vmatpush1.bf16.msra.mxu0 0
  %1786 = vmatprep.mubr.bf16.mxu0 0
  %1787 = vmatmul.mubr.bf16.gmra.mrb[0].mxu0 %v1630
  %v1788 = vpop.f32.mrb[0].mxu0
  %v1789 = vadd.f32 %v1708, %v1788
  %v1790 = vpop.f32.mrb[0].mxu0
  %v1791 = vpop.f32.mrb[0].mxu0
  %v1792 = vpop.f32.mrb[0].mxu0
  %1793 = vdwg.mxu0
  %v1794 = vadd.f32 %v1748, %v127
  %v1795 = vadd.f32 %v1750, %v131
  %v1796 = vadd.f32 %v1789, %v135
  %v1797 = vpack.c.bf16 %v1626, %v1626
  %1798 = vmatprep.subr.bf16.mxu0 %v651
  %1799 = vmatpush1.bf16.msra.mxu0 %v650
  %1800 = vmatprep.subr.bf16.mxu0 %v654
  %1801 = vmatpush1.bf16.msra.mxu0 %v653
  %1802 = vmatprep.subr.bf16.mxu0 %v657
  %1803 = vmatpush1.bf16.msra.mxu0 %v656
  %1804 = vmatprep.subr.bf16.mxu0 %v660
  %1805 = vmatpush1.bf16.msra.mxu0 %v659
  %1806 = vmatprep.subr.bf16.mxu0 %v663
  %1807 = vmatpush1.bf16.msra.mxu0 %v662
  %1808 = vmatprep.subr.bf16.mxu0 %v666
  %1809 = vmatpush1.bf16.msra.mxu0 %v665
  %1810 = vmatprep.subr.bf16.mxu0 %v669
  %1811 = vmatpush1.bf16.msra.mxu0 %v668
  %1812 = vmatprep.subr.bf16.mxu0 %v672
  %1813 = vmatpush1.bf16.msra.mxu0 %v671
  %1814 = vmatprep.subr.bf16.mxu0 0
  %1815 = vmatpush1.bf16.msra.mxu0 0
  %1816 = vmatprep.subr.bf16.mxu0 0
  %1817 = vmatpush1.bf16.msra.mxu0 0
  %1818 = vmatprep.subr.bf16.mxu0 0
  %1819 = vmatpush1.bf16.msra.mxu0 0
  %1820 = vmatprep.subr.bf16.mxu0 0
  %1821 = vmatpush1.bf16.msra.mxu0 0
  %1822 = vmatprep.subr.bf16.mxu0 0
  %1823 = vmatpush1.bf16.msra.mxu0 0
  %1824 = vmatprep.subr.bf16.mxu0 0
  %1825 = vmatpush1.bf16.msra.mxu0 0
  %1826 = vmatprep.subr.bf16.mxu0 0
  %1827 = vmatpush1.bf16.msra.mxu0 0
  %1828 = vmatprep.subr.bf16.mxu0 0
  %1829 = vmatpush1.bf16.msra.mxu0 0
  %1830 = vmatprep.mubr.bf16.mxu0 0
  %1831 = vmatmul.mubr.bf16.gmra.mrb[0].mxu0 %v1797
  %v1832 = vpop.f32.mrb[0].mxu0
  %v1833 = vadd.f32 0.0, %v1832
  %v1834 = vpop.f32.mrb[0].mxu0
  %v1835 = vadd.f32 0.0, %v1834
  %v1836 = vpop.f32.mrb[0].mxu0
  %v1837 = vpop.f32.mrb[0].mxu0
  %1838 = vdwg.mxu0
  %1839 = vmatprep.subr.bf16.mxu0 0
  %1840 = vmatpush1.bf16.msra.mxu0 %v652
  %1841 = vmatprep.subr.bf16.mxu0 0
  %1842 = vmatpush1.bf16.msra.mxu0 %v655
  %1843 = vmatprep.subr.bf16.mxu0 0
  %1844 = vmatpush1.bf16.msra.mxu0 %v658
  %1845 = vmatprep.subr.bf16.mxu0 0
  %1846 = vmatpush1.bf16.msra.mxu0 %v661
  %1847 = vmatprep.subr.bf16.mxu0 0
  %1848 = vmatpush1.bf16.msra.mxu0 %v664
  %1849 = vmatprep.subr.bf16.mxu0 0
  %1850 = vmatpush1.bf16.msra.mxu0 %v667
  %1851 = vmatprep.subr.bf16.mxu0 0
  %1852 = vmatpush1.bf16.msra.mxu0 %v670
  %1853 = vmatprep.subr.bf16.mxu0 0
  %1854 = vmatpush1.bf16.msra.mxu0 %v673
  %1855 = vmatprep.subr.bf16.mxu0 0
  %1856 = vmatpush1.bf16.msra.mxu0 0
  %1857 = vmatprep.subr.bf16.mxu0 0
  %1858 = vmatpush1.bf16.msra.mxu0 0
  %1859 = vmatprep.subr.bf16.mxu0 0
  %1860 = vmatpush1.bf16.msra.mxu0 0
  %1861 = vmatprep.subr.bf16.mxu0 0
  %1862 = vmatpush1.bf16.msra.mxu0 0
  %1863 = vmatprep.subr.bf16.mxu0 0
  %1864 = vmatpush1.bf16.msra.mxu0 0
  %1865 = vmatprep.subr.bf16.mxu0 0
  %1866 = vmatpush1.bf16.msra.mxu0 0
  %1867 = vmatprep.subr.bf16.mxu0 0
  %1868 = vmatpush1.bf16.msra.mxu0 0
  %1869 = vmatprep.subr.bf16.mxu0 0
  %1870 = vmatpush1.bf16.msra.mxu0 0
  %1871 = vmatprep.mubr.bf16.mxu0 0
  %1872 = vmatmul.mubr.bf16.gmra.mrb[0].mxu0 %v1797
  %v1873 = vpop.f32.mrb[0].mxu0
  %v1874 = vadd.f32 0.0, %v1873
  %v1875 = vpop.f32.mrb[0].mxu0
  %v1876 = vpop.f32.mrb[0].mxu0
  %v1877 = vpop.f32.mrb[0].mxu0
  %1878 = vdwg.mxu0
  %v1879 = vadd.f32 %v1794, %v1833
  %v1880 = vxor.u32 %v1879, 2147483648
  %v1881 = vmul.f32 %v1880, 1.442695
  %v1882 = vpow.pop %v1881
  %v1883 = vadd.f32 %v1882, 1.0
  %v1884 = vrcp.pop %v1883
  %v1885 = vmul.f32 1.0, %v1884
  %v1886 = vadd.f32 %v1795, %v1835
  %v1887 = vxor.u32 %v1886, 2147483648
  %v1888 = vmul.f32 %v1887, 1.442695
  %v1889 = vpow.pop %v1888
  %v1890 = vadd.f32 %v1889, 1.0
  %v1891 = vrcp.pop %v1890
  %v1892 = vmul.f32 1.0, %v1891
  %v1893 = vadd.f32 %v1874, %v144
  %v1894 = vmul.f32 %v1885, %v1893
  %v1895 = vadd.f32 %v1796, %v1894
  %v1896 = vtanh.pop %v1895
  %v1897 = vsub.f32 1.0, %v1892
  %v1898 = vmul.f32 %v1897, %v1896
  %v1899 = vmul.f32 %v1892, %v1626
  %v1900 = vadd.f32 %v1898, %v1899
  %s1901 = scalar_lea.vmem %s6, 32
  %1902 = vst [vmem:[%s1901] sm:$0xff] %v1900
  %v1903 = vmax.f32 %v1629, %v1900
  %v1904 = vld [vmem:[%s1080] sm:$0xf]
  %v1905 = vld [vmem:[%s1078] sm:$0xf]
  %1906 = vmatprep.subr.bf16.mxu0 %v230
  %1907 = vmatpush1.bf16.msra.mxu0 %v229
  %1908 = vmatprep.subr.bf16.mxu0 %v233
  %1909 = vmatpush1.bf16.msra.mxu0 %v232
  %1910 = vmatprep.subr.bf16.mxu0 %v236
  %1911 = vmatpush1.bf16.msra.mxu0 %v235
  %1912 = vmatprep.subr.bf16.mxu0 %v239
  %1913 = vmatpush1.bf16.msra.mxu0 %v238
  %1914 = vmatprep.subr.bf16.mxu0 %v242
  %1915 = vmatpush1.bf16.msra.mxu0 %v241
  %1916 = vmatprep.subr.bf16.mxu0 %v245
  %1917 = vmatpush1.bf16.msra.mxu0 %v244
  %1918 = vmatprep.subr.bf16.mxu0 %v248
  %1919 = vmatpush1.bf16.msra.mxu0 %v247
  %1920 = vmatprep.subr.bf16.mxu0 %v251
  %1921 = vmatpush1.bf16.msra.mxu0 %v250
  %1922 = vmatprep.subr.bf16.mxu0 0
  %1923 = vmatpush1.bf16.msra.mxu0 0
  %1924 = vmatprep.subr.bf16.mxu0 0
  %1925 = vmatpush1.bf16.msra.mxu0 0
  %1926 = vmatprep.subr.bf16.mxu0 0
  %1927 = vmatpush1.bf16.msra.mxu0 0
  %1928 = vmatprep.subr.bf16.mxu0 0
  %1929 = vmatpush1.bf16.msra.mxu0 0
  %1930 = vmatprep.subr.bf16.mxu0 0
  %1931 = vmatpush1.bf16.msra.mxu0 0
  %1932 = vmatprep.subr.bf16.mxu0 0
  %1933 = vmatpush1.bf16.msra.mxu0 0
  %1934 = vmatprep.subr.bf16.mxu0 0
  %1935 = vmatpush1.bf16.msra.mxu0 0
  %1936 = vmatprep.subr.bf16.mxu0 0
  %1937 = vmatpush1.bf16.msra.mxu0 0
  %1938 = vmatprep.mubr.bf16.mxu0 0
  %1939 = vmatmul.mubr.bf16.gmra.mrb[0].mxu0 %v1905
  %v1940 = vpop.f32.mrb[0].mxu0
  %v1941 = vadd.f32 0.0, %v1940
  %v1942 = vpop.f32.mrb[0].mxu0
  %v1943 = vadd.f32 0.0, %v1942
  %v1944 = vpop.f32.mrb[0].mxu0
  %v1945 = vpop.f32.mrb[0].mxu0
  %1946 = vdwg.mxu0
  %1947 = vmatprep.subr.bf16.mxu0 0
  %1948 = vmatpush1.bf16.msra.mxu0 %v231
  %1949 = vmatprep.subr.bf16.mxu0 0
  %1950 = vmatpush1.bf16.msra.mxu0 %v234
  %1951 = vmatprep.subr.bf16.mxu0 0
  %1952 = vmatpush1.bf16.msra.mxu0 %v237
  %1953 = vmatprep.subr.bf16.mxu0 0
  %1954 = vmatpush1.bf16.msra.mxu0 %v240
  %1955 = vmatprep.subr.bf16.mxu0 0
  %1956 = vmatpush1.bf16.msra.mxu0 %v243
  %1957 = vmatprep.subr.bf16.mxu0 0
  %1958 = vmatpush1.bf16.msra.mxu0 %v246
  %1959 = vmatprep.subr.bf16.mxu0 0
  %1960 = vmatpush1.bf16.msra.mxu0 %v249
  %1961 = vmatprep.subr.bf16.mxu0 0
  %1962 = vmatpush1.bf16.msra.mxu0 %v252
  %1963 = vmatprep.subr.bf16.mxu0 0
  %1964 = vmatpush1.bf16.msra.mxu0 0
  %1965 = vmatprep.subr.bf16.mxu0 0
  %1966 = vmatpush1.bf16.msra.mxu0 0
  %1967 = vmatprep.subr.bf16.mxu0 0
  %1968 = vmatpush1.bf16.msra.mxu0 0
  %1969 = vmatprep.subr.bf16.mxu0 0
  %1970 = vmatpush1.bf16.msra.mxu0 0
  %1971 = vmatprep.subr.bf16.mxu0 0
  %1972 = vmatpush1.bf16.msra.mxu0 0
  %1973 = vmatprep.subr.bf16.mxu0 0
  %1974 = vmatpush1.bf16.msra.mxu0 0
  %1975 = vmatprep.subr.bf16.mxu0 0
  %1976 = vmatpush1.bf16.msra.mxu0 0
  %1977 = vmatprep.subr.bf16.mxu0 0
  %1978 = vmatpush1.bf16.msra.mxu0 0
  %1979 = vmatprep.mubr.bf16.mxu0 0
  %1980 = vmatmul.mubr.bf16.gmra.mrb[0].mxu0 %v1905
  %v1981 = vpop.f32.mrb[0].mxu0
  %v1982 = vadd.f32 0.0, %v1981
  %v1983 = vpop.f32.mrb[0].mxu0
  %v1984 = vpop.f32.mrb[0].mxu0
  %v1985 = vpop.f32.mrb[0].mxu0
  %1986 = vdwg.mxu0
  %1987 = vmatprep.subr.bf16.mxu0 %v439
  %1988 = vmatpush1.bf16.msra.mxu0 %v438
  %1989 = vmatprep.subr.bf16.mxu0 %v442
  %1990 = vmatpush1.bf16.msra.mxu0 %v441
  %1991 = vmatprep.subr.bf16.mxu0 %v445
  %1992 = vmatpush1.bf16.msra.mxu0 %v444
  %1993 = vmatprep.subr.bf16.mxu0 %v448
  %1994 = vmatpush1.bf16.msra.mxu0 %v447
  %1995 = vmatprep.subr.bf16.mxu0 %v451
  %1996 = vmatpush1.bf16.msra.mxu0 %v450
  %1997 = vmatprep.subr.bf16.mxu0 %v454
  %1998 = vmatpush1.bf16.msra.mxu0 %v453
  %1999 = vmatprep.subr.bf16.mxu0 %v457
  %2000 = vmatpush1.bf16.msra.mxu0 %v456
  %2001 = vmatprep.subr.bf16.mxu0 %v460
  %2002 = vmatpush1.bf16.msra.mxu0 %v459
  %2003 = vmatprep.subr.bf16.mxu0 0
  %2004 = vmatpush1.bf16.msra.mxu0 0
  %2005 = vmatprep.subr.bf16.mxu0 0
  %2006 = vmatpush1.bf16.msra.mxu0 0
  %2007 = vmatprep.subr.bf16.mxu0 0
  %2008 = vmatpush1.bf16.msra.mxu0 0
  %2009 = vmatprep.subr.bf16.mxu0 0
  %2010 = vmatpush1.bf16.msra.mxu0 0
  %2011 = vmatprep.subr.bf16.mxu0 0
  %2012 = vmatpush1.bf16.msra.mxu0 0
  %2013 = vmatprep.subr.bf16.mxu0 0
  %2014 = vmatpush1.bf16.msra.mxu0 0
  %2015 = vmatprep.subr.bf16.mxu0 0
  %2016 = vmatpush1.bf16.msra.mxu0 0
  %2017 = vmatprep.subr.bf16.mxu0 0
  %2018 = vmatpush1.bf16.msra.mxu0 0
  %2019 = vmatprep.mubr.bf16.mxu0 0
  %2020 = vmatmul.mubr.bf16.gmra.mrb[0].mxu0 %v1904
  %v2021 = vpop.f32.mrb[0].mxu0
  %v2022 = vadd.f32 %v1941, %v2021
  %v2023 = vpop.f32.mrb[0].mxu0
  %v2024 = vadd.f32 %v1943, %v2023
  %v2025 = vpop.f32.mrb[0].mxu0
  %v2026 = vpop.f32.mrb[0].mxu0
  %2027 = vdwg.mxu0
  %2028 = vmatprep.subr.bf16.mxu0 0
  %2029 = vmatpush1.bf16.msra.mxu0 %v440
  %2030 = vmatprep.subr.bf16.mxu0 0
  %2031 = vmatpush1.bf16.msra.mxu0 %v443
  %2032 = vmatprep.subr.bf16.mxu0 0
  %2033 = vmatpush1.bf16.msra.mxu0 %v446
  %2034 = vmatprep.subr.bf16.mxu0 0
  %2035 = vmatpush1.bf16.msra.mxu0 %v449
  %2036 = vmatprep.subr.bf16.mxu0 0
  %2037 = vmatpush1.bf16.msra.mxu0 %v452
  %2038 = vmatprep.subr.bf16.mxu0 0
  %2039 = vmatpush1.bf16.msra.mxu0 %v455
  %2040 = vmatprep.subr.bf16.mxu0 0
  %2041 = vmatpush1.bf16.msra.mxu0 %v458
  %2042 = vmatprep.subr.bf16.mxu0 0
  %2043 = vmatpush1.bf16.msra.mxu0 %v461
  %2044 = vmatprep.subr.bf16.mxu0 0
  %2045 = vmatpush1.bf16.msra.mxu0 0
  %2046 = vmatprep.subr.bf16.mxu0 0
  %2047 = vmatpush1.bf16.msra.mxu0 0
  %2048 = vmatprep.subr.bf16.mxu0 0
  %2049 = vmatpush1.bf16.msra.mxu0 0
  %2050 = vmatprep.subr.bf16.mxu0 0
  %2051 = vmatpush1.bf16.msra.mxu0 0
  %2052 = vmatprep.subr.bf16.mxu0 0
  %2053 = vmatpush1.bf16.msra.mxu0 0
  %2054 = vmatprep.subr.bf16.mxu0 0
  %2055 = vmatpush1.bf16.msra.mxu0 0
  %2056 = vmatprep.subr.bf16.mxu0 0
  %2057 = vmatpush1.bf16.msra.mxu0 0
  %2058 = vmatprep.subr.bf16.mxu0 0
  %2059 = vmatpush1.bf16.msra.mxu0 0
  %2060 = vmatprep.mubr.bf16.mxu0 0
  %2061 = vmatmul.mubr.bf16.gmra.mrb[0].mxu0 %v1904
  %v2062 = vpop.f32.mrb[0].mxu0
  %v2063 = vadd.f32 %v1982, %v2062
  %v2064 = vpop.f32.mrb[0].mxu0
  %v2065 = vpop.f32.mrb[0].mxu0
  %v2066 = vpop.f32.mrb[0].mxu0
  %2067 = vdwg.mxu0
  %v2068 = vadd.f32 %v2022, %v127
  %v2069 = vadd.f32 %v2024, %v131
  %v2070 = vadd.f32 %v2063, %v135
  %v2071 = vpack.c.bf16 %v1900, %v1900
  %2072 = vmatprep.subr.bf16.mxu0 %v651
  %2073 = vmatpush1.bf16.msra.mxu0 %v650
  %2074 = vmatprep.subr.bf16.mxu0 %v654
  %2075 = vmatpush1.bf16.msra.mxu0 %v653
  %2076 = vmatprep.subr.bf16.mxu0 %v657
  %2077 = vmatpush1.bf16.msra.mxu0 %v656
  %2078 = vmatprep.subr.bf16.mxu0 %v660
  %2079 = vmatpush1.bf16.msra.mxu0 %v659
  %2080 = vmatprep.subr.bf16.mxu0 %v663
  %2081 = vmatpush1.bf16.msra.mxu0 %v662
  %2082 = vmatprep.subr.bf16.mxu0 %v666
  %2083 = vmatpush1.bf16.msra.mxu0 %v665
  %2084 = vmatprep.subr.bf16.mxu0 %v669
  %2085 = vmatpush1.bf16.msra.mxu0 %v668
  %2086 = vmatprep.subr.bf16.mxu0 %v672
  %2087 = vmatpush1.bf16.msra.mxu0 %v671
  %2088 = vmatprep.subr.bf16.mxu0 0
  %2089 = vmatpush1.bf16.msra.mxu0 0
  %2090 = vmatprep.subr.bf16.mxu0 0
  %2091 = vmatpush1.bf16.msra.mxu0 0
  %2092 = vmatprep.subr.bf16.mxu0 0
  %2093 = vmatpush1.bf16.msra.mxu0 0
  %2094 = vmatprep.subr.bf16.mxu0 0
  %2095 = vmatpush1.bf16.msra.mxu0 0
  %2096 = vmatprep.subr.bf16.mxu0 0
  %2097 = vmatpush1.bf16.msra.mxu0 0
  %2098 = vmatprep.subr.bf16.mxu0 0
  %2099 = vmatpush1.bf16.msra.mxu0 0
  %2100 = vmatprep.subr.bf16.mxu0 0
  %2101 = vmatpush1.bf16.msra.mxu0 0
  %2102 = vmatprep.subr.bf16.mxu0 0
  %2103 = vmatpush1.bf16.msra.mxu0 0
  %2104 = vmatprep.mubr.bf16.mxu0 0
  %2105 = vmatmul.mubr.bf16.gmra.mrb[0].mxu0 %v2071
  %v2106 = vpop.f32.mrb[0].mxu0
  %v2107 = vadd.f32 0.0, %v2106
  %v2108 = vpop.f32.mrb[0].mxu0
  %v2109 = vadd.f32 0.0, %v2108
  %v2110 = vpop.f32.mrb[0].mxu0
  %v2111 = vpop.f32.mrb[0].mxu0
  %2112 = vdwg.mxu0
  %2113 = vmatprep.subr.bf16.mxu0 0
  %2114 = vmatpush1.bf16.msra.mxu0 %v652
  %2115 = vmatprep.subr.bf16.mxu0 0
  %2116 = vmatpush1.bf16.msra.mxu0 %v655
  %2117 = vmatprep.subr.bf16.mxu0 0
  %2118 = vmatpush1.bf16.msra.mxu0 %v658
  %2119 = vmatprep.subr.bf16.mxu0 0
  %2120 = vmatpush1.bf16.msra.mxu0 %v661
  %2121 = vmatprep.subr.bf16.mxu0 0
  %2122 = vmatpush1.bf16.msra.mxu0 %v664
  %2123 = vmatprep.subr.bf16.mxu0 0
  %2124 = vmatpush1.bf16.msra.mxu0 %v667
  %2125 = vmatprep.subr.bf16.mxu0 0
  %2126 = vmatpush1.bf16.msra.mxu0 %v670
  %2127 = vmatprep.subr.bf16.mxu0 0
  %2128 = vmatpush1.bf16.msra.mxu0 %v673
  %2129 = vmatprep.subr.bf16.mxu0 0
  %2130 = vmatpush1.bf16.msra.mxu0 0
  %2131 = vmatprep.subr.bf16.mxu0 0
  %2132 = vmatpush1.bf16.msra.mxu0 0
  %2133 = vmatprep.subr.bf16.mxu0 0
  %2134 = vmatpush1.bf16.msra.mxu0 0
  %2135 = vmatprep.subr.bf16.mxu0 0
  %2136 = vmatpush1.bf16.msra.mxu0 0
  %2137 = vmatprep.subr.bf16.mxu0 0
  %2138 = vmatpush1.bf16.msra.mxu0 0
  %2139 = vmatprep.subr.bf16.mxu0 0
  %2140 = vmatpush1.bf16.msra.mxu0 0
  %2141 = vmatprep.subr.bf16.mxu0 0
  %2142 = vmatpush1.bf16.msra.mxu0 0
  %2143 = vmatprep.subr.bf16.mxu0 0
  %2144 = vmatpush1.bf16.msra.mxu0 0
  %2145 = vmatprep.mubr.bf16.mxu0 0
  %2146 = vmatmul.mubr.bf16.gmra.mrb[0].mxu0 %v2071
  %v2147 = vpop.f32.mrb[0].mxu0
  %v2148 = vadd.f32 0.0, %v2147
  %v2149 = vpop.f32.mrb[0].mxu0
  %v2150 = vpop.f32.mrb[0].mxu0
  %v2151 = vpop.f32.mrb[0].mxu0
  %2152 = vdwg.mxu0
  %v2153 = vadd.f32 %v2068, %v2107
  %v2154 = vxor.u32 %v2153, 2147483648
  %v2155 = vmul.f32 %v2154, 1.442695
  %v2156 = vpow.pop %v2155
  %v2157 = vadd.f32 %v2156, 1.0
  %v2158 = vrcp.pop %v2157
  %v2159 = vmul.f32 1.0, %v2158
  %v2160 = vadd.f32 %v2069, %v2109
  %v2161 = vxor.u32 %v2160, 2147483648
  %v2162 = vmul.f32 %v2161, 1.442695
  %v2163 = vpow.pop %v2162
  %v2164 = vadd.f32 %v2163, 1.0
  %v2165 = vrcp.pop %v2164
  %v2166 = vmul.f32 1.0, %v2165
  %v2167 = vadd.f32 %v2148, %v144
  %v2168 = vmul.f32 %v2159, %v2167
  %v2169 = vadd.f32 %v2070, %v2168
  %v2170 = vtanh.pop %v2169
  %v2171 = vsub.f32 1.0, %v2166
  %v2172 = vmul.f32 %v2171, %v2170
  %v2173 = vmul.f32 %v2166, %v1900
  %v2174 = vadd.f32 %v2172, %v2173
  %s2175 = scalar_lea.vmem %s6, 40
  %2176 = vst [vmem:[%s2175] sm:$0xff] %v2174
  %v2177 = vmax.f32 %v1903, %v2174
  %v2178 = vld [vmem:[%s804] sm:$0xf]
  %v2179 = vld [vmem:[%s802] sm:$0xf]
  %2180 = vmatprep.subr.bf16.mxu0 %v230
  %2181 = vmatpush1.bf16.msra.mxu0 %v229
  %2182 = vmatprep.subr.bf16.mxu0 %v233
  %2183 = vmatpush1.bf16.msra.mxu0 %v232
  %2184 = vmatprep.subr.bf16.mxu0 %v236
  %2185 = vmatpush1.bf16.msra.mxu0 %v235
  %2186 = vmatprep.subr.bf16.mxu0 %v239
  %2187 = vmatpush1.bf16.msra.mxu0 %v238
  %2188 = vmatprep.subr.bf16.mxu0 %v242
  %2189 = vmatpush1.bf16.msra.mxu0 %v241
  %2190 = vmatprep.subr.bf16.mxu0 %v245
  %2191 = vmatpush1.bf16.msra.mxu0 %v244
  %2192 = vmatprep.subr.bf16.mxu0 %v248
  %2193 = vmatpush1.bf16.msra.mxu0 %v247
  %2194 = vmatprep.subr.bf16.mxu0 %v251
  %2195 = vmatpush1.bf16.msra.mxu0 %v250
  %2196 = vmatprep.subr.bf16.mxu0 0
  %2197 = vmatpush1.bf16.msra.mxu0 0
  %2198 = vmatprep.subr.bf16.mxu0 0
  %2199 = vmatpush1.bf16.msra.mxu0 0
  %2200 = vmatprep.subr.bf16.mxu0 0
  %2201 = vmatpush1.bf16.msra.mxu0 0
  %2202 = vmatprep.subr.bf16.mxu0 0
  %2203 = vmatpush1.bf16.msra.mxu0 0
  %2204 = vmatprep.subr.bf16.mxu0 0
  %2205 = vmatpush1.bf16.msra.mxu0 0
  %2206 = vmatprep.subr.bf16.mxu0 0
  %2207 = vmatpush1.bf16.msra.mxu0 0
  %2208 = vmatprep.subr.bf16.mxu0 0
  %2209 = vmatpush1.bf16.msra.mxu0 0
  %2210 = vmatprep.subr.bf16.mxu0 0
  %2211 = vmatpush1.bf16.msra.mxu0 0
  %2212 = vmatprep.mubr.bf16.mxu0 0
  %2213 = vmatmul.mubr.bf16.gmra.mrb[0].mxu0 %v2179
  %v2214 = vpop.f32.mrb[0].mxu0
  %v2215 = vadd.f32 0.0, %v2214
  %v2216 = vpop.f32.mrb[0].mxu0
  %v2217 = vadd.f32 0.0, %v2216
  %v2218 = vpop.f32.mrb[0].mxu0
  %v2219 = vpop.f32.mrb[0].mxu0
  %2220 = vdwg.mxu0
  %2221 = vmatprep.subr.bf16.mxu0 0
  %2222 = vmatpush1.bf16.msra.mxu0 %v231
  %2223 = vmatprep.subr.bf16.mxu0 0
  %2224 = vmatpush1.bf16.msra.mxu0 %v234
  %2225 = vmatprep.subr.bf16.mxu0 0
  %2226 = vmatpush1.bf16.msra.mxu0 %v237
  %2227 = vmatprep.subr.bf16.mxu0 0
  %2228 = vmatpush1.bf16.msra.mxu0 %v240
  %2229 = vmatprep.subr.bf16.mxu0 0
  %2230 = vmatpush1.bf16.msra.mxu0 %v243
  %2231 = vmatprep.subr.bf16.mxu0 0
  %2232 = vmatpush1.bf16.msra.mxu0 %v246
  %2233 = vmatprep.subr.bf16.mxu0 0
  %2234 = vmatpush1.bf16.msra.mxu0 %v249
  %2235 = vmatprep.subr.bf16.mxu0 0
  %2236 = vmatpush1.bf16.msra.mxu0 %v252
  %2237 = vmatprep.subr.bf16.mxu0 0
  %2238 = vmatpush1.bf16.msra.mxu0 0
  %2239 = vmatprep.subr.bf16.mxu0 0
  %2240 = vmatpush1.bf16.msra.mxu0 0
  %2241 = vmatprep.subr.bf16.mxu0 0
  %2242 = vmatpush1.bf16.msra.mxu0 0
  %2243 = vmatprep.subr.bf16.mxu0 0
  %2244 = vmatpush1.bf16.msra.mxu0 0
  %2245 = vmatprep.subr.bf16.mxu0 0
  %2246 = vmatpush1.bf16.msra.mxu0 0
  %2247 = vmatprep.subr.bf16.mxu0 0
  %2248 = vmatpush1.bf16.msra.mxu0 0
  %2249 = vmatprep.subr.bf16.mxu0 0
  %2250 = vmatpush1.bf16.msra.mxu0 0
  %2251 = vmatprep.subr.bf16.mxu0 0
  %2252 = vmatpush1.bf16.msra.mxu0 0
  %2253 = vmatprep.mubr.bf16.mxu0 0
  %2254 = vmatmul.mubr.bf16.gmra.mrb[0].mxu0 %v2179
  %v2255 = vpop.f32.mrb[0].mxu0
  %v2256 = vadd.f32 0.0, %v2255
  %v2257 = vpop.f32.mrb[0].mxu0
  %v2258 = vpop.f32.mrb[0].mxu0
  %v2259 = vpop.f32.mrb[0].mxu0
  %2260 = vdwg.mxu0
  %2261 = vmatprep.subr.bf16.mxu0 %v439
  %2262 = vmatpush1.bf16.msra.mxu0 %v438
  %2263 = vmatprep.subr.bf16.mxu0 %v442
  %2264 = vmatpush1.bf16.msra.mxu0 %v441
  %2265 = vmatprep.subr.bf16.mxu0 %v445
  %2266 = vmatpush1.bf16.msra.mxu0 %v444
  %2267 = vmatprep.subr.bf16.mxu0 %v448
  %2268 = vmatpush1.bf16.msra.mxu0 %v447
  %2269 = vmatprep.subr.bf16.mxu0 %v451
  %2270 = vmatpush1.bf16.msra.mxu0 %v450
  %2271 = vmatprep.subr.bf16.mxu0 %v454
  %2272 = vmatpush1.bf16.msra.mxu0 %v453
  %2273 = vmatprep.subr.bf16.mxu0 %v457
  %2274 = vmatpush1.bf16.msra.mxu0 %v456
  %2275 = vmatprep.subr.bf16.mxu0 %v460
  %2276 = vmatpush1.bf16.msra.mxu0 %v459
  %2277 = vmatprep.subr.bf16.mxu0 0
  %2278 = vmatpush1.bf16.msra.mxu0 0
  %2279 = vmatprep.subr.bf16.mxu0 0
  %2280 = vmatpush1.bf16.msra.mxu0 0
  %2281 = vmatprep.subr.bf16.mxu0 0
  %2282 = vmatpush1.bf16.msra.mxu0 0
  %2283 = vmatprep.subr.bf16.mxu0 0
  %2284 = vmatpush1.bf16.msra.mxu0 0
  %2285 = vmatprep.subr.bf16.mxu0 0
  %2286 = vmatpush1.bf16.msra.mxu0 0
  %2287 = vmatprep.subr.bf16.mxu0 0
  %2288 = vmatpush1.bf16.msra.mxu0 0
  %2289 = vmatprep.subr.bf16.mxu0 0
  %2290 = vmatpush1.bf16.msra.mxu0 0
  %2291 = vmatprep.subr.bf16.mxu0 0
  %2292 = vmatpush1.bf16.msra.mxu0 0
  %2293 = vmatprep.mubr.bf16.mxu0 0
  %2294 = vmatmul.mubr.bf16.gmra.mrb[0].mxu0 %v2178
  %v2295 = vpop.f32.mrb[0].mxu0
  %v2296 = vadd.f32 %v2215, %v2295
  %v2297 = vpop.f32.mrb[0].mxu0
  %v2298 = vadd.f32 %v2217, %v2297
  %v2299 = vpop.f32.mrb[0].mxu0
  %v2300 = vpop.f32.mrb[0].mxu0
  %2301 = vdwg.mxu0
  %2302 = vmatprep.subr.bf16.mxu0 0
  %2303 = vmatpush1.bf16.msra.mxu0 %v440
  %2304 = vmatprep.subr.bf16.mxu0 0
  %2305 = vmatpush1.bf16.msra.mxu0 %v443
  %2306 = vmatprep.subr.bf16.mxu0 0
  %2307 = vmatpush1.bf16.msra.mxu0 %v446
  %2308 = vmatprep.subr.bf16.mxu0 0
  %2309 = vmatpush1.bf16.msra.mxu0 %v449
  %2310 = vmatprep.subr.bf16.mxu0 0
  %2311 = vmatpush1.bf16.msra.mxu0 %v452
  %2312 = vmatprep.subr.bf16.mxu0 0
  %2313 = vmatpush1.bf16.msra.mxu0 %v455
  %2314 = vmatprep.subr.bf16.mxu0 0
  %2315 = vmatpush1.bf16.msra.mxu0 %v458
  %2316 = vmatprep.subr.bf16.mxu0 0
  %2317 = vmatpush1.bf16.msra.mxu0 %v461
  %2318 = vmatprep.subr.bf16.mxu0 0
  %2319 = vmatpush1.bf16.msra.mxu0 0
  %2320 = vmatprep.subr.bf16.mxu0 0
  %2321 = vmatpush1.bf16.msra.mxu0 0
  %2322 = vmatprep.subr.bf16.mxu0 0
  %2323 = vmatpush1.bf16.msra.mxu0 0
  %2324 = vmatprep.subr.bf16.mxu0 0
  %2325 = vmatpush1.bf16.msra.mxu0 0
  %2326 = vmatprep.subr.bf16.mxu0 0
  %2327 = vmatpush1.bf16.msra.mxu0 0
  %2328 = vmatprep.subr.bf16.mxu0 0
  %2329 = vmatpush1.bf16.msra.mxu0 0
  %2330 = vmatprep.subr.bf16.mxu0 0
  %2331 = vmatpush1.bf16.msra.mxu0 0
  %2332 = vmatprep.subr.bf16.mxu0 0
  %2333 = vmatpush1.bf16.msra.mxu0 0
  %2334 = vmatprep.mubr.bf16.mxu0 0
  %2335 = vmatmul.mubr.bf16.gmra.mrb[0].mxu0 %v2178
  %v2336 = vpop.f32.mrb[0].mxu0
  %v2337 = vadd.f32 %v2256, %v2336
  %v2338 = vpop.f32.mrb[0].mxu0
  %v2339 = vpop.f32.mrb[0].mxu0
  %v2340 = vpop.f32.mrb[0].mxu0
  %2341 = vdwg.mxu0
  %v2342 = vadd.f32 %v2296, %v127
  %v2343 = vadd.f32 %v2298, %v131
  %v2344 = vadd.f32 %v2337, %v135
  %v2345 = vpack.c.bf16 %v2174, %v2174
  %2346 = vmatprep.subr.bf16.mxu0 %v651
  %2347 = vmatpush1.bf16.msra.mxu0 %v650
  %2348 = vmatprep.subr.bf16.mxu0 %v654
  %2349 = vmatpush1.bf16.msra.mxu0 %v653
  %2350 = vmatprep.subr.bf16.mxu0 %v657
  %2351 = vmatpush1.bf16.msra.mxu0 %v656
  %2352 = vmatprep.subr.bf16.mxu0 %v660
  %2353 = vmatpush1.bf16.msra.mxu0 %v659
  %2354 = vmatprep.subr.bf16.mxu0 %v663
  %2355 = vmatpush1.bf16.msra.mxu0 %v662
  %2356 = vmatprep.subr.bf16.mxu0 %v666
  %2357 = vmatpush1.bf16.msra.mxu0 %v665
  %2358 = vmatprep.subr.bf16.mxu0 %v669
  %2359 = vmatpush1.bf16.msra.mxu0 %v668
  %2360 = vmatprep.subr.bf16.mxu0 %v672
  %2361 = vmatpush1.bf16.msra.mxu0 %v671
  %2362 = vmatprep.subr.bf16.mxu0 0
  %2363 = vmatpush1.bf16.msra.mxu0 0
  %2364 = vmatprep.subr.bf16.mxu0 0
  %2365 = vmatpush1.bf16.msra.mxu0 0
  %2366 = vmatprep.subr.bf16.mxu0 0
  %2367 = vmatpush1.bf16.msra.mxu0 0
  %2368 = vmatprep.subr.bf16.mxu0 0
  %2369 = vmatpush1.bf16.msra.mxu0 0
  %2370 = vmatprep.subr.bf16.mxu0 0
  %2371 = vmatpush1.bf16.msra.mxu0 0
  %2372 = vmatprep.subr.bf16.mxu0 0
  %2373 = vmatpush1.bf16.msra.mxu0 0
  %2374 = vmatprep.subr.bf16.mxu0 0
  %2375 = vmatpush1.bf16.msra.mxu0 0
  %2376 = vmatprep.subr.bf16.mxu0 0
  %2377 = vmatpush1.bf16.msra.mxu0 0
  %2378 = vmatprep.mubr.bf16.mxu0 0
  %2379 = vmatmul.mubr.bf16.gmra.mrb[0].mxu0 %v2345
  %v2380 = vpop.f32.mrb[0].mxu0
  %v2381 = vadd.f32 0.0, %v2380
  %v2382 = vpop.f32.mrb[0].mxu0
  %v2383 = vadd.f32 0.0, %v2382
  %v2384 = vpop.f32.mrb[0].mxu0
  %v2385 = vpop.f32.mrb[0].mxu0
  %2386 = vdwg.mxu0
  %2387 = vmatprep.subr.bf16.mxu0 0
  %2388 = vmatpush1.bf16.msra.mxu0 %v652
  %2389 = vmatprep.subr.bf16.mxu0 0
  %2390 = vmatpush1.bf16.msra.mxu0 %v655
  %2391 = vmatprep.subr.bf16.mxu0 0
  %2392 = vmatpush1.bf16.msra.mxu0 %v658
  %2393 = vmatprep.subr.bf16.mxu0 0
  %2394 = vmatpush1.bf16.msra.mxu0 %v661
  %2395 = vmatprep.subr.bf16.mxu0 0
  %2396 = vmatpush1.bf16.msra.mxu0 %v664
  %2397 = vmatprep.subr.bf16.mxu0 0
  %2398 = vmatpush1.bf16.msra.mxu0 %v667
  %2399 = vmatprep.subr.bf16.mxu0 0
  %2400 = vmatpush1.bf16.msra.mxu0 %v670
  %2401 = vmatprep.subr.bf16.mxu0 0
  %2402 = vmatpush1.bf16.msra.mxu0 %v673
  %2403 = vmatprep.subr.bf16.mxu0 0
  %2404 = vmatpush1.bf16.msra.mxu0 0
  %2405 = vmatprep.subr.bf16.mxu0 0
  %2406 = vmatpush1.bf16.msra.mxu0 0
  %2407 = vmatprep.subr.bf16.mxu0 0
  %2408 = vmatpush1.bf16.msra.mxu0 0
  %2409 = vmatprep.subr.bf16.mxu0 0
  %2410 = vmatpush1.bf16.msra.mxu0 0
  %2411 = vmatprep.subr.bf16.mxu0 0
  %2412 = vmatpush1.bf16.msra.mxu0 0
  %2413 = vmatprep.subr.bf16.mxu0 0
  %2414 = vmatpush1.bf16.msra.mxu0 0
  %2415 = vmatprep.subr.bf16.mxu0 0
  %2416 = vmatpush1.bf16.msra.mxu0 0
  %2417 = vmatprep.subr.bf16.mxu0 0
  %2418 = vmatpush1.bf16.msra.mxu0 0
  %2419 = vmatprep.mubr.bf16.mxu0 0
  %2420 = vmatmul.mubr.bf16.gmra.mrb[0].mxu0 %v2345
  %v2421 = vpop.f32.mrb[0].mxu0
  %v2422 = vadd.f32 0.0, %v2421
  %v2423 = vpop.f32.mrb[0].mxu0
  %v2424 = vpop.f32.mrb[0].mxu0
  %v2425 = vpop.f32.mrb[0].mxu0
  %2426 = vdwg.mxu0
  %v2427 = vadd.f32 %v2342, %v2381
  %v2428 = vxor.u32 %v2427, 2147483648
  %v2429 = vmul.f32 %v2428, 1.442695
  %v2430 = vpow.pop %v2429
  %v2431 = vadd.f32 %v2430, 1.0
  %v2432 = vrcp.pop %v2431
  %v2433 = vmul.f32 1.0, %v2432
  %v2434 = vadd.f32 %v2343, %v2383
  %v2435 = vxor.u32 %v2434, 2147483648
  %v2436 = vmul.f32 %v2435, 1.442695
  %v2437 = vpow.pop %v2436
  %v2438 = vadd.f32 %v2437, 1.0
  %v2439 = vrcp.pop %v2438
  %v2440 = vmul.f32 1.0, %v2439
  %v2441 = vadd.f32 %v2422, %v144
  %v2442 = vmul.f32 %v2433, %v2441
  %v2443 = vadd.f32 %v2344, %v2442
  %v2444 = vtanh.pop %v2443
  %v2445 = vsub.f32 1.0, %v2440
  %v2446 = vmul.f32 %v2445, %v2444
  %v2447 = vmul.f32 %v2440, %v2174
  %v2448 = vadd.f32 %v2446, %v2447
  %s2449 = scalar_lea.vmem %s6, 48
  %2450 = vst [vmem:[%s2449] sm:$0xff] %v2448
  %v2451 = vmax.f32 %v2177, %v2448
  %v2452 = vld [vmem:[%s147] sm:$0xf]
  %v2453 = vld [vmem:[%s0] sm:$0xf]
  %2454 = vmatprep.subr.bf16.mxu0 %v230
  %2455 = vmatpush1.bf16.msra.mxu0 %v229
  %2456 = vmatprep.subr.bf16.mxu0 %v233
  %2457 = vmatpush1.bf16.msra.mxu0 %v232
  %2458 = vmatprep.subr.bf16.mxu0 %v236
  %2459 = vmatpush1.bf16.msra.mxu0 %v235
  %2460 = vmatprep.subr.bf16.mxu0 %v239
  %2461 = vmatpush1.bf16.msra.mxu0 %v238
  %2462 = vmatprep.subr.bf16.mxu0 %v242
  %2463 = vmatpush1.bf16.msra.mxu0 %v241
  %2464 = vmatprep.subr.bf16.mxu0 %v245
  %2465 = vmatpush1.bf16.msra.mxu0 %v244
  %2466 = vmatprep.subr.bf16.mxu0 %v248
  %2467 = vmatpush1.bf16.msra.mxu0 %v247
  %2468 = vmatprep.subr.bf16.mxu0 %v251
  %2469 = vmatpush1.bf16.msra.mxu0 %v250
  %2470 = vmatprep.subr.bf16.mxu0 0
  %2471 = vmatpush1.bf16.msra.mxu0 0
  %2472 = vmatprep.subr.bf16.mxu0 0
  %2473 = vmatpush1.bf16.msra.mxu0 0
  %2474 = vmatprep.subr.bf16.mxu0 0
  %2475 = vmatpush1.bf16.msra.mxu0 0
  %2476 = vmatprep.subr.bf16.mxu0 0
  %2477 = vmatpush1.bf16.msra.mxu0 0
  %2478 = vmatprep.subr.bf16.mxu0 0
  %2479 = vmatpush1.bf16.msra.mxu0 0
  %2480 = vmatprep.subr.bf16.mxu0 0
  %2481 = vmatpush1.bf16.msra.mxu0 0
  %2482 = vmatprep.subr.bf16.mxu0 0
  %2483 = vmatpush1.bf16.msra.mxu0 0
  %2484 = vmatprep.subr.bf16.mxu0 0
  %2485 = vmatpush1.bf16.msra.mxu0 0
  %2486 = vmatprep.mubr.bf16.mxu0 0
  %2487 = vmatmul.mubr.bf16.gmra.mrb[0].mxu0 %v2453
  %v2488 = vpop.f32.mrb[0].mxu0
  %v2489 = vadd.f32 0.0, %v2488
  %v2490 = vpop.f32.mrb[0].mxu0
  %v2491 = vadd.f32 0.0, %v2490
  %v2492 = vpop.f32.mrb[0].mxu0
  %v2493 = vpop.f32.mrb[0].mxu0
  %2494 = vdwg.mxu0
  %2495 = vmatprep.subr.bf16.mxu0 0
  %2496 = vmatpush1.bf16.msra.mxu0 %v231
  %2497 = vmatprep.subr.bf16.mxu0 0
  %2498 = vmatpush1.bf16.msra.mxu0 %v234
  %2499 = vmatprep.subr.bf16.mxu0 0
  %2500 = vmatpush1.bf16.msra.mxu0 %v237
  %2501 = vmatprep.subr.bf16.mxu0 0
  %2502 = vmatpush1.bf16.msra.mxu0 %v240
  %2503 = vmatprep.subr.bf16.mxu0 0
  %2504 = vmatpush1.bf16.msra.mxu0 %v243
  %2505 = vmatprep.subr.bf16.mxu0 0
  %2506 = vmatpush1.bf16.msra.mxu0 %v246
  %2507 = vmatprep.subr.bf16.mxu0 0
  %2508 = vmatpush1.bf16.msra.mxu0 %v249
  %2509 = vmatprep.subr.bf16.mxu0 0
  %2510 = vmatpush1.bf16.msra.mxu0 %v252
  %2511 = vmatprep.subr.bf16.mxu0 0
  %2512 = vmatpush1.bf16.msra.mxu0 0
  %2513 = vmatprep.subr.bf16.mxu0 0
  %2514 = vmatpush1.bf16.msra.mxu0 0
  %2515 = vmatprep.subr.bf16.mxu0 0
  %2516 = vmatpush1.bf16.msra.mxu0 0
  %2517 = vmatprep.subr.bf16.mxu0 0
  %2518 = vmatpush1.bf16.msra.mxu0 0
  %2519 = vmatprep.subr.bf16.mxu0 0
  %2520 = vmatpush1.bf16.msra.mxu0 0
  %2521 = vmatprep.subr.bf16.mxu0 0
  %2522 = vmatpush1.bf16.msra.mxu0 0
  %2523 = vmatprep.subr.bf16.mxu0 0
  %2524 = vmatpush1.bf16.msra.mxu0 0
  %2525 = vmatprep.subr.bf16.mxu0 0
  %2526 = vmatpush1.bf16.msra.mxu0 0
  %2527 = vmatprep.mubr.bf16.mxu0 0
  %2528 = vmatmul.mubr.bf16.gmra.mrb[0].mxu0 %v2453
  %v2529 = vpop.f32.mrb[0].mxu0
  %v2530 = vadd.f32 0.0, %v2529
  %v2531 = vpop.f32.mrb[0].mxu0
  %v2532 = vpop.f32.mrb[0].mxu0
  %v2533 = vpop.f32.mrb[0].mxu0
  %2534 = vdwg.mxu0
  %2535 = vmatprep.subr.bf16.mxu0 %v439
  %2536 = vmatpush1.bf16.msra.mxu0 %v438
  %2537 = vmatprep.subr.bf16.mxu0 %v442
  %2538 = vmatpush1.bf16.msra.mxu0 %v441
  %2539 = vmatprep.subr.bf16.mxu0 %v445
  %2540 = vmatpush1.bf16.msra.mxu0 %v444
  %2541 = vmatprep.subr.bf16.mxu0 %v448
  %2542 = vmatpush1.bf16.msra.mxu0 %v447
  %2543 = vmatprep.subr.bf16.mxu0 %v451
  %2544 = vmatpush1.bf16.msra.mxu0 %v450
  %2545 = vmatprep.subr.bf16.mxu0 %v454
  %2546 = vmatpush1.bf16.msra.mxu0 %v453
  %2547 = vmatprep.subr.bf16.mxu0 %v457
  %2548 = vmatpush1.bf16.msra.mxu0 %v456
  %2549 = vmatprep.subr.bf16.mxu0 %v460
  %2550 = vmatpush1.bf16.msra.mxu0 %v459
  %2551 = vmatprep.subr.bf16.mxu0 0
  %2552 = vmatpush1.bf16.msra.mxu0 0
  %2553 = vmatprep.subr.bf16.mxu0 0
  %2554 = vmatpush1.bf16.msra.mxu0 0
  %2555 = vmatprep.subr.bf16.mxu0 0
  %2556 = vmatpush1.bf16.msra.mxu0 0
  %2557 = vmatprep.subr.bf16.mxu0 0
  %2558 = vmatpush1.bf16.msra.mxu0 0
  %2559 = vmatprep.subr.bf16.mxu0 0
  %2560 = vmatpush1.bf16.msra.mxu0 0
  %2561 = vmatprep.subr.bf16.mxu0 0
  %2562 = vmatpush1.bf16.msra.mxu0 0
  %2563 = vmatprep.subr.bf16.mxu0 0
  %2564 = vmatpush1.bf16.msra.mxu0 0
  %2565 = vmatprep.subr.bf16.mxu0 0
  %2566 = vmatpush1.bf16.msra.mxu0 0
  %2567 = vmatprep.mubr.bf16.mxu0 0
  %2568 = vmatmul.mubr.bf16.gmra.mrb[0].mxu0 %v2452
  %v2569 = vpop.f32.mrb[0].mxu0
  %v2570 = vadd.f32 %v2489, %v2569
  %v2571 = vpop.f32.mrb[0].mxu0
  %v2572 = vadd.f32 %v2491, %v2571
  %v2573 = vpop.f32.mrb[0].mxu0
  %v2574 = vpop.f32.mrb[0].mxu0
  %2575 = vdwg.mxu0
  %2576 = vmatprep.subr.bf16.mxu0 0
  %2577 = vmatpush1.bf16.msra.mxu0 %v440
  %2578 = vmatprep.subr.bf16.mxu0 0
  %2579 = vmatpush1.bf16.msra.mxu0 %v443
  %2580 = vmatprep.subr.bf16.mxu0 0
  %2581 = vmatpush1.bf16.msra.mxu0 %v446
  %2582 = vmatprep.subr.bf16.mxu0 0
  %2583 = vmatpush1.bf16.msra.mxu0 %v449
  %2584 = vmatprep.subr.bf16.mxu0 0
  %2585 = vmatpush1.bf16.msra.mxu0 %v452
  %2586 = vmatprep.subr.bf16.mxu0 0
  %2587 = vmatpush1.bf16.msra.mxu0 %v455
  %2588 = vmatprep.subr.bf16.mxu0 0
  %2589 = vmatpush1.bf16.msra.mxu0 %v458
  %2590 = vmatprep.subr.bf16.mxu0 0
  %2591 = vmatpush1.bf16.msra.mxu0 %v461
  %2592 = vmatprep.subr.bf16.mxu0 0
  %2593 = vmatpush1.bf16.msra.mxu0 0
  %2594 = vmatprep.subr.bf16.mxu0 0
  %2595 = vmatpush1.bf16.msra.mxu0 0
  %2596 = vmatprep.subr.bf16.mxu0 0
  %2597 = vmatpush1.bf16.msra.mxu0 0
  %2598 = vmatprep.subr.bf16.mxu0 0
  %2599 = vmatpush1.bf16.msra.mxu0 0
  %2600 = vmatprep.subr.bf16.mxu0 0
  %2601 = vmatpush1.bf16.msra.mxu0 0
  %2602 = vmatprep.subr.bf16.mxu0 0
  %2603 = vmatpush1.bf16.msra.mxu0 0
  %2604 = vmatprep.subr.bf16.mxu0 0
  %2605 = vmatpush1.bf16.msra.mxu0 0
  %2606 = vmatprep.subr.bf16.mxu0 0
  %2607 = vmatpush1.bf16.msra.mxu0 0
  %2608 = vmatprep.mubr.bf16.mxu0 0
  %2609 = vmatmul.mubr.bf16.gmra.mrb[0].mxu0 %v2452
  %v2610 = vpop.f32.mrb[0].mxu0
  %v2611 = vadd.f32 %v2530, %v2610
  %v2612 = vpop.f32.mrb[0].mxu0
  %v2613 = vpop.f32.mrb[0].mxu0
  %v2614 = vpop.f32.mrb[0].mxu0
  %2615 = vdwg.mxu0
  %v2616 = vadd.f32 %v2570, %v127
  %v2617 = vadd.f32 %v2572, %v131
  %v2618 = vadd.f32 %v2611, %v135
  %v2619 = vpack.c.bf16 %v2448, %v2448
  %2620 = vmatprep.subr.bf16.mxu0 %v651
  %2621 = vmatpush1.bf16.msra.mxu0 %v650
  %2622 = vmatprep.subr.bf16.mxu0 %v654
  %2623 = vmatpush1.bf16.msra.mxu0 %v653
  %2624 = vmatprep.subr.bf16.mxu0 %v657
  %2625 = vmatpush1.bf16.msra.mxu0 %v656
  %2626 = vmatprep.subr.bf16.mxu0 %v660
  %2627 = vmatpush1.bf16.msra.mxu0 %v659
  %2628 = vmatprep.subr.bf16.mxu0 %v663
  %2629 = vmatpush1.bf16.msra.mxu0 %v662
  %2630 = vmatprep.subr.bf16.mxu0 %v666
  %2631 = vmatpush1.bf16.msra.mxu0 %v665
  %2632 = vmatprep.subr.bf16.mxu0 %v669
  %2633 = vmatpush1.bf16.msra.mxu0 %v668
  %2634 = vmatprep.subr.bf16.mxu0 %v672
  %2635 = vmatpush1.bf16.msra.mxu0 %v671
  %2636 = vmatprep.subr.bf16.mxu0 0
  %2637 = vmatpush1.bf16.msra.mxu0 0
  %2638 = vmatprep.subr.bf16.mxu0 0
  %2639 = vmatpush1.bf16.msra.mxu0 0
  %2640 = vmatprep.subr.bf16.mxu0 0
  %2641 = vmatpush1.bf16.msra.mxu0 0
  %2642 = vmatprep.subr.bf16.mxu0 0
  %2643 = vmatpush1.bf16.msra.mxu0 0
  %2644 = vmatprep.subr.bf16.mxu0 0
  %2645 = vmatpush1.bf16.msra.mxu0 0
  %2646 = vmatprep.subr.bf16.mxu0 0
  %2647 = vmatpush1.bf16.msra.mxu0 0
  %2648 = vmatprep.subr.bf16.mxu0 0
  %2649 = vmatpush1.bf16.msra.mxu0 0
  %2650 = vmatprep.subr.bf16.mxu0 0
  %2651 = vmatpush1.bf16.msra.mxu0 0
  %2652 = vmatprep.mubr.bf16.mxu0 0
  %2653 = vmatmul.mubr.bf16.gmra.mrb[0].mxu0 %v2619
  %v2654 = vpop.f32.mrb[0].mxu0
  %v2655 = vadd.f32 0.0, %v2654
  %v2656 = vpop.f32.mrb[0].mxu0
  %v2657 = vadd.f32 0.0, %v2656
  %v2658 = vpop.f32.mrb[0].mxu0
  %v2659 = vpop.f32.mrb[0].mxu0
  %2660 = vdwg.mxu0
  %2661 = vmatprep.subr.bf16.mxu0 0
  %2662 = vmatpush1.bf16.msra.mxu0 %v652
  %2663 = vmatprep.subr.bf16.mxu0 0
  %2664 = vmatpush1.bf16.msra.mxu0 %v655
  %2665 = vmatprep.subr.bf16.mxu0 0
  %2666 = vmatpush1.bf16.msra.mxu0 %v658
  %2667 = vmatprep.subr.bf16.mxu0 0
  %2668 = vmatpush1.bf16.msra.mxu0 %v661
  %2669 = vmatprep.subr.bf16.mxu0 0
  %2670 = vmatpush1.bf16.msra.mxu0 %v664
  %2671 = vmatprep.subr.bf16.mxu0 0
  %2672 = vmatpush1.bf16.msra.mxu0 %v667
  %2673 = vmatprep.subr.bf16.mxu0 0
  %2674 = vmatpush1.bf16.msra.mxu0 %v670
  %2675 = vmatprep.subr.bf16.mxu0 0
  %2676 = vmatpush1.bf16.msra.mxu0 %v673
  %2677 = vmatprep.subr.bf16.mxu0 0
  %2678 = vmatpush1.bf16.msra.mxu0 0
  %2679 = vmatprep.subr.bf16.mxu0 0
  %2680 = vmatpush1.bf16.msra.mxu0 0
  %2681 = vmatprep.subr.bf16.mxu0 0
  %2682 = vmatpush1.bf16.msra.mxu0 0
  %2683 = vmatprep.subr.bf16.mxu0 0
  %2684 = vmatpush1.bf16.msra.mxu0 0
  %2685 = vmatprep.subr.bf16.mxu0 0
  %2686 = vmatpush1.bf16.msra.mxu0 0
  %2687 = vmatprep.subr.bf16.mxu0 0
  %2688 = vmatpush1.bf16.msra.mxu0 0
  %2689 = vmatprep.subr.bf16.mxu0 0
  %2690 = vmatpush1.bf16.msra.mxu0 0
  %2691 = vmatprep.subr.bf16.mxu0 0
  %2692 = vmatpush1.bf16.msra.mxu0 0
  %2693 = vmatprep.mubr.bf16.mxu0 0
  %2694 = vmatmul.mubr.bf16.gmra.mrb[0].mxu0 %v2619
  %v2695 = vpop.f32.mrb[0].mxu0
  %v2696 = vadd.f32 0.0, %v2695
  %v2697 = vpop.f32.mrb[0].mxu0
  %v2698 = vpop.f32.mrb[0].mxu0
  %v2699 = vpop.f32.mrb[0].mxu0
  %2700 = vdwg.mxu0
  %v2701 = vadd.f32 %v2616, %v2655
  %v2702 = vxor.u32 %v2701, 2147483648
  %v2703 = vmul.f32 %v2702, 1.442695
  %v2704 = vpow.pop %v2703
  %v2705 = vadd.f32 %v2704, 1.0
  %v2706 = vrcp.pop %v2705
  %v2707 = vmul.f32 1.0, %v2706
  %v2708 = vadd.f32 %v2617, %v2657
  %v2709 = vxor.u32 %v2708, 2147483648
  %v2710 = vmul.f32 %v2709, 1.442695
  %v2711 = vpow.pop %v2710
  %v2712 = vadd.f32 %v2711, 1.0
  %v2713 = vrcp.pop %v2712
  %v2714 = vmul.f32 1.0, %v2713
  %v2715 = vadd.f32 %v2696, %v144
  %v2716 = vmul.f32 %v2707, %v2715
  %v2717 = vadd.f32 %v2618, %v2716
  %v2718 = vtanh.pop %v2717
  %v2719 = vsub.f32 1.0, %v2714
  %v2720 = vmul.f32 %v2719, %v2718
  %v2721 = vmul.f32 %v2714, %v2448
  %v2722 = vadd.f32 %v2720, %v2721
  %s2723 = scalar_lea.vmem %s6, 56
  %2724 = vst [vmem:[%s2723] sm:$0xff] %v2722
  %v2725 = vmax.f32 %v2451, %v2722
  %v2726 = vtanh.pop %v2725
  %v2727 = vtanh.pop %v2726
  %2728 = vst [vmem:[%s7] sm:$0xff] %v2727
  // Predicated region
  $region26: #{utterance_net_forward.3} parent=0 // pred_check
    _
  $region27: #{utterance_net_forward.3} parent=0 // pred_check_branch
    %2730 = sbr.rel (0) target = $region29
  $region28: #{utterance_net_forward.3} parent=0 // pred_region
    _
  $region29: #{utterance_net_forward.3} parent=0 // pred_fallthru
    _
  // Predicated region
  $region30: #{utterance_net_forward.3} parent=0 // pred_check
    _
  $region31: #{utterance_net_forward.3} parent=0 // pred_check_branch
    %2732 = sbr.rel (0) target = $region33
  $region32: #{utterance_net_forward.3} parent=0 // pred_region
    _
  $region33: #{utterance_net_forward.3} parent=0 // pred_fallthru
    _
  // Predicated region
  $region34: #{utterance_net_forward.3} parent=0 // pred_check
    _
  $region35: #{utterance_net_forward.3} parent=0 // pred_check_branch
    %2734 = sbr.rel (0) target = $region37
  $region36: #{utterance_net_forward.3} parent=0 // pred_region
    _
  $region37: #{utterance_net_forward.3} parent=0 // pred_fallthru
    _
  // Predicated region
  $region38: #{utterance_net_forward.3} parent=0 // pred_check
    _
  $region39: #{utterance_net_forward.3} parent=0 // pred_check_branch
    %2736 = sbr.rel (0) target = $region41
  $region40: #{utterance_net_forward.3} parent=0 // pred_region
    _
  $region41: #{utterance_net_forward.3} parent=0 // pred_fallthru
    _

</llo_original>
